<compile_context>
chip_gen: v7x
topology: tpu7x:2x2x1
jax: 0.10.0
libtpu: 0.0.40
codegen_flags: <defaults>
</compile_context>

<pallas_src>
import numpy as np
import jax
import jax.numpy as jnp
from jax.experimental import pallas as pl
from jax.experimental.pallas import tpu as pltpu


def _make_kernel(B, L, Lp):
    BLp = B * Lp

    def kernel(xs_ref,
               w1_ref, b1_ref, w2_ref, b2_ref, w3_ref, b3_ref,
               w4_ref, b4_ref, w5_hbm_ref, b5_ref, w6_ref, b6_ref,
               out_ref,
               w5_vmem, w5_sem):
        # Kick off the dominant (4 MB) w5 DMA immediately; it is only consumed by
        # the second dense layer, so all earlier compute hides under the copy and
        # the body does not wait for it in the prologue.
        cp5 = pltpu.make_async_copy(w5_hbm_ref, w5_vmem, w5_sem)
        cp5.start()

        # Within-block row index, built once as a (BLp, 1) column and broadcast
        # (JAX does not CSE broadcast_in_dim, so don't rebuild it per conv).
        within = jax.lax.broadcasted_iota(jnp.int32, (BLp, 1), 0) & (Lp - 1)

        def conv_relu(h, w_ref, b_ref, lout, mask=True):
            """Conv1d(k=2, stride=1, padding=1) + ReLU on the batch-stacked slab.

            h is (BLp, Cin) with each block's padded conv input at rows
            [0, 1+lin]: row 0 is the left pad (zero), rows [1, lin] the signal,
            everything above zero.  Output has the same structure with valid rows
            [1, lout], lout = lin + 1.  Two dots against static slices of the
            fused (2*Cin, Cout) weight; the tap-0 product is rolled down one row
            (roll(h,1)@W0 == roll(h@W0,1); the wrap row is zero by construction).
            """
            cin = w_ref.shape[0] // 2
            hb = h.astype(jnp.bfloat16)
            y_prev = jnp.dot(hb, w_ref[0:cin, :], preferred_element_type=jnp.float32)  # tap 0
            y_cur = jnp.dot(hb, w_ref[cin:, :], preferred_element_type=jnp.float32)    # tap 1
            y = pltpu.roll(y_prev, shift=1, axis=0) + y_cur
            y = jnp.maximum(y + b_ref[...], 0.0)
            if mask:
                # Zero rows outside [1, lout] so relu(bias) garbage cannot act as
                # the next conv's (supposedly zero) padding rows.
                y = jnp.where((within >= 1) & (within <= lout), y, 0.0)
            return y

        h = conv_relu(xs_ref[...], w1_ref, b1_ref, L + 1)            # (BLp, 384)
        h = conv_relu(h, w2_ref, b2_ref, L + 2)                      # (BLp, 128)
        h = conv_relu(h, w3_ref, b3_ref, L + 3, mask=False)          # (BLp, 64); pool masks below

        # AdaptiveAvgPool1d(1): per-batch mean over the L+3 valid rows, done as a
        # small (B, BLp) @ (BLp, 64) masked-average matmul.  The mask also drops
        # the unmasked conv3 garbage rows (relu(b3) outside [1, L+3]).
        l3 = L + 3
        bid = jax.lax.broadcasted_iota(jnp.int32, (B, BLp), 0)
        rid = jax.lax.broadcasted_iota(jnp.int32, (B, BLp), 1)
        off = rid - bid * Lp
        pool = jnp.where((off >= 1) & (off <= l3), 1.0 / l3, 0.0).astype(jnp.float32)
        pooled = jnp.dot(pool, h, preferred_element_type=jnp.float32)     # (B, 64)

        d = jnp.maximum(
            jnp.dot(pooled.astype(jnp.bfloat16), w4_ref[...],
                    preferred_element_type=jnp.float32) + b4_ref[...], 0.0)   # (B, 2048)

        cp5.wait()   # first consumer of w5
        d = jnp.maximum(
            jnp.dot(d.astype(jnp.bfloat16), w5_vmem[...],
                    preferred_element_type=jnp.float32) + b5_ref[...], 0.0)   # (B, 1024)

        logit = jnp.dot(d.astype(jnp.bfloat16), w6_ref[...],
                        preferred_element_type=jnp.float32) + b6_ref[...]     # (B, 1)
        logit = jnp.clip(logit, -30.0, 30.0)
        out_ref[...] = 1.0 / (1.0 + jnp.exp(-logit))   # exact sigmoid (kernel is DMA-bound)

    return kernel


def prepare_params(params):
    """One-time conversion of the torch-layout params to the kernel layout.

    Call this ONCE (off the hot path) and reuse the result: it fuses the k=2 conv
    taps into a single (2*Cin, Cout) matrix and casts all matmul weights to bf16
    so the per-call HBM traffic is only what the kernel itself consumes.
    """
    w1, b1, w2, b2, w3, b3, w4, b4, w5, b5, w6, b6 = params
    bf16 = lambda w: jnp.asarray(w, jnp.bfloat16)
    flat = lambda w: bf16(w.reshape(-1, w.shape[-1]))       # (2, Cin, Cout) -> (2*Cin, Cout)
    f32 = lambda b: jnp.asarray(b, jnp.float32)
    return (flat(w1), f32(b1), flat(w2), f32(b2), flat(w3), f32(b3),
            bf16(w4), f32(b4), bf16(w5), f32(b5), bf16(w6), f32(b6))


def score_predictor(x, prepared):
    """x: (B, L, input_dim) float32, prepared = prepare_params(params) -> (B, 1) f32."""
    w1f, b1, w2f, b2, w3f, b3, w4, b4, w5, b5, w6, b6 = prepared
    B, L, D = x.shape

    # Per-batch row budget: power of two (cheap `& (Lp-1)` row masking), multiple
    # of 8, with room for the left zero-pad row, the deepest (L+3)-row activation
    # and at least one trailing zero row (keeps the roll wrap-around clean).
    Lp = max(8, pl.next_power_of_2(L + 4))
    assert (Lp & (Lp - 1)) == 0 and Lp >= L + 4, (Lp, L)   # roll-wrap / mask invariants

    # Batch-stacked zero-padded slab in bf16 (the conv matmul input dtype):
    # element b occupies rows [b*Lp, (b+1)*Lp); its L positions sit at rows [1, L].
    xs = jnp.pad(x.astype(jnp.bfloat16), ((0, 0), (1, Lp - 1 - L), (0, 0)))
    xs = xs.reshape(B * Lp, D)

    vmem = pl.BlockSpec(memory_space=pltpu.MemorySpace.VMEM)  # whole array, single-buffered
    hbm = pl.BlockSpec(memory_space=pl.ANY)                   # w5 stays in HBM; kernel DMAs it

    # NOTE: at large B, switch to a batch-block grid (blocked xs/out specs, weights
    # still whole-array VMEM) and a lane-dense (1, B) output instead of raising the
    # VMEM limit -- matters first on v7x (64 MiB VMEM).
    out = pl.pallas_call(
        _make_kernel(B, L, Lp),
        out_shape=jax.ShapeDtypeStruct((B, 1), jnp.float32),
        in_specs=[vmem] * 9 + [hbm] + [vmem] * 3,
        out_specs=vmem,
        scratch_shapes=[pltpu.VMEM(w5.shape, w5.dtype),        # w5 landing buffer
                        pltpu.SemaphoreType.DMA(())],
        compiler_params=pltpu.CompilerParams(vmem_limit_bytes=32 << 20),
    )(xs, w1f, b1, w2f, b2, w3f, b3, w4, b4, w5, b5, w6, b6)
    return out


def init_params(key, input_dim=768):
    """Deterministic parameters in the torch-equivalent layout."""
    params = []
    # Conv1d layers: (C_in, C_out) pairs, kernel_size=2; weight stored (K, C_in, C_out).
    for cin, cout in [(input_dim, 384), (384, 128), (128, 64)]:
        key, k1, k2 = jax.random.split(key, 3)
        bound = 1.0 / float(np.sqrt(cin * 2))
        params.append(jax.random.uniform(k1, (2, cin, cout), jnp.float32, -bound, bound))
        params.append(jax.random.uniform(k2, (1, cout), jnp.float32, -bound, bound))
    # Linear layers: weight stored (in, out).
    for cin, cout in [(64, 2048), (2048, 1024), (1024, 1)]:
        key, k1, k2 = jax.random.split(key, 3)
        bound = 1.0 / float(np.sqrt(cin))
        params.append(jax.random.uniform(k1, (cin, cout), jnp.float32, -bound, bound))
        params.append(jax.random.uniform(k2, (1, cout), jnp.float32, -bound, bound))
    return params


def reference(x, params):
    """Pure-JAX (XLA, f32) reference mirroring the PyTorch forward exactly."""
    w1, b1, w2, b2, w3, b3, w4, b4, w5, b5, w6, b6 = params
    h = jnp.transpose(x, (0, 2, 1))                  # (B, C, L)  == x.transpose(1, 2)
    for w, b in [(w1, b1), (w2, b2), (w3, b3)]:
        wk = jnp.transpose(w, (2, 1, 0))             # (C_out, C_in, K) torch layout
        h = jax.lax.conv_general_dilated(
            h, wk, window_strides=(1,), padding=[(1, 1)],
            dimension_numbers=("NCH", "OIH", "NCH"))
        h = jnp.maximum(h + b[0][None, :, None], 0.0)
    pooled = jnp.mean(h, axis=-1)                    # AdaptiveAvgPool1d(1) + squeeze
    d = jnp.maximum(pooled @ w4 + b4, 0.0)
    d = jnp.maximum(d @ w5 + b5, 0.0)
    return jax.nn.sigmoid(d @ w6 + b6)


if __name__ == "__main__":
    B, L, D = 2, 8, 768
    key = jax.random.PRNGKey(0)
    kx, kp = jax.random.split(key)
    x = jax.random.normal(kx, (B, L, D), jnp.float32)
    params = init_params(kp, input_dim=D)

    # One-time weight staging (bf16 + fused conv taps) -- NOT part of the hot path.
    prepared = jax.block_until_ready(prepare_params(params))

    fwd = jax.jit(score_predictor)
    out = jax.block_until_ready(fwd(x, prepared))
    ref = jax.block_until_ready(reference(x, params))

    assert out.shape == (B, 1), out.shape
    # Kernel uses bf16 weights/activations on the MXU (f32 accumulation) vs the
    # f32 reference -> expect ~1e-3 absolute difference on the sigmoid output.
    if not np.allclose(np.asarray(out), np.asarray(ref), rtol=2e-2, atol=2e-2):
        raise AssertionError(f"mismatch: kernel={out} ref={ref}")
    print("KERNEL_OK")
</pallas_src>

<mosaic_0001>
module attributes {stable_mosaic.version = 11 : i64} {
  func.func @kernel(%arg0: memref<32x768xbf16, #tpu.memory_space<vmem>>, %arg1: memref<1536x384xbf16, #tpu.memory_space<vmem>>, %arg2: memref<1x384xf32, #tpu.memory_space<vmem>>, %arg3: memref<768x128xbf16, #tpu.memory_space<vmem>>, %arg4: memref<1x128xf32, #tpu.memory_space<vmem>>, %arg5: memref<256x64xbf16, #tpu.memory_space<vmem>>, %arg6: memref<1x64xf32, #tpu.memory_space<vmem>>, %arg7: memref<64x2048xbf16, #tpu.memory_space<vmem>>, %arg8: memref<1x2048xf32, #tpu.memory_space<vmem>>, %arg9: memref<2048x1024xbf16, #tpu.memory_space<any>>, %arg10: memref<1x1024xf32, #tpu.memory_space<vmem>>, %arg11: memref<1024x1xbf16, #tpu.memory_space<vmem>>, %arg12: memref<1x1xf32, #tpu.memory_space<vmem>>, %arg13: memref<2x1xf32, #tpu.memory_space<vmem>>, %arg14: memref<2048x1024xbf16, #tpu.memory_space<vmem>>, %arg15: memref<!tpu.dma_semaphore, #tpu.memory_space<semaphore_mem>>) attributes {dimension_semantics = [], scalar_prefetch = 0 : i64, scratch_operands = 2 : i64, tpu.core_type = #tpu.core_type<tc>} {
    tpu.enqueue_dma source(%arg9 : memref<2048x1024xbf16, #tpu.memory_space<any>>) target(%arg14 : memref<2048x1024xbf16, #tpu.memory_space<vmem>>) target_semaphore(%arg15 : memref<!tpu.dma_semaphore, #tpu.memory_space<semaphore_mem>>)
    %0 = tpu.iota {dimensions = array<i32: 0>} : vector<32x1xi32>
    %c15_i32 = arith.constant 15 : i32
    %1 = vector.broadcast %c15_i32 : i32 to vector<32x1xi32>
    %2 = arith.andi %0, %1 : vector<32x1xi32>
    %c0 = arith.constant 0 : index
    %c0_0 = arith.constant 0 : index
    %3 = vector.load %arg0[%c0, %c0_0] : memref<32x768xbf16, #tpu.memory_space<vmem>>, vector<32x768xbf16>
    %c0_1 = arith.constant 0 : index
    %c0_2 = arith.constant 0 : index
    %4 = vector.load %arg1[%c0_1, %c0_2] : memref<1536x384xbf16, #tpu.memory_space<vmem>>, vector<768x384xbf16>
    %cst = arith.constant dense<0.000000e+00> : vector<32x384xf32>
    %5 = tpu.matmul %3, %4, %cst {dimension_numbers = #tpu.dot_dimension_numbers<[1], [0], [0], [1], [0, 0, 1, 1], [], []>} : vector<32x768xbf16>, vector<768x384xbf16>, vector<32x384xf32> -> vector<32x384xf32>
    %c768 = arith.constant 768 : index
    %c0_3 = arith.constant 0 : index
    %6 = vector.load %arg1[%c768, %c0_3] : memref<1536x384xbf16, #tpu.memory_space<vmem>>, vector<768x384xbf16>
    %cst_4 = arith.constant dense<0.000000e+00> : vector<32x384xf32>
    %7 = tpu.matmul %3, %6, %cst_4 {dimension_numbers = #tpu.dot_dimension_numbers<[1], [0], [0], [1], [0, 0, 1, 1], [], []>} : vector<32x768xbf16>, vector<768x384xbf16>, vector<32x384xf32> -> vector<32x384xf32>
    %c1_i32 = arith.constant 1 : i32
    %8 = tpu.dynamic_rotate %5 by %c1_i32 dim 0 : vector<32x384xf32>, i32 -> vector<32x384xf32>
    %9 = arith.addf %8, %7 : vector<32x384xf32>
    %c0_5 = arith.constant 0 : index
    %c0_6 = arith.constant 0 : index
    %10 = vector.load %arg2[%c0_5, %c0_6] : memref<1x384xf32, #tpu.memory_space<vmem>>, vector<1x384xf32>
    %11 = vector.broadcast %10 : vector<1x384xf32> to vector<32x384xf32>
    %12 = arith.addf %9, %11 : vector<32x384xf32>
    %cst_7 = arith.constant 0.000000e+00 : f32
    %13 = vector.broadcast %cst_7 : f32 to vector<32x384xf32>
    %14 = arith.maximumf %12, %13 : vector<32x384xf32>
    %c1_i32_8 = arith.constant 1 : i32
    %15 = vector.broadcast %c1_i32_8 : i32 to vector<32x1xi32>
    %16 = arith.cmpi sge, %2, %15 : vector<32x1xi32>
    %c9_i32 = arith.constant 9 : i32
    %17 = vector.broadcast %c9_i32 : i32 to vector<32x1xi32>
    %18 = arith.cmpi sle, %2, %17 : vector<32x1xi32>
    %19 = arith.andi %16, %18 : vector<32x1xi1>
    %cst_9 = arith.constant 0.000000e+00 : f32
    %20 = vector.shape_cast %19 : vector<32x1xi1> to vector<32x1xi1>
    %21 = vector.broadcast %20 : vector<32x1xi1> to vector<32x384xi1>
    %22 = vector.broadcast %cst_9 : f32 to vector<32x384xf32>
    %23 = arith.select %21, %14, %22 : vector<32x384xi1>, vector<32x384xf32>
    %24 = arith.truncf %23 : vector<32x384xf32> to vector<32x384xbf16>
    %c0_10 = arith.constant 0 : index
    %c0_11 = arith.constant 0 : index
    %25 = vector.load %arg3[%c0_10, %c0_11] : memref<768x128xbf16, #tpu.memory_space<vmem>>, vector<384x128xbf16>
    %cst_12 = arith.constant dense<0.000000e+00> : vector<32x128xf32>
    %26 = tpu.matmul %24, %25, %cst_12 {dimension_numbers = #tpu.dot_dimension_numbers<[1], [0], [0], [1], [0, 0, 1, 1], [], []>} : vector<32x384xbf16>, vector<384x128xbf16>, vector<32x128xf32> -> vector<32x128xf32>
    %c384 = arith.constant 384 : index
    %c0_13 = arith.constant 0 : index
    %27 = vector.load %arg3[%c384, %c0_13] : memref<768x128xbf16, #tpu.memory_space<vmem>>, vector<384x128xbf16>
    %cst_14 = arith.constant dense<0.000000e+00> : vector<32x128xf32>
    %28 = tpu.matmul %24, %27, %cst_14 {dimension_numbers = #tpu.dot_dimension_numbers<[1], [0], [0], [1], [0, 0, 1, 1], [], []>} : vector<32x384xbf16>, vector<384x128xbf16>, vector<32x128xf32> -> vector<32x128xf32>
    %c1_i32_15 = arith.constant 1 : i32
    %29 = tpu.dynamic_rotate %26 by %c1_i32_15 dim 0 : vector<32x128xf32>, i32 -> vector<32x128xf32>
    %30 = arith.addf %29, %28 : vector<32x128xf32>
    %c0_16 = arith.constant 0 : index
    %c0_17 = arith.constant 0 : index
    %31 = vector.load %arg4[%c0_16, %c0_17] : memref<1x128xf32, #tpu.memory_space<vmem>>, vector<1x128xf32>
    %32 = vector.broadcast %31 : vector<1x128xf32> to vector<32x128xf32>
    %33 = arith.addf %30, %32 : vector<32x128xf32>
    %cst_18 = arith.constant 0.000000e+00 : f32
    %34 = vector.broadcast %cst_18 : f32 to vector<32x128xf32>
    %35 = arith.maximumf %33, %34 : vector<32x128xf32>
    %c1_i32_19 = arith.constant 1 : i32
    %36 = vector.broadcast %c1_i32_19 : i32 to vector<32x1xi32>
    %37 = arith.cmpi sge, %2, %36 : vector<32x1xi32>
    %c10_i32 = arith.constant 10 : i32
    %38 = vector.broadcast %c10_i32 : i32 to vector<32x1xi32>
    %39 = arith.cmpi sle, %2, %38 : vector<32x1xi32>
    %40 = arith.andi %37, %39 : vector<32x1xi1>
    %cst_20 = arith.constant 0.000000e+00 : f32
    %41 = vector.shape_cast %40 : vector<32x1xi1> to vector<32x1xi1>
    %42 = vector.broadcast %41 : vector<32x1xi1> to vector<32x128xi1>
    %43 = vector.broadcast %cst_20 : f32 to vector<32x128xf32>
    %44 = arith.select %42, %35, %43 : vector<32x128xi1>, vector<32x128xf32>
    %45 = arith.truncf %44 : vector<32x128xf32> to vector<32x128xbf16>
    %c0_21 = arith.constant 0 : index
    %c0_22 = arith.constant 0 : index
    %46 = vector.load %arg5[%c0_21, %c0_22] : memref<256x64xbf16, #tpu.memory_space<vmem>>, vector<128x64xbf16>
    %cst_23 = arith.constant dense<0.000000e+00> : vector<32x64xf32>
    %47 = tpu.matmul %45, %46, %cst_23 {dimension_numbers = #tpu.dot_dimension_numbers<[1], [0], [0], [1], [0, 0, 1, 1], [], []>} : vector<32x128xbf16>, vector<128x64xbf16>, vector<32x64xf32> -> vector<32x64xf32>
    %c128 = arith.constant 128 : index
    %c0_24 = arith.constant 0 : index
    %48 = vector.load %arg5[%c128, %c0_24] : memref<256x64xbf16, #tpu.memory_space<vmem>>, vector<128x64xbf16>
    %cst_25 = arith.constant dense<0.000000e+00> : vector<32x64xf32>
    %49 = tpu.matmul %45, %48, %cst_25 {dimension_numbers = #tpu.dot_dimension_numbers<[1], [0], [0], [1], [0, 0, 1, 1], [], []>} : vector<32x128xbf16>, vector<128x64xbf16>, vector<32x64xf32> -> vector<32x64xf32>
    %c1_i32_26 = arith.constant 1 : i32
    %50 = tpu.dynamic_rotate %47 by %c1_i32_26 dim 0 : vector<32x64xf32>, i32 -> vector<32x64xf32>
    %51 = arith.addf %50, %49 : vector<32x64xf32>
    %c0_27 = arith.constant 0 : index
    %c0_28 = arith.constant 0 : index
    %52 = vector.load %arg6[%c0_27, %c0_28] : memref<1x64xf32, #tpu.memory_space<vmem>>, vector<1x64xf32>
    %53 = vector.broadcast %52 : vector<1x64xf32> to vector<32x64xf32>
    %54 = arith.addf %51, %53 : vector<32x64xf32>
    %cst_29 = arith.constant 0.000000e+00 : f32
    %55 = vector.broadcast %cst_29 : f32 to vector<32x64xf32>
    %56 = arith.maximumf %54, %55 : vector<32x64xf32>
    %57 = tpu.iota {dimensions = array<i32: 0>} : vector<2x32xi32>
    %58 = tpu.iota {dimensions = array<i32: 1>} : vector<2x32xi32>
    %c16_i32 = arith.constant 16 : i32
    %59 = vector.broadcast %c16_i32 : i32 to vector<2x32xi32>
    %60 = arith.muli %57, %59 : vector<2x32xi32>
    %61 = arith.subi %58, %60 : vector<2x32xi32>
    %c1_i32_30 = arith.constant 1 : i32
    %62 = vector.broadcast %c1_i32_30 : i32 to vector<2x32xi32>
    %63 = arith.cmpi sge, %61, %62 : vector<2x32xi32>
    %c11_i32 = arith.constant 11 : i32
    %64 = vector.broadcast %c11_i32 : i32 to vector<2x32xi32>
    %65 = arith.cmpi sle, %61, %64 : vector<2x32xi32>
    %66 = arith.andi %63, %65 : vector<2x32xi1>
    %cst_31 = arith.constant 0.0909090936 : f32
    %cst_32 = arith.constant 0.000000e+00 : f32
    %67 = vector.broadcast %cst_31 : f32 to vector<2x32xf32>
    %68 = vector.broadcast %cst_32 : f32 to vector<2x32xf32>
    %69 = arith.select %66, %67, %68 : vector<2x32xi1>, vector<2x32xf32>
    %cst_33 = arith.constant dense<0.000000e+00> : vector<2x64xf32>
    %70 = tpu.matmul %69, %56, %cst_33 {dimension_numbers = #tpu.dot_dimension_numbers<[1], [0], [0], [1], [0, 0, 1, 1], [], []>} : vector<2x32xf32>, vector<32x64xf32>, vector<2x64xf32> -> vector<2x64xf32>
    %71 = arith.truncf %70 : vector<2x64xf32> to vector<2x64xbf16>
    %c0_34 = arith.constant 0 : index
    %c0_35 = arith.constant 0 : index
    %72 = vector.load %arg7[%c0_34, %c0_35] : memref<64x2048xbf16, #tpu.memory_space<vmem>>, vector<64x2048xbf16>
    %cst_36 = arith.constant dense<0.000000e+00> : vector<2x2048xf32>
    %73 = tpu.matmul %71, %72, %cst_36 {dimension_numbers = #tpu.dot_dimension_numbers<[1], [0], [0], [1], [0, 0, 1, 1], [], []>} : vector<2x64xbf16>, vector<64x2048xbf16>, vector<2x2048xf32> -> vector<2x2048xf32>
    %c0_37 = arith.constant 0 : index
    %c0_38 = arith.constant 0 : index
    %74 = vector.load %arg8[%c0_37, %c0_38] : memref<1x2048xf32, #tpu.memory_space<vmem>>, vector<1x2048xf32>
    %75 = vector.broadcast %74 : vector<1x2048xf32> to vector<2x2048xf32>
    %76 = arith.addf %73, %75 : vector<2x2048xf32>
    %cst_39 = arith.constant 0.000000e+00 : f32
    %77 = vector.broadcast %cst_39 : f32 to vector<2x2048xf32>
    %78 = arith.maximumf %76, %77 : vector<2x2048xf32>
    tpu.wait_dma2 semaphore(%arg15 : memref<!tpu.dma_semaphore, #tpu.memory_space<semaphore_mem>>) src(%arg9 : memref<2048x1024xbf16, #tpu.memory_space<any>>) dst(%arg14 : memref<2048x1024xbf16, #tpu.memory_space<vmem>>)
    %79 = arith.truncf %78 : vector<2x2048xf32> to vector<2x2048xbf16>
    %c0_40 = arith.constant 0 : index
    %c0_41 = arith.constant 0 : index
    %80 = vector.load %arg14[%c0_40, %c0_41] : memref<2048x1024xbf16, #tpu.memory_space<vmem>>, vector<2048x1024xbf16>
    %cst_42 = arith.constant dense<0.000000e+00> : vector<2x1024xf32>
    %81 = tpu.matmul %79, %80, %cst_42 {dimension_numbers = #tpu.dot_dimension_numbers<[1], [0], [0], [1], [0, 0, 1, 1], [], []>} : vector<2x2048xbf16>, vector<2048x1024xbf16>, vector<2x1024xf32> -> vector<2x1024xf32>
    %c0_43 = arith.constant 0 : index
    %c0_44 = arith.constant 0 : index
    %82 = vector.load %arg10[%c0_43, %c0_44] : memref<1x1024xf32, #tpu.memory_space<vmem>>, vector<1x1024xf32>
    %83 = vector.broadcast %82 : vector<1x1024xf32> to vector<2x1024xf32>
    %84 = arith.addf %81, %83 : vector<2x1024xf32>
    %cst_45 = arith.constant 0.000000e+00 : f32
    %85 = vector.broadcast %cst_45 : f32 to vector<2x1024xf32>
    %86 = arith.maximumf %84, %85 : vector<2x1024xf32>
    %87 = arith.truncf %86 : vector<2x1024xf32> to vector<2x1024xbf16>
    %c0_46 = arith.constant 0 : index
    %c0_47 = arith.constant 0 : index
    %88 = vector.load %arg11[%c0_46, %c0_47] : memref<1024x1xbf16, #tpu.memory_space<vmem>>, vector<1024x1xbf16>
    %cst_48 = arith.constant dense<0.000000e+00> : vector<2x1xf32>
    %89 = tpu.matmul %87, %88, %cst_48 {dimension_numbers = #tpu.dot_dimension_numbers<[1], [0], [0], [1], [0, 0, 1, 1], [], []>} : vector<2x1024xbf16>, vector<1024x1xbf16>, vector<2x1xf32> -> vector<2x1xf32>
    %c0_49 = arith.constant 0 : index
    %c0_50 = arith.constant 0 : index
    %90 = vector.load %arg12[%c0_49, %c0_50] : memref<1x1xf32, #tpu.memory_space<vmem>>, vector<1x1xf32>
    %91 = vector.broadcast %90 : vector<1x1xf32> to vector<2x1xf32>
    %92 = arith.addf %89, %91 : vector<2x1xf32>
    %cst_51 = arith.constant -3.000000e+01 : f32
    %cst_52 = arith.constant 3.000000e+01 : f32
    %93 = vector.broadcast %cst_51 : f32 to vector<2x1xf32>
    %94 = arith.maximumf %93, %92 : vector<2x1xf32>
    %95 = vector.broadcast %cst_52 : f32 to vector<2x1xf32>
    %96 = arith.minimumf %95, %94 : vector<2x1xf32>
    %cst_53 = arith.constant 0.000000e+00 : f32
    %97 = vector.broadcast %cst_53 : f32 to vector<2x1xf32>
    %98 = arith.subf %97, %96 : vector<2x1xf32>
    %99 = math.exp %98 : vector<2x1xf32>
    %cst_54 = arith.constant 1.000000e+00 : f32
    %100 = vector.broadcast %cst_54 : f32 to vector<2x1xf32>
    %101 = arith.addf %100, %99 : vector<2x1xf32>
    %cst_55 = arith.constant 1.000000e+00 : f32
    %102 = vector.broadcast %cst_55 : f32 to vector<2x1xf32>
    %103 = arith.divf %102, %101 : vector<2x1xf32>
    %c0_56 = arith.constant 0 : index
    %c0_57 = arith.constant 0 : index
    %104 = vector.load %arg13[%c0_56, %c0_57] : memref<2x1xf32, #tpu.memory_space<vmem>>, vector<2x1xf32>
    tpu.vector_store %arg13[%c0_56, %c0_57], %103 {strides = array<i32>} : memref<2x1xf32, #tpu.memory_space<vmem>>, vector<2x1xf32>,
    return
  }
}

</mosaic_0001>

<llo_original>
// kernel: score_predictor.1
$region0: #{score_predictor.1}
  #allocation0 [shape = 'u32[]', space=smem, size = 0x4, offset = 0x4, fixed_abs, tag = 'smem constant byte address 0x4 - core index']
  #allocation1 [shape = 'u32[144,128]{1,0:T(1,128)}', space=vmem, size = 0x12000, scoped, tag = 'internal scratch']
  #allocation2 [shape = 'bf16[2048,1024]{1,0:T(16,128)(2,1)}', space=vmem, size = 0x400000, scoped, tag = 'scratch operand']
  #allocation3 [shape = 's32[1]{0}', space=sflag, size = 0x4, scoped, tag = 'scratch operand']
  #allocation4 [shape = 'f32[1,1]{1,0:T(1,128)S(1)}', space=vmem, size = 0x200, scoped, tag = 'scoped memory for score_predictor.1']
  #allocation18 [shape = 's32[]', space=sflag, size = 0x4, offset = 0, fixed_abs, tag = 'sflag constant byte address 0x0 - dummy sync flag']
  %s0 = inlined_call_operand.vmem [shape: bf16[32,768], index: 0, kind: input, shape index: {}]
  %s1 = inlined_call_operand.hbm [shape: bf16[1536,384], index: 1, kind: input, shape index: {}]
  %s2 = inlined_call_operand.hbm [shape: f32[1,384], index: 2, kind: input, shape index: {}]
  %s3 = inlined_call_operand.hbm [shape: bf16[768,128], index: 3, kind: input, shape index: {}]
  %s4 = inlined_call_operand.hbm [shape: f32[1,128], index: 4, kind: input, shape index: {}]
  %s5 = inlined_call_operand.vmem [shape: bf16[256,64], index: 5, kind: input, shape index: {}]
  %s6 = inlined_call_operand.hbm [shape: f32[1,64], index: 6, kind: input, shape index: {}]
  %s7 = inlined_call_operand.hbm [shape: bf16[64,2048], index: 7, kind: input, shape index: {}]
  %s8 = inlined_call_operand.hbm [shape: f32[1,2048], index: 8, kind: input, shape index: {}]
  %s9 = inlined_call_operand.hbm [shape: bf16[2048,1024], index: 9, kind: input, shape index: {}]
  %s10 = inlined_call_operand.hbm [shape: f32[1,1024], index: 10, kind: input, shape index: {}]
  %s11 = inlined_call_operand.vmem [shape: bf16[1024,1], index: 11, kind: input, shape index: {}]
  %s12 = inlined_call_operand.<no memory space> [shape: f32[1,1], index: 12, kind: input, shape index: {}]
  %s13 = inlined_call_operand.vmem [shape: f32[2,1], index: 13, kind: output, shape index: {}]
  %s14 = sld [smem:[#allocation0]]
  $region90: #{score_predictor.1} parent=0
    _
  %s16 = ssub.s32 1, %s14
  %s17 = scalar_select 0, %s16, %s14
  %v18 = vstv %s12
  %19 = vst [vmem:[#allocation4] sm:$0x1] %v18
  $region1: #{score_predictor.1} parent=0
    #allocation5 [shape = 'u8[1179648]{0}', space=vmem, size = 0x120000, scoped, tag = 'input window, operand 1, single buffered']
    #allocation6 [shape = 's32[1]{0}', space=sflag, size = 0x4, scoped, tag = 'scoped memory for score_predictor.1']
    #allocation7 [shape = 'u8[1536]{0}', space=vmem, size = 0x800, scoped, tag = 'input window, operand 2, single buffered']
    #allocation8 [shape = 's32[1]{0}', space=sflag, size = 0x4, scoped, tag = 'scoped memory for score_predictor.1']
    #allocation9 [shape = 'u8[196608]{0}', space=vmem, size = 0x30000, scoped, tag = 'input window, operand 3, single buffered']
    #allocation10 [shape = 'u8[512]{0}', space=vmem, size = 0x400, scoped, tag = 'input window, operand 4, single buffered']
    #allocation11 [shape = 's32[1]{0}', space=sflag, size = 0x4, scoped, tag = 'scoped memory for score_predictor.1']
    #allocation12 [shape = 'u8[512]{0}', space=vmem, size = 0x400, scoped, tag = 'input window, operand 6, single buffered']
    #allocation13 [shape = 'u8[262144]{0}', space=vmem, size = 0x40000, scoped, tag = 'input window, operand 7, single buffered']
    #allocation14 [shape = 's32[1]{0}', space=sflag, size = 0x4, scoped, tag = 'scoped memory for score_predictor.1']
    #allocation15 [shape = 'u8[8192]{0}', space=vmem, size = 0x2000, scoped, tag = 'input window, operand 8, single buffered']
    #allocation16 [shape = 'u8[4096]{0}', space=vmem, size = 0x1000, scoped, tag = 'input window, operand 10, single buffered']
    #allocation17 [shape = 's32[1]{0}', space=sflag, size = 0x4, scoped, tag = 'scoped memory for score_predictor.1']
    #allocation19 [shape = 'u32[9]{0}', space=smem, size = 0x24, scoped, tag = 'DMA stride descriptor']
    %20 = vsyncpa [#allocation6], 0
    %21 = vsyncpa [#allocation8], 0
    %22 = vsyncpa [#allocation11], 0
    %23 = vsyncpa [#allocation14], 0
    %24 = vsyncpa [#allocation17], 0
    // Predicated region
    $region2: #{score_predictor.1} parent=1 // pred_check
      _
    $region3: #{score_predictor.1} parent=1 // pred_check_branch
      %26 = sbr.rel (0) target = $region5
    $region4: #{score_predictor.1} parent=1 // pred_region
      _
    $region5: #{score_predictor.1} parent=1 // pred_fallthru
      _
    // Predicated region
    $region6: #{score_predictor.1} parent=1 // pred_check
      _
    $region7: #{score_predictor.1} parent=1 // pred_check_branch
      %28 = sbr.rel (0) target = $region9
    $region8: #{score_predictor.1} parent=1 // pred_region
      %s30 = ssub.s32 36864, 36864
      %31 = vsyncadd [#allocation6], %s30
      %s32 = sshll.u32 [#allocation5], 4
      %s33 = int_to_ptr.vmem [resolvable:$true] %s32
      %38 = dma.hbm_to_vmem [thread:$0]  %s1, 36864, %s33, [#allocation6], 192, 192, 12
    $region9: #{score_predictor.1} parent=1 // pred_fallthru
      _
    // Predicated region
    $region10: #{score_predictor.1} parent=1 // pred_check
      _
    $region11: #{score_predictor.1} parent=1 // pred_check_branch
      %40 = sbr.rel (0) target = $region13
    $region12: #{score_predictor.1} parent=1 // pred_region
      %s42 = ssub.s32 48, 48
      %43 = vsyncadd [#allocation8], %s42
      %s45 = sshll.u32 [#allocation7], 4
      %s46 = int_to_ptr.vmem [resolvable:$true] %s45
      %48 = dma.hbm_to_vmem [thread:$0]  %s2, 48, %s46, [#allocation8]
    $region13: #{score_predictor.1} parent=1 // pred_fallthru
      _
    // Predicated region
    $region14: #{score_predictor.1} parent=1 // pred_check
      _
    $region15: #{score_predictor.1} parent=1 // pred_check_branch
      %50 = sbr.rel (0) target = $region17
    $region16: #{score_predictor.1} parent=1 // pred_region
      %s52 = ssub.s32 6144, 6144
      %53 = vsyncadd [#allocation8], %s52
      %s54 = sshll.u32 [#allocation9], 4
      %s55 = int_to_ptr.vmem [resolvable:$true] %s54
      %60 = dma.hbm_to_vmem [thread:$0]  %s3, 6144, %s55, [#allocation8], 64, 64, 4
    $region17: #{score_predictor.1} parent=1 // pred_fallthru
      _
    // Predicated region
    $region18: #{score_predictor.1} parent=1 // pred_check
      _
    $region19: #{score_predictor.1} parent=1 // pred_check_branch
      %62 = sbr.rel (0) target = $region21
    $region20: #{score_predictor.1} parent=1 // pred_region
      %s64 = ssub.s32 16, 16
      %65 = vsyncadd [#allocation11], %s64
      %s67 = sshll.u32 [#allocation10], 4
      %s68 = int_to_ptr.vmem [resolvable:$true] %s67
      %70 = dma.hbm_to_vmem [thread:$0]  %s4, 16, %s68, [#allocation11]
    $region21: #{score_predictor.1} parent=1 // pred_fallthru
      _
    // Predicated region
    $region22: #{score_predictor.1} parent=1 // pred_check
      _
    $region23: #{score_predictor.1} parent=1 // pred_check_branch
      %72 = sbr.rel (0) target = $region25
    $region24: #{score_predictor.1} parent=1 // pred_region
      _
    $region25: #{score_predictor.1} parent=1 // pred_fallthru
      _
    // Predicated region
    $region26: #{score_predictor.1} parent=1 // pred_check
      _
    $region27: #{score_predictor.1} parent=1 // pred_check_branch
      %74 = sbr.rel (0) target = $region29
    $region28: #{score_predictor.1} parent=1 // pred_region
      %s76 = ssub.s32 16, 16
      %77 = vsyncadd [#allocation11], %s76
      %s79 = sshll.u32 [#allocation12], 4
      %s80 = int_to_ptr.vmem [resolvable:$true] %s79
      %82 = dma.hbm_to_vmem [thread:$0]  %s6, 16, %s80, [#allocation11]
    $region29: #{score_predictor.1} parent=1 // pred_fallthru
      _
    // Predicated region
    $region30: #{score_predictor.1} parent=1 // pred_check
      _
    $region31: #{score_predictor.1} parent=1 // pred_check_branch
      %84 = sbr.rel (0) target = $region33
    $region32: #{score_predictor.1} parent=1 // pred_region
      %s86 = ssub.s32 8192, 8192
      %87 = vsyncadd [#allocation14], %s86
      %s88 = sshll.u32 [#allocation13], 4
      %s89 = int_to_ptr.vmem [resolvable:$true] %s88
      %94 = dma.hbm_to_vmem [thread:$0]  %s7, 8192, %s89, [#allocation14], 1024, 1024, 64
    $region33: #{score_predictor.1} parent=1 // pred_fallthru
      _
    // Predicated region
    $region34: #{score_predictor.1} parent=1 // pred_check
      _
    $region35: #{score_predictor.1} parent=1 // pred_check_branch
      %96 = sbr.rel (0) target = $region37
    $region36: #{score_predictor.1} parent=1 // pred_region
      %s98 = ssub.s32 256, 256
      %99 = vsyncadd [#allocation14], %s98
      %s101 = sshll.u32 [#allocation15], 4
      %s102 = int_to_ptr.vmem [resolvable:$true] %s101
      %104 = dma.hbm_to_vmem [thread:$0]  %s8, 256, %s102, [#allocation14]
    $region37: #{score_predictor.1} parent=1 // pred_fallthru
      _
    // Predicated region
    $region38: #{score_predictor.1} parent=1 // pred_check
      _
    $region39: #{score_predictor.1} parent=1 // pred_check_branch
      %106 = sbr.rel (0) target = $region41
    $region40: #{score_predictor.1} parent=1 // pred_region
      %s108 = ssub.s32 128, 128
      %109 = vsyncadd [#allocation17], %s108
      %s111 = sshll.u32 [#allocation16], 4
      %s112 = int_to_ptr.vmem [resolvable:$true] %s111
      %114 = dma.hbm_to_vmem [thread:$0]  %s10, 128, %s112, [#allocation17]
    $region41: #{score_predictor.1} parent=1 // pred_fallthru
      _
    // Predicated region
    $region42: #{score_predictor.1} parent=1 // pred_check
      _
    $region43: #{score_predictor.1} parent=1 // pred_check_branch
      %116 = sbr.rel (0) target = $region45
    $region44: #{score_predictor.1} parent=1 // pred_region
      _
    $region45: #{score_predictor.1} parent=1 // pred_fallthru
      _
    // Predicated region
    $region46: #{score_predictor.1} parent=1 // pred_check
      _
    $region47: #{score_predictor.1} parent=1 // pred_check_branch
      %118 = sbr.rel (0) target = $region49
    $region48: #{score_predictor.1} parent=1 // pred_region
      _
    $region49: #{score_predictor.1} parent=1 // pred_fallthru
      _
    // Predicated region
    $region50: #{score_predictor.1} parent=1 // pred_check
      _
    $region51: #{score_predictor.1} parent=1 // pred_check_branch
      %120 = sbr.rel (0) target = $region53
    $region52: #{score_predictor.1} parent=1 // pred_region
      %121 = dma.done [#allocation6], 36864
    $region53: #{score_predictor.1} parent=1 // pred_fallthru
      _
    // Predicated region
    $region54: #{score_predictor.1} parent=1 // pred_check
      _
    $region55: #{score_predictor.1} parent=1 // pred_check_branch
      %123 = sbr.rel (0) target = $region57
    $region56: #{score_predictor.1} parent=1 // pred_region
      %124 = dma.done [#allocation8], 48
    $region57: #{score_predictor.1} parent=1 // pred_fallthru
      _
    // Predicated region
    $region58: #{score_predictor.1} parent=1 // pred_check
      _
    $region59: #{score_predictor.1} parent=1 // pred_check_branch
      %126 = sbr.rel (0) target = $region61
    $region60: #{score_predictor.1} parent=1 // pred_region
      %127 = dma.done [#allocation8], 6144
    $region61: #{score_predictor.1} parent=1 // pred_fallthru
      _
    // Predicated region
    $region62: #{score_predictor.1} parent=1 // pred_check
      _
    $region63: #{score_predictor.1} parent=1 // pred_check_branch
      %129 = sbr.rel (0) target = $region65
    $region64: #{score_predictor.1} parent=1 // pred_region
      %130 = dma.done [#allocation11], 16
    $region65: #{score_predictor.1} parent=1 // pred_fallthru
      _
    // Predicated region
    $region66: #{score_predictor.1} parent=1 // pred_check
      _
    $region67: #{score_predictor.1} parent=1 // pred_check_branch
      %132 = sbr.rel (0) target = $region69
    $region68: #{score_predictor.1} parent=1 // pred_region
      %133 = dma.done [#allocation11], 16
    $region69: #{score_predictor.1} parent=1 // pred_fallthru
      _
    // Predicated region
    $region70: #{score_predictor.1} parent=1 // pred_check
      _
    $region71: #{score_predictor.1} parent=1 // pred_check_branch
      %135 = sbr.rel (0) target = $region73
    $region72: #{score_predictor.1} parent=1 // pred_region
      %136 = dma.done [#allocation14], 8192
    $region73: #{score_predictor.1} parent=1 // pred_fallthru
      _
    // Predicated region
    $region74: #{score_predictor.1} parent=1 // pred_check
      _
    $region75: #{score_predictor.1} parent=1 // pred_check_branch
      %138 = sbr.rel (0) target = $region77
    $region76: #{score_predictor.1} parent=1 // pred_region
      %139 = dma.done [#allocation14], 256
    $region77: #{score_predictor.1} parent=1 // pred_fallthru
      _
    // Predicated region
    $region78: #{score_predictor.1} parent=1 // pred_check
      _
    $region79: #{score_predictor.1} parent=1 // pred_check_branch
      %141 = sbr.rel (0) target = $region81
    $region80: #{score_predictor.1} parent=1 // pred_region
      %142 = dma.done [#allocation17], 128
    $region81: #{score_predictor.1} parent=1 // pred_fallthru
      _
    %s145 = sshll.u32 1, 14
    %s146 = sxor.u32 4294967295, %s145
    %s148 = sld [smem:[#allocation0]]
    %s149 = sadd.s32 2, %s148
    %s151 = sshll.u32 7, 26
    %s152 = sxor.u32 4294967295, %s151
    %s153 = sand.u32 0, %s152
    %s154 = sshll.u32 %s149, 26
    %s155 = sor.u32 %s153, %s154
    %s156 = sshll.u32 [#allocation2], 4
    %s157 = int_to_ptr.vmem [resolvable:$true] %s156
    %160 = sst [smem:[#allocation19]] 1024
    %s161 = scalar_lea.smem [#allocation19], 1
    %162 = sst [smem:[%s161]] 1024
    %s163 = scalar_lea.smem [#allocation19], 2
    %164 = sst [smem:[%s163]] 8
    %s165 = scalar_lea.smem [#allocation19], 3
    %166 = sst [smem:[%s165]] 64
    %s167 = scalar_lea.smem [#allocation19], 4
    %168 = sst [smem:[%s167]] 128
    %s169 = scalar_lea.smem [#allocation19], 5
    %170 = sst [smem:[%s169]] 2
    %s171 = scalar_lea.smem [#allocation19], 6
    %172 = sst [smem:[%s171]] 512
    %s173 = scalar_lea.smem [#allocation19], 7
    %174 = sst [smem:[%s173]] 64
    %s175 = scalar_lea.smem [#allocation19], 8
    %176 = sst [smem:[%s175]] 4
    %178 = dma.general %s9, 131072, %s157, [#allocation3], [#allocation18], [#allocation19], %s155, 0
    %v179 = vlaneseq
    %v180 = vshrl.u32 %v179, 7
    %v181 = vadd.s32 %v180, 8
    %v182 = vadd.s32 %v180, 16
    %v183 = vadd.s32 %v180, 24
    %v184 = vand.u32 %v180, 15
    %v185 = vand.u32 %v181, 15
    %v186 = vand.u32 %v182, 15
    %v187 = vand.u32 %v183, 15
    %v188 = vld [vmem:[%s0] sm:$0xff]
    %v189 = vld [vmem:[%s0 + $0x8] sm:$0xff]
    %v190 = vld [vmem:[%s0 + $0x10] sm:$0xff]
    %v191 = vld [vmem:[%s0 + $0x18] sm:$0xff]
    %v192 = vld [vmem:[%s0 + $0x20] sm:$0xff]
    %v193 = vld [vmem:[%s0 + $0x28] sm:$0xff]
    %v194 = vld [vmem:[%s0 + $0x30] sm:$0xff]
    %v195 = vld [vmem:[%s0 + $0x38] sm:$0xff]
    %v196 = vld [vmem:[%s0 + $0x40] sm:$0xff]
    %v197 = vld [vmem:[%s0 + $0x48] sm:$0xff]
    %v198 = vld [vmem:[%s0 + $0x50] sm:$0xff]
    %v199 = vld [vmem:[%s0 + $0x58] sm:$0xff]
    %v200 = vld [vmem:[#allocation5] sm:$0xff]
    %v201 = vld [vmem:[#allocation5 + $0x8] sm:$0xf]
    %v202 = vld [vmem:[#allocation5 + $0xc] sm:$0xff]
    %v203 = vld [vmem:[#allocation5 + $0x14] sm:$0xf]
    %v204 = vld [vmem:[#allocation5 + $0x18] sm:$0xff]
    %v205 = vld [vmem:[#allocation5 + $0x20] sm:$0xf]
    %v206 = vld [vmem:[#allocation5 + $0x24] sm:$0xff]
    %v207 = vld [vmem:[#allocation5 + $0x2c] sm:$0xf]
    %v208 = vld [vmem:[#allocation5 + $0x30] sm:$0xff]
    %v209 = vld [vmem:[#allocation5 + $0x38] sm:$0xf]
    %v210 = vld [vmem:[#allocation5 + $0x3c] sm:$0xff]
    %v211 = vld [vmem:[#allocation5 + $0x44] sm:$0xf]
    %v212 = vld [vmem:[#allocation5 + $0x48] sm:$0xff]
    %v213 = vld [vmem:[#allocation5 + $0x50] sm:$0xf]
    %v214 = vld [vmem:[#allocation5 + $0x54] sm:$0xff]
    %v215 = vld [vmem:[#allocation5 + $0x5c] sm:$0xf]
    %v216 = vld [vmem:[#allocation5 + $0x60] sm:$0xff]
    %v217 = vld [vmem:[#allocation5 + $0x68] sm:$0xf]
    %v218 = vld [vmem:[#allocation5 + $0x6c] sm:$0xff]
    %v219 = vld [vmem:[#allocation5 + $0x74] sm:$0xf]
    %v220 = vld [vmem:[#allocation5 + $0x78] sm:$0xff]
    %v221 = vld [vmem:[#allocation5 + $0x80] sm:$0xf]
    %v222 = vld [vmem:[#allocation5 + $0x84] sm:$0xff]
    %v223 = vld [vmem:[#allocation5 + $0x8c] sm:$0xf]
    %v224 = vld [vmem:[#allocation5 + $0x90] sm:$0xff]
    %v225 = vld [vmem:[#allocation5 + $0x98] sm:$0xf]
    %v226 = vld [vmem:[#allocation5 + $0x9c] sm:$0xff]
    %v227 = vld [vmem:[#allocation5 + $0xa4] sm:$0xf]
    %v228 = vld [vmem:[#allocation5 + $0xa8] sm:$0xff]
    %v229 = vld [vmem:[#allocation5 + $0xb0] sm:$0xf]
    %v230 = vld [vmem:[#allocation5 + $0xb4] sm:$0xff]
    %v231 = vld [vmem:[#allocation5 + $0xbc] sm:$0xf]
    %v232 = vld [vmem:[#allocation5 + $0xc0] sm:$0xff]
    %v233 = vld [vmem:[#allocation5 + $0xc8] sm:$0xf]
    %v234 = vld [vmem:[#allocation5 + $0xcc] sm:$0xff]
    %v235 = vld [vmem:[#allocation5 + $0xd4] sm:$0xf]
    %v236 = vld [vmem:[#allocation5 + $0xd8] sm:$0xff]
    %v237 = vld [vmem:[#allocation5 + $0xe0] sm:$0xf]
    %v238 = vld [vmem:[#allocation5 + $0xe4] sm:$0xff]
    %v239 = vld [vmem:[#allocation5 + $0xec] sm:$0xf]
    %v240 = vld [vmem:[#allocation5 + $0xf0] sm:$0xff]
    %v241 = vld [vmem:[#allocation5 + $0xf8] sm:$0xf]
    %v242 = vld [vmem:[#allocation5 + $0xfc] sm:$0xff]
    %v243 = vld [vmem:[#allocation5 + $0x104] sm:$0xf]
    %v244 = vld [vmem:[#allocation5 + $0x108] sm:$0xff]
    %v245 = vld [vmem:[#allocation5 + $0x110] sm:$0xf]
    %v246 = vld [vmem:[#allocation5 + $0x114] sm:$0xff]
    %v247 = vld [vmem:[#allocation5 + $0x11c] sm:$0xf]
    %v248 = vld [vmem:[#allocation5 + $0x120] sm:$0xff]
    %v249 = vld [vmem:[#allocation5 + $0x128] sm:$0xf]
    %v250 = vld [vmem:[#allocation5 + $0x12c] sm:$0xff]
    %v251 = vld [vmem:[#allocation5 + $0x134] sm:$0xf]
    %v252 = vld [vmem:[#allocation5 + $0x138] sm:$0xff]
    %v253 = vld [vmem:[#allocation5 + $0x140] sm:$0xf]
    %v254 = vld [vmem:[#allocation5 + $0x144] sm:$0xff]
    %v255 = vld [vmem:[#allocation5 + $0x14c] sm:$0xf]
    %v256 = vld [vmem:[#allocation5 + $0x150] sm:$0xff]
    %v257 = vld [vmem:[#allocation5 + $0x158] sm:$0xf]
    %v258 = vld [vmem:[#allocation5 + $0x15c] sm:$0xff]
    %v259 = vld [vmem:[#allocation5 + $0x164] sm:$0xf]
    %v260 = vld [vmem:[#allocation5 + $0x168] sm:$0xff]
    %v261 = vld [vmem:[#allocation5 + $0x170] sm:$0xf]
    %v262 = vld [vmem:[#allocation5 + $0x174] sm:$0xff]
    %v263 = vld [vmem:[#allocation5 + $0x17c] sm:$0xf]
    %v264 = vld [vmem:[#allocation5 + $0x180] sm:$0xff]
    %v265 = vld [vmem:[#allocation5 + $0x188] sm:$0xf]
    %v266 = vld [vmem:[#allocation5 + $0x18c] sm:$0xff]
    %v267 = vld [vmem:[#allocation5 + $0x194] sm:$0xf]
    %v268 = vld [vmem:[#allocation5 + $0x198] sm:$0xff]
    %v269 = vld [vmem:[#allocation5 + $0x1a0] sm:$0xf]
    %v270 = vld [vmem:[#allocation5 + $0x1a4] sm:$0xff]
    %v271 = vld [vmem:[#allocation5 + $0x1ac] sm:$0xf]
    %v272 = vld [vmem:[#allocation5 + $0x1b0] sm:$0xff]
    %v273 = vld [vmem:[#allocation5 + $0x1b8] sm:$0xf]
    %v274 = vld [vmem:[#allocation5 + $0x1bc] sm:$0xff]
    %v275 = vld [vmem:[#allocation5 + $0x1c4] sm:$0xf]
    %v276 = vld [vmem:[#allocation5 + $0x1c8] sm:$0xff]
    %v277 = vld [vmem:[#allocation5 + $0x1d0] sm:$0xf]
    %v278 = vld [vmem:[#allocation5 + $0x1d4] sm:$0xff]
    %v279 = vld [vmem:[#allocation5 + $0x1dc] sm:$0xf]
    %v280 = vld [vmem:[#allocation5 + $0x1e0] sm:$0xff]
    %v281 = vld [vmem:[#allocation5 + $0x1e8] sm:$0xf]
    %v282 = vld [vmem:[#allocation5 + $0x1ec] sm:$0xff]
    %v283 = vld [vmem:[#allocation5 + $0x1f4] sm:$0xf]
    %v284 = vld [vmem:[#allocation5 + $0x1f8] sm:$0xff]
    %v285 = vld [vmem:[#allocation5 + $0x200] sm:$0xf]
    %v286 = vld [vmem:[#allocation5 + $0x204] sm:$0xff]
    %v287 = vld [vmem:[#allocation5 + $0x20c] sm:$0xf]
    %v288 = vld [vmem:[#allocation5 + $0x210] sm:$0xff]
    %v289 = vld [vmem:[#allocation5 + $0x218] sm:$0xf]
    %v290 = vld [vmem:[#allocation5 + $0x21c] sm:$0xff]
    %v291 = vld [vmem:[#allocation5 + $0x224] sm:$0xf]
    %v292 = vld [vmem:[#allocation5 + $0x228] sm:$0xff]
    %v293 = vld [vmem:[#allocation5 + $0x230] sm:$0xf]
    %v294 = vld [vmem:[#allocation5 + $0x234] sm:$0xff]
    %v295 = vld [vmem:[#allocation5 + $0x23c] sm:$0xf]
    %v296 = vld [vmem:[#allocation5 + $0x240] sm:$0xff]
    %v297 = vld [vmem:[#allocation5 + $0x248] sm:$0xf]
    %v298 = vld [vmem:[#allocation5 + $0x24c] sm:$0xff]
    %v299 = vld [vmem:[#allocation5 + $0x254] sm:$0xf]
    %v300 = vld [vmem:[#allocation5 + $0x258] sm:$0xff]
    %v301 = vld [vmem:[#allocation5 + $0x260] sm:$0xf]
    %v302 = vld [vmem:[#allocation5 + $0x264] sm:$0xff]
    %v303 = vld [vmem:[#allocation5 + $0x26c] sm:$0xf]
    %v304 = vld [vmem:[#allocation5 + $0x270] sm:$0xff]
    %v305 = vld [vmem:[#allocation5 + $0x278] sm:$0xf]
    %v306 = vld [vmem:[#allocation5 + $0x27c] sm:$0xff]
    %v307 = vld [vmem:[#allocation5 + $0x284] sm:$0xf]
    %v308 = vld [vmem:[#allocation5 + $0x288] sm:$0xff]
    %v309 = vld [vmem:[#allocation5 + $0x290] sm:$0xf]
    %v310 = vld [vmem:[#allocation5 + $0x294] sm:$0xff]
    %v311 = vld [vmem:[#allocation5 + $0x29c] sm:$0xf]
    %v312 = vld [vmem:[#allocation5 + $0x2a0] sm:$0xff]
    %v313 = vld [vmem:[#allocation5 + $0x2a8] sm:$0xf]
    %v314 = vld [vmem:[#allocation5 + $0x2ac] sm:$0xff]
    %v315 = vld [vmem:[#allocation5 + $0x2b4] sm:$0xf]
    %v316 = vld [vmem:[#allocation5 + $0x2b8] sm:$0xff]
    %v317 = vld [vmem:[#allocation5 + $0x2c0] sm:$0xf]
    %v318 = vld [vmem:[#allocation5 + $0x2c4] sm:$0xff]
    %v319 = vld [vmem:[#allocation5 + $0x2cc] sm:$0xf]
    %v320 = vld [vmem:[#allocation5 + $0x2d0] sm:$0xff]
    %v321 = vld [vmem:[#allocation5 + $0x2d8] sm:$0xf]
    %v322 = vld [vmem:[#allocation5 + $0x2dc] sm:$0xff]
    %v323 = vld [vmem:[#allocation5 + $0x2e4] sm:$0xf]
    %v324 = vld [vmem:[#allocation5 + $0x2e8] sm:$0xff]
    %v325 = vld [vmem:[#allocation5 + $0x2f0] sm:$0xf]
    %v326 = vld [vmem:[#allocation5 + $0x2f4] sm:$0xff]
    %v327 = vld [vmem:[#allocation5 + $0x2fc] sm:$0xf]
    %v328 = vld [vmem:[#allocation5 + $0x300] sm:$0xff]
    %v329 = vld [vmem:[#allocation5 + $0x308] sm:$0xf]
    %v330 = vld [vmem:[#allocation5 + $0x30c] sm:$0xff]
    %v331 = vld [vmem:[#allocation5 + $0x314] sm:$0xf]
    %v332 = vld [vmem:[#allocation5 + $0x318] sm:$0xff]
    %v333 = vld [vmem:[#allocation5 + $0x320] sm:$0xf]
    %v334 = vld [vmem:[#allocation5 + $0x324] sm:$0xff]
    %v335 = vld [vmem:[#allocation5 + $0x32c] sm:$0xf]
    %v336 = vld [vmem:[#allocation5 + $0x330] sm:$0xff]
    %v337 = vld [vmem:[#allocation5 + $0x338] sm:$0xf]
    %v338 = vld [vmem:[#allocation5 + $0x33c] sm:$0xff]
    %v339 = vld [vmem:[#allocation5 + $0x344] sm:$0xf]
    %v340 = vld [vmem:[#allocation5 + $0x348] sm:$0xff]
    %v341 = vld [vmem:[#allocation5 + $0x350] sm:$0xf]
    %v342 = vld [vmem:[#allocation5 + $0x354] sm:$0xff]
    %v343 = vld [vmem:[#allocation5 + $0x35c] sm:$0xf]
    %v344 = vld [vmem:[#allocation5 + $0x360] sm:$0xff]
    %v345 = vld [vmem:[#allocation5 + $0x368] sm:$0xf]
    %v346 = vld [vmem:[#allocation5 + $0x36c] sm:$0xff]
    %v347 = vld [vmem:[#allocation5 + $0x374] sm:$0xf]
    %v348 = vld [vmem:[#allocation5 + $0x378] sm:$0xff]
    %v349 = vld [vmem:[#allocation5 + $0x380] sm:$0xf]
    %v350 = vld [vmem:[#allocation5 + $0x384] sm:$0xff]
    %v351 = vld [vmem:[#allocation5 + $0x38c] sm:$0xf]
    %v352 = vld [vmem:[#allocation5 + $0x390] sm:$0xff]
    %v353 = vld [vmem:[#allocation5 + $0x398] sm:$0xf]
    %v354 = vld [vmem:[#allocation5 + $0x39c] sm:$0xff]
    %v355 = vld [vmem:[#allocation5 + $0x3a4] sm:$0xf]
    %v356 = vld [vmem:[#allocation5 + $0x3a8] sm:$0xff]
    %v357 = vld [vmem:[#allocation5 + $0x3b0] sm:$0xf]
    %v358 = vld [vmem:[#allocation5 + $0x3b4] sm:$0xff]
    %v359 = vld [vmem:[#allocation5 + $0x3bc] sm:$0xf]
    %v360 = vld [vmem:[#allocation5 + $0x3c0] sm:$0xff]
    %v361 = vld [vmem:[#allocation5 + $0x3c8] sm:$0xf]
    %v362 = vld [vmem:[#allocation5 + $0x3cc] sm:$0xff]
    %v363 = vld [vmem:[#allocation5 + $0x3d4] sm:$0xf]
    %v364 = vld [vmem:[#allocation5 + $0x3d8] sm:$0xff]
    %v365 = vld [vmem:[#allocation5 + $0x3e0] sm:$0xf]
    %v366 = vld [vmem:[#allocation5 + $0x3e4] sm:$0xff]
    %v367 = vld [vmem:[#allocation5 + $0x3ec] sm:$0xf]
    %v368 = vld [vmem:[#allocation5 + $0x3f0] sm:$0xff]
    %v369 = vld [vmem:[#allocation5 + $0x3f8] sm:$0xf]
    %v370 = vld [vmem:[#allocation5 + $0x3fc] sm:$0xff]
    %v371 = vld [vmem:[#allocation5 + $0x404] sm:$0xf]
    %v372 = vld [vmem:[#allocation5 + $0x408] sm:$0xff]
    %v373 = vld [vmem:[#allocation5 + $0x410] sm:$0xf]
    %v374 = vld [vmem:[#allocation5 + $0x414] sm:$0xff]
    %v375 = vld [vmem:[#allocation5 + $0x41c] sm:$0xf]
    %v376 = vld [vmem:[#allocation5 + $0x420] sm:$0xff]
    %v377 = vld [vmem:[#allocation5 + $0x428] sm:$0xf]
    %v378 = vld [vmem:[#allocation5 + $0x42c] sm:$0xff]
    %v379 = vld [vmem:[#allocation5 + $0x434] sm:$0xf]
    %v380 = vld [vmem:[#allocation5 + $0x438] sm:$0xff]
    %v381 = vld [vmem:[#allocation5 + $0x440] sm:$0xf]
    %v382 = vld [vmem:[#allocation5 + $0x444] sm:$0xff]
    %v383 = vld [vmem:[#allocation5 + $0x44c] sm:$0xf]
    %v384 = vld [vmem:[#allocation5 + $0x450] sm:$0xff]
    %v385 = vld [vmem:[#allocation5 + $0x458] sm:$0xf]
    %v386 = vld [vmem:[#allocation5 + $0x45c] sm:$0xff]
    %v387 = vld [vmem:[#allocation5 + $0x464] sm:$0xf]
    %v388 = vld [vmem:[#allocation5 + $0x468] sm:$0xff]
    %v389 = vld [vmem:[#allocation5 + $0x470] sm:$0xf]
    %v390 = vld [vmem:[#allocation5 + $0x474] sm:$0xff]
    %v391 = vld [vmem:[#allocation5 + $0x47c] sm:$0xf]
    %v404 = vunpack.c.l.b16 %v188
    %v405 = vunpack.c.h.b16 %v188
    %v406 = vunpack.c.l.b16 %v189
    %v407 = vunpack.c.h.b16 %v189
    %v408 = vunpack.c.l.b16 %v190
    %v409 = vunpack.c.h.b16 %v190
    %v410 = vunpack.c.l.b16 %v191
    %v411 = vunpack.c.h.b16 %v191
    %v412 = vunpack.c.l.b16 %v192
    %v413 = vunpack.c.h.b16 %v192
    %v414 = vunpack.c.l.b16 %v193
    %v415 = vunpack.c.h.b16 %v193
    %v416 = vunpack.c.l.b16 %v194
    %v417 = vunpack.c.h.b16 %v194
    %v418 = vunpack.c.l.b16 %v195
    %v419 = vunpack.c.h.b16 %v195
    %v420 = vunpack.c.l.b16 %v196
    %v421 = vunpack.c.h.b16 %v196
    %v422 = vunpack.c.l.b16 %v197
    %v423 = vunpack.c.h.b16 %v197
    %v424 = vunpack.c.l.b16 %v198
    %v425 = vunpack.c.h.b16 %v198
    %v426 = vunpack.c.l.b16 %v199
    %v427 = vunpack.c.h.b16 %v199
    %v428 = vpack.c.b16 %v410, %v404
    %v429 = vpack.c.b16 %v411, %v405
    %v430 = vpack.c.b16 %v412, %v406
    %v431 = vpack.c.b16 %v413, %v407
    %v432 = vpack.c.b16 %v414, %v408
    %v433 = vpack.c.b16 %v415, %v409
    %v434 = vpack.c.b16 %v422, %v416
    %v435 = vpack.c.b16 %v423, %v417
    %v436 = vpack.c.b16 %v424, %v418
    %v437 = vpack.c.b16 %v425, %v419
    %v438 = vpack.c.b16 %v426, %v420
    %v439 = vpack.c.b16 %v427, %v421
    %v644 = vunpack.c.l.b16 %v200
    %v645 = vunpack.c.h.b16 %v200
    %v646 = vunpack.c.l.b16 %v201
    %v647 = vunpack.c.l.b16 %v202
    %v648 = vunpack.c.h.b16 %v202
    %v649 = vunpack.c.l.b16 %v203
    %v650 = vunpack.c.l.b16 %v204
    %v651 = vunpack.c.h.b16 %v204
    %v652 = vunpack.c.l.b16 %v205
    %v653 = vunpack.c.l.b16 %v206
    %v654 = vunpack.c.h.b16 %v206
    %v655 = vunpack.c.l.b16 %v207
    %v656 = vunpack.c.l.b16 %v208
    %v657 = vunpack.c.h.b16 %v208
    %v658 = vunpack.c.l.b16 %v209
    %v659 = vunpack.c.l.b16 %v210
    %v660 = vunpack.c.h.b16 %v210
    %v661 = vunpack.c.l.b16 %v211
    %v662 = vunpack.c.l.b16 %v212
    %v663 = vunpack.c.h.b16 %v212
    %v664 = vunpack.c.l.b16 %v213
    %v665 = vunpack.c.l.b16 %v214
    %v666 = vunpack.c.h.b16 %v214
    %v667 = vunpack.c.l.b16 %v215
    %v668 = vunpack.c.l.b16 %v216
    %v669 = vunpack.c.h.b16 %v216
    %v670 = vunpack.c.l.b16 %v217
    %v671 = vunpack.c.l.b16 %v218
    %v672 = vunpack.c.h.b16 %v218
    %v673 = vunpack.c.l.b16 %v219
    %v674 = vunpack.c.l.b16 %v220
    %v675 = vunpack.c.h.b16 %v220
    %v676 = vunpack.c.l.b16 %v221
    %v677 = vunpack.c.l.b16 %v222
    %v678 = vunpack.c.h.b16 %v222
    %v679 = vunpack.c.l.b16 %v223
    %v680 = vunpack.c.l.b16 %v224
    %v681 = vunpack.c.h.b16 %v224
    %v682 = vunpack.c.l.b16 %v225
    %v683 = vunpack.c.l.b16 %v226
    %v684 = vunpack.c.h.b16 %v226
    %v685 = vunpack.c.l.b16 %v227
    %v686 = vunpack.c.l.b16 %v228
    %v687 = vunpack.c.h.b16 %v228
    %v688 = vunpack.c.l.b16 %v229
    %v689 = vunpack.c.l.b16 %v230
    %v690 = vunpack.c.h.b16 %v230
    %v691 = vunpack.c.l.b16 %v231
    %v692 = vunpack.c.l.b16 %v232
    %v693 = vunpack.c.h.b16 %v232
    %v694 = vunpack.c.l.b16 %v233
    %v695 = vunpack.c.l.b16 %v234
    %v696 = vunpack.c.h.b16 %v234
    %v697 = vunpack.c.l.b16 %v235
    %v698 = vunpack.c.l.b16 %v236
    %v699 = vunpack.c.h.b16 %v236
    %v700 = vunpack.c.l.b16 %v237
    %v701 = vunpack.c.l.b16 %v238
    %v702 = vunpack.c.h.b16 %v238
    %v703 = vunpack.c.l.b16 %v239
    %v704 = vunpack.c.l.b16 %v240
    %v705 = vunpack.c.h.b16 %v240
    %v706 = vunpack.c.l.b16 %v241
    %v707 = vunpack.c.l.b16 %v242
    %v708 = vunpack.c.h.b16 %v242
    %v709 = vunpack.c.l.b16 %v243
    %v710 = vunpack.c.l.b16 %v244
    %v711 = vunpack.c.h.b16 %v244
    %v712 = vunpack.c.l.b16 %v245
    %v713 = vunpack.c.l.b16 %v246
    %v714 = vunpack.c.h.b16 %v246
    %v715 = vunpack.c.l.b16 %v247
    %v716 = vunpack.c.l.b16 %v248
    %v717 = vunpack.c.h.b16 %v248
    %v718 = vunpack.c.l.b16 %v249
    %v719 = vunpack.c.l.b16 %v250
    %v720 = vunpack.c.h.b16 %v250
    %v721 = vunpack.c.l.b16 %v251
    %v722 = vunpack.c.l.b16 %v252
    %v723 = vunpack.c.h.b16 %v252
    %v724 = vunpack.c.l.b16 %v253
    %v725 = vunpack.c.l.b16 %v254
    %v726 = vunpack.c.h.b16 %v254
    %v727 = vunpack.c.l.b16 %v255
    %v728 = vunpack.c.l.b16 %v256
    %v729 = vunpack.c.h.b16 %v256
    %v730 = vunpack.c.l.b16 %v257
    %v731 = vunpack.c.l.b16 %v258
    %v732 = vunpack.c.h.b16 %v258
    %v733 = vunpack.c.l.b16 %v259
    %v734 = vunpack.c.l.b16 %v260
    %v735 = vunpack.c.h.b16 %v260
    %v736 = vunpack.c.l.b16 %v261
    %v737 = vunpack.c.l.b16 %v262
    %v738 = vunpack.c.h.b16 %v262
    %v739 = vunpack.c.l.b16 %v263
    %v740 = vunpack.c.l.b16 %v264
    %v741 = vunpack.c.h.b16 %v264
    %v742 = vunpack.c.l.b16 %v265
    %v743 = vunpack.c.l.b16 %v266
    %v744 = vunpack.c.h.b16 %v266
    %v745 = vunpack.c.l.b16 %v267
    %v746 = vunpack.c.l.b16 %v268
    %v747 = vunpack.c.h.b16 %v268
    %v748 = vunpack.c.l.b16 %v269
    %v749 = vunpack.c.l.b16 %v270
    %v750 = vunpack.c.h.b16 %v270
    %v751 = vunpack.c.l.b16 %v271
    %v752 = vunpack.c.l.b16 %v272
    %v753 = vunpack.c.h.b16 %v272
    %v754 = vunpack.c.l.b16 %v273
    %v755 = vunpack.c.l.b16 %v274
    %v756 = vunpack.c.h.b16 %v274
    %v757 = vunpack.c.l.b16 %v275
    %v758 = vunpack.c.l.b16 %v276
    %v759 = vunpack.c.h.b16 %v276
    %v760 = vunpack.c.l.b16 %v277
    %v761 = vunpack.c.l.b16 %v278
    %v762 = vunpack.c.h.b16 %v278
    %v763 = vunpack.c.l.b16 %v279
    %v764 = vunpack.c.l.b16 %v280
    %v765 = vunpack.c.h.b16 %v280
    %v766 = vunpack.c.l.b16 %v281
    %v767 = vunpack.c.l.b16 %v282
    %v768 = vunpack.c.h.b16 %v282
    %v769 = vunpack.c.l.b16 %v283
    %v770 = vunpack.c.l.b16 %v284
    %v771 = vunpack.c.h.b16 %v284
    %v772 = vunpack.c.l.b16 %v285
    %v773 = vunpack.c.l.b16 %v286
    %v774 = vunpack.c.h.b16 %v286
    %v775 = vunpack.c.l.b16 %v287
    %v776 = vunpack.c.l.b16 %v288
    %v777 = vunpack.c.h.b16 %v288
    %v778 = vunpack.c.l.b16 %v289
    %v779 = vunpack.c.l.b16 %v290
    %v780 = vunpack.c.h.b16 %v290
    %v781 = vunpack.c.l.b16 %v291
    %v782 = vunpack.c.l.b16 %v292
    %v783 = vunpack.c.h.b16 %v292
    %v784 = vunpack.c.l.b16 %v293
    %v785 = vunpack.c.l.b16 %v294
    %v786 = vunpack.c.h.b16 %v294
    %v787 = vunpack.c.l.b16 %v295
    %v788 = vunpack.c.l.b16 %v296
    %v789 = vunpack.c.h.b16 %v296
    %v790 = vunpack.c.l.b16 %v297
    %v791 = vunpack.c.l.b16 %v298
    %v792 = vunpack.c.h.b16 %v298
    %v793 = vunpack.c.l.b16 %v299
    %v794 = vunpack.c.l.b16 %v300
    %v795 = vunpack.c.h.b16 %v300
    %v796 = vunpack.c.l.b16 %v301
    %v797 = vunpack.c.l.b16 %v302
    %v798 = vunpack.c.h.b16 %v302
    %v799 = vunpack.c.l.b16 %v303
    %v800 = vunpack.c.l.b16 %v304
    %v801 = vunpack.c.h.b16 %v304
    %v802 = vunpack.c.l.b16 %v305
    %v803 = vunpack.c.l.b16 %v306
    %v804 = vunpack.c.h.b16 %v306
    %v805 = vunpack.c.l.b16 %v307
    %v806 = vunpack.c.l.b16 %v308
    %v807 = vunpack.c.h.b16 %v308
    %v808 = vunpack.c.l.b16 %v309
    %v809 = vunpack.c.l.b16 %v310
    %v810 = vunpack.c.h.b16 %v310
    %v811 = vunpack.c.l.b16 %v311
    %v812 = vunpack.c.l.b16 %v312
    %v813 = vunpack.c.h.b16 %v312
    %v814 = vunpack.c.l.b16 %v313
    %v815 = vunpack.c.l.b16 %v314
    %v816 = vunpack.c.h.b16 %v314
    %v817 = vunpack.c.l.b16 %v315
    %v818 = vunpack.c.l.b16 %v316
    %v819 = vunpack.c.h.b16 %v316
    %v820 = vunpack.c.l.b16 %v317
    %v821 = vunpack.c.l.b16 %v318
    %v822 = vunpack.c.h.b16 %v318
    %v823 = vunpack.c.l.b16 %v319
    %v824 = vunpack.c.l.b16 %v320
    %v825 = vunpack.c.h.b16 %v320
    %v826 = vunpack.c.l.b16 %v321
    %v827 = vunpack.c.l.b16 %v322
    %v828 = vunpack.c.h.b16 %v322
    %v829 = vunpack.c.l.b16 %v323
    %v830 = vunpack.c.l.b16 %v324
    %v831 = vunpack.c.h.b16 %v324
    %v832 = vunpack.c.l.b16 %v325
    %v833 = vunpack.c.l.b16 %v326
    %v834 = vunpack.c.h.b16 %v326
    %v835 = vunpack.c.l.b16 %v327
    %v836 = vunpack.c.l.b16 %v328
    %v837 = vunpack.c.h.b16 %v328
    %v838 = vunpack.c.l.b16 %v329
    %v839 = vunpack.c.l.b16 %v330
    %v840 = vunpack.c.h.b16 %v330
    %v841 = vunpack.c.l.b16 %v331
    %v842 = vunpack.c.l.b16 %v332
    %v843 = vunpack.c.h.b16 %v332
    %v844 = vunpack.c.l.b16 %v333
    %v845 = vunpack.c.l.b16 %v334
    %v846 = vunpack.c.h.b16 %v334
    %v847 = vunpack.c.l.b16 %v335
    %v848 = vunpack.c.l.b16 %v336
    %v849 = vunpack.c.h.b16 %v336
    %v850 = vunpack.c.l.b16 %v337
    %v851 = vunpack.c.l.b16 %v338
    %v852 = vunpack.c.h.b16 %v338
    %v853 = vunpack.c.l.b16 %v339
    %v854 = vunpack.c.l.b16 %v340
    %v855 = vunpack.c.h.b16 %v340
    %v856 = vunpack.c.l.b16 %v341
    %v857 = vunpack.c.l.b16 %v342
    %v858 = vunpack.c.h.b16 %v342
    %v859 = vunpack.c.l.b16 %v343
    %v860 = vunpack.c.l.b16 %v344
    %v861 = vunpack.c.h.b16 %v344
    %v862 = vunpack.c.l.b16 %v345
    %v863 = vunpack.c.l.b16 %v346
    %v864 = vunpack.c.h.b16 %v346
    %v865 = vunpack.c.l.b16 %v347
    %v866 = vunpack.c.l.b16 %v348
    %v867 = vunpack.c.h.b16 %v348
    %v868 = vunpack.c.l.b16 %v349
    %v869 = vunpack.c.l.b16 %v350
    %v870 = vunpack.c.h.b16 %v350
    %v871 = vunpack.c.l.b16 %v351
    %v872 = vunpack.c.l.b16 %v352
    %v873 = vunpack.c.h.b16 %v352
    %v874 = vunpack.c.l.b16 %v353
    %v875 = vunpack.c.l.b16 %v354
    %v876 = vunpack.c.h.b16 %v354
    %v877 = vunpack.c.l.b16 %v355
    %v878 = vunpack.c.l.b16 %v356
    %v879 = vunpack.c.h.b16 %v356
    %v880 = vunpack.c.l.b16 %v357
    %v881 = vunpack.c.l.b16 %v358
    %v882 = vunpack.c.h.b16 %v358
    %v883 = vunpack.c.l.b16 %v359
    %v884 = vunpack.c.l.b16 %v360
    %v885 = vunpack.c.h.b16 %v360
    %v886 = vunpack.c.l.b16 %v361
    %v887 = vunpack.c.l.b16 %v362
    %v888 = vunpack.c.h.b16 %v362
    %v889 = vunpack.c.l.b16 %v363
    %v890 = vunpack.c.l.b16 %v364
    %v891 = vunpack.c.h.b16 %v364
    %v892 = vunpack.c.l.b16 %v365
    %v893 = vunpack.c.l.b16 %v366
    %v894 = vunpack.c.h.b16 %v366
    %v895 = vunpack.c.l.b16 %v367
    %v896 = vunpack.c.l.b16 %v368
    %v897 = vunpack.c.h.b16 %v368
    %v898 = vunpack.c.l.b16 %v369
    %v899 = vunpack.c.l.b16 %v370
    %v900 = vunpack.c.h.b16 %v370
    %v901 = vunpack.c.l.b16 %v371
    %v902 = vunpack.c.l.b16 %v372
    %v903 = vunpack.c.h.b16 %v372
    %v904 = vunpack.c.l.b16 %v373
    %v905 = vunpack.c.l.b16 %v374
    %v906 = vunpack.c.h.b16 %v374
    %v907 = vunpack.c.l.b16 %v375
    %v908 = vunpack.c.l.b16 %v376
    %v909 = vunpack.c.h.b16 %v376
    %v910 = vunpack.c.l.b16 %v377
    %v911 = vunpack.c.l.b16 %v378
    %v912 = vunpack.c.h.b16 %v378
    %v913 = vunpack.c.l.b16 %v379
    %v914 = vunpack.c.l.b16 %v380
    %v915 = vunpack.c.h.b16 %v380
    %v916 = vunpack.c.l.b16 %v381
    %v917 = vunpack.c.l.b16 %v382
    %v918 = vunpack.c.h.b16 %v382
    %v919 = vunpack.c.l.b16 %v383
    %v920 = vunpack.c.l.b16 %v384
    %v921 = vunpack.c.h.b16 %v384
    %v922 = vunpack.c.l.b16 %v385
    %v923 = vunpack.c.l.b16 %v386
    %v924 = vunpack.c.h.b16 %v386
    %v925 = vunpack.c.l.b16 %v387
    %v926 = vunpack.c.l.b16 %v388
    %v927 = vunpack.c.h.b16 %v388
    %v928 = vunpack.c.l.b16 %v389
    %v929 = vunpack.c.l.b16 %v390
    %v930 = vunpack.c.h.b16 %v390
    %v931 = vunpack.c.l.b16 %v391
    %v932 = vpack.c.b16 %v647, %v644
    %v933 = vpack.c.b16 %v648, %v645
    %v934 = vpack.c.b16 %v649, %v646
    %v935 = vpack.c.b16 %v653, %v650
    %v936 = vpack.c.b16 %v654, %v651
    %v937 = vpack.c.b16 %v655, %v652
    %v938 = vpack.c.b16 %v659, %v656
    %v939 = vpack.c.b16 %v660, %v657
    %v940 = vpack.c.b16 %v661, %v658
    %v941 = vpack.c.b16 %v665, %v662
    %v942 = vpack.c.b16 %v666, %v663
    %v943 = vpack.c.b16 %v667, %v664
    %v944 = vpack.c.b16 %v671, %v668
    %v945 = vpack.c.b16 %v672, %v669
    %v946 = vpack.c.b16 %v673, %v670
    %v947 = vpack.c.b16 %v677, %v674
    %v948 = vpack.c.b16 %v678, %v675
    %v949 = vpack.c.b16 %v679, %v676
    %v950 = vpack.c.b16 %v683, %v680
    %v951 = vpack.c.b16 %v684, %v681
    %v952 = vpack.c.b16 %v685, %v682
    %v953 = vpack.c.b16 %v689, %v686
    %v954 = vpack.c.b16 %v690, %v687
    %v955 = vpack.c.b16 %v691, %v688
    %v956 = vpack.c.b16 %v695, %v692
    %v957 = vpack.c.b16 %v696, %v693
    %v958 = vpack.c.b16 %v697, %v694
    %v959 = vpack.c.b16 %v701, %v698
    %v960 = vpack.c.b16 %v702, %v699
    %v961 = vpack.c.b16 %v703, %v700
    %v962 = vpack.c.b16 %v707, %v704
    %v963 = vpack.c.b16 %v708, %v705
    %v964 = vpack.c.b16 %v709, %v706
    %v965 = vpack.c.b16 %v713, %v710
    %v966 = vpack.c.b16 %v714, %v711
    %v967 = vpack.c.b16 %v715, %v712
    %v968 = vpack.c.b16 %v719, %v716
    %v969 = vpack.c.b16 %v720, %v717
    %v970 = vpack.c.b16 %v721, %v718
    %v971 = vpack.c.b16 %v725, %v722
    %v972 = vpack.c.b16 %v726, %v723
    %v973 = vpack.c.b16 %v727, %v724
    %v974 = vpack.c.b16 %v731, %v728
    %v975 = vpack.c.b16 %v732, %v729
    %v976 = vpack.c.b16 %v733, %v730
    %v977 = vpack.c.b16 %v737, %v734
    %v978 = vpack.c.b16 %v738, %v735
    %v979 = vpack.c.b16 %v739, %v736
    %v980 = vpack.c.b16 %v743, %v740
    %v981 = vpack.c.b16 %v744, %v741
    %v982 = vpack.c.b16 %v745, %v742
    %v983 = vpack.c.b16 %v749, %v746
    %v984 = vpack.c.b16 %v750, %v747
    %v985 = vpack.c.b16 %v751, %v748
    %v986 = vpack.c.b16 %v755, %v752
    %v987 = vpack.c.b16 %v756, %v753
    %v988 = vpack.c.b16 %v757, %v754
    %v989 = vpack.c.b16 %v761, %v758
    %v990 = vpack.c.b16 %v762, %v759
    %v991 = vpack.c.b16 %v763, %v760
    %v992 = vpack.c.b16 %v767, %v764
    %v993 = vpack.c.b16 %v768, %v765
    %v994 = vpack.c.b16 %v769, %v766
    %v995 = vpack.c.b16 %v773, %v770
    %v996 = vpack.c.b16 %v774, %v771
    %v997 = vpack.c.b16 %v775, %v772
    %v998 = vpack.c.b16 %v779, %v776
    %v999 = vpack.c.b16 %v780, %v777
    %v1000 = vpack.c.b16 %v781, %v778
    %v1001 = vpack.c.b16 %v785, %v782
    %v1002 = vpack.c.b16 %v786, %v783
    %v1003 = vpack.c.b16 %v787, %v784
    %v1004 = vpack.c.b16 %v791, %v788
    %v1005 = vpack.c.b16 %v792, %v789
    %v1006 = vpack.c.b16 %v793, %v790
    %v1007 = vpack.c.b16 %v797, %v794
    %v1008 = vpack.c.b16 %v798, %v795
    %v1009 = vpack.c.b16 %v799, %v796
    %v1010 = vpack.c.b16 %v803, %v800
    %v1011 = vpack.c.b16 %v804, %v801
    %v1012 = vpack.c.b16 %v805, %v802
    %v1013 = vpack.c.b16 %v809, %v806
    %v1014 = vpack.c.b16 %v810, %v807
    %v1015 = vpack.c.b16 %v811, %v808
    %v1016 = vpack.c.b16 %v815, %v812
    %v1017 = vpack.c.b16 %v816, %v813
    %v1018 = vpack.c.b16 %v817, %v814
    %v1019 = vpack.c.b16 %v821, %v818
    %v1020 = vpack.c.b16 %v822, %v819
    %v1021 = vpack.c.b16 %v823, %v820
    %v1022 = vpack.c.b16 %v827, %v824
    %v1023 = vpack.c.b16 %v828, %v825
    %v1024 = vpack.c.b16 %v829, %v826
    %v1025 = vpack.c.b16 %v833, %v830
    %v1026 = vpack.c.b16 %v834, %v831
    %v1027 = vpack.c.b16 %v835, %v832
    %v1028 = vpack.c.b16 %v839, %v836
    %v1029 = vpack.c.b16 %v840, %v837
    %v1030 = vpack.c.b16 %v841, %v838
    %v1031 = vpack.c.b16 %v845, %v842
    %v1032 = vpack.c.b16 %v846, %v843
    %v1033 = vpack.c.b16 %v847, %v844
    %v1034 = vpack.c.b16 %v851, %v848
    %v1035 = vpack.c.b16 %v852, %v849
    %v1036 = vpack.c.b16 %v853, %v850
    %v1037 = vpack.c.b16 %v857, %v854
    %v1038 = vpack.c.b16 %v858, %v855
    %v1039 = vpack.c.b16 %v859, %v856
    %v1040 = vpack.c.b16 %v863, %v860
    %v1041 = vpack.c.b16 %v864, %v861
    %v1042 = vpack.c.b16 %v865, %v862
    %v1043 = vpack.c.b16 %v869, %v866
    %v1044 = vpack.c.b16 %v870, %v867
    %v1045 = vpack.c.b16 %v871, %v868
    %v1046 = vpack.c.b16 %v875, %v872
    %v1047 = vpack.c.b16 %v876, %v873
    %v1048 = vpack.c.b16 %v877, %v874
    %v1049 = vpack.c.b16 %v881, %v878
    %v1050 = vpack.c.b16 %v882, %v879
    %v1051 = vpack.c.b16 %v883, %v880
    %v1052 = vpack.c.b16 %v887, %v884
    %v1053 = vpack.c.b16 %v888, %v885
    %v1054 = vpack.c.b16 %v889, %v886
    %v1055 = vpack.c.b16 %v893, %v890
    %v1056 = vpack.c.b16 %v894, %v891
    %v1057 = vpack.c.b16 %v895, %v892
    %v1058 = vpack.c.b16 %v899, %v896
    %v1059 = vpack.c.b16 %v900, %v897
    %v1060 = vpack.c.b16 %v901, %v898
    %v1061 = vpack.c.b16 %v905, %v902
    %v1062 = vpack.c.b16 %v906, %v903
    %v1063 = vpack.c.b16 %v907, %v904
    %v1064 = vpack.c.b16 %v911, %v908
    %v1065 = vpack.c.b16 %v912, %v909
    %v1066 = vpack.c.b16 %v913, %v910
    %v1067 = vpack.c.b16 %v917, %v914
    %v1068 = vpack.c.b16 %v918, %v915
    %v1069 = vpack.c.b16 %v919, %v916
    %v1070 = vpack.c.b16 %v923, %v920
    %v1071 = vpack.c.b16 %v924, %v921
    %v1072 = vpack.c.b16 %v925, %v922
    %v1073 = vpack.c.b16 %v929, %v926
    %v1074 = vpack.c.b16 %v930, %v927
    %v1075 = vpack.c.b16 %v931, %v928
    %1220 = vmatprep.subr.bf16.mxu0 %v933
    %1221 = vmatpush1.bf16.msra.mxu0 %v932
    %1222 = vmatprep.subr.bf16.mxu0 %v936
    %1223 = vmatpush1.bf16.msra.mxu0 %v935
    %1224 = vmatprep.subr.bf16.mxu0 %v939
    %1225 = vmatpush1.bf16.msra.mxu0 %v938
    %1226 = vmatprep.subr.bf16.mxu0 %v942
    %1227 = vmatpush1.bf16.msra.mxu0 %v941
    %1228 = vmatprep.subr.bf16.mxu0 %v945
    %1229 = vmatpush1.bf16.msra.mxu0 %v944
    %1230 = vmatprep.subr.bf16.mxu0 %v948
    %1231 = vmatpush1.bf16.msra.mxu0 %v947
    %1232 = vmatprep.subr.bf16.mxu0 %v951
    %1233 = vmatpush1.bf16.msra.mxu0 %v950
    %1234 = vmatprep.subr.bf16.mxu0 %v954
    %1235 = vmatpush1.bf16.msra.mxu0 %v953
    %1236 = vmatprep.subr.bf16.mxu0 %v957
    %1237 = vmatpush1.bf16.msra.mxu0 %v956
    %1238 = vmatprep.subr.bf16.mxu0 %v960
    %1239 = vmatpush1.bf16.msra.mxu0 %v959
    %1240 = vmatprep.subr.bf16.mxu0 %v963
    %1241 = vmatpush1.bf16.msra.mxu0 %v962
    %1242 = vmatprep.subr.bf16.mxu0 %v966
    %1243 = vmatpush1.bf16.msra.mxu0 %v965
    %1244 = vmatprep.subr.bf16.mxu0 %v969
    %1245 = vmatpush1.bf16.msra.mxu0 %v968
    %1246 = vmatprep.subr.bf16.mxu0 %v972
    %1247 = vmatpush1.bf16.msra.mxu0 %v971
    %1248 = vmatprep.subr.bf16.mxu0 %v975
    %1249 = vmatpush1.bf16.msra.mxu0 %v974
    %1250 = vmatprep.subr.bf16.mxu0 %v978
    %1251 = vmatpush1.bf16.msra.mxu0 %v977
    %1252 = vmatprep.mubr.bf16.mxu0 %v429
    %1253 = vmatmul.mubr.bf16.gmra.mrb[0].mxu0 %v428
    %v1254 = vpop.f32.mrb[0].mxu0
    %v1255 = vadd.f32 0.0, %v1254
    %v1256 = vpop.f32.mrb[0].mxu0
    %v1257 = vadd.f32 0.0, %v1256
    %v1258 = vpop.f32.mrb[0].mxu0
    %v1259 = vadd.f32 0.0, %v1258
    %v1260 = vpop.f32.mrb[0].mxu0
    %v1261 = vadd.f32 0.0, %v1260
    %1262 = vmatprep.mubr.bf16.mxu0 %v435
    %1263 = vmatmul.mubr.bf16.gmra.mrb[0].mxu0 %v434
    %v1264 = vpop.f32.mrb[0].mxu0
    %v1265 = vadd.f32 0.0, %v1264
    %v1266 = vpop.f32.mrb[0].mxu0
    %v1267 = vadd.f32 0.0, %v1266
    %v1268 = vpop.f32.mrb[0].mxu0
    %v1269 = vadd.f32 0.0, %v1268
    %v1270 = vpop.f32.mrb[0].mxu0
    %v1271 = vadd.f32 0.0, %v1270
    %1272 = vdwg.mxu0
    %1273 = vmatprep.subr.bf16.mxu0 %v981
    %1274 = vmatpush1.bf16.msra.mxu0 %v980
    %1275 = vmatprep.subr.bf16.mxu0 %v984
    %1276 = vmatpush1.bf16.msra.mxu0 %v983
    %1277 = vmatprep.subr.bf16.mxu0 %v987
    %1278 = vmatpush1.bf16.msra.mxu0 %v986
    %1279 = vmatprep.subr.bf16.mxu0 %v990
    %1280 = vmatpush1.bf16.msra.mxu0 %v989
    %1281 = vmatprep.subr.bf16.mxu0 %v993
    %1282 = vmatpush1.bf16.msra.mxu0 %v992
    %1283 = vmatprep.subr.bf16.mxu0 %v996
    %1284 = vmatpush1.bf16.msra.mxu0 %v995
    %1285 = vmatprep.subr.bf16.mxu0 %v999
    %1286 = vmatpush1.bf16.msra.mxu0 %v998
    %1287 = vmatprep.subr.bf16.mxu0 %v1002
    %1288 = vmatpush1.bf16.msra.mxu0 %v1001
    %1289 = vmatprep.subr.bf16.mxu0 %v1005
    %1290 = vmatpush1.bf16.msra.mxu0 %v1004
    %1291 = vmatprep.subr.bf16.mxu0 %v1008
    %1292 = vmatpush1.bf16.msra.mxu0 %v1007
    %1293 = vmatprep.subr.bf16.mxu0 %v1011
    %1294 = vmatpush1.bf16.msra.mxu0 %v1010
    %1295 = vmatprep.subr.bf16.mxu0 %v1014
    %1296 = vmatpush1.bf16.msra.mxu0 %v1013
    %1297 = vmatprep.subr.bf16.mxu0 %v1017
    %1298 = vmatpush1.bf16.msra.mxu0 %v1016
    %1299 = vmatprep.subr.bf16.mxu0 %v1020
    %1300 = vmatpush1.bf16.msra.mxu0 %v1019
    %1301 = vmatprep.subr.bf16.mxu0 %v1023
    %1302 = vmatpush1.bf16.msra.mxu0 %v1022
    %1303 = vmatprep.subr.bf16.mxu0 %v1026
    %1304 = vmatpush1.bf16.msra.mxu0 %v1025
    %1305 = vmatprep.mubr.bf16.mxu0 %v431
    %1306 = vmatmul.mubr.bf16.gmra.mrb[0].mxu0 %v430
    %v1307 = vpop.f32.mrb[0].mxu0
    %v1308 = vadd.f32 %v1255, %v1307
    %v1309 = vpop.f32.mrb[0].mxu0
    %v1310 = vadd.f32 %v1257, %v1309
    %v1311 = vpop.f32.mrb[0].mxu0
    %v1312 = vadd.f32 %v1259, %v1311
    %v1313 = vpop.f32.mrb[0].mxu0
    %v1314 = vadd.f32 %v1261, %v1313
    %1315 = vmatprep.mubr.bf16.mxu0 %v437
    %1316 = vmatmul.mubr.bf16.gmra.mrb[0].mxu0 %v436
    %v1317 = vpop.f32.mrb[0].mxu0
    %v1318 = vadd.f32 %v1265, %v1317
    %v1319 = vpop.f32.mrb[0].mxu0
    %v1320 = vadd.f32 %v1267, %v1319
    %v1321 = vpop.f32.mrb[0].mxu0
    %v1322 = vadd.f32 %v1269, %v1321
    %v1323 = vpop.f32.mrb[0].mxu0
    %v1324 = vadd.f32 %v1271, %v1323
    %1325 = vdwg.mxu0
    %1326 = vmatprep.subr.bf16.mxu0 %v1029
    %1327 = vmatpush1.bf16.msra.mxu0 %v1028
    %1328 = vmatprep.subr.bf16.mxu0 %v1032
    %1329 = vmatpush1.bf16.msra.mxu0 %v1031
    %1330 = vmatprep.subr.bf16.mxu0 %v1035
    %1331 = vmatpush1.bf16.msra.mxu0 %v1034
    %1332 = vmatprep.subr.bf16.mxu0 %v1038
    %1333 = vmatpush1.bf16.msra.mxu0 %v1037
    %1334 = vmatprep.subr.bf16.mxu0 %v1041
    %1335 = vmatpush1.bf16.msra.mxu0 %v1040
    %1336 = vmatprep.subr.bf16.mxu0 %v1044
    %1337 = vmatpush1.bf16.msra.mxu0 %v1043
    %1338 = vmatprep.subr.bf16.mxu0 %v1047
    %1339 = vmatpush1.bf16.msra.mxu0 %v1046
    %1340 = vmatprep.subr.bf16.mxu0 %v1050
    %1341 = vmatpush1.bf16.msra.mxu0 %v1049
    %1342 = vmatprep.subr.bf16.mxu0 %v1053
    %1343 = vmatpush1.bf16.msra.mxu0 %v1052
    %1344 = vmatprep.subr.bf16.mxu0 %v1056
    %1345 = vmatpush1.bf16.msra.mxu0 %v1055
    %1346 = vmatprep.subr.bf16.mxu0 %v1059
    %1347 = vmatpush1.bf16.msra.mxu0 %v1058
    %1348 = vmatprep.subr.bf16.mxu0 %v1062
    %1349 = vmatpush1.bf16.msra.mxu0 %v1061
    %1350 = vmatprep.subr.bf16.mxu0 %v1065
    %1351 = vmatpush1.bf16.msra.mxu0 %v1064
    %1352 = vmatprep.subr.bf16.mxu0 %v1068
    %1353 = vmatpush1.bf16.msra.mxu0 %v1067
    %1354 = vmatprep.subr.bf16.mxu0 %v1071
    %1355 = vmatpush1.bf16.msra.mxu0 %v1070
    %1356 = vmatprep.subr.bf16.mxu0 %v1074
    %1357 = vmatpush1.bf16.msra.mxu0 %v1073
    %1358 = vmatprep.mubr.bf16.mxu0 %v433
    %1359 = vmatmul.mubr.bf16.gmra.mrb[0].mxu0 %v432
    %v1360 = vpop.f32.mrb[0].mxu0
    %v1361 = vadd.f32 %v1308, %v1360
    %v1362 = vpop.f32.mrb[0].mxu0
    %v1363 = vadd.f32 %v1310, %v1362
    %v1364 = vpop.f32.mrb[0].mxu0
    %v1365 = vadd.f32 %v1312, %v1364
    %v1366 = vpop.f32.mrb[0].mxu0
    %v1367 = vadd.f32 %v1314, %v1366
    %1368 = vmatprep.mubr.bf16.mxu0 %v439
    %1369 = vmatmul.mubr.bf16.gmra.mrb[0].mxu0 %v438
    %v1370 = vpop.f32.mrb[0].mxu0
    %v1371 = vadd.f32 %v1318, %v1370
    %v1372 = vpop.f32.mrb[0].mxu0
    %v1373 = vadd.f32 %v1320, %v1372
    %v1374 = vpop.f32.mrb[0].mxu0
    %v1375 = vadd.f32 %v1322, %v1374
    %v1376 = vpop.f32.mrb[0].mxu0
    %v1377 = vadd.f32 %v1324, %v1376
    %1378 = vdwg.mxu0
    %1379 = vmatprep.subr.bf16.mxu0 0
    %1380 = vmatpush1.bf16.msra.mxu0 %v934
    %1381 = vmatprep.subr.bf16.mxu0 0
    %1382 = vmatpush1.bf16.msra.mxu0 %v937
    %1383 = vmatprep.subr.bf16.mxu0 0
    %1384 = vmatpush1.bf16.msra.mxu0 %v940
    %1385 = vmatprep.subr.bf16.mxu0 0
    %1386 = vmatpush1.bf16.msra.mxu0 %v943
    %1387 = vmatprep.subr.bf16.mxu0 0
    %1388 = vmatpush1.bf16.msra.mxu0 %v946
    %1389 = vmatprep.subr.bf16.mxu0 0
    %1390 = vmatpush1.bf16.msra.mxu0 %v949
    %1391 = vmatprep.subr.bf16.mxu0 0
    %1392 = vmatpush1.bf16.msra.mxu0 %v952
    %1393 = vmatprep.subr.bf16.mxu0 0
    %1394 = vmatpush1.bf16.msra.mxu0 %v955
    %1395 = vmatprep.subr.bf16.mxu0 0
    %1396 = vmatpush1.bf16.msra.mxu0 %v958
    %1397 = vmatprep.subr.bf16.mxu0 0
    %1398 = vmatpush1.bf16.msra.mxu0 %v961
    %1399 = vmatprep.subr.bf16.mxu0 0
    %1400 = vmatpush1.bf16.msra.mxu0 %v964
    %1401 = vmatprep.subr.bf16.mxu0 0
    %1402 = vmatpush1.bf16.msra.mxu0 %v967
    %1403 = vmatprep.subr.bf16.mxu0 0
    %1404 = vmatpush1.bf16.msra.mxu0 %v970
    %1405 = vmatprep.subr.bf16.mxu0 0
    %1406 = vmatpush1.bf16.msra.mxu0 %v973
    %1407 = vmatprep.subr.bf16.mxu0 0
    %1408 = vmatpush1.bf16.msra.mxu0 %v976
    %1409 = vmatprep.subr.bf16.mxu0 0
    %1410 = vmatpush1.bf16.msra.mxu0 %v979
    %1411 = vmatprep.mubr.bf16.mxu0 %v429
    %1412 = vmatmul.mubr.bf16.gmra.mrb[0].mxu0 %v428
    %v1413 = vpop.f32.mrb[0].mxu0
    %v1414 = vadd.f32 0.0, %v1413
    %v1415 = vpop.f32.mrb[0].mxu0
    %v1416 = vpop.f32.mrb[0].mxu0
    %v1417 = vadd.f32 0.0, %v1416
    %v1418 = vpop.f32.mrb[0].mxu0
    %1419 = vmatprep.mubr.bf16.mxu0 %v435
    %1420 = vmatmul.mubr.bf16.gmra.mrb[0].mxu0 %v434
    %v1421 = vpop.f32.mrb[0].mxu0
    %v1422 = vadd.f32 0.0, %v1421
    %v1423 = vpop.f32.mrb[0].mxu0
    %v1424 = vpop.f32.mrb[0].mxu0
    %v1425 = vadd.f32 0.0, %v1424
    %v1426 = vpop.f32.mrb[0].mxu0
    %1427 = vdwg.mxu0
    %1428 = vmatprep.subr.bf16.mxu0 0
    %1429 = vmatpush1.bf16.msra.mxu0 %v982
    %1430 = vmatprep.subr.bf16.mxu0 0
    %1431 = vmatpush1.bf16.msra.mxu0 %v985
    %1432 = vmatprep.subr.bf16.mxu0 0
    %1433 = vmatpush1.bf16.msra.mxu0 %v988
    %1434 = vmatprep.subr.bf16.mxu0 0
    %1435 = vmatpush1.bf16.msra.mxu0 %v991
    %1436 = vmatprep.subr.bf16.mxu0 0
    %1437 = vmatpush1.bf16.msra.mxu0 %v994
    %1438 = vmatprep.subr.bf16.mxu0 0
    %1439 = vmatpush1.bf16.msra.mxu0 %v997
    %1440 = vmatprep.subr.bf16.mxu0 0
    %1441 = vmatpush1.bf16.msra.mxu0 %v1000
    %1442 = vmatprep.subr.bf16.mxu0 0
    %1443 = vmatpush1.bf16.msra.mxu0 %v1003
    %1444 = vmatprep.subr.bf16.mxu0 0
    %1445 = vmatpush1.bf16.msra.mxu0 %v1006
    %1446 = vmatprep.subr.bf16.mxu0 0
    %1447 = vmatpush1.bf16.msra.mxu0 %v1009
    %1448 = vmatprep.subr.bf16.mxu0 0
    %1449 = vmatpush1.bf16.msra.mxu0 %v1012
    %1450 = vmatprep.subr.bf16.mxu0 0
    %1451 = vmatpush1.bf16.msra.mxu0 %v1015
    %1452 = vmatprep.subr.bf16.mxu0 0
    %1453 = vmatpush1.bf16.msra.mxu0 %v1018
    %1454 = vmatprep.subr.bf16.mxu0 0
    %1455 = vmatpush1.bf16.msra.mxu0 %v1021
    %1456 = vmatprep.subr.bf16.mxu0 0
    %1457 = vmatpush1.bf16.msra.mxu0 %v1024
    %1458 = vmatprep.subr.bf16.mxu0 0
    %1459 = vmatpush1.bf16.msra.mxu0 %v1027
    %1460 = vmatprep.mubr.bf16.mxu0 %v431
    %1461 = vmatmul.mubr.bf16.gmra.mrb[0].mxu0 %v430
    %v1462 = vpop.f32.mrb[0].mxu0
    %v1463 = vadd.f32 %v1414, %v1462
    %v1464 = vpop.f32.mrb[0].mxu0
    %v1465 = vpop.f32.mrb[0].mxu0
    %v1466 = vadd.f32 %v1417, %v1465
    %v1467 = vpop.f32.mrb[0].mxu0
    %1468 = vmatprep.mubr.bf16.mxu0 %v437
    %1469 = vmatmul.mubr.bf16.gmra.mrb[0].mxu0 %v436
    %v1470 = vpop.f32.mrb[0].mxu0
    %v1471 = vadd.f32 %v1422, %v1470
    %v1472 = vpop.f32.mrb[0].mxu0
    %v1473 = vpop.f32.mrb[0].mxu0
    %v1474 = vadd.f32 %v1425, %v1473
    %v1475 = vpop.f32.mrb[0].mxu0
    %1476 = vdwg.mxu0
    %1477 = vmatprep.subr.bf16.mxu0 0
    %1478 = vmatpush1.bf16.msra.mxu0 %v1030
    %1479 = vmatprep.subr.bf16.mxu0 0
    %1480 = vmatpush1.bf16.msra.mxu0 %v1033
    %1481 = vmatprep.subr.bf16.mxu0 0
    %1482 = vmatpush1.bf16.msra.mxu0 %v1036
    %1483 = vmatprep.subr.bf16.mxu0 0
    %1484 = vmatpush1.bf16.msra.mxu0 %v1039
    %1485 = vmatprep.subr.bf16.mxu0 0
    %1486 = vmatpush1.bf16.msra.mxu0 %v1042
    %1487 = vmatprep.subr.bf16.mxu0 0
    %1488 = vmatpush1.bf16.msra.mxu0 %v1045
    %1489 = vmatprep.subr.bf16.mxu0 0
    %1490 = vmatpush1.bf16.msra.mxu0 %v1048
    %1491 = vmatprep.subr.bf16.mxu0 0
    %1492 = vmatpush1.bf16.msra.mxu0 %v1051
    %1493 = vmatprep.subr.bf16.mxu0 0
    %1494 = vmatpush1.bf16.msra.mxu0 %v1054
    %1495 = vmatprep.subr.bf16.mxu0 0
    %1496 = vmatpush1.bf16.msra.mxu0 %v1057
    %1497 = vmatprep.subr.bf16.mxu0 0
    %1498 = vmatpush1.bf16.msra.mxu0 %v1060
    %1499 = vmatprep.subr.bf16.mxu0 0
    %1500 = vmatpush1.bf16.msra.mxu0 %v1063
    %1501 = vmatprep.subr.bf16.mxu0 0
    %1502 = vmatpush1.bf16.msra.mxu0 %v1066
    %1503 = vmatprep.subr.bf16.mxu0 0
    %1504 = vmatpush1.bf16.msra.mxu0 %v1069
    %1505 = vmatprep.subr.bf16.mxu0 0
    %1506 = vmatpush1.bf16.msra.mxu0 %v1072
    %1507 = vmatprep.subr.bf16.mxu0 0
    %1508 = vmatpush1.bf16.msra.mxu0 %v1075
    %1509 = vmatprep.mubr.bf16.mxu0 %v433
    %1510 = vmatmul.mubr.bf16.gmra.mrb[0].mxu0 %v432
    %v1511 = vpop.f32.mrb[0].mxu0
    %v1512 = vadd.f32 %v1463, %v1511
    %v1513 = vpop.f32.mrb[0].mxu0
    %v1514 = vpop.f32.mrb[0].mxu0
    %v1515 = vadd.f32 %v1466, %v1514
    %v1516 = vpop.f32.mrb[0].mxu0
    %1517 = vmatprep.mubr.bf16.mxu0 %v439
    %1518 = vmatmul.mubr.bf16.gmra.mrb[0].mxu0 %v438
    %v1519 = vpop.f32.mrb[0].mxu0
    %v1520 = vadd.f32 %v1471, %v1519
    %v1521 = vpop.f32.mrb[0].mxu0
    %v1522 = vpop.f32.mrb[0].mxu0
    %v1523 = vadd.f32 %v1474, %v1522
    %v1524 = vpop.f32.mrb[0].mxu0
    %1525 = vdwg.mxu0
    %v1526 = vld [vmem:[#allocation5 + $0x480] sm:$0xff]
    %v1527 = vld [vmem:[#allocation5 + $0x488] sm:$0xf]
    %v1528 = vld [vmem:[#allocation5 + $0x48c] sm:$0xff]
    %v1529 = vld [vmem:[#allocation5 + $0x494] sm:$0xf]
    %v1530 = vld [vmem:[#allocation5 + $0x498] sm:$0xff]
    %v1531 = vld [vmem:[#allocation5 + $0x4a0] sm:$0xf]
    %v1532 = vld [vmem:[#allocation5 + $0x4a4] sm:$0xff]
    %v1533 = vld [vmem:[#allocation5 + $0x4ac] sm:$0xf]
    %v1534 = vld [vmem:[#allocation5 + $0x4b0] sm:$0xff]
    %v1535 = vld [vmem:[#allocation5 + $0x4b8] sm:$0xf]
    %v1536 = vld [vmem:[#allocation5 + $0x4bc] sm:$0xff]
    %v1537 = vld [vmem:[#allocation5 + $0x4c4] sm:$0xf]
    %v1538 = vld [vmem:[#allocation5 + $0x4c8] sm:$0xff]
    %v1539 = vld [vmem:[#allocation5 + $0x4d0] sm:$0xf]
    %v1540 = vld [vmem:[#allocation5 + $0x4d4] sm:$0xff]
    %v1541 = vld [vmem:[#allocation5 + $0x4dc] sm:$0xf]
    %v1542 = vld [vmem:[#allocation5 + $0x4e0] sm:$0xff]
    %v1543 = vld [vmem:[#allocation5 + $0x4e8] sm:$0xf]
    %v1544 = vld [vmem:[#allocation5 + $0x4ec] sm:$0xff]
    %v1545 = vld [vmem:[#allocation5 + $0x4f4] sm:$0xf]
    %v1546 = vld [vmem:[#allocation5 + $0x4f8] sm:$0xff]
    %v1547 = vld [vmem:[#allocation5 + $0x500] sm:$0xf]
    %v1548 = vld [vmem:[#allocation5 + $0x504] sm:$0xff]
    %v1549 = vld [vmem:[#allocation5 + $0x50c] sm:$0xf]
    %v1550 = vld [vmem:[#allocation5 + $0x510] sm:$0xff]
    %v1551 = vld [vmem:[#allocation5 + $0x518] sm:$0xf]
    %v1552 = vld [vmem:[#allocation5 + $0x51c] sm:$0xff]
    %v1553 = vld [vmem:[#allocation5 + $0x524] sm:$0xf]
    %v1554 = vld [vmem:[#allocation5 + $0x528] sm:$0xff]
    %v1555 = vld [vmem:[#allocation5 + $0x530] sm:$0xf]
    %v1556 = vld [vmem:[#allocation5 + $0x534] sm:$0xff]
    %v1557 = vld [vmem:[#allocation5 + $0x53c] sm:$0xf]
    %v1558 = vld [vmem:[#allocation5 + $0x540] sm:$0xff]
    %v1559 = vld [vmem:[#allocation5 + $0x548] sm:$0xf]
    %v1560 = vld [vmem:[#allocation5 + $0x54c] sm:$0xff]
    %v1561 = vld [vmem:[#allocation5 + $0x554] sm:$0xf]
    %v1562 = vld [vmem:[#allocation5 + $0x558] sm:$0xff]
    %v1563 = vld [vmem:[#allocation5 + $0x560] sm:$0xf]
    %v1564 = vld [vmem:[#allocation5 + $0x564] sm:$0xff]
    %v1565 = vld [vmem:[#allocation5 + $0x56c] sm:$0xf]
    %v1566 = vld [vmem:[#allocation5 + $0x570] sm:$0xff]
    %v1567 = vld [vmem:[#allocation5 + $0x578] sm:$0xf]
    %v1568 = vld [vmem:[#allocation5 + $0x57c] sm:$0xff]
    %v1569 = vld [vmem:[#allocation5 + $0x584] sm:$0xf]
    %v1570 = vld [vmem:[#allocation5 + $0x588] sm:$0xff]
    %v1571 = vld [vmem:[#allocation5 + $0x590] sm:$0xf]
    %v1572 = vld [vmem:[#allocation5 + $0x594] sm:$0xff]
    %v1573 = vld [vmem:[#allocation5 + $0x59c] sm:$0xf]
    %v1574 = vld [vmem:[#allocation5 + $0x5a0] sm:$0xff]
    %v1575 = vld [vmem:[#allocation5 + $0x5a8] sm:$0xf]
    %v1576 = vld [vmem:[#allocation5 + $0x5ac] sm:$0xff]
    %v1577 = vld [vmem:[#allocation5 + $0x5b4] sm:$0xf]
    %v1578 = vld [vmem:[#allocation5 + $0x5b8] sm:$0xff]
    %v1579 = vld [vmem:[#allocation5 + $0x5c0] sm:$0xf]
    %v1580 = vld [vmem:[#allocation5 + $0x5c4] sm:$0xff]
    %v1581 = vld [vmem:[#allocation5 + $0x5cc] sm:$0xf]
    %v1582 = vld [vmem:[#allocation5 + $0x5d0] sm:$0xff]
    %v1583 = vld [vmem:[#allocation5 + $0x5d8] sm:$0xf]
    %v1584 = vld [vmem:[#allocation5 + $0x5dc] sm:$0xff]
    %v1585 = vld [vmem:[#allocation5 + $0x5e4] sm:$0xf]
    %v1586 = vld [vmem:[#allocation5 + $0x5e8] sm:$0xff]
    %v1587 = vld [vmem:[#allocation5 + $0x5f0] sm:$0xf]
    %v1588 = vld [vmem:[#allocation5 + $0x5f4] sm:$0xff]
    %v1589 = vld [vmem:[#allocation5 + $0x5fc] sm:$0xf]
    %v1590 = vld [vmem:[#allocation5 + $0x600] sm:$0xff]
    %v1591 = vld [vmem:[#allocation5 + $0x608] sm:$0xf]
    %v1592 = vld [vmem:[#allocation5 + $0x60c] sm:$0xff]
    %v1593 = vld [vmem:[#allocation5 + $0x614] sm:$0xf]
    %v1594 = vld [vmem:[#allocation5 + $0x618] sm:$0xff]
    %v1595 = vld [vmem:[#allocation5 + $0x620] sm:$0xf]
    %v1596 = vld [vmem:[#allocation5 + $0x624] sm:$0xff]
    %v1597 = vld [vmem:[#allocation5 + $0x62c] sm:$0xf]
    %v1598 = vld [vmem:[#allocation5 + $0x630] sm:$0xff]
    %v1599 = vld [vmem:[#allocation5 + $0x638] sm:$0xf]
    %v1600 = vld [vmem:[#allocation5 + $0x63c] sm:$0xff]
    %v1601 = vld [vmem:[#allocation5 + $0x644] sm:$0xf]
    %v1602 = vld [vmem:[#allocation5 + $0x648] sm:$0xff]
    %v1603 = vld [vmem:[#allocation5 + $0x650] sm:$0xf]
    %v1604 = vld [vmem:[#allocation5 + $0x654] sm:$0xff]
    %v1605 = vld [vmem:[#allocation5 + $0x65c] sm:$0xf]
    %v1606 = vld [vmem:[#allocation5 + $0x660] sm:$0xff]
    %v1607 = vld [vmem:[#allocation5 + $0x668] sm:$0xf]
    %v1608 = vld [vmem:[#allocation5 + $0x66c] sm:$0xff]
    %v1609 = vld [vmem:[#allocation5 + $0x674] sm:$0xf]
    %v1610 = vld [vmem:[#allocation5 + $0x678] sm:$0xff]
    %v1611 = vld [vmem:[#allocation5 + $0x680] sm:$0xf]
    %v1612 = vld [vmem:[#allocation5 + $0x684] sm:$0xff]
    %v1613 = vld [vmem:[#allocation5 + $0x68c] sm:$0xf]
    %v1614 = vld [vmem:[#allocation5 + $0x690] sm:$0xff]
    %v1615 = vld [vmem:[#allocation5 + $0x698] sm:$0xf]
    %v1616 = vld [vmem:[#allocation5 + $0x69c] sm:$0xff]
    %v1617 = vld [vmem:[#allocation5 + $0x6a4] sm:$0xf]
    %v1618 = vld [vmem:[#allocation5 + $0x6a8] sm:$0xff]
    %v1619 = vld [vmem:[#allocation5 + $0x6b0] sm:$0xf]
    %v1620 = vld [vmem:[#allocation5 + $0x6b4] sm:$0xff]
    %v1621 = vld [vmem:[#allocation5 + $0x6bc] sm:$0xf]
    %v1622 = vld [vmem:[#allocation5 + $0x6c0] sm:$0xff]
    %v1623 = vld [vmem:[#allocation5 + $0x6c8] sm:$0xf]
    %v1624 = vld [vmem:[#allocation5 + $0x6cc] sm:$0xff]
    %v1625 = vld [vmem:[#allocation5 + $0x6d4] sm:$0xf]
    %v1626 = vld [vmem:[#allocation5 + $0x6d8] sm:$0xff]
    %v1627 = vld [vmem:[#allocation5 + $0x6e0] sm:$0xf]
    %v1628 = vld [vmem:[#allocation5 + $0x6e4] sm:$0xff]
    %v1629 = vld [vmem:[#allocation5 + $0x6ec] sm:$0xf]
    %v1630 = vld [vmem:[#allocation5 + $0x6f0] sm:$0xff]
    %v1631 = vld [vmem:[#allocation5 + $0x6f8] sm:$0xf]
    %v1632 = vld [vmem:[#allocation5 + $0x6fc] sm:$0xff]
    %v1633 = vld [vmem:[#allocation5 + $0x704] sm:$0xf]
    %v1634 = vld [vmem:[#allocation5 + $0x708] sm:$0xff]
    %v1635 = vld [vmem:[#allocation5 + $0x710] sm:$0xf]
    %v1636 = vld [vmem:[#allocation5 + $0x714] sm:$0xff]
    %v1637 = vld [vmem:[#allocation5 + $0x71c] sm:$0xf]
    %v1638 = vld [vmem:[#allocation5 + $0x720] sm:$0xff]
    %v1639 = vld [vmem:[#allocation5 + $0x728] sm:$0xf]
    %v1640 = vld [vmem:[#allocation5 + $0x72c] sm:$0xff]
    %v1641 = vld [vmem:[#allocation5 + $0x734] sm:$0xf]
    %v1642 = vld [vmem:[#allocation5 + $0x738] sm:$0xff]
    %v1643 = vld [vmem:[#allocation5 + $0x740] sm:$0xf]
    %v1644 = vld [vmem:[#allocation5 + $0x744] sm:$0xff]
    %v1645 = vld [vmem:[#allocation5 + $0x74c] sm:$0xf]
    %v1646 = vld [vmem:[#allocation5 + $0x750] sm:$0xff]
    %v1647 = vld [vmem:[#allocation5 + $0x758] sm:$0xf]
    %v1648 = vld [vmem:[#allocation5 + $0x75c] sm:$0xff]
    %v1649 = vld [vmem:[#allocation5 + $0x764] sm:$0xf]
    %v1650 = vld [vmem:[#allocation5 + $0x768] sm:$0xff]
    %v1651 = vld [vmem:[#allocation5 + $0x770] sm:$0xf]
    %v1652 = vld [vmem:[#allocation5 + $0x774] sm:$0xff]
    %v1653 = vld [vmem:[#allocation5 + $0x77c] sm:$0xf]
    %v1654 = vld [vmem:[#allocation5 + $0x780] sm:$0xff]
    %v1655 = vld [vmem:[#allocation5 + $0x788] sm:$0xf]
    %v1656 = vld [vmem:[#allocation5 + $0x78c] sm:$0xff]
    %v1657 = vld [vmem:[#allocation5 + $0x794] sm:$0xf]
    %v1658 = vld [vmem:[#allocation5 + $0x798] sm:$0xff]
    %v1659 = vld [vmem:[#allocation5 + $0x7a0] sm:$0xf]
    %v1660 = vld [vmem:[#allocation5 + $0x7a4] sm:$0xff]
    %v1661 = vld [vmem:[#allocation5 + $0x7ac] sm:$0xf]
    %v1662 = vld [vmem:[#allocation5 + $0x7b0] sm:$0xff]
    %v1663 = vld [vmem:[#allocation5 + $0x7b8] sm:$0xf]
    %v1664 = vld [vmem:[#allocation5 + $0x7bc] sm:$0xff]
    %v1665 = vld [vmem:[#allocation5 + $0x7c4] sm:$0xf]
    %v1666 = vld [vmem:[#allocation5 + $0x7c8] sm:$0xff]
    %v1667 = vld [vmem:[#allocation5 + $0x7d0] sm:$0xf]
    %v1668 = vld [vmem:[#allocation5 + $0x7d4] sm:$0xff]
    %v1669 = vld [vmem:[#allocation5 + $0x7dc] sm:$0xf]
    %v1670 = vld [vmem:[#allocation5 + $0x7e0] sm:$0xff]
    %v1671 = vld [vmem:[#allocation5 + $0x7e8] sm:$0xf]
    %v1672 = vld [vmem:[#allocation5 + $0x7ec] sm:$0xff]
    %v1673 = vld [vmem:[#allocation5 + $0x7f4] sm:$0xf]
    %v1674 = vld [vmem:[#allocation5 + $0x7f8] sm:$0xff]
    %v1675 = vld [vmem:[#allocation5 + $0x800] sm:$0xf]
    %v1676 = vld [vmem:[#allocation5 + $0x804] sm:$0xff]
    %v1677 = vld [vmem:[#allocation5 + $0x80c] sm:$0xf]
    %v1678 = vld [vmem:[#allocation5 + $0x810] sm:$0xff]
    %v1679 = vld [vmem:[#allocation5 + $0x818] sm:$0xf]
    %v1680 = vld [vmem:[#allocation5 + $0x81c] sm:$0xff]
    %v1681 = vld [vmem:[#allocation5 + $0x824] sm:$0xf]
    %v1682 = vld [vmem:[#allocation5 + $0x828] sm:$0xff]
    %v1683 = vld [vmem:[#allocation5 + $0x830] sm:$0xf]
    %v1684 = vld [vmem:[#allocation5 + $0x834] sm:$0xff]
    %v1685 = vld [vmem:[#allocation5 + $0x83c] sm:$0xf]
    %v1686 = vld [vmem:[#allocation5 + $0x840] sm:$0xff]
    %v1687 = vld [vmem:[#allocation5 + $0x848] sm:$0xf]
    %v1688 = vld [vmem:[#allocation5 + $0x84c] sm:$0xff]
    %v1689 = vld [vmem:[#allocation5 + $0x854] sm:$0xf]
    %v1690 = vld [vmem:[#allocation5 + $0x858] sm:$0xff]
    %v1691 = vld [vmem:[#allocation5 + $0x860] sm:$0xf]
    %v1692 = vld [vmem:[#allocation5 + $0x864] sm:$0xff]
    %v1693 = vld [vmem:[#allocation5 + $0x86c] sm:$0xf]
    %v1694 = vld [vmem:[#allocation5 + $0x870] sm:$0xff]
    %v1695 = vld [vmem:[#allocation5 + $0x878] sm:$0xf]
    %v1696 = vld [vmem:[#allocation5 + $0x87c] sm:$0xff]
    %v1697 = vld [vmem:[#allocation5 + $0x884] sm:$0xf]
    %v1698 = vld [vmem:[#allocation5 + $0x888] sm:$0xff]
    %v1699 = vld [vmem:[#allocation5 + $0x890] sm:$0xf]
    %v1700 = vld [vmem:[#allocation5 + $0x894] sm:$0xff]
    %v1701 = vld [vmem:[#allocation5 + $0x89c] sm:$0xf]
    %v1702 = vld [vmem:[#allocation5 + $0x8a0] sm:$0xff]
    %v1703 = vld [vmem:[#allocation5 + $0x8a8] sm:$0xf]
    %v1704 = vld [vmem:[#allocation5 + $0x8ac] sm:$0xff]
    %v1705 = vld [vmem:[#allocation5 + $0x8b4] sm:$0xf]
    %v1706 = vld [vmem:[#allocation5 + $0x8b8] sm:$0xff]
    %v1707 = vld [vmem:[#allocation5 + $0x8c0] sm:$0xf]
    %v1708 = vld [vmem:[#allocation5 + $0x8c4] sm:$0xff]
    %v1709 = vld [vmem:[#allocation5 + $0x8cc] sm:$0xf]
    %v1710 = vld [vmem:[#allocation5 + $0x8d0] sm:$0xff]
    %v1711 = vld [vmem:[#allocation5 + $0x8d8] sm:$0xf]
    %v1712 = vld [vmem:[#allocation5 + $0x8dc] sm:$0xff]
    %v1713 = vld [vmem:[#allocation5 + $0x8e4] sm:$0xf]
    %v1714 = vld [vmem:[#allocation5 + $0x8e8] sm:$0xff]
    %v1715 = vld [vmem:[#allocation5 + $0x8f0] sm:$0xf]
    %v1716 = vld [vmem:[#allocation5 + $0x8f4] sm:$0xff]
    %v1717 = vld [vmem:[#allocation5 + $0x8fc] sm:$0xf]
    %v1910 = vunpack.c.l.b16 %v1526
    %v1911 = vunpack.c.h.b16 %v1526
    %v1912 = vunpack.c.l.b16 %v1527
    %v1913 = vunpack.c.l.b16 %v1528
    %v1914 = vunpack.c.h.b16 %v1528
    %v1915 = vunpack.c.l.b16 %v1529
    %v1916 = vunpack.c.l.b16 %v1530
    %v1917 = vunpack.c.h.b16 %v1530
    %v1918 = vunpack.c.l.b16 %v1531
    %v1919 = vunpack.c.l.b16 %v1532
    %v1920 = vunpack.c.h.b16 %v1532
    %v1921 = vunpack.c.l.b16 %v1533
    %v1922 = vunpack.c.l.b16 %v1534
    %v1923 = vunpack.c.h.b16 %v1534
    %v1924 = vunpack.c.l.b16 %v1535
    %v1925 = vunpack.c.l.b16 %v1536
    %v1926 = vunpack.c.h.b16 %v1536
    %v1927 = vunpack.c.l.b16 %v1537
    %v1928 = vunpack.c.l.b16 %v1538
    %v1929 = vunpack.c.h.b16 %v1538
    %v1930 = vunpack.c.l.b16 %v1539
    %v1931 = vunpack.c.l.b16 %v1540
    %v1932 = vunpack.c.h.b16 %v1540
    %v1933 = vunpack.c.l.b16 %v1541
    %v1934 = vunpack.c.l.b16 %v1542
    %v1935 = vunpack.c.h.b16 %v1542
    %v1936 = vunpack.c.l.b16 %v1543
    %v1937 = vunpack.c.l.b16 %v1544
    %v1938 = vunpack.c.h.b16 %v1544
    %v1939 = vunpack.c.l.b16 %v1545
    %v1940 = vunpack.c.l.b16 %v1546
    %v1941 = vunpack.c.h.b16 %v1546
    %v1942 = vunpack.c.l.b16 %v1547
    %v1943 = vunpack.c.l.b16 %v1548
    %v1944 = vunpack.c.h.b16 %v1548
    %v1945 = vunpack.c.l.b16 %v1549
    %v1946 = vunpack.c.l.b16 %v1550
    %v1947 = vunpack.c.h.b16 %v1550
    %v1948 = vunpack.c.l.b16 %v1551
    %v1949 = vunpack.c.l.b16 %v1552
    %v1950 = vunpack.c.h.b16 %v1552
    %v1951 = vunpack.c.l.b16 %v1553
    %v1952 = vunpack.c.l.b16 %v1554
    %v1953 = vunpack.c.h.b16 %v1554
    %v1954 = vunpack.c.l.b16 %v1555
    %v1955 = vunpack.c.l.b16 %v1556
    %v1956 = vunpack.c.h.b16 %v1556
    %v1957 = vunpack.c.l.b16 %v1557
    %v1958 = vunpack.c.l.b16 %v1558
    %v1959 = vunpack.c.h.b16 %v1558
    %v1960 = vunpack.c.l.b16 %v1559
    %v1961 = vunpack.c.l.b16 %v1560
    %v1962 = vunpack.c.h.b16 %v1560
    %v1963 = vunpack.c.l.b16 %v1561
    %v1964 = vunpack.c.l.b16 %v1562
    %v1965 = vunpack.c.h.b16 %v1562
    %v1966 = vunpack.c.l.b16 %v1563
    %v1967 = vunpack.c.l.b16 %v1564
    %v1968 = vunpack.c.h.b16 %v1564
    %v1969 = vunpack.c.l.b16 %v1565
    %v1970 = vunpack.c.l.b16 %v1566
    %v1971 = vunpack.c.h.b16 %v1566
    %v1972 = vunpack.c.l.b16 %v1567
    %v1973 = vunpack.c.l.b16 %v1568
    %v1974 = vunpack.c.h.b16 %v1568
    %v1975 = vunpack.c.l.b16 %v1569
    %v1976 = vunpack.c.l.b16 %v1570
    %v1977 = vunpack.c.h.b16 %v1570
    %v1978 = vunpack.c.l.b16 %v1571
    %v1979 = vunpack.c.l.b16 %v1572
    %v1980 = vunpack.c.h.b16 %v1572
    %v1981 = vunpack.c.l.b16 %v1573
    %v1982 = vunpack.c.l.b16 %v1574
    %v1983 = vunpack.c.h.b16 %v1574
    %v1984 = vunpack.c.l.b16 %v1575
    %v1985 = vunpack.c.l.b16 %v1576
    %v1986 = vunpack.c.h.b16 %v1576
    %v1987 = vunpack.c.l.b16 %v1577
    %v1988 = vunpack.c.l.b16 %v1578
    %v1989 = vunpack.c.h.b16 %v1578
    %v1990 = vunpack.c.l.b16 %v1579
    %v1991 = vunpack.c.l.b16 %v1580
    %v1992 = vunpack.c.h.b16 %v1580
    %v1993 = vunpack.c.l.b16 %v1581
    %v1994 = vunpack.c.l.b16 %v1582
    %v1995 = vunpack.c.h.b16 %v1582
    %v1996 = vunpack.c.l.b16 %v1583
    %v1997 = vunpack.c.l.b16 %v1584
    %v1998 = vunpack.c.h.b16 %v1584
    %v1999 = vunpack.c.l.b16 %v1585
    %v2000 = vunpack.c.l.b16 %v1586
    %v2001 = vunpack.c.h.b16 %v1586
    %v2002 = vunpack.c.l.b16 %v1587
    %v2003 = vunpack.c.l.b16 %v1588
    %v2004 = vunpack.c.h.b16 %v1588
    %v2005 = vunpack.c.l.b16 %v1589
    %v2006 = vunpack.c.l.b16 %v1590
    %v2007 = vunpack.c.h.b16 %v1590
    %v2008 = vunpack.c.l.b16 %v1591
    %v2009 = vunpack.c.l.b16 %v1592
    %v2010 = vunpack.c.h.b16 %v1592
    %v2011 = vunpack.c.l.b16 %v1593
    %v2012 = vunpack.c.l.b16 %v1594
    %v2013 = vunpack.c.h.b16 %v1594
    %v2014 = vunpack.c.l.b16 %v1595
    %v2015 = vunpack.c.l.b16 %v1596
    %v2016 = vunpack.c.h.b16 %v1596
    %v2017 = vunpack.c.l.b16 %v1597
    %v2018 = vunpack.c.l.b16 %v1598
    %v2019 = vunpack.c.h.b16 %v1598
    %v2020 = vunpack.c.l.b16 %v1599
    %v2021 = vunpack.c.l.b16 %v1600
    %v2022 = vunpack.c.h.b16 %v1600
    %v2023 = vunpack.c.l.b16 %v1601
    %v2024 = vunpack.c.l.b16 %v1602
    %v2025 = vunpack.c.h.b16 %v1602
    %v2026 = vunpack.c.l.b16 %v1603
    %v2027 = vunpack.c.l.b16 %v1604
    %v2028 = vunpack.c.h.b16 %v1604
    %v2029 = vunpack.c.l.b16 %v1605
    %v2030 = vunpack.c.l.b16 %v1606
    %v2031 = vunpack.c.h.b16 %v1606
    %v2032 = vunpack.c.l.b16 %v1607
    %v2033 = vunpack.c.l.b16 %v1608
    %v2034 = vunpack.c.h.b16 %v1608
    %v2035 = vunpack.c.l.b16 %v1609
    %v2036 = vunpack.c.l.b16 %v1610
    %v2037 = vunpack.c.h.b16 %v1610
    %v2038 = vunpack.c.l.b16 %v1611
    %v2039 = vunpack.c.l.b16 %v1612
    %v2040 = vunpack.c.h.b16 %v1612
    %v2041 = vunpack.c.l.b16 %v1613
    %v2042 = vunpack.c.l.b16 %v1614
    %v2043 = vunpack.c.h.b16 %v1614
    %v2044 = vunpack.c.l.b16 %v1615
    %v2045 = vunpack.c.l.b16 %v1616
    %v2046 = vunpack.c.h.b16 %v1616
    %v2047 = vunpack.c.l.b16 %v1617
    %v2048 = vunpack.c.l.b16 %v1618
    %v2049 = vunpack.c.h.b16 %v1618
    %v2050 = vunpack.c.l.b16 %v1619
    %v2051 = vunpack.c.l.b16 %v1620
    %v2052 = vunpack.c.h.b16 %v1620
    %v2053 = vunpack.c.l.b16 %v1621
    %v2054 = vunpack.c.l.b16 %v1622
    %v2055 = vunpack.c.h.b16 %v1622
    %v2056 = vunpack.c.l.b16 %v1623
    %v2057 = vunpack.c.l.b16 %v1624
    %v2058 = vunpack.c.h.b16 %v1624
    %v2059 = vunpack.c.l.b16 %v1625
    %v2060 = vunpack.c.l.b16 %v1626
    %v2061 = vunpack.c.h.b16 %v1626
    %v2062 = vunpack.c.l.b16 %v1627
    %v2063 = vunpack.c.l.b16 %v1628
    %v2064 = vunpack.c.h.b16 %v1628
    %v2065 = vunpack.c.l.b16 %v1629
    %v2066 = vunpack.c.l.b16 %v1630
    %v2067 = vunpack.c.h.b16 %v1630
    %v2068 = vunpack.c.l.b16 %v1631
    %v2069 = vunpack.c.l.b16 %v1632
    %v2070 = vunpack.c.h.b16 %v1632
    %v2071 = vunpack.c.l.b16 %v1633
    %v2072 = vunpack.c.l.b16 %v1634
    %v2073 = vunpack.c.h.b16 %v1634
    %v2074 = vunpack.c.l.b16 %v1635
    %v2075 = vunpack.c.l.b16 %v1636
    %v2076 = vunpack.c.h.b16 %v1636
    %v2077 = vunpack.c.l.b16 %v1637
    %v2078 = vunpack.c.l.b16 %v1638
    %v2079 = vunpack.c.h.b16 %v1638
    %v2080 = vunpack.c.l.b16 %v1639
    %v2081 = vunpack.c.l.b16 %v1640
    %v2082 = vunpack.c.h.b16 %v1640
    %v2083 = vunpack.c.l.b16 %v1641
    %v2084 = vunpack.c.l.b16 %v1642
    %v2085 = vunpack.c.h.b16 %v1642
    %v2086 = vunpack.c.l.b16 %v1643
    %v2087 = vunpack.c.l.b16 %v1644
    %v2088 = vunpack.c.h.b16 %v1644
    %v2089 = vunpack.c.l.b16 %v1645
    %v2090 = vunpack.c.l.b16 %v1646
    %v2091 = vunpack.c.h.b16 %v1646
    %v2092 = vunpack.c.l.b16 %v1647
    %v2093 = vunpack.c.l.b16 %v1648
    %v2094 = vunpack.c.h.b16 %v1648
    %v2095 = vunpack.c.l.b16 %v1649
    %v2096 = vunpack.c.l.b16 %v1650
    %v2097 = vunpack.c.h.b16 %v1650
    %v2098 = vunpack.c.l.b16 %v1651
    %v2099 = vunpack.c.l.b16 %v1652
    %v2100 = vunpack.c.h.b16 %v1652
    %v2101 = vunpack.c.l.b16 %v1653
    %v2102 = vunpack.c.l.b16 %v1654
    %v2103 = vunpack.c.h.b16 %v1654
    %v2104 = vunpack.c.l.b16 %v1655
    %v2105 = vunpack.c.l.b16 %v1656
    %v2106 = vunpack.c.h.b16 %v1656
    %v2107 = vunpack.c.l.b16 %v1657
    %v2108 = vunpack.c.l.b16 %v1658
    %v2109 = vunpack.c.h.b16 %v1658
    %v2110 = vunpack.c.l.b16 %v1659
    %v2111 = vunpack.c.l.b16 %v1660
    %v2112 = vunpack.c.h.b16 %v1660
    %v2113 = vunpack.c.l.b16 %v1661
    %v2114 = vunpack.c.l.b16 %v1662
    %v2115 = vunpack.c.h.b16 %v1662
    %v2116 = vunpack.c.l.b16 %v1663
    %v2117 = vunpack.c.l.b16 %v1664
    %v2118 = vunpack.c.h.b16 %v1664
    %v2119 = vunpack.c.l.b16 %v1665
    %v2120 = vunpack.c.l.b16 %v1666
    %v2121 = vunpack.c.h.b16 %v1666
    %v2122 = vunpack.c.l.b16 %v1667
    %v2123 = vunpack.c.l.b16 %v1668
    %v2124 = vunpack.c.h.b16 %v1668
    %v2125 = vunpack.c.l.b16 %v1669
    %v2126 = vunpack.c.l.b16 %v1670
    %v2127 = vunpack.c.h.b16 %v1670
    %v2128 = vunpack.c.l.b16 %v1671
    %v2129 = vunpack.c.l.b16 %v1672
    %v2130 = vunpack.c.h.b16 %v1672
    %v2131 = vunpack.c.l.b16 %v1673
    %v2132 = vunpack.c.l.b16 %v1674
    %v2133 = vunpack.c.h.b16 %v1674
    %v2134 = vunpack.c.l.b16 %v1675
    %v2135 = vunpack.c.l.b16 %v1676
    %v2136 = vunpack.c.h.b16 %v1676
    %v2137 = vunpack.c.l.b16 %v1677
    %v2138 = vunpack.c.l.b16 %v1678
    %v2139 = vunpack.c.h.b16 %v1678
    %v2140 = vunpack.c.l.b16 %v1679
    %v2141 = vunpack.c.l.b16 %v1680
    %v2142 = vunpack.c.h.b16 %v1680
    %v2143 = vunpack.c.l.b16 %v1681
    %v2144 = vunpack.c.l.b16 %v1682
    %v2145 = vunpack.c.h.b16 %v1682
    %v2146 = vunpack.c.l.b16 %v1683
    %v2147 = vunpack.c.l.b16 %v1684
    %v2148 = vunpack.c.h.b16 %v1684
    %v2149 = vunpack.c.l.b16 %v1685
    %v2150 = vunpack.c.l.b16 %v1686
    %v2151 = vunpack.c.h.b16 %v1686
    %v2152 = vunpack.c.l.b16 %v1687
    %v2153 = vunpack.c.l.b16 %v1688
    %v2154 = vunpack.c.h.b16 %v1688
    %v2155 = vunpack.c.l.b16 %v1689
    %v2156 = vunpack.c.l.b16 %v1690
    %v2157 = vunpack.c.h.b16 %v1690
    %v2158 = vunpack.c.l.b16 %v1691
    %v2159 = vunpack.c.l.b16 %v1692
    %v2160 = vunpack.c.h.b16 %v1692
    %v2161 = vunpack.c.l.b16 %v1693
    %v2162 = vunpack.c.l.b16 %v1694
    %v2163 = vunpack.c.h.b16 %v1694
    %v2164 = vunpack.c.l.b16 %v1695
    %v2165 = vunpack.c.l.b16 %v1696
    %v2166 = vunpack.c.h.b16 %v1696
    %v2167 = vunpack.c.l.b16 %v1697
    %v2168 = vunpack.c.l.b16 %v1698
    %v2169 = vunpack.c.h.b16 %v1698
    %v2170 = vunpack.c.l.b16 %v1699
    %v2171 = vunpack.c.l.b16 %v1700
    %v2172 = vunpack.c.h.b16 %v1700
    %v2173 = vunpack.c.l.b16 %v1701
    %v2174 = vunpack.c.l.b16 %v1702
    %v2175 = vunpack.c.h.b16 %v1702
    %v2176 = vunpack.c.l.b16 %v1703
    %v2177 = vunpack.c.l.b16 %v1704
    %v2178 = vunpack.c.h.b16 %v1704
    %v2179 = vunpack.c.l.b16 %v1705
    %v2180 = vunpack.c.l.b16 %v1706
    %v2181 = vunpack.c.h.b16 %v1706
    %v2182 = vunpack.c.l.b16 %v1707
    %v2183 = vunpack.c.l.b16 %v1708
    %v2184 = vunpack.c.h.b16 %v1708
    %v2185 = vunpack.c.l.b16 %v1709
    %v2186 = vunpack.c.l.b16 %v1710
    %v2187 = vunpack.c.h.b16 %v1710
    %v2188 = vunpack.c.l.b16 %v1711
    %v2189 = vunpack.c.l.b16 %v1712
    %v2190 = vunpack.c.h.b16 %v1712
    %v2191 = vunpack.c.l.b16 %v1713
    %v2192 = vunpack.c.l.b16 %v1714
    %v2193 = vunpack.c.h.b16 %v1714
    %v2194 = vunpack.c.l.b16 %v1715
    %v2195 = vunpack.c.l.b16 %v1716
    %v2196 = vunpack.c.h.b16 %v1716
    %v2197 = vunpack.c.l.b16 %v1717
    %v2198 = vpack.c.b16 %v1913, %v1910
    %v2199 = vpack.c.b16 %v1914, %v1911
    %v2200 = vpack.c.b16 %v1915, %v1912
    %v2201 = vpack.c.b16 %v1919, %v1916
    %v2202 = vpack.c.b16 %v1920, %v1917
    %v2203 = vpack.c.b16 %v1921, %v1918
    %v2204 = vpack.c.b16 %v1925, %v1922
    %v2205 = vpack.c.b16 %v1926, %v1923
    %v2206 = vpack.c.b16 %v1927, %v1924
    %v2207 = vpack.c.b16 %v1931, %v1928
    %v2208 = vpack.c.b16 %v1932, %v1929
    %v2209 = vpack.c.b16 %v1933, %v1930
    %v2210 = vpack.c.b16 %v1937, %v1934
    %v2211 = vpack.c.b16 %v1938, %v1935
    %v2212 = vpack.c.b16 %v1939, %v1936
    %v2213 = vpack.c.b16 %v1943, %v1940
    %v2214 = vpack.c.b16 %v1944, %v1941
    %v2215 = vpack.c.b16 %v1945, %v1942
    %v2216 = vpack.c.b16 %v1949, %v1946
    %v2217 = vpack.c.b16 %v1950, %v1947
    %v2218 = vpack.c.b16 %v1951, %v1948
    %v2219 = vpack.c.b16 %v1955, %v1952
    %v2220 = vpack.c.b16 %v1956, %v1953
    %v2221 = vpack.c.b16 %v1957, %v1954
    %v2222 = vpack.c.b16 %v1961, %v1958
    %v2223 = vpack.c.b16 %v1962, %v1959
    %v2224 = vpack.c.b16 %v1963, %v1960
    %v2225 = vpack.c.b16 %v1967, %v1964
    %v2226 = vpack.c.b16 %v1968, %v1965
    %v2227 = vpack.c.b16 %v1969, %v1966
    %v2228 = vpack.c.b16 %v1973, %v1970
    %v2229 = vpack.c.b16 %v1974, %v1971
    %v2230 = vpack.c.b16 %v1975, %v1972
    %v2231 = vpack.c.b16 %v1979, %v1976
    %v2232 = vpack.c.b16 %v1980, %v1977
    %v2233 = vpack.c.b16 %v1981, %v1978
    %v2234 = vpack.c.b16 %v1985, %v1982
    %v2235 = vpack.c.b16 %v1986, %v1983
    %v2236 = vpack.c.b16 %v1987, %v1984
    %v2237 = vpack.c.b16 %v1991, %v1988
    %v2238 = vpack.c.b16 %v1992, %v1989
    %v2239 = vpack.c.b16 %v1993, %v1990
    %v2240 = vpack.c.b16 %v1997, %v1994
    %v2241 = vpack.c.b16 %v1998, %v1995
    %v2242 = vpack.c.b16 %v1999, %v1996
    %v2243 = vpack.c.b16 %v2003, %v2000
    %v2244 = vpack.c.b16 %v2004, %v2001
    %v2245 = vpack.c.b16 %v2005, %v2002
    %v2246 = vpack.c.b16 %v2009, %v2006
    %v2247 = vpack.c.b16 %v2010, %v2007
    %v2248 = vpack.c.b16 %v2011, %v2008
    %v2249 = vpack.c.b16 %v2015, %v2012
    %v2250 = vpack.c.b16 %v2016, %v2013
    %v2251 = vpack.c.b16 %v2017, %v2014
    %v2252 = vpack.c.b16 %v2021, %v2018
    %v2253 = vpack.c.b16 %v2022, %v2019
    %v2254 = vpack.c.b16 %v2023, %v2020
    %v2255 = vpack.c.b16 %v2027, %v2024
    %v2256 = vpack.c.b16 %v2028, %v2025
    %v2257 = vpack.c.b16 %v2029, %v2026
    %v2258 = vpack.c.b16 %v2033, %v2030
    %v2259 = vpack.c.b16 %v2034, %v2031
    %v2260 = vpack.c.b16 %v2035, %v2032
    %v2261 = vpack.c.b16 %v2039, %v2036
    %v2262 = vpack.c.b16 %v2040, %v2037
    %v2263 = vpack.c.b16 %v2041, %v2038
    %v2264 = vpack.c.b16 %v2045, %v2042
    %v2265 = vpack.c.b16 %v2046, %v2043
    %v2266 = vpack.c.b16 %v2047, %v2044
    %v2267 = vpack.c.b16 %v2051, %v2048
    %v2268 = vpack.c.b16 %v2052, %v2049
    %v2269 = vpack.c.b16 %v2053, %v2050
    %v2270 = vpack.c.b16 %v2057, %v2054
    %v2271 = vpack.c.b16 %v2058, %v2055
    %v2272 = vpack.c.b16 %v2059, %v2056
    %v2273 = vpack.c.b16 %v2063, %v2060
    %v2274 = vpack.c.b16 %v2064, %v2061
    %v2275 = vpack.c.b16 %v2065, %v2062
    %v2276 = vpack.c.b16 %v2069, %v2066
    %v2277 = vpack.c.b16 %v2070, %v2067
    %v2278 = vpack.c.b16 %v2071, %v2068
    %v2279 = vpack.c.b16 %v2075, %v2072
    %v2280 = vpack.c.b16 %v2076, %v2073
    %v2281 = vpack.c.b16 %v2077, %v2074
    %v2282 = vpack.c.b16 %v2081, %v2078
    %v2283 = vpack.c.b16 %v2082, %v2079
    %v2284 = vpack.c.b16 %v2083, %v2080
    %v2285 = vpack.c.b16 %v2087, %v2084
    %v2286 = vpack.c.b16 %v2088, %v2085
    %v2287 = vpack.c.b16 %v2089, %v2086
    %v2288 = vpack.c.b16 %v2093, %v2090
    %v2289 = vpack.c.b16 %v2094, %v2091
    %v2290 = vpack.c.b16 %v2095, %v2092
    %v2291 = vpack.c.b16 %v2099, %v2096
    %v2292 = vpack.c.b16 %v2100, %v2097
    %v2293 = vpack.c.b16 %v2101, %v2098
    %v2294 = vpack.c.b16 %v2105, %v2102
    %v2295 = vpack.c.b16 %v2106, %v2103
    %v2296 = vpack.c.b16 %v2107, %v2104
    %v2297 = vpack.c.b16 %v2111, %v2108
    %v2298 = vpack.c.b16 %v2112, %v2109
    %v2299 = vpack.c.b16 %v2113, %v2110
    %v2300 = vpack.c.b16 %v2117, %v2114
    %v2301 = vpack.c.b16 %v2118, %v2115
    %v2302 = vpack.c.b16 %v2119, %v2116
    %v2303 = vpack.c.b16 %v2123, %v2120
    %v2304 = vpack.c.b16 %v2124, %v2121
    %v2305 = vpack.c.b16 %v2125, %v2122
    %v2306 = vpack.c.b16 %v2129, %v2126
    %v2307 = vpack.c.b16 %v2130, %v2127
    %v2308 = vpack.c.b16 %v2131, %v2128
    %v2309 = vpack.c.b16 %v2135, %v2132
    %v2310 = vpack.c.b16 %v2136, %v2133
    %v2311 = vpack.c.b16 %v2137, %v2134
    %v2312 = vpack.c.b16 %v2141, %v2138
    %v2313 = vpack.c.b16 %v2142, %v2139
    %v2314 = vpack.c.b16 %v2143, %v2140
    %v2315 = vpack.c.b16 %v2147, %v2144
    %v2316 = vpack.c.b16 %v2148, %v2145
    %v2317 = vpack.c.b16 %v2149, %v2146
    %v2318 = vpack.c.b16 %v2153, %v2150
    %v2319 = vpack.c.b16 %v2154, %v2151
    %v2320 = vpack.c.b16 %v2155, %v2152
    %v2321 = vpack.c.b16 %v2159, %v2156
    %v2322 = vpack.c.b16 %v2160, %v2157
    %v2323 = vpack.c.b16 %v2161, %v2158
    %v2324 = vpack.c.b16 %v2165, %v2162
    %v2325 = vpack.c.b16 %v2166, %v2163
    %v2326 = vpack.c.b16 %v2167, %v2164
    %v2327 = vpack.c.b16 %v2171, %v2168
    %v2328 = vpack.c.b16 %v2172, %v2169
    %v2329 = vpack.c.b16 %v2173, %v2170
    %v2330 = vpack.c.b16 %v2177, %v2174
    %v2331 = vpack.c.b16 %v2178, %v2175
    %v2332 = vpack.c.b16 %v2179, %v2176
    %v2333 = vpack.c.b16 %v2183, %v2180
    %v2334 = vpack.c.b16 %v2184, %v2181
    %v2335 = vpack.c.b16 %v2185, %v2182
    %v2336 = vpack.c.b16 %v2189, %v2186
    %v2337 = vpack.c.b16 %v2190, %v2187
    %v2338 = vpack.c.b16 %v2191, %v2188
    %v2339 = vpack.c.b16 %v2195, %v2192
    %v2340 = vpack.c.b16 %v2196, %v2193
    %v2341 = vpack.c.b16 %v2197, %v2194
    %2486 = vmatprep.subr.bf16.mxu0 %v2199
    %2487 = vmatpush1.bf16.msra.mxu0 %v2198
    %2488 = vmatprep.subr.bf16.mxu0 %v2202
    %2489 = vmatpush1.bf16.msra.mxu0 %v2201
    %2490 = vmatprep.subr.bf16.mxu0 %v2205
    %2491 = vmatpush1.bf16.msra.mxu0 %v2204
    %2492 = vmatprep.subr.bf16.mxu0 %v2208
    %2493 = vmatpush1.bf16.msra.mxu0 %v2207
    %2494 = vmatprep.subr.bf16.mxu0 %v2211
    %2495 = vmatpush1.bf16.msra.mxu0 %v2210
    %2496 = vmatprep.subr.bf16.mxu0 %v2214
    %2497 = vmatpush1.bf16.msra.mxu0 %v2213
    %2498 = vmatprep.subr.bf16.mxu0 %v2217
    %2499 = vmatpush1.bf16.msra.mxu0 %v2216
    %2500 = vmatprep.subr.bf16.mxu0 %v2220
    %2501 = vmatpush1.bf16.msra.mxu0 %v2219
    %2502 = vmatprep.subr.bf16.mxu0 %v2223
    %2503 = vmatpush1.bf16.msra.mxu0 %v2222
    %2504 = vmatprep.subr.bf16.mxu0 %v2226
    %2505 = vmatpush1.bf16.msra.mxu0 %v2225
    %2506 = vmatprep.subr.bf16.mxu0 %v2229
    %2507 = vmatpush1.bf16.msra.mxu0 %v2228
    %2508 = vmatprep.subr.bf16.mxu0 %v2232
    %2509 = vmatpush1.bf16.msra.mxu0 %v2231
    %2510 = vmatprep.subr.bf16.mxu0 %v2235
    %2511 = vmatpush1.bf16.msra.mxu0 %v2234
    %2512 = vmatprep.subr.bf16.mxu0 %v2238
    %2513 = vmatpush1.bf16.msra.mxu0 %v2237
    %2514 = vmatprep.subr.bf16.mxu0 %v2241
    %2515 = vmatpush1.bf16.msra.mxu0 %v2240
    %2516 = vmatprep.subr.bf16.mxu0 %v2244
    %2517 = vmatpush1.bf16.msra.mxu0 %v2243
    %2518 = vmatprep.mubr.bf16.mxu0 %v429
    %2519 = vmatmul.mubr.bf16.gmra.mrb[0].mxu0 %v428
    %v2520 = vpop.f32.mrb[0].mxu0
    %v2521 = vadd.f32 0.0, %v2520
    %v2522 = vpop.f32.mrb[0].mxu0
    %v2523 = vadd.f32 0.0, %v2522
    %v2524 = vpop.f32.mrb[0].mxu0
    %v2525 = vadd.f32 0.0, %v2524
    %v2526 = vpop.f32.mrb[0].mxu0
    %v2527 = vadd.f32 0.0, %v2526
    %2528 = vmatprep.mubr.bf16.mxu0 %v435
    %2529 = vmatmul.mubr.bf16.gmra.mrb[0].mxu0 %v434
    %v2530 = vpop.f32.mrb[0].mxu0
    %v2531 = vadd.f32 0.0, %v2530
    %v2532 = vpop.f32.mrb[0].mxu0
    %v2533 = vadd.f32 0.0, %v2532
    %v2534 = vpop.f32.mrb[0].mxu0
    %v2535 = vadd.f32 0.0, %v2534
    %v2536 = vpop.f32.mrb[0].mxu0
    %v2537 = vadd.f32 0.0, %v2536
    %2538 = vdwg.mxu0
    %2539 = vmatprep.subr.bf16.mxu0 %v2247
    %2540 = vmatpush1.bf16.msra.mxu0 %v2246
    %2541 = vmatprep.subr.bf16.mxu0 %v2250
    %2542 = vmatpush1.bf16.msra.mxu0 %v2249
    %2543 = vmatprep.subr.bf16.mxu0 %v2253
    %2544 = vmatpush1.bf16.msra.mxu0 %v2252
    %2545 = vmatprep.subr.bf16.mxu0 %v2256
    %2546 = vmatpush1.bf16.msra.mxu0 %v2255
    %2547 = vmatprep.subr.bf16.mxu0 %v2259
    %2548 = vmatpush1.bf16.msra.mxu0 %v2258
    %2549 = vmatprep.subr.bf16.mxu0 %v2262
    %2550 = vmatpush1.bf16.msra.mxu0 %v2261
    %2551 = vmatprep.subr.bf16.mxu0 %v2265
    %2552 = vmatpush1.bf16.msra.mxu0 %v2264
    %2553 = vmatprep.subr.bf16.mxu0 %v2268
    %2554 = vmatpush1.bf16.msra.mxu0 %v2267
    %2555 = vmatprep.subr.bf16.mxu0 %v2271
    %2556 = vmatpush1.bf16.msra.mxu0 %v2270
    %2557 = vmatprep.subr.bf16.mxu0 %v2274
    %2558 = vmatpush1.bf16.msra.mxu0 %v2273
    %2559 = vmatprep.subr.bf16.mxu0 %v2277
    %2560 = vmatpush1.bf16.msra.mxu0 %v2276
    %2561 = vmatprep.subr.bf16.mxu0 %v2280
    %2562 = vmatpush1.bf16.msra.mxu0 %v2279
    %2563 = vmatprep.subr.bf16.mxu0 %v2283
    %2564 = vmatpush1.bf16.msra.mxu0 %v2282
    %2565 = vmatprep.subr.bf16.mxu0 %v2286
    %2566 = vmatpush1.bf16.msra.mxu0 %v2285
    %2567 = vmatprep.subr.bf16.mxu0 %v2289
    %2568 = vmatpush1.bf16.msra.mxu0 %v2288
    %2569 = vmatprep.subr.bf16.mxu0 %v2292
    %2570 = vmatpush1.bf16.msra.mxu0 %v2291
    %2571 = vmatprep.mubr.bf16.mxu0 %v431
    %2572 = vmatmul.mubr.bf16.gmra.mrb[0].mxu0 %v430
    %v2573 = vpop.f32.mrb[0].mxu0
    %v2574 = vadd.f32 %v2521, %v2573
    %v2575 = vpop.f32.mrb[0].mxu0
    %v2576 = vadd.f32 %v2523, %v2575
    %v2577 = vpop.f32.mrb[0].mxu0
    %v2578 = vadd.f32 %v2525, %v2577
    %v2579 = vpop.f32.mrb[0].mxu0
    %v2580 = vadd.f32 %v2527, %v2579
    %2581 = vmatprep.mubr.bf16.mxu0 %v437
    %2582 = vmatmul.mubr.bf16.gmra.mrb[0].mxu0 %v436
    %v2583 = vpop.f32.mrb[0].mxu0
    %v2584 = vadd.f32 %v2531, %v2583
    %v2585 = vpop.f32.mrb[0].mxu0
    %v2586 = vadd.f32 %v2533, %v2585
    %v2587 = vpop.f32.mrb[0].mxu0
    %v2588 = vadd.f32 %v2535, %v2587
    %v2589 = vpop.f32.mrb[0].mxu0
    %v2590 = vadd.f32 %v2537, %v2589
    %2591 = vdwg.mxu0
    %2592 = vmatprep.subr.bf16.mxu0 %v2295
    %2593 = vmatpush1.bf16.msra.mxu0 %v2294
    %2594 = vmatprep.subr.bf16.mxu0 %v2298
    %2595 = vmatpush1.bf16.msra.mxu0 %v2297
    %2596 = vmatprep.subr.bf16.mxu0 %v2301
    %2597 = vmatpush1.bf16.msra.mxu0 %v2300
    %2598 = vmatprep.subr.bf16.mxu0 %v2304
    %2599 = vmatpush1.bf16.msra.mxu0 %v2303
    %2600 = vmatprep.subr.bf16.mxu0 %v2307
    %2601 = vmatpush1.bf16.msra.mxu0 %v2306
    %2602 = vmatprep.subr.bf16.mxu0 %v2310
    %2603 = vmatpush1.bf16.msra.mxu0 %v2309
    %2604 = vmatprep.subr.bf16.mxu0 %v2313
    %2605 = vmatpush1.bf16.msra.mxu0 %v2312
    %2606 = vmatprep.subr.bf16.mxu0 %v2316
    %2607 = vmatpush1.bf16.msra.mxu0 %v2315
    %2608 = vmatprep.subr.bf16.mxu0 %v2319
    %2609 = vmatpush1.bf16.msra.mxu0 %v2318
    %2610 = vmatprep.subr.bf16.mxu0 %v2322
    %2611 = vmatpush1.bf16.msra.mxu0 %v2321
    %2612 = vmatprep.subr.bf16.mxu0 %v2325
    %2613 = vmatpush1.bf16.msra.mxu0 %v2324
    %2614 = vmatprep.subr.bf16.mxu0 %v2328
    %2615 = vmatpush1.bf16.msra.mxu0 %v2327
    %2616 = vmatprep.subr.bf16.mxu0 %v2331
    %2617 = vmatpush1.bf16.msra.mxu0 %v2330
    %2618 = vmatprep.subr.bf16.mxu0 %v2334
    %2619 = vmatpush1.bf16.msra.mxu0 %v2333
    %2620 = vmatprep.subr.bf16.mxu0 %v2337
    %2621 = vmatpush1.bf16.msra.mxu0 %v2336
    %2622 = vmatprep.subr.bf16.mxu0 %v2340
    %2623 = vmatpush1.bf16.msra.mxu0 %v2339
    %2624 = vmatprep.mubr.bf16.mxu0 %v433
    %2625 = vmatmul.mubr.bf16.gmra.mrb[0].mxu0 %v432
    %v2626 = vpop.f32.mrb[0].mxu0
    %v2627 = vadd.f32 %v2574, %v2626
    %v2628 = vpop.f32.mrb[0].mxu0
    %v2629 = vadd.f32 %v2576, %v2628
    %v2630 = vpop.f32.mrb[0].mxu0
    %v2631 = vadd.f32 %v2578, %v2630
    %v2632 = vpop.f32.mrb[0].mxu0
    %v2633 = vadd.f32 %v2580, %v2632
    %2634 = vmatprep.mubr.bf16.mxu0 %v439
    %2635 = vmatmul.mubr.bf16.gmra.mrb[0].mxu0 %v438
    %v2636 = vpop.f32.mrb[0].mxu0
    %v2637 = vadd.f32 %v2584, %v2636
    %v2638 = vpop.f32.mrb[0].mxu0
    %v2639 = vadd.f32 %v2586, %v2638
    %v2640 = vpop.f32.mrb[0].mxu0
    %v2641 = vadd.f32 %v2588, %v2640
    %v2642 = vpop.f32.mrb[0].mxu0
    %v2643 = vadd.f32 %v2590, %v2642
    %2644 = vdwg.mxu0
    %2645 = vmatprep.subr.bf16.mxu0 0
    %2646 = vmatpush1.bf16.msra.mxu0 %v2200
    %2647 = vmatprep.subr.bf16.mxu0 0
    %2648 = vmatpush1.bf16.msra.mxu0 %v2203
    %2649 = vmatprep.subr.bf16.mxu0 0
    %2650 = vmatpush1.bf16.msra.mxu0 %v2206
    %2651 = vmatprep.subr.bf16.mxu0 0
    %2652 = vmatpush1.bf16.msra.mxu0 %v2209
    %2653 = vmatprep.subr.bf16.mxu0 0
    %2654 = vmatpush1.bf16.msra.mxu0 %v2212
    %2655 = vmatprep.subr.bf16.mxu0 0
    %2656 = vmatpush1.bf16.msra.mxu0 %v2215
    %2657 = vmatprep.subr.bf16.mxu0 0
    %2658 = vmatpush1.bf16.msra.mxu0 %v2218
    %2659 = vmatprep.subr.bf16.mxu0 0
    %2660 = vmatpush1.bf16.msra.mxu0 %v2221
    %2661 = vmatprep.subr.bf16.mxu0 0
    %2662 = vmatpush1.bf16.msra.mxu0 %v2224
    %2663 = vmatprep.subr.bf16.mxu0 0
    %2664 = vmatpush1.bf16.msra.mxu0 %v2227
    %2665 = vmatprep.subr.bf16.mxu0 0
    %2666 = vmatpush1.bf16.msra.mxu0 %v2230
    %2667 = vmatprep.subr.bf16.mxu0 0
    %2668 = vmatpush1.bf16.msra.mxu0 %v2233
    %2669 = vmatprep.subr.bf16.mxu0 0
    %2670 = vmatpush1.bf16.msra.mxu0 %v2236
    %2671 = vmatprep.subr.bf16.mxu0 0
    %2672 = vmatpush1.bf16.msra.mxu0 %v2239
    %2673 = vmatprep.subr.bf16.mxu0 0
    %2674 = vmatpush1.bf16.msra.mxu0 %v2242
    %2675 = vmatprep.subr.bf16.mxu0 0
    %2676 = vmatpush1.bf16.msra.mxu0 %v2245
    %2677 = vmatprep.mubr.bf16.mxu0 %v429
    %2678 = vmatmul.mubr.bf16.gmra.mrb[0].mxu0 %v428
    %v2679 = vpop.f32.mrb[0].mxu0
    %v2680 = vadd.f32 0.0, %v2679
    %v2681 = vpop.f32.mrb[0].mxu0
    %v2682 = vpop.f32.mrb[0].mxu0
    %v2683 = vadd.f32 0.0, %v2682
    %v2684 = vpop.f32.mrb[0].mxu0
    %2685 = vmatprep.mubr.bf16.mxu0 %v435
    %2686 = vmatmul.mubr.bf16.gmra.mrb[0].mxu0 %v434
    %v2687 = vpop.f32.mrb[0].mxu0
    %v2688 = vadd.f32 0.0, %v2687
    %v2689 = vpop.f32.mrb[0].mxu0
    %v2690 = vpop.f32.mrb[0].mxu0
    %v2691 = vadd.f32 0.0, %v2690
    %v2692 = vpop.f32.mrb[0].mxu0
    %2693 = vdwg.mxu0
    %2694 = vmatprep.subr.bf16.mxu0 0
    %2695 = vmatpush1.bf16.msra.mxu0 %v2248
    %2696 = vmatprep.subr.bf16.mxu0 0
    %2697 = vmatpush1.bf16.msra.mxu0 %v2251
    %2698 = vmatprep.subr.bf16.mxu0 0
    %2699 = vmatpush1.bf16.msra.mxu0 %v2254
    %2700 = vmatprep.subr.bf16.mxu0 0
    %2701 = vmatpush1.bf16.msra.mxu0 %v2257
    %2702 = vmatprep.subr.bf16.mxu0 0
    %2703 = vmatpush1.bf16.msra.mxu0 %v2260
    %2704 = vmatprep.subr.bf16.mxu0 0
    %2705 = vmatpush1.bf16.msra.mxu0 %v2263
    %2706 = vmatprep.subr.bf16.mxu0 0
    %2707 = vmatpush1.bf16.msra.mxu0 %v2266
    %2708 = vmatprep.subr.bf16.mxu0 0
    %2709 = vmatpush1.bf16.msra.mxu0 %v2269
    %2710 = vmatprep.subr.bf16.mxu0 0
    %2711 = vmatpush1.bf16.msra.mxu0 %v2272
    %2712 = vmatprep.subr.bf16.mxu0 0
    %2713 = vmatpush1.bf16.msra.mxu0 %v2275
    %2714 = vmatprep.subr.bf16.mxu0 0
    %2715 = vmatpush1.bf16.msra.mxu0 %v2278
    %2716 = vmatprep.subr.bf16.mxu0 0
    %2717 = vmatpush1.bf16.msra.mxu0 %v2281
    %2718 = vmatprep.subr.bf16.mxu0 0
    %2719 = vmatpush1.bf16.msra.mxu0 %v2284
    %2720 = vmatprep.subr.bf16.mxu0 0
    %2721 = vmatpush1.bf16.msra.mxu0 %v2287
    %2722 = vmatprep.subr.bf16.mxu0 0
    %2723 = vmatpush1.bf16.msra.mxu0 %v2290
    %2724 = vmatprep.subr.bf16.mxu0 0
    %2725 = vmatpush1.bf16.msra.mxu0 %v2293
    %2726 = vmatprep.mubr.bf16.mxu0 %v431
    %2727 = vmatmul.mubr.bf16.gmra.mrb[0].mxu0 %v430
    %v2728 = vpop.f32.mrb[0].mxu0
    %v2729 = vadd.f32 %v2680, %v2728
    %v2730 = vpop.f32.mrb[0].mxu0
    %v2731 = vpop.f32.mrb[0].mxu0
    %v2732 = vadd.f32 %v2683, %v2731
    %v2733 = vpop.f32.mrb[0].mxu0
    %2734 = vmatprep.mubr.bf16.mxu0 %v437
    %2735 = vmatmul.mubr.bf16.gmra.mrb[0].mxu0 %v436
    %v2736 = vpop.f32.mrb[0].mxu0
    %v2737 = vadd.f32 %v2688, %v2736
    %v2738 = vpop.f32.mrb[0].mxu0
    %v2739 = vpop.f32.mrb[0].mxu0
    %v2740 = vadd.f32 %v2691, %v2739
    %v2741 = vpop.f32.mrb[0].mxu0
    %2742 = vdwg.mxu0
    %2743 = vmatprep.subr.bf16.mxu0 0
    %2744 = vmatpush1.bf16.msra.mxu0 %v2296
    %2745 = vmatprep.subr.bf16.mxu0 0
    %2746 = vmatpush1.bf16.msra.mxu0 %v2299
    %2747 = vmatprep.subr.bf16.mxu0 0
    %2748 = vmatpush1.bf16.msra.mxu0 %v2302
    %2749 = vmatprep.subr.bf16.mxu0 0
    %2750 = vmatpush1.bf16.msra.mxu0 %v2305
    %2751 = vmatprep.subr.bf16.mxu0 0
    %2752 = vmatpush1.bf16.msra.mxu0 %v2308
    %2753 = vmatprep.subr.bf16.mxu0 0
    %2754 = vmatpush1.bf16.msra.mxu0 %v2311
    %2755 = vmatprep.subr.bf16.mxu0 0
    %2756 = vmatpush1.bf16.msra.mxu0 %v2314
    %2757 = vmatprep.subr.bf16.mxu0 0
    %2758 = vmatpush1.bf16.msra.mxu0 %v2317
    %2759 = vmatprep.subr.bf16.mxu0 0
    %2760 = vmatpush1.bf16.msra.mxu0 %v2320
    %2761 = vmatprep.subr.bf16.mxu0 0
    %2762 = vmatpush1.bf16.msra.mxu0 %v2323
    %2763 = vmatprep.subr.bf16.mxu0 0
    %2764 = vmatpush1.bf16.msra.mxu0 %v2326
    %2765 = vmatprep.subr.bf16.mxu0 0
    %2766 = vmatpush1.bf16.msra.mxu0 %v2329
    %2767 = vmatprep.subr.bf16.mxu0 0
    %2768 = vmatpush1.bf16.msra.mxu0 %v2332
    %2769 = vmatprep.subr.bf16.mxu0 0
    %2770 = vmatpush1.bf16.msra.mxu0 %v2335
    %2771 = vmatprep.subr.bf16.mxu0 0
    %2772 = vmatpush1.bf16.msra.mxu0 %v2338
    %2773 = vmatprep.subr.bf16.mxu0 0
    %2774 = vmatpush1.bf16.msra.mxu0 %v2341
    %2775 = vmatprep.mubr.bf16.mxu0 %v433
    %2776 = vmatmul.mubr.bf16.gmra.mrb[0].mxu0 %v432
    %v2777 = vpop.f32.mrb[0].mxu0
    %v2778 = vadd.f32 %v2729, %v2777
    %v2779 = vpop.f32.mrb[0].mxu0
    %v2780 = vpop.f32.mrb[0].mxu0
    %v2781 = vadd.f32 %v2732, %v2780
    %v2782 = vpop.f32.mrb[0].mxu0
    %2783 = vmatprep.mubr.bf16.mxu0 %v439
    %2784 = vmatmul.mubr.bf16.gmra.mrb[0].mxu0 %v438
    %v2785 = vpop.f32.mrb[0].mxu0
    %v2786 = vadd.f32 %v2737, %v2785
    %v2787 = vpop.f32.mrb[0].mxu0
    %v2788 = vpop.f32.mrb[0].mxu0
    %v2789 = vadd.f32 %v2740, %v2788
    %v2790 = vpop.f32.mrb[0].mxu0
    %2791 = vdwg.mxu0
    %v2792 = vrot.slane %v1361, 7
    %v2793 = vrot.slane %v1363, 7
    %v2794 = vrot.slane %v1512, 7
    %v2795 = vrot.slane %v1365, 7
    %v2796 = vrot.slane %v1367, 7
    %v2797 = vrot.slane %v1515, 7
    %v2798 = vrot.slane %v1371, 7
    %v2799 = vrot.slane %v1373, 7
    %v2800 = vrot.slane %v1520, 7
    %v2801 = vrot.slane %v1375, 7
    %v2802 = vrot.slane %v1377, 7
    %v2803 = vrot.slane %v1523, 7
    %vm2804 = vcmp.lt.s32.totalorder %v180, 1
    %v2805 = vsel %vm2804, %v2798, %v2801
    %v2806 = vsel %vm2804, %v2799, %v2802
    %v2807 = vsel %vm2804, %v2800, %v2803
    %v2808 = vsel %vm2804, %v2795, %v2798
    %v2809 = vsel %vm2804, %v2796, %v2799
    %v2810 = vsel %vm2804, %v2797, %v2800
    %v2811 = vsel %vm2804, %v2792, %v2795
    %v2812 = vsel %vm2804, %v2793, %v2796
    %v2813 = vsel %vm2804, %v2794, %v2797
    %v2814 = vsel %vm2804, %v2801, %v2792
    %v2815 = vsel %vm2804, %v2802, %v2793
    %v2816 = vsel %vm2804, %v2803, %v2794
    %v2817 = vadd.f32 %v2814, %v2627
    %v2818 = vadd.f32 %v2815, %v2629
    %v2819 = vadd.f32 %v2816, %v2778
    %v2820 = vadd.f32 %v2811, %v2631
    %v2821 = vadd.f32 %v2812, %v2633
    %v2822 = vadd.f32 %v2813, %v2781
    %v2823 = vadd.f32 %v2808, %v2637
    %v2824 = vadd.f32 %v2809, %v2639
    %v2825 = vadd.f32 %v2810, %v2786
    %v2826 = vadd.f32 %v2805, %v2641
    %v2827 = vadd.f32 %v2806, %v2643
    %v2828 = vadd.f32 %v2807, %v2789
    %v2829 = vld [vmem:[#allocation7] sm:$0x7]
    %v2831 = vlaneseq
    %v2832 = vshrl.u32 %v2831, 7
    %v2833 = vsub.s32 0, %v2832
    %v2834 = vrot.slane %v2829, %v2833
    %v2835 = vlaneseq
    %v2836 = vshrl.u32 %v2835, 7
    %v2837 = vsub.s32 1, %v2836
    %v2838 = vrot.slane %v2829, %v2837
    %v2839 = vlaneseq
    %v2840 = vshrl.u32 %v2839, 7
    %v2841 = vsub.s32 2, %v2840
    %v2842 = vrot.slane %v2829, %v2841
    %v2846 = vadd.f32 %v2817, %v2834
    %v2847 = vadd.f32 %v2818, %v2838
    %v2848 = vadd.f32 %v2819, %v2842
    %v2849 = vadd.f32 %v2820, %v2834
    %v2850 = vadd.f32 %v2821, %v2838
    %v2851 = vadd.f32 %v2822, %v2842
    %v2852 = vadd.f32 %v2823, %v2834
    %v2853 = vadd.f32 %v2824, %v2838
    %v2854 = vadd.f32 %v2825, %v2842
    %v2855 = vadd.f32 %v2826, %v2834
    %v2856 = vadd.f32 %v2827, %v2838
    %v2857 = vadd.f32 %v2828, %v2842
    %v2858 = vmax.f32 %v2846, 0.0
    %v2859 = vmax.f32 %v2847, 0.0
    %v2860 = vmax.f32 %v2848, 0.0
    %v2861 = vmax.f32 %v2849, 0.0
    %v2862 = vmax.f32 %v2850, 0.0
    %v2863 = vmax.f32 %v2851, 0.0
    %v2864 = vmax.f32 %v2852, 0.0
    %v2865 = vmax.f32 %v2853, 0.0
    %v2866 = vmax.f32 %v2854, 0.0
    %v2867 = vmax.f32 %v2855, 0.0
    %v2868 = vmax.f32 %v2856, 0.0
    %v2869 = vmax.f32 %v2857, 0.0
    %vm2870 = vcmp.ge.s32.totalorder %v184, 1
    %vm2871 = vcmp.ge.s32.totalorder %v185, 1
    %vm2872 = vcmp.ge.s32.totalorder %v186, 1
    %vm2873 = vcmp.ge.s32.totalorder %v187, 1
    %vm2874 = vcmp.le.s32.totalorder %v184, 9
    %vm2875 = vcmp.le.s32.totalorder %v185, 9
    %vm2876 = vcmp.le.s32.totalorder %v186, 9
    %vm2877 = vcmp.le.s32.totalorder %v187, 9
    %vm2878 = vmand %vm2870, %vm2874
    %vm2879 = vmand %vm2871, %vm2875
    %vm2880 = vmand %vm2872, %vm2876
    %vm2881 = vmand %vm2873, %vm2877
    %v2882 = vsel %vm2878, 1, 0
    %v2883 = vsel %vm2879, 1, 0
    %v2884 = vsel %vm2880, 1, 0
    %v2885 = vsel %vm2881, 1, 0
    %vm2886 = vcmp.eq.s32.totalorder %v2882, 1
    %vm2887 = vcmp.eq.s32.totalorder %v2883, 1
    %vm2888 = vcmp.eq.s32.totalorder %v2884, 1
    %vm2889 = vcmp.eq.s32.totalorder %v2885, 1
    %v2890 = vsel %vm2886, %v2858, 0.0
    %v2891 = vsel %vm2886, %v2859, 0.0
    %v2892 = vsel %vm2886, %v2860, 0.0
    %v2893 = vsel %vm2887, %v2861, 0.0
    %v2894 = vsel %vm2887, %v2862, 0.0
    %v2895 = vsel %vm2887, %v2863, 0.0
    %v2896 = vsel %vm2888, %v2864, 0.0
    %v2897 = vsel %vm2888, %v2865, 0.0
    %v2898 = vsel %vm2888, %v2866, 0.0
    %v2899 = vsel %vm2889, %v2867, 0.0
    %v2900 = vsel %vm2889, %v2868, 0.0
    %v2901 = vsel %vm2889, %v2869, 0.0
    %v2902 = vpack.c.bf16 %v2893, %v2890
    %v2903 = vpack.c.bf16 %v2894, %v2891
    %v2904 = vpack.c.bf16 %v2895, %v2892
    %v2905 = vpack.c.bf16 %v2899, %v2896
    %v2906 = vpack.c.bf16 %v2900, %v2897
    %v2907 = vpack.c.bf16 %v2901, %v2898
    %v2908 = vld [vmem:[#allocation9] sm:$0xf]
    %v2909 = vld [vmem:[#allocation9 + $0x4] sm:$0xf]
    %v2910 = vld [vmem:[#allocation9 + $0x8] sm:$0xf]
    %v2911 = vld [vmem:[#allocation9 + $0xc] sm:$0xf]
    %v2912 = vld [vmem:[#allocation9 + $0x10] sm:$0xf]
    %v2913 = vld [vmem:[#allocation9 + $0x14] sm:$0xf]
    %v2914 = vld [vmem:[#allocation9 + $0x18] sm:$0xf]
    %v2915 = vld [vmem:[#allocation9 + $0x1c] sm:$0xf]
    %v2916 = vld [vmem:[#allocation9 + $0x20] sm:$0xf]
    %v2917 = vld [vmem:[#allocation9 + $0x24] sm:$0xf]
    %v2918 = vld [vmem:[#allocation9 + $0x28] sm:$0xf]
    %v2919 = vld [vmem:[#allocation9 + $0x2c] sm:$0xf]
    %v2920 = vld [vmem:[#allocation9 + $0x30] sm:$0xf]
    %v2921 = vld [vmem:[#allocation9 + $0x34] sm:$0xf]
    %v2922 = vld [vmem:[#allocation9 + $0x38] sm:$0xf]
    %v2923 = vld [vmem:[#allocation9 + $0x3c] sm:$0xf]
    %v2924 = vld [vmem:[#allocation9 + $0x40] sm:$0xf]
    %v2925 = vld [vmem:[#allocation9 + $0x44] sm:$0xf]
    %v2926 = vld [vmem:[#allocation9 + $0x48] sm:$0xf]
    %v2927 = vld [vmem:[#allocation9 + $0x4c] sm:$0xf]
    %v2928 = vld [vmem:[#allocation9 + $0x50] sm:$0xf]
    %v2929 = vld [vmem:[#allocation9 + $0x54] sm:$0xf]
    %v2930 = vld [vmem:[#allocation9 + $0x58] sm:$0xf]
    %v2931 = vld [vmem:[#allocation9 + $0x5c] sm:$0xf]
    %v2932 = vld [vmem:[#allocation9 + $0x60] sm:$0xf]
    %v2933 = vld [vmem:[#allocation9 + $0x64] sm:$0xf]
    %v2934 = vld [vmem:[#allocation9 + $0x68] sm:$0xf]
    %v2935 = vld [vmem:[#allocation9 + $0x6c] sm:$0xf]
    %v2936 = vld [vmem:[#allocation9 + $0x70] sm:$0xf]
    %v2937 = vld [vmem:[#allocation9 + $0x74] sm:$0xf]
    %v2938 = vld [vmem:[#allocation9 + $0x78] sm:$0xf]
    %v2939 = vld [vmem:[#allocation9 + $0x7c] sm:$0xf]
    %v2940 = vld [vmem:[#allocation9 + $0x80] sm:$0xf]
    %v2941 = vld [vmem:[#allocation9 + $0x84] sm:$0xf]
    %v2942 = vld [vmem:[#allocation9 + $0x88] sm:$0xf]
    %v2943 = vld [vmem:[#allocation9 + $0x8c] sm:$0xf]
    %v2944 = vld [vmem:[#allocation9 + $0x90] sm:$0xf]
    %v2945 = vld [vmem:[#allocation9 + $0x94] sm:$0xf]
    %v2946 = vld [vmem:[#allocation9 + $0x98] sm:$0xf]
    %v2947 = vld [vmem:[#allocation9 + $0x9c] sm:$0xf]
    %v2948 = vld [vmem:[#allocation9 + $0xa0] sm:$0xf]
    %v2949 = vld [vmem:[#allocation9 + $0xa4] sm:$0xf]
    %v2950 = vld [vmem:[#allocation9 + $0xa8] sm:$0xf]
    %v2951 = vld [vmem:[#allocation9 + $0xac] sm:$0xf]
    %v2952 = vld [vmem:[#allocation9 + $0xb0] sm:$0xf]
    %v2953 = vld [vmem:[#allocation9 + $0xb4] sm:$0xf]
    %v2954 = vld [vmem:[#allocation9 + $0xb8] sm:$0xf]
    %v2955 = vld [vmem:[#allocation9 + $0xbc] sm:$0xf]
    %v3004 = vunpack.c.l.b16 %v2908
    %v3005 = vunpack.c.l.b16 %v2909
    %v3006 = vunpack.c.l.b16 %v2910
    %v3007 = vunpack.c.l.b16 %v2911
    %v3008 = vunpack.c.l.b16 %v2912
    %v3009 = vunpack.c.l.b16 %v2913
    %v3010 = vunpack.c.l.b16 %v2914
    %v3011 = vunpack.c.l.b16 %v2915
    %v3012 = vunpack.c.l.b16 %v2916
    %v3013 = vunpack.c.l.b16 %v2917
    %v3014 = vunpack.c.l.b16 %v2918
    %v3015 = vunpack.c.l.b16 %v2919
    %v3016 = vunpack.c.l.b16 %v2920
    %v3017 = vunpack.c.l.b16 %v2921
    %v3018 = vunpack.c.l.b16 %v2922
    %v3019 = vunpack.c.l.b16 %v2923
    %v3020 = vunpack.c.l.b16 %v2924
    %v3021 = vunpack.c.l.b16 %v2925
    %v3022 = vunpack.c.l.b16 %v2926
    %v3023 = vunpack.c.l.b16 %v2927
    %v3024 = vunpack.c.l.b16 %v2928
    %v3025 = vunpack.c.l.b16 %v2929
    %v3026 = vunpack.c.l.b16 %v2930
    %v3027 = vunpack.c.l.b16 %v2931
    %v3028 = vunpack.c.l.b16 %v2932
    %v3029 = vunpack.c.l.b16 %v2933
    %v3030 = vunpack.c.l.b16 %v2934
    %v3031 = vunpack.c.l.b16 %v2935
    %v3032 = vunpack.c.l.b16 %v2936
    %v3033 = vunpack.c.l.b16 %v2937
    %v3034 = vunpack.c.l.b16 %v2938
    %v3035 = vunpack.c.l.b16 %v2939
    %v3036 = vunpack.c.l.b16 %v2940
    %v3037 = vunpack.c.l.b16 %v2941
    %v3038 = vunpack.c.l.b16 %v2942
    %v3039 = vunpack.c.l.b16 %v2943
    %v3040 = vunpack.c.l.b16 %v2944
    %v3041 = vunpack.c.l.b16 %v2945
    %v3042 = vunpack.c.l.b16 %v2946
    %v3043 = vunpack.c.l.b16 %v2947
    %v3044 = vunpack.c.l.b16 %v2948
    %v3045 = vunpack.c.l.b16 %v2949
    %v3046 = vunpack.c.l.b16 %v2950
    %v3047 = vunpack.c.l.b16 %v2951
    %v3048 = vunpack.c.l.b16 %v2952
    %v3049 = vunpack.c.l.b16 %v2953
    %v3050 = vunpack.c.l.b16 %v2954
    %v3051 = vunpack.c.l.b16 %v2955
    %v3052 = vpack.c.b16 %v3005, %v3004
    %v3053 = vpack.c.b16 %v3007, %v3006
    %v3054 = vpack.c.b16 %v3009, %v3008
    %v3055 = vpack.c.b16 %v3011, %v3010
    %v3056 = vpack.c.b16 %v3013, %v3012
    %v3057 = vpack.c.b16 %v3015, %v3014
    %v3058 = vpack.c.b16 %v3017, %v3016
    %v3059 = vpack.c.b16 %v3019, %v3018
    %v3060 = vpack.c.b16 %v3021, %v3020
    %v3061 = vpack.c.b16 %v3023, %v3022
    %v3062 = vpack.c.b16 %v3025, %v3024
    %v3063 = vpack.c.b16 %v3027, %v3026
    %v3064 = vpack.c.b16 %v3029, %v3028
    %v3065 = vpack.c.b16 %v3031, %v3030
    %v3066 = vpack.c.b16 %v3033, %v3032
    %v3067 = vpack.c.b16 %v3035, %v3034
    %v3068 = vpack.c.b16 %v3037, %v3036
    %v3069 = vpack.c.b16 %v3039, %v3038
    %v3070 = vpack.c.b16 %v3041, %v3040
    %v3071 = vpack.c.b16 %v3043, %v3042
    %v3072 = vpack.c.b16 %v3045, %v3044
    %v3073 = vpack.c.b16 %v3047, %v3046
    %v3074 = vpack.c.b16 %v3049, %v3048
    %v3075 = vpack.c.b16 %v3051, %v3050
    %3100 = vmatprep.subr.bf16.mxu0 0
    %3101 = vmatpush1.bf16.msra.mxu0 %v3052
    %3102 = vmatprep.subr.bf16.mxu0 0
    %3103 = vmatpush1.bf16.msra.mxu0 %v3053
    %3104 = vmatprep.subr.bf16.mxu0 0
    %3105 = vmatpush1.bf16.msra.mxu0 %v3054
    %3106 = vmatprep.subr.bf16.mxu0 0
    %3107 = vmatpush1.bf16.msra.mxu0 %v3055
    %3108 = vmatprep.subr.bf16.mxu0 0
    %3109 = vmatpush1.bf16.msra.mxu0 %v3056
    %3110 = vmatprep.subr.bf16.mxu0 0
    %3111 = vmatpush1.bf16.msra.mxu0 %v3057
    %3112 = vmatprep.subr.bf16.mxu0 0
    %3113 = vmatpush1.bf16.msra.mxu0 %v3058
    %3114 = vmatprep.subr.bf16.mxu0 0
    %3115 = vmatpush1.bf16.msra.mxu0 %v3059
    %3116 = vmatprep.subr.bf16.mxu0 0
    %3117 = vmatpush1.bf16.msra.mxu0 %v3060
    %3118 = vmatprep.subr.bf16.mxu0 0
    %3119 = vmatpush1.bf16.msra.mxu0 %v3061
    %3120 = vmatprep.subr.bf16.mxu0 0
    %3121 = vmatpush1.bf16.msra.mxu0 %v3062
    %3122 = vmatprep.subr.bf16.mxu0 0
    %3123 = vmatpush1.bf16.msra.mxu0 %v3063
    %3124 = vmatprep.subr.bf16.mxu0 0
    %3125 = vmatpush1.bf16.msra.mxu0 %v3064
    %3126 = vmatprep.subr.bf16.mxu0 0
    %3127 = vmatpush1.bf16.msra.mxu0 %v3065
    %3128 = vmatprep.subr.bf16.mxu0 0
    %3129 = vmatpush1.bf16.msra.mxu0 %v3066
    %3130 = vmatprep.subr.bf16.mxu0 0
    %3131 = vmatpush1.bf16.msra.mxu0 %v3067
    %3132 = vmatprep.mubr.bf16.mxu0 %v2903
    %3133 = vmatmul.mubr.bf16.gmra.mrb[0].mxu0 %v2902
    %v3134 = vpop.f32.mrb[0].mxu0
    %v3135 = vadd.f32 0.0, %v3134
    %v3136 = vpop.f32.mrb[0].mxu0
    %v3137 = vpop.f32.mrb[0].mxu0
    %v3138 = vadd.f32 0.0, %v3137
    %v3139 = vpop.f32.mrb[0].mxu0
    %3140 = vmatprep.mubr.bf16.mxu0 %v2906
    %3141 = vmatmul.mubr.bf16.gmra.mrb[0].mxu0 %v2905
    %v3142 = vpop.f32.mrb[0].mxu0
    %v3143 = vadd.f32 0.0, %v3142
    %v3144 = vpop.f32.mrb[0].mxu0
    %v3145 = vpop.f32.mrb[0].mxu0
    %v3146 = vadd.f32 0.0, %v3145
    %v3147 = vpop.f32.mrb[0].mxu0
    %3148 = vdwg.mxu0
    %3149 = vmatprep.subr.bf16.mxu0 0
    %3150 = vmatpush1.bf16.msra.mxu0 %v3068
    %3151 = vmatprep.subr.bf16.mxu0 0
    %3152 = vmatpush1.bf16.msra.mxu0 %v3069
    %3153 = vmatprep.subr.bf16.mxu0 0
    %3154 = vmatpush1.bf16.msra.mxu0 %v3070
    %3155 = vmatprep.subr.bf16.mxu0 0
    %3156 = vmatpush1.bf16.msra.mxu0 %v3071
    %3157 = vmatprep.subr.bf16.mxu0 0
    %3158 = vmatpush1.bf16.msra.mxu0 %v3072
    %3159 = vmatprep.subr.bf16.mxu0 0
    %3160 = vmatpush1.bf16.msra.mxu0 %v3073
    %3161 = vmatprep.subr.bf16.mxu0 0
    %3162 = vmatpush1.bf16.msra.mxu0 %v3074
    %3163 = vmatprep.subr.bf16.mxu0 0
    %3164 = vmatpush1.bf16.msra.mxu0 %v3075
    %3165 = vmatprep.subr.bf16.mxu0 0
    %3166 = vmatpush1.bf16.msra.mxu0 0
    %3167 = vmatprep.subr.bf16.mxu0 0
    %3168 = vmatpush1.bf16.msra.mxu0 0
    %3169 = vmatprep.subr.bf16.mxu0 0
    %3170 = vmatpush1.bf16.msra.mxu0 0
    %3171 = vmatprep.subr.bf16.mxu0 0
    %3172 = vmatpush1.bf16.msra.mxu0 0
    %3173 = vmatprep.subr.bf16.mxu0 0
    %3174 = vmatpush1.bf16.msra.mxu0 0
    %3175 = vmatprep.subr.bf16.mxu0 0
    %3176 = vmatpush1.bf16.msra.mxu0 0
    %3177 = vmatprep.subr.bf16.mxu0 0
    %3178 = vmatpush1.bf16.msra.mxu0 0
    %3179 = vmatprep.subr.bf16.mxu0 0
    %3180 = vmatpush1.bf16.msra.mxu0 0
    %3181 = vmatprep.mubr.bf16.mxu0 0
    %3182 = vmatmul.mubr.bf16.gmra.mrb[0].mxu0 %v2904
    %v3183 = vpop.f32.mrb[0].mxu0
    %v3184 = vadd.f32 %v3135, %v3183
    %v3185 = vpop.f32.mrb[0].mxu0
    %v3186 = vpop.f32.mrb[0].mxu0
    %v3187 = vadd.f32 %v3138, %v3186
    %v3188 = vpop.f32.mrb[0].mxu0
    %3189 = vmatprep.mubr.bf16.mxu0 0
    %3190 = vmatmul.mubr.bf16.gmra.mrb[0].mxu0 %v2907
    %v3191 = vpop.f32.mrb[0].mxu0
    %v3192 = vadd.f32 %v3143, %v3191
    %v3193 = vpop.f32.mrb[0].mxu0
    %v3194 = vpop.f32.mrb[0].mxu0
    %v3195 = vadd.f32 %v3146, %v3194
    %v3196 = vpop.f32.mrb[0].mxu0
    %3197 = vdwg.mxu0
    %v3198 = vld [vmem:[#allocation9 + $0xc0] sm:$0xf]
    %v3199 = vld [vmem:[#allocation9 + $0xc4] sm:$0xf]
    %v3200 = vld [vmem:[#allocation9 + $0xc8] sm:$0xf]
    %v3201 = vld [vmem:[#allocation9 + $0xcc] sm:$0xf]
    %v3202 = vld [vmem:[#allocation9 + $0xd0] sm:$0xf]
    %v3203 = vld [vmem:[#allocation9 + $0xd4] sm:$0xf]
    %v3204 = vld [vmem:[#allocation9 + $0xd8] sm:$0xf]
    %v3205 = vld [vmem:[#allocation9 + $0xdc] sm:$0xf]
    %v3206 = vld [vmem:[#allocation9 + $0xe0] sm:$0xf]
    %v3207 = vld [vmem:[#allocation9 + $0xe4] sm:$0xf]
    %v3208 = vld [vmem:[#allocation9 + $0xe8] sm:$0xf]
    %v3209 = vld [vmem:[#allocation9 + $0xec] sm:$0xf]
    %v3210 = vld [vmem:[#allocation9 + $0xf0] sm:$0xf]
    %v3211 = vld [vmem:[#allocation9 + $0xf4] sm:$0xf]
    %v3212 = vld [vmem:[#allocation9 + $0xf8] sm:$0xf]
    %v3213 = vld [vmem:[#allocation9 + $0xfc] sm:$0xf]
    %v3214 = vld [vmem:[#allocation9 + $0x100] sm:$0xf]
    %v3215 = vld [vmem:[#allocation9 + $0x104] sm:$0xf]
    %v3216 = vld [vmem:[#allocation9 + $0x108] sm:$0xf]
    %v3217 = vld [vmem:[#allocation9 + $0x10c] sm:$0xf]
    %v3218 = vld [vmem:[#allocation9 + $0x110] sm:$0xf]
    %v3219 = vld [vmem:[#allocation9 + $0x114] sm:$0xf]
    %v3220 = vld [vmem:[#allocation9 + $0x118] sm:$0xf]
    %v3221 = vld [vmem:[#allocation9 + $0x11c] sm:$0xf]
    %v3222 = vld [vmem:[#allocation9 + $0x120] sm:$0xf]
    %v3223 = vld [vmem:[#allocation9 + $0x124] sm:$0xf]
    %v3224 = vld [vmem:[#allocation9 + $0x128] sm:$0xf]
    %v3225 = vld [vmem:[#allocation9 + $0x12c] sm:$0xf]
    %v3226 = vld [vmem:[#allocation9 + $0x130] sm:$0xf]
    %v3227 = vld [vmem:[#allocation9 + $0x134] sm:$0xf]
    %v3228 = vld [vmem:[#allocation9 + $0x138] sm:$0xf]
    %v3229 = vld [vmem:[#allocation9 + $0x13c] sm:$0xf]
    %v3230 = vld [vmem:[#allocation9 + $0x140] sm:$0xf]
    %v3231 = vld [vmem:[#allocation9 + $0x144] sm:$0xf]
    %v3232 = vld [vmem:[#allocation9 + $0x148] sm:$0xf]
    %v3233 = vld [vmem:[#allocation9 + $0x14c] sm:$0xf]
    %v3234 = vld [vmem:[#allocation9 + $0x150] sm:$0xf]
    %v3235 = vld [vmem:[#allocation9 + $0x154] sm:$0xf]
    %v3236 = vld [vmem:[#allocation9 + $0x158] sm:$0xf]
    %v3237 = vld [vmem:[#allocation9 + $0x15c] sm:$0xf]
    %v3238 = vld [vmem:[#allocation9 + $0x160] sm:$0xf]
    %v3239 = vld [vmem:[#allocation9 + $0x164] sm:$0xf]
    %v3240 = vld [vmem:[#allocation9 + $0x168] sm:$0xf]
    %v3241 = vld [vmem:[#allocation9 + $0x16c] sm:$0xf]
    %v3242 = vld [vmem:[#allocation9 + $0x170] sm:$0xf]
    %v3243 = vld [vmem:[#allocation9 + $0x174] sm:$0xf]
    %v3244 = vld [vmem:[#allocation9 + $0x178] sm:$0xf]
    %v3245 = vld [vmem:[#allocation9 + $0x17c] sm:$0xf]
    %v3294 = vunpack.c.l.b16 %v3198
    %v3295 = vunpack.c.l.b16 %v3199
    %v3296 = vunpack.c.l.b16 %v3200
    %v3297 = vunpack.c.l.b16 %v3201
    %v3298 = vunpack.c.l.b16 %v3202
    %v3299 = vunpack.c.l.b16 %v3203
    %v3300 = vunpack.c.l.b16 %v3204
    %v3301 = vunpack.c.l.b16 %v3205
    %v3302 = vunpack.c.l.b16 %v3206
    %v3303 = vunpack.c.l.b16 %v3207
    %v3304 = vunpack.c.l.b16 %v3208
    %v3305 = vunpack.c.l.b16 %v3209
    %v3306 = vunpack.c.l.b16 %v3210
    %v3307 = vunpack.c.l.b16 %v3211
    %v3308 = vunpack.c.l.b16 %v3212
    %v3309 = vunpack.c.l.b16 %v3213
    %v3310 = vunpack.c.l.b16 %v3214
    %v3311 = vunpack.c.l.b16 %v3215
    %v3312 = vunpack.c.l.b16 %v3216
    %v3313 = vunpack.c.l.b16 %v3217
    %v3314 = vunpack.c.l.b16 %v3218
    %v3315 = vunpack.c.l.b16 %v3219
    %v3316 = vunpack.c.l.b16 %v3220
    %v3317 = vunpack.c.l.b16 %v3221
    %v3318 = vunpack.c.l.b16 %v3222
    %v3319 = vunpack.c.l.b16 %v3223
    %v3320 = vunpack.c.l.b16 %v3224
    %v3321 = vunpack.c.l.b16 %v3225
    %v3322 = vunpack.c.l.b16 %v3226
    %v3323 = vunpack.c.l.b16 %v3227
    %v3324 = vunpack.c.l.b16 %v3228
    %v3325 = vunpack.c.l.b16 %v3229
    %v3326 = vunpack.c.l.b16 %v3230
    %v3327 = vunpack.c.l.b16 %v3231
    %v3328 = vunpack.c.l.b16 %v3232
    %v3329 = vunpack.c.l.b16 %v3233
    %v3330 = vunpack.c.l.b16 %v3234
    %v3331 = vunpack.c.l.b16 %v3235
    %v3332 = vunpack.c.l.b16 %v3236
    %v3333 = vunpack.c.l.b16 %v3237
    %v3334 = vunpack.c.l.b16 %v3238
    %v3335 = vunpack.c.l.b16 %v3239
    %v3336 = vunpack.c.l.b16 %v3240
    %v3337 = vunpack.c.l.b16 %v3241
    %v3338 = vunpack.c.l.b16 %v3242
    %v3339 = vunpack.c.l.b16 %v3243
    %v3340 = vunpack.c.l.b16 %v3244
    %v3341 = vunpack.c.l.b16 %v3245
    %v3342 = vpack.c.b16 %v3295, %v3294
    %v3343 = vpack.c.b16 %v3297, %v3296
    %v3344 = vpack.c.b16 %v3299, %v3298
    %v3345 = vpack.c.b16 %v3301, %v3300
    %v3346 = vpack.c.b16 %v3303, %v3302
    %v3347 = vpack.c.b16 %v3305, %v3304
    %v3348 = vpack.c.b16 %v3307, %v3306
    %v3349 = vpack.c.b16 %v3309, %v3308
    %v3350 = vpack.c.b16 %v3311, %v3310
    %v3351 = vpack.c.b16 %v3313, %v3312
    %v3352 = vpack.c.b16 %v3315, %v3314
    %v3353 = vpack.c.b16 %v3317, %v3316
    %v3354 = vpack.c.b16 %v3319, %v3318
    %v3355 = vpack.c.b16 %v3321, %v3320
    %v3356 = vpack.c.b16 %v3323, %v3322
    %v3357 = vpack.c.b16 %v3325, %v3324
    %v3358 = vpack.c.b16 %v3327, %v3326
    %v3359 = vpack.c.b16 %v3329, %v3328
    %v3360 = vpack.c.b16 %v3331, %v3330
    %v3361 = vpack.c.b16 %v3333, %v3332
    %v3362 = vpack.c.b16 %v3335, %v3334
    %v3363 = vpack.c.b16 %v3337, %v3336
    %v3364 = vpack.c.b16 %v3339, %v3338
    %v3365 = vpack.c.b16 %v3341, %v3340
    %3390 = vmatprep.subr.bf16.mxu0 0
    %3391 = vmatpush1.bf16.msra.mxu0 %v3342
    %3392 = vmatprep.subr.bf16.mxu0 0
    %3393 = vmatpush1.bf16.msra.mxu0 %v3343
    %3394 = vmatprep.subr.bf16.mxu0 0
    %3395 = vmatpush1.bf16.msra.mxu0 %v3344
    %3396 = vmatprep.subr.bf16.mxu0 0
    %3397 = vmatpush1.bf16.msra.mxu0 %v3345
    %3398 = vmatprep.subr.bf16.mxu0 0
    %3399 = vmatpush1.bf16.msra.mxu0 %v3346
    %3400 = vmatprep.subr.bf16.mxu0 0
    %3401 = vmatpush1.bf16.msra.mxu0 %v3347
    %3402 = vmatprep.subr.bf16.mxu0 0
    %3403 = vmatpush1.bf16.msra.mxu0 %v3348
    %3404 = vmatprep.subr.bf16.mxu0 0
    %3405 = vmatpush1.bf16.msra.mxu0 %v3349
    %3406 = vmatprep.subr.bf16.mxu0 0
    %3407 = vmatpush1.bf16.msra.mxu0 %v3350
    %3408 = vmatprep.subr.bf16.mxu0 0
    %3409 = vmatpush1.bf16.msra.mxu0 %v3351
    %3410 = vmatprep.subr.bf16.mxu0 0
    %3411 = vmatpush1.bf16.msra.mxu0 %v3352
    %3412 = vmatprep.subr.bf16.mxu0 0
    %3413 = vmatpush1.bf16.msra.mxu0 %v3353
    %3414 = vmatprep.subr.bf16.mxu0 0
    %3415 = vmatpush1.bf16.msra.mxu0 %v3354
    %3416 = vmatprep.subr.bf16.mxu0 0
    %3417 = vmatpush1.bf16.msra.mxu0 %v3355
    %3418 = vmatprep.subr.bf16.mxu0 0
    %3419 = vmatpush1.bf16.msra.mxu0 %v3356
    %3420 = vmatprep.subr.bf16.mxu0 0
    %3421 = vmatpush1.bf16.msra.mxu0 %v3357
    %3422 = vmatprep.mubr.bf16.mxu0 %v2903
    %3423 = vmatmul.mubr.bf16.gmra.mrb[0].mxu0 %v2902
    %v3424 = vpop.f32.mrb[0].mxu0
    %v3425 = vadd.f32 0.0, %v3424
    %v3426 = vpop.f32.mrb[0].mxu0
    %v3427 = vpop.f32.mrb[0].mxu0
    %v3428 = vadd.f32 0.0, %v3427
    %v3429 = vpop.f32.mrb[0].mxu0
    %3430 = vmatprep.mubr.bf16.mxu0 %v2906
    %3431 = vmatmul.mubr.bf16.gmra.mrb[0].mxu0 %v2905
    %v3432 = vpop.f32.mrb[0].mxu0
    %v3433 = vadd.f32 0.0, %v3432
    %v3434 = vpop.f32.mrb[0].mxu0
    %v3435 = vpop.f32.mrb[0].mxu0
    %v3436 = vadd.f32 0.0, %v3435
    %v3437 = vpop.f32.mrb[0].mxu0
    %3438 = vdwg.mxu0
    %3439 = vmatprep.subr.bf16.mxu0 0
    %3440 = vmatpush1.bf16.msra.mxu0 %v3358
    %3441 = vmatprep.subr.bf16.mxu0 0
    %3442 = vmatpush1.bf16.msra.mxu0 %v3359
    %3443 = vmatprep.subr.bf16.mxu0 0
    %3444 = vmatpush1.bf16.msra.mxu0 %v3360
    %3445 = vmatprep.subr.bf16.mxu0 0
    %3446 = vmatpush1.bf16.msra.mxu0 %v3361
    %3447 = vmatprep.subr.bf16.mxu0 0
    %3448 = vmatpush1.bf16.msra.mxu0 %v3362
    %3449 = vmatprep.subr.bf16.mxu0 0
    %3450 = vmatpush1.bf16.msra.mxu0 %v3363
    %3451 = vmatprep.subr.bf16.mxu0 0
    %3452 = vmatpush1.bf16.msra.mxu0 %v3364
    %3453 = vmatprep.subr.bf16.mxu0 0
    %3454 = vmatpush1.bf16.msra.mxu0 %v3365
    %3455 = vmatprep.subr.bf16.mxu0 0
    %3456 = vmatpush1.bf16.msra.mxu0 0
    %3457 = vmatprep.subr.bf16.mxu0 0
    %3458 = vmatpush1.bf16.msra.mxu0 0
    %3459 = vmatprep.subr.bf16.mxu0 0
    %3460 = vmatpush1.bf16.msra.mxu0 0
    %3461 = vmatprep.subr.bf16.mxu0 0
    %3462 = vmatpush1.bf16.msra.mxu0 0
    %3463 = vmatprep.subr.bf16.mxu0 0
    %3464 = vmatpush1.bf16.msra.mxu0 0
    %3465 = vmatprep.subr.bf16.mxu0 0
    %3466 = vmatpush1.bf16.msra.mxu0 0
    %3467 = vmatprep.subr.bf16.mxu0 0
    %3468 = vmatpush1.bf16.msra.mxu0 0
    %3469 = vmatprep.subr.bf16.mxu0 0
    %3470 = vmatpush1.bf16.msra.mxu0 0
    %3471 = vmatprep.mubr.bf16.mxu0 0
    %3472 = vmatmul.mubr.bf16.gmra.mrb[0].mxu0 %v2904
    %v3473 = vpop.f32.mrb[0].mxu0
    %v3474 = vadd.f32 %v3425, %v3473
    %v3475 = vpop.f32.mrb[0].mxu0
    %v3476 = vpop.f32.mrb[0].mxu0
    %v3477 = vadd.f32 %v3428, %v3476
    %v3478 = vpop.f32.mrb[0].mxu0
    %3479 = vmatprep.mubr.bf16.mxu0 0
    %3480 = vmatmul.mubr.bf16.gmra.mrb[0].mxu0 %v2907
    %v3481 = vpop.f32.mrb[0].mxu0
    %v3482 = vadd.f32 %v3433, %v3481
    %v3483 = vpop.f32.mrb[0].mxu0
    %v3484 = vpop.f32.mrb[0].mxu0
    %v3485 = vadd.f32 %v3436, %v3484
    %v3486 = vpop.f32.mrb[0].mxu0
    %3487 = vdwg.mxu0
    %v3488 = vrot.slane %v3184, 7
    %v3489 = vrot.slane %v3187, 7
    %v3490 = vrot.slane %v3192, 7
    %v3491 = vrot.slane %v3195, 7
    %v3492 = vsel %vm2804, %v3490, %v3491
    %v3493 = vsel %vm2804, %v3489, %v3490
    %v3494 = vsel %vm2804, %v3488, %v3489
    %v3495 = vsel %vm2804, %v3491, %v3488
    %v3496 = vadd.f32 %v3495, %v3474
    %v3497 = vadd.f32 %v3494, %v3477
    %v3498 = vadd.f32 %v3493, %v3482
    %v3499 = vadd.f32 %v3492, %v3485
    %v3500 = vld [vmem:[#allocation10] sm:$0x1]
    %v3502 = vlaneseq
    %v3503 = vshrl.u32 %v3502, 7
    %v3504 = vsub.s32 0, %v3503
    %v3505 = vrot.slane %v3500, %v3504
    %v3507 = vadd.f32 %v3496, %v3505
    %v3508 = vadd.f32 %v3497, %v3505
    %v3509 = vadd.f32 %v3498, %v3505
    %v3510 = vadd.f32 %v3499, %v3505
    %v3511 = vmax.f32 %v3507, 0.0
    %v3512 = vmax.f32 %v3508, 0.0
    %v3513 = vmax.f32 %v3509, 0.0
    %v3514 = vmax.f32 %v3510, 0.0
    %vm3515 = vcmp.le.s32.totalorder %v184, 10
    %vm3516 = vcmp.le.s32.totalorder %v185, 10
    %vm3517 = vcmp.le.s32.totalorder %v186, 10
    %vm3518 = vcmp.le.s32.totalorder %v187, 10
    %vm3519 = vmand %vm2870, %vm3515
    %vm3520 = vmand %vm2871, %vm3516
    %vm3521 = vmand %vm2872, %vm3517
    %vm3522 = vmand %vm2873, %vm3518
    %v3523 = vsel %vm3519, 1, 0
    %v3524 = vsel %vm3520, 1, 0
    %v3525 = vsel %vm3521, 1, 0
    %v3526 = vsel %vm3522, 1, 0
    %vm3527 = vcmp.eq.s32.totalorder %v3523, 1
    %vm3528 = vcmp.eq.s32.totalorder %v3524, 1
    %vm3529 = vcmp.eq.s32.totalorder %v3525, 1
    %vm3530 = vcmp.eq.s32.totalorder %v3526, 1
    %v3531 = vsel %vm3527, %v3511, 0.0
    %v3532 = vsel %vm3528, %v3512, 0.0
    %v3533 = vsel %vm3529, %v3513, 0.0
    %v3534 = vsel %vm3530, %v3514, 0.0
    %v3535 = vpack.c.bf16 %v3532, %v3531
    %v3536 = vpack.c.bf16 %v3534, %v3533
    %v3537 = vld [vmem:[%s5] sm:$0xf]
    %v3538 = vld [vmem:[%s5 + $0x4] sm:$0xf]
    %v3539 = vld [vmem:[%s5 + $0x8] sm:$0xf]
    %v3540 = vld [vmem:[%s5 + $0xc] sm:$0xf]
    %v3541 = vld [vmem:[%s5 + $0x10] sm:$0xf]
    %v3542 = vld [vmem:[%s5 + $0x14] sm:$0xf]
    %v3543 = vld [vmem:[%s5 + $0x18] sm:$0xf]
    %v3544 = vld [vmem:[%s5 + $0x1c] sm:$0xf]
    %v3545 = vld [vmem:[%s5 + $0x20] sm:$0xf]
    %v3546 = vld [vmem:[%s5 + $0x24] sm:$0xf]
    %v3547 = vld [vmem:[%s5 + $0x28] sm:$0xf]
    %v3548 = vld [vmem:[%s5 + $0x2c] sm:$0xf]
    %v3549 = vld [vmem:[%s5 + $0x30] sm:$0xf]
    %v3550 = vld [vmem:[%s5 + $0x34] sm:$0xf]
    %v3551 = vld [vmem:[%s5 + $0x38] sm:$0xf]
    %v3552 = vld [vmem:[%s5 + $0x3c] sm:$0xf]
    %v3569 = vunpack.c.l.b16 %v3537
    %v3570 = vunpack.c.l.b16 %v3538
    %v3571 = vunpack.c.l.b16 %v3539
    %v3572 = vunpack.c.l.b16 %v3540
    %v3573 = vunpack.c.l.b16 %v3541
    %v3574 = vunpack.c.l.b16 %v3542
    %v3575 = vunpack.c.l.b16 %v3543
    %v3576 = vunpack.c.l.b16 %v3544
    %v3577 = vunpack.c.l.b16 %v3545
    %v3578 = vunpack.c.l.b16 %v3546
    %v3579 = vunpack.c.l.b16 %v3547
    %v3580 = vunpack.c.l.b16 %v3548
    %v3581 = vunpack.c.l.b16 %v3549
    %v3582 = vunpack.c.l.b16 %v3550
    %v3583 = vunpack.c.l.b16 %v3551
    %v3584 = vunpack.c.l.b16 %v3552
    %v3585 = vpack.c.b16 %v3570, %v3569
    %v3586 = vpack.c.b16 %v3572, %v3571
    %v3587 = vpack.c.b16 %v3574, %v3573
    %v3588 = vpack.c.b16 %v3576, %v3575
    %v3589 = vpack.c.b16 %v3578, %v3577
    %v3590 = vpack.c.b16 %v3580, %v3579
    %v3591 = vpack.c.b16 %v3582, %v3581
    %v3592 = vpack.c.b16 %v3584, %v3583
    %3601 = vmatprep.subr.bf16.mxu0 0
    %3602 = vmatpush1.bf16.msra.mxu0 %v3585
    %3603 = vmatprep.subr.bf16.mxu0 0
    %3604 = vmatpush1.bf16.msra.mxu0 %v3586
    %3605 = vmatprep.subr.bf16.mxu0 0
    %3606 = vmatpush1.bf16.msra.mxu0 %v3587
    %3607 = vmatprep.subr.bf16.mxu0 0
    %3608 = vmatpush1.bf16.msra.mxu0 %v3588
    %3609 = vmatprep.subr.bf16.mxu0 0
    %3610 = vmatpush1.bf16.msra.mxu0 %v3589
    %3611 = vmatprep.subr.bf16.mxu0 0
    %3612 = vmatpush1.bf16.msra.mxu0 %v3590
    %3613 = vmatprep.subr.bf16.mxu0 0
    %3614 = vmatpush1.bf16.msra.mxu0 %v3591
    %3615 = vmatprep.subr.bf16.mxu0 0
    %3616 = vmatpush1.bf16.msra.mxu0 %v3592
    %3617 = vmatprep.subr.bf16.mxu0 0
    %3618 = vmatpush1.bf16.msra.mxu0 0
    %3619 = vmatprep.subr.bf16.mxu0 0
    %3620 = vmatpush1.bf16.msra.mxu0 0
    %3621 = vmatprep.subr.bf16.mxu0 0
    %3622 = vmatpush1.bf16.msra.mxu0 0
    %3623 = vmatprep.subr.bf16.mxu0 0
    %3624 = vmatpush1.bf16.msra.mxu0 0
    %3625 = vmatprep.subr.bf16.mxu0 0
    %3626 = vmatpush1.bf16.msra.mxu0 0
    %3627 = vmatprep.subr.bf16.mxu0 0
    %3628 = vmatpush1.bf16.msra.mxu0 0
    %3629 = vmatprep.subr.bf16.mxu0 0
    %3630 = vmatpush1.bf16.msra.mxu0 0
    %3631 = vmatprep.subr.bf16.mxu0 0
    %3632 = vmatpush1.bf16.msra.mxu0 0
    %3633 = vmatprep.mubr.bf16.mxu0 0
    %3634 = vmatmul.mubr.bf16.gmra.mrb[0].mxu0 %v3535
    %v3635 = vpop.f32.mrb[0].mxu0
    %v3636 = vadd.f32 0.0, %v3635
    %v3637 = vpop.f32.mrb[0].mxu0
    %v3638 = vpop.f32.mrb[0].mxu0
    %v3639 = vadd.f32 0.0, %v3638
    %v3640 = vpop.f32.mrb[0].mxu0
    %3641 = vmatprep.mubr.bf16.mxu0 0
    %3642 = vmatmul.mubr.bf16.gmra.mrb[0].mxu0 %v3536
    %v3643 = vpop.f32.mrb[0].mxu0
    %v3644 = vadd.f32 0.0, %v3643
    %v3645 = vpop.f32.mrb[0].mxu0
    %v3646 = vpop.f32.mrb[0].mxu0
    %v3647 = vadd.f32 0.0, %v3646
    %v3648 = vpop.f32.mrb[0].mxu0
    %3649 = vdwg.mxu0
    %v3650 = vld [vmem:[%s5 + $0x40] sm:$0xf]
    %v3651 = vld [vmem:[%s5 + $0x44] sm:$0xf]
    %v3652 = vld [vmem:[%s5 + $0x48] sm:$0xf]
    %v3653 = vld [vmem:[%s5 + $0x4c] sm:$0xf]
    %v3654 = vld [vmem:[%s5 + $0x50] sm:$0xf]
    %v3655 = vld [vmem:[%s5 + $0x54] sm:$0xf]
    %v3656 = vld [vmem:[%s5 + $0x58] sm:$0xf]
    %v3657 = vld [vmem:[%s5 + $0x5c] sm:$0xf]
    %v3658 = vld [vmem:[%s5 + $0x60] sm:$0xf]
    %v3659 = vld [vmem:[%s5 + $0x64] sm:$0xf]
    %v3660 = vld [vmem:[%s5 + $0x68] sm:$0xf]
    %v3661 = vld [vmem:[%s5 + $0x6c] sm:$0xf]
    %v3662 = vld [vmem:[%s5 + $0x70] sm:$0xf]
    %v3663 = vld [vmem:[%s5 + $0x74] sm:$0xf]
    %v3664 = vld [vmem:[%s5 + $0x78] sm:$0xf]
    %v3665 = vld [vmem:[%s5 + $0x7c] sm:$0xf]
    %v3682 = vunpack.c.l.b16 %v3650
    %v3683 = vunpack.c.l.b16 %v3651
    %v3684 = vunpack.c.l.b16 %v3652
    %v3685 = vunpack.c.l.b16 %v3653
    %v3686 = vunpack.c.l.b16 %v3654
    %v3687 = vunpack.c.l.b16 %v3655
    %v3688 = vunpack.c.l.b16 %v3656
    %v3689 = vunpack.c.l.b16 %v3657
    %v3690 = vunpack.c.l.b16 %v3658
    %v3691 = vunpack.c.l.b16 %v3659
    %v3692 = vunpack.c.l.b16 %v3660
    %v3693 = vunpack.c.l.b16 %v3661
    %v3694 = vunpack.c.l.b16 %v3662
    %v3695 = vunpack.c.l.b16 %v3663
    %v3696 = vunpack.c.l.b16 %v3664
    %v3697 = vunpack.c.l.b16 %v3665
    %v3698 = vpack.c.b16 %v3683, %v3682
    %v3699 = vpack.c.b16 %v3685, %v3684
    %v3700 = vpack.c.b16 %v3687, %v3686
    %v3701 = vpack.c.b16 %v3689, %v3688
    %v3702 = vpack.c.b16 %v3691, %v3690
    %v3703 = vpack.c.b16 %v3693, %v3692
    %v3704 = vpack.c.b16 %v3695, %v3694
    %v3705 = vpack.c.b16 %v3697, %v3696
    %3714 = vmatprep.subr.bf16.mxu0 0
    %3715 = vmatpush1.bf16.msra.mxu0 %v3698
    %3716 = vmatprep.subr.bf16.mxu0 0
    %3717 = vmatpush1.bf16.msra.mxu0 %v3699
    %3718 = vmatprep.subr.bf16.mxu0 0
    %3719 = vmatpush1.bf16.msra.mxu0 %v3700
    %3720 = vmatprep.subr.bf16.mxu0 0
    %3721 = vmatpush1.bf16.msra.mxu0 %v3701
    %3722 = vmatprep.subr.bf16.mxu0 0
    %3723 = vmatpush1.bf16.msra.mxu0 %v3702
    %3724 = vmatprep.subr.bf16.mxu0 0
    %3725 = vmatpush1.bf16.msra.mxu0 %v3703
    %3726 = vmatprep.subr.bf16.mxu0 0
    %3727 = vmatpush1.bf16.msra.mxu0 %v3704
    %3728 = vmatprep.subr.bf16.mxu0 0
    %3729 = vmatpush1.bf16.msra.mxu0 %v3705
    %3730 = vmatprep.subr.bf16.mxu0 0
    %3731 = vmatpush1.bf16.msra.mxu0 0
    %3732 = vmatprep.subr.bf16.mxu0 0
    %3733 = vmatpush1.bf16.msra.mxu0 0
    %3734 = vmatprep.subr.bf16.mxu0 0
    %3735 = vmatpush1.bf16.msra.mxu0 0
    %3736 = vmatprep.subr.bf16.mxu0 0
    %3737 = vmatpush1.bf16.msra.mxu0 0
    %3738 = vmatprep.subr.bf16.mxu0 0
    %3739 = vmatpush1.bf16.msra.mxu0 0
    %3740 = vmatprep.subr.bf16.mxu0 0
    %3741 = vmatpush1.bf16.msra.mxu0 0
    %3742 = vmatprep.subr.bf16.mxu0 0
    %3743 = vmatpush1.bf16.msra.mxu0 0
    %3744 = vmatprep.subr.bf16.mxu0 0
    %3745 = vmatpush1.bf16.msra.mxu0 0
    %3746 = vmatprep.mubr.bf16.mxu0 0
    %3747 = vmatmul.mubr.bf16.gmra.mrb[0].mxu0 %v3535
    %v3748 = vpop.f32.mrb[0].mxu0
    %v3749 = vadd.f32 0.0, %v3748
    %v3750 = vpop.f32.mrb[0].mxu0
    %v3751 = vpop.f32.mrb[0].mxu0
    %v3752 = vadd.f32 0.0, %v3751
    %v3753 = vpop.f32.mrb[0].mxu0
    %3754 = vmatprep.mubr.bf16.mxu0 0
    %3755 = vmatmul.mubr.bf16.gmra.mrb[0].mxu0 %v3536
    %v3756 = vpop.f32.mrb[0].mxu0
    %v3757 = vadd.f32 0.0, %v3756
    %v3758 = vpop.f32.mrb[0].mxu0
    %v3759 = vpop.f32.mrb[0].mxu0
    %v3760 = vadd.f32 0.0, %v3759
    %v3761 = vpop.f32.mrb[0].mxu0
    %3762 = vdwg.mxu0
    %v3763 = vrot.slane %v3636, 7
    %v3764 = vrot.slane %v3639, 7
    %v3765 = vrot.slane %v3644, 7
    %v3766 = vrot.slane %v3647, 7
    %v3767 = vsel %vm2804, %v3765, %v3766
    %v3768 = vsel %vm2804, %v3764, %v3765
    %v3769 = vsel %vm2804, %v3763, %v3764
    %v3770 = vsel %vm2804, %v3766, %v3763
    %v3771 = vadd.f32 %v3770, %v3749
    %v3772 = vadd.f32 %v3769, %v3752
    %v3773 = vadd.f32 %v3768, %v3757
    %v3774 = vadd.f32 %v3767, %v3760
    %v3775 = vld [vmem:[#allocation12] sm:$0x1]
    %v3777 = vlaneseq
    %v3778 = vshrl.u32 %v3777, 7
    %v3779 = vsub.s32 0, %v3778
    %v3780 = vrot.slane %v3775, %v3779
    %v3782 = vadd.f32 %v3771, %v3780
    %v3783 = vadd.f32 %v3772, %v3780
    %v3784 = vadd.f32 %v3773, %v3780
    %v3785 = vadd.f32 %v3774, %v3780
    %v3786 = vmax.f32 %v3782, 0.0
    %v3787 = vmax.f32 %v3783, 0.0
    %v3788 = vmax.f32 %v3784, 0.0
    %v3789 = vmax.f32 %v3785, 0.0
    %v3790 = vlaneseq
    %v3791 = vand.u32 %v3790, 127
    %v3792 = vmul.u32 %v180, 16
    %v3793 = vsub.s32 %v3791, %v3792
    %vm3794 = vcmp.ge.s32.totalorder %v3793, 1
    %vm3795 = vcmp.le.s32.totalorder %v3793, 11
    %vm3796 = vmand %vm3794, %vm3795
    %v3797 = vsel %vm3796, 0.09090909, 0.0
    %vm3798 = vcmask 261120
    %v3800 = vsel %vm3798, %v3797, 0
    %3802 = vmatprep.subr.mxu0 0.0
    %3803 = vmatpush1.msra.mxu0 %v3786
    %3804 = vmatprep.subr.mxu0 0.0
    %3805 = vmatpush1.msra.mxu0 %v3787
    %3806 = vmatprep.subr.mxu0 0.0
    %3807 = vmatpush1.msra.mxu0 %v3788
    %3808 = vmatprep.subr.mxu0 0.0
    %3809 = vmatpush1.msra.mxu0 %v3789
    %3810 = vmatprep.subr.mxu0 0.0
    %3811 = vmatpush1.msra.mxu0 0.0
    %3812 = vmatprep.subr.mxu0 0.0
    %3813 = vmatpush1.msra.mxu0 0.0
    %3814 = vmatprep.subr.mxu0 0.0
    %3815 = vmatpush1.msra.mxu0 0.0
    %3816 = vmatprep.subr.mxu0 0.0
    %3817 = vmatpush1.msra.mxu0 0.0
    %3818 = vmatprep.subr.mxu0 0.0
    %3819 = vmatpush1.msra.mxu0 0.0
    %3820 = vmatprep.subr.mxu0 0.0
    %3821 = vmatpush1.msra.mxu0 0.0
    %3822 = vmatprep.subr.mxu0 0.0
    %3823 = vmatpush1.msra.mxu0 0.0
    %3824 = vmatprep.subr.mxu0 0.0
    %3825 = vmatpush1.msra.mxu0 0.0
    %3826 = vmatprep.subr.mxu0 0.0
    %3827 = vmatpush1.msra.mxu0 0.0
    %3828 = vmatprep.subr.mxu0 0.0
    %3829 = vmatpush1.msra.mxu0 0.0
    %3830 = vmatprep.subr.mxu0 0.0
    %3831 = vmatpush1.msra.mxu0 0.0
    %3832 = vmatprep.subr.mxu0 0.0
    %3833 = vmatpush1.msra.mxu0 0.0
    %3834 = vmatprep.subr.mxu0 0.0
    %3835 = vmatpush1.msra.mxu0 0.0
    %3836 = vmatprep.subr.mxu0 0.0
    %3837 = vmatpush1.msra.mxu0 0.0
    %3838 = vmatprep.subr.mxu0 0.0
    %3839 = vmatpush1.msra.mxu0 0.0
    %3840 = vmatprep.subr.mxu0 0.0
    %3841 = vmatpush1.msra.mxu0 0.0
    %3842 = vmatprep.subr.mxu0 0.0
    %3843 = vmatpush1.msra.mxu0 0.0
    %3844 = vmatprep.subr.mxu0 0.0
    %3845 = vmatpush1.msra.mxu0 0.0
    %3846 = vmatprep.subr.mxu0 0.0
    %3847 = vmatpush1.msra.mxu0 0.0
    %3848 = vmatprep.subr.mxu0 0.0
    %3849 = vmatpush1.msra.mxu0 0.0
    %3850 = vmatprep.subr.mxu0 0.0
    %3851 = vmatpush1.msra.mxu0 0.0
    %3852 = vmatprep.subr.mxu0 0.0
    %3853 = vmatpush1.msra.mxu0 0.0
    %3854 = vmatprep.subr.mxu0 0.0
    %3855 = vmatpush1.msra.mxu0 0.0
    %3856 = vmatprep.subr.mxu0 0.0
    %3857 = vmatpush1.msra.mxu0 0.0
    %3858 = vmatprep.subr.mxu0 0.0
    %3859 = vmatpush1.msra.mxu0 0.0
    %3860 = vmatprep.subr.mxu0 0.0
    %3861 = vmatpush1.msra.mxu0 0.0
    %3862 = vmatprep.subr.mxu0 0.0
    %3863 = vmatpush1.msra.mxu0 0.0
    %3864 = vmatprep.subr.mxu0 0.0
    %3865 = vmatpush1.msra.mxu0 0.0
    %3866 = vmatprep.mubr.f32.mxu0 0.0
    %3867 = vmatmul.mubr.f32.gmra.mrb[0].mxu0 %v3800
    %v3868 = vpop.f32.mrb[0].mxu0
    %v3869 = vadd.f32 0.0, %v3868
    %v3870 = vpop.f32.mrb[0].mxu0
    %3871 = vdwg.mxu0
    %v3872 = vpack.c.bf16 %v3869, %v3869
    %v3873 = vld [vmem:[#allocation13] sm:$0xff]
    %v3874 = vld [vmem:[#allocation13 + $0x8] sm:$0xff]
    %v3875 = vld [vmem:[#allocation13 + $0x10] sm:$0xff]
    %v3876 = vld [vmem:[#allocation13 + $0x18] sm:$0xff]
    %v3877 = vld [vmem:[#allocation13 + $0x20] sm:$0xff]
    %v3878 = vld [vmem:[#allocation13 + $0x28] sm:$0xff]
    %v3879 = vld [vmem:[#allocation13 + $0x30] sm:$0xff]
    %v3880 = vld [vmem:[#allocation13 + $0x38] sm:$0xff]
    %v3881 = vld [vmem:[#allocation13 + $0x40] sm:$0xff]
    %v3882 = vld [vmem:[#allocation13 + $0x48] sm:$0xff]
    %v3883 = vld [vmem:[#allocation13 + $0x50] sm:$0xff]
    %v3884 = vld [vmem:[#allocation13 + $0x58] sm:$0xff]
    %v3885 = vld [vmem:[#allocation13 + $0x60] sm:$0xff]
    %v3886 = vld [vmem:[#allocation13 + $0x68] sm:$0xff]
    %v3887 = vld [vmem:[#allocation13 + $0x70] sm:$0xff]
    %v3888 = vld [vmem:[#allocation13 + $0x78] sm:$0xff]
    %v3889 = vld [vmem:[#allocation13 + $0x80] sm:$0xff]
    %v3890 = vld [vmem:[#allocation13 + $0x88] sm:$0xff]
    %v3891 = vld [vmem:[#allocation13 + $0x90] sm:$0xff]
    %v3892 = vld [vmem:[#allocation13 + $0x98] sm:$0xff]
    %v3893 = vld [vmem:[#allocation13 + $0xa0] sm:$0xff]
    %v3894 = vld [vmem:[#allocation13 + $0xa8] sm:$0xff]
    %v3895 = vld [vmem:[#allocation13 + $0xb0] sm:$0xff]
    %v3896 = vld [vmem:[#allocation13 + $0xb8] sm:$0xff]
    %v3897 = vld [vmem:[#allocation13 + $0xc0] sm:$0xff]
    %v3898 = vld [vmem:[#allocation13 + $0xc8] sm:$0xff]
    %v3899 = vld [vmem:[#allocation13 + $0xd0] sm:$0xff]
    %v3900 = vld [vmem:[#allocation13 + $0xd8] sm:$0xff]
    %v3901 = vld [vmem:[#allocation13 + $0xe0] sm:$0xff]
    %v3902 = vld [vmem:[#allocation13 + $0xe8] sm:$0xff]
    %v3903 = vld [vmem:[#allocation13 + $0xf0] sm:$0xff]
    %v3904 = vld [vmem:[#allocation13 + $0xf8] sm:$0xff]
    %v3905 = vld [vmem:[#allocation13 + $0x100] sm:$0xff]
    %v3906 = vld [vmem:[#allocation13 + $0x108] sm:$0xff]
    %v3907 = vld [vmem:[#allocation13 + $0x110] sm:$0xff]
    %v3908 = vld [vmem:[#allocation13 + $0x118] sm:$0xff]
    %v3909 = vld [vmem:[#allocation13 + $0x120] sm:$0xff]
    %v3910 = vld [vmem:[#allocation13 + $0x128] sm:$0xff]
    %v3911 = vld [vmem:[#allocation13 + $0x130] sm:$0xff]
    %v3912 = vld [vmem:[#allocation13 + $0x138] sm:$0xff]
    %v3913 = vld [vmem:[#allocation13 + $0x140] sm:$0xff]
    %v3914 = vld [vmem:[#allocation13 + $0x148] sm:$0xff]
    %v3915 = vld [vmem:[#allocation13 + $0x150] sm:$0xff]
    %v3916 = vld [vmem:[#allocation13 + $0x158] sm:$0xff]
    %v3917 = vld [vmem:[#allocation13 + $0x160] sm:$0xff]
    %v3918 = vld [vmem:[#allocation13 + $0x168] sm:$0xff]
    %v3919 = vld [vmem:[#allocation13 + $0x170] sm:$0xff]
    %v3920 = vld [vmem:[#allocation13 + $0x178] sm:$0xff]
    %v3921 = vld [vmem:[#allocation13 + $0x180] sm:$0xff]
    %v3922 = vld [vmem:[#allocation13 + $0x188] sm:$0xff]
    %v3923 = vld [vmem:[#allocation13 + $0x190] sm:$0xff]
    %v3924 = vld [vmem:[#allocation13 + $0x198] sm:$0xff]
    %v3925 = vld [vmem:[#allocation13 + $0x1a0] sm:$0xff]
    %v3926 = vld [vmem:[#allocation13 + $0x1a8] sm:$0xff]
    %v3927 = vld [vmem:[#allocation13 + $0x1b0] sm:$0xff]
    %v3928 = vld [vmem:[#allocation13 + $0x1b8] sm:$0xff]
    %v3929 = vld [vmem:[#allocation13 + $0x1c0] sm:$0xff]
    %v3930 = vld [vmem:[#allocation13 + $0x1c8] sm:$0xff]
    %v3931 = vld [vmem:[#allocation13 + $0x1d0] sm:$0xff]
    %v3932 = vld [vmem:[#allocation13 + $0x1d8] sm:$0xff]
    %v3933 = vld [vmem:[#allocation13 + $0x1e0] sm:$0xff]
    %v3934 = vld [vmem:[#allocation13 + $0x1e8] sm:$0xff]
    %v3935 = vld [vmem:[#allocation13 + $0x1f0] sm:$0xff]
    %v3936 = vld [vmem:[#allocation13 + $0x1f8] sm:$0xff]
    %v3937 = vld [vmem:[#allocation15] sm:$0xff]
    %v3938 = vld [vmem:[#allocation15 + $0x8] sm:$0xff]
    %v3941 = vlaneseq
    %v3942 = vshrl.u32 %v3941, 7
    %v3943 = vsub.s32 0, %v3942
    %v3944 = vrot.slane %v3937, %v3943
    %v3945 = vlaneseq
    %v3946 = vshrl.u32 %v3945, 7
    %v3947 = vsub.s32 1, %v3946
    %v3948 = vrot.slane %v3937, %v3947
    %v3949 = vlaneseq
    %v3950 = vshrl.u32 %v3949, 7
    %v3951 = vsub.s32 2, %v3950
    %v3952 = vrot.slane %v3937, %v3951
    %v3953 = vlaneseq
    %v3954 = vshrl.u32 %v3953, 7
    %v3955 = vsub.s32 3, %v3954
    %v3956 = vrot.slane %v3937, %v3955
    %v3957 = vlaneseq
    %v3958 = vshrl.u32 %v3957, 7
    %v3959 = vsub.s32 4, %v3958
    %v3960 = vrot.slane %v3937, %v3959
    %v3961 = vlaneseq
    %v3962 = vshrl.u32 %v3961, 7
    %v3963 = vsub.s32 5, %v3962
    %v3964 = vrot.slane %v3937, %v3963
    %v3965 = vlaneseq
    %v3966 = vshrl.u32 %v3965, 7
    %v3967 = vsub.s32 6, %v3966
    %v3968 = vrot.slane %v3937, %v3967
    %v3969 = vlaneseq
    %v3970 = vshrl.u32 %v3969, 7
    %v3971 = vsub.s32 7, %v3970
    %v3972 = vrot.slane %v3937, %v3971
    %v3973 = vlaneseq
    %v3974 = vshrl.u32 %v3973, 7
    %v3975 = vsub.s32 0, %v3974
    %v3976 = vrot.slane %v3938, %v3975
    %v3977 = vlaneseq
    %v3978 = vshrl.u32 %v3977, 7
    %v3979 = vsub.s32 1, %v3978
    %v3980 = vrot.slane %v3938, %v3979
    %v3981 = vlaneseq
    %v3982 = vshrl.u32 %v3981, 7
    %v3983 = vsub.s32 2, %v3982
    %v3984 = vrot.slane %v3938, %v3983
    %v3985 = vlaneseq
    %v3986 = vshrl.u32 %v3985, 7
    %v3987 = vsub.s32 3, %v3986
    %v3988 = vrot.slane %v3938, %v3987
    %v3989 = vlaneseq
    %v3990 = vshrl.u32 %v3989, 7
    %v3991 = vsub.s32 4, %v3990
    %v3992 = vrot.slane %v3938, %v3991
    %v3993 = vlaneseq
    %v3994 = vshrl.u32 %v3993, 7
    %v3995 = vsub.s32 5, %v3994
    %v3996 = vrot.slane %v3938, %v3995
    %v3997 = vlaneseq
    %v3998 = vshrl.u32 %v3997, 7
    %v3999 = vsub.s32 6, %v3998
    %v4000 = vrot.slane %v3938, %v3999
    %v4001 = vlaneseq
    %v4002 = vshrl.u32 %v4001, 7
    %v4003 = vsub.s32 7, %v4002
    %v4004 = vrot.slane %v3938, %v4003
    %v4085 = vunpack.c.l.b16 %v3873
    %v4086 = vunpack.c.h.b16 %v3873
    %v4087 = vunpack.c.l.b16 %v3874
    %v4088 = vunpack.c.h.b16 %v3874
    %v4089 = vunpack.c.l.b16 %v3875
    %v4090 = vunpack.c.h.b16 %v3875
    %v4091 = vunpack.c.l.b16 %v3876
    %v4092 = vunpack.c.h.b16 %v3876
    %v4093 = vunpack.c.l.b16 %v3877
    %v4094 = vunpack.c.h.b16 %v3877
    %v4095 = vunpack.c.l.b16 %v3878
    %v4096 = vunpack.c.h.b16 %v3878
    %v4097 = vunpack.c.l.b16 %v3879
    %v4098 = vunpack.c.h.b16 %v3879
    %v4099 = vunpack.c.l.b16 %v3880
    %v4100 = vunpack.c.h.b16 %v3880
    %v4101 = vunpack.c.l.b16 %v3881
    %v4102 = vunpack.c.h.b16 %v3881
    %v4103 = vunpack.c.l.b16 %v3882
    %v4104 = vunpack.c.h.b16 %v3882
    %v4105 = vunpack.c.l.b16 %v3883
    %v4106 = vunpack.c.h.b16 %v3883
    %v4107 = vunpack.c.l.b16 %v3884
    %v4108 = vunpack.c.h.b16 %v3884
    %v4109 = vunpack.c.l.b16 %v3885
    %v4110 = vunpack.c.h.b16 %v3885
    %v4111 = vunpack.c.l.b16 %v3886
    %v4112 = vunpack.c.h.b16 %v3886
    %v4113 = vunpack.c.l.b16 %v3887
    %v4114 = vunpack.c.h.b16 %v3887
    %v4115 = vunpack.c.l.b16 %v3888
    %v4116 = vunpack.c.h.b16 %v3888
    %v4117 = vunpack.c.l.b16 %v3889
    %v4118 = vunpack.c.h.b16 %v3889
    %v4119 = vunpack.c.l.b16 %v3890
    %v4120 = vunpack.c.h.b16 %v3890
    %v4121 = vunpack.c.l.b16 %v3891
    %v4122 = vunpack.c.h.b16 %v3891
    %v4123 = vunpack.c.l.b16 %v3892
    %v4124 = vunpack.c.h.b16 %v3892
    %v4125 = vunpack.c.l.b16 %v3893
    %v4126 = vunpack.c.h.b16 %v3893
    %v4127 = vunpack.c.l.b16 %v3894
    %v4128 = vunpack.c.h.b16 %v3894
    %v4129 = vunpack.c.l.b16 %v3895
    %v4130 = vunpack.c.h.b16 %v3895
    %v4131 = vunpack.c.l.b16 %v3896
    %v4132 = vunpack.c.h.b16 %v3896
    %v4133 = vunpack.c.l.b16 %v3897
    %v4134 = vunpack.c.h.b16 %v3897
    %v4135 = vunpack.c.l.b16 %v3898
    %v4136 = vunpack.c.h.b16 %v3898
    %v4137 = vunpack.c.l.b16 %v3899
    %v4138 = vunpack.c.h.b16 %v3899
    %v4139 = vunpack.c.l.b16 %v3900
    %v4140 = vunpack.c.h.b16 %v3900
    %v4141 = vunpack.c.l.b16 %v3901
    %v4142 = vunpack.c.h.b16 %v3901
    %v4143 = vunpack.c.l.b16 %v3902
    %v4144 = vunpack.c.h.b16 %v3902
    %v4145 = vunpack.c.l.b16 %v3903
    %v4146 = vunpack.c.h.b16 %v3903
    %v4147 = vunpack.c.l.b16 %v3904
    %v4148 = vunpack.c.h.b16 %v3904
    %v4149 = vunpack.c.l.b16 %v3905
    %v4150 = vunpack.c.h.b16 %v3905
    %v4151 = vunpack.c.l.b16 %v3906
    %v4152 = vunpack.c.h.b16 %v3906
    %v4153 = vunpack.c.l.b16 %v3907
    %v4154 = vunpack.c.h.b16 %v3907
    %v4155 = vunpack.c.l.b16 %v3908
    %v4156 = vunpack.c.h.b16 %v3908
    %v4157 = vunpack.c.l.b16 %v3909
    %v4158 = vunpack.c.h.b16 %v3909
    %v4159 = vunpack.c.l.b16 %v3910
    %v4160 = vunpack.c.h.b16 %v3910
    %v4161 = vunpack.c.l.b16 %v3911
    %v4162 = vunpack.c.h.b16 %v3911
    %v4163 = vunpack.c.l.b16 %v3912
    %v4164 = vunpack.c.h.b16 %v3912
    %v4165 = vunpack.c.l.b16 %v3913
    %v4166 = vunpack.c.h.b16 %v3913
    %v4167 = vunpack.c.l.b16 %v3914
    %v4168 = vunpack.c.h.b16 %v3914
    %v4169 = vunpack.c.l.b16 %v3915
    %v4170 = vunpack.c.h.b16 %v3915
    %v4171 = vunpack.c.l.b16 %v3916
    %v4172 = vunpack.c.h.b16 %v3916
    %v4173 = vunpack.c.l.b16 %v3917
    %v4174 = vunpack.c.h.b16 %v3917
    %v4175 = vunpack.c.l.b16 %v3918
    %v4176 = vunpack.c.h.b16 %v3918
    %v4177 = vunpack.c.l.b16 %v3919
    %v4178 = vunpack.c.h.b16 %v3919
    %v4179 = vunpack.c.l.b16 %v3920
    %v4180 = vunpack.c.h.b16 %v3920
    %v4181 = vunpack.c.l.b16 %v3921
    %v4182 = vunpack.c.h.b16 %v3921
    %v4183 = vunpack.c.l.b16 %v3922
    %v4184 = vunpack.c.h.b16 %v3922
    %v4185 = vunpack.c.l.b16 %v3923
    %v4186 = vunpack.c.h.b16 %v3923
    %v4187 = vunpack.c.l.b16 %v3924
    %v4188 = vunpack.c.h.b16 %v3924
    %v4189 = vunpack.c.l.b16 %v3925
    %v4190 = vunpack.c.h.b16 %v3925
    %v4191 = vunpack.c.l.b16 %v3926
    %v4192 = vunpack.c.h.b16 %v3926
    %v4193 = vunpack.c.l.b16 %v3927
    %v4194 = vunpack.c.h.b16 %v3927
    %v4195 = vunpack.c.l.b16 %v3928
    %v4196 = vunpack.c.h.b16 %v3928
    %v4197 = vunpack.c.l.b16 %v3929
    %v4198 = vunpack.c.h.b16 %v3929
    %v4199 = vunpack.c.l.b16 %v3930
    %v4200 = vunpack.c.h.b16 %v3930
    %v4201 = vunpack.c.l.b16 %v3931
    %v4202 = vunpack.c.h.b16 %v3931
    %v4203 = vunpack.c.l.b16 %v3932
    %v4204 = vunpack.c.h.b16 %v3932
    %v4205 = vunpack.c.l.b16 %v3933
    %v4206 = vunpack.c.h.b16 %v3933
    %v4207 = vunpack.c.l.b16 %v3934
    %v4208 = vunpack.c.h.b16 %v3934
    %v4209 = vunpack.c.l.b16 %v3935
    %v4210 = vunpack.c.h.b16 %v3935
    %v4211 = vunpack.c.l.b16 %v3936
    %v4212 = vunpack.c.h.b16 %v3936
    %v4213 = vpack.c.b16 %v4101, %v4085
    %v4214 = vpack.c.b16 %v4102, %v4086
    %v4215 = vpack.c.b16 %v4103, %v4087
    %v4216 = vpack.c.b16 %v4104, %v4088
    %v4217 = vpack.c.b16 %v4105, %v4089
    %v4218 = vpack.c.b16 %v4106, %v4090
    %v4219 = vpack.c.b16 %v4107, %v4091
    %v4220 = vpack.c.b16 %v4108, %v4092
    %v4221 = vpack.c.b16 %v4109, %v4093
    %v4222 = vpack.c.b16 %v4110, %v4094
    %v4223 = vpack.c.b16 %v4111, %v4095
    %v4224 = vpack.c.b16 %v4112, %v4096
    %v4225 = vpack.c.b16 %v4113, %v4097
    %v4226 = vpack.c.b16 %v4114, %v4098
    %v4227 = vpack.c.b16 %v4115, %v4099
    %v4228 = vpack.c.b16 %v4116, %v4100
    %v4229 = vpack.c.b16 %v4133, %v4117
    %v4230 = vpack.c.b16 %v4134, %v4118
    %v4231 = vpack.c.b16 %v4135, %v4119
    %v4232 = vpack.c.b16 %v4136, %v4120
    %v4233 = vpack.c.b16 %v4137, %v4121
    %v4234 = vpack.c.b16 %v4138, %v4122
    %v4235 = vpack.c.b16 %v4139, %v4123
    %v4236 = vpack.c.b16 %v4140, %v4124
    %v4237 = vpack.c.b16 %v4141, %v4125
    %v4238 = vpack.c.b16 %v4142, %v4126
    %v4239 = vpack.c.b16 %v4143, %v4127
    %v4240 = vpack.c.b16 %v4144, %v4128
    %v4241 = vpack.c.b16 %v4145, %v4129
    %v4242 = vpack.c.b16 %v4146, %v4130
    %v4243 = vpack.c.b16 %v4147, %v4131
    %v4244 = vpack.c.b16 %v4148, %v4132
    %v4245 = vpack.c.b16 %v4165, %v4149
    %v4246 = vpack.c.b16 %v4166, %v4150
    %v4247 = vpack.c.b16 %v4167, %v4151
    %v4248 = vpack.c.b16 %v4168, %v4152
    %v4249 = vpack.c.b16 %v4169, %v4153
    %v4250 = vpack.c.b16 %v4170, %v4154
    %v4251 = vpack.c.b16 %v4171, %v4155
    %v4252 = vpack.c.b16 %v4172, %v4156
    %v4253 = vpack.c.b16 %v4173, %v4157
    %v4254 = vpack.c.b16 %v4174, %v4158
    %v4255 = vpack.c.b16 %v4175, %v4159
    %v4256 = vpack.c.b16 %v4176, %v4160
    %v4257 = vpack.c.b16 %v4177, %v4161
    %v4258 = vpack.c.b16 %v4178, %v4162
    %v4259 = vpack.c.b16 %v4179, %v4163
    %v4260 = vpack.c.b16 %v4180, %v4164
    %v4261 = vpack.c.b16 %v4197, %v4181
    %v4262 = vpack.c.b16 %v4198, %v4182
    %v4263 = vpack.c.b16 %v4199, %v4183
    %v4264 = vpack.c.b16 %v4200, %v4184
    %v4265 = vpack.c.b16 %v4201, %v4185
    %v4266 = vpack.c.b16 %v4202, %v4186
    %v4267 = vpack.c.b16 %v4203, %v4187
    %v4268 = vpack.c.b16 %v4204, %v4188
    %v4269 = vpack.c.b16 %v4205, %v4189
    %v4270 = vpack.c.b16 %v4206, %v4190
    %v4271 = vpack.c.b16 %v4207, %v4191
    %v4272 = vpack.c.b16 %v4208, %v4192
    %v4273 = vpack.c.b16 %v4209, %v4193
    %v4274 = vpack.c.b16 %v4210, %v4194
    %v4275 = vpack.c.b16 %v4211, %v4195
    %v4276 = vpack.c.b16 %v4212, %v4196
    %vm4341 = vcmask 523264
    %v4343 = vsel %vm4341, %v3872, 0
    %4345 = vmatprep.subr.bf16.mxu0 %v4214
    %4346 = vmatpush1.bf16.msra.mxu0 %v4213
    %4347 = vmatprep.subr.bf16.mxu0 %v4230
    %4348 = vmatpush1.bf16.msra.mxu0 %v4229
    %4349 = vmatprep.subr.bf16.mxu0 %v4246
    %4350 = vmatpush1.bf16.msra.mxu0 %v4245
    %4351 = vmatprep.subr.bf16.mxu0 %v4262
    %4352 = vmatpush1.bf16.msra.mxu0 %v4261
    %4353 = vmatprep.subr.bf16.mxu0 0
    %4354 = vmatpush1.bf16.msra.mxu0 0
    %4355 = vmatprep.subr.bf16.mxu0 0
    %4356 = vmatpush1.bf16.msra.mxu0 0
    %4357 = vmatprep.subr.bf16.mxu0 0
    %4358 = vmatpush1.bf16.msra.mxu0 0
    %4359 = vmatprep.subr.bf16.mxu0 0
    %4360 = vmatpush1.bf16.msra.mxu0 0
    %4361 = vmatprep.subr.bf16.mxu0 0
    %4362 = vmatpush1.bf16.msra.mxu0 0
    %4363 = vmatprep.subr.bf16.mxu0 0
    %4364 = vmatpush1.bf16.msra.mxu0 0
    %4365 = vmatprep.subr.bf16.mxu0 0
    %4366 = vmatpush1.bf16.msra.mxu0 0
    %4367 = vmatprep.subr.bf16.mxu0 0
    %4368 = vmatpush1.bf16.msra.mxu0 0
    %4369 = vmatprep.subr.bf16.mxu0 0
    %4370 = vmatpush1.bf16.msra.mxu0 0
    %4371 = vmatprep.subr.bf16.mxu0 0
    %4372 = vmatpush1.bf16.msra.mxu0 0
    %4373 = vmatprep.subr.bf16.mxu0 0
    %4374 = vmatpush1.bf16.msra.mxu0 0
    %4375 = vmatprep.subr.bf16.mxu0 0
    %4376 = vmatpush1.bf16.msra.mxu0 0
    %4377 = vmatprep.mubr.bf16.mxu0 0
    %4378 = vmatmul.mubr.bf16.gmra.mrb[0].mxu0 %v4343
    %v4379 = vpop.f32.mrb[0].mxu0
    %v4380 = vadd.f32 %v3944, %v4379
    %v4381 = vpop.f32.mrb[0].mxu0
    %v4382 = vadd.f32 %v3948, %v4381
    %v4383 = vpop.f32.mrb[0].mxu0
    %v4384 = vpop.f32.mrb[0].mxu0
    %4385 = vdwg.mxu0
    %4386 = vmatprep.subr.bf16.mxu0 %v4216
    %4387 = vmatpush1.bf16.msra.mxu0 %v4215
    %4388 = vmatprep.subr.bf16.mxu0 %v4232
    %4389 = vmatpush1.bf16.msra.mxu0 %v4231
    %4390 = vmatprep.subr.bf16.mxu0 %v4248
    %4391 = vmatpush1.bf16.msra.mxu0 %v4247
    %4392 = vmatprep.subr.bf16.mxu0 %v4264
    %4393 = vmatpush1.bf16.msra.mxu0 %v4263
    %4394 = vmatprep.subr.bf16.mxu0 0
    %4395 = vmatpush1.bf16.msra.mxu0 0
    %4396 = vmatprep.subr.bf16.mxu0 0
    %4397 = vmatpush1.bf16.msra.mxu0 0
    %4398 = vmatprep.subr.bf16.mxu0 0
    %4399 = vmatpush1.bf16.msra.mxu0 0
    %4400 = vmatprep.subr.bf16.mxu0 0
    %4401 = vmatpush1.bf16.msra.mxu0 0
    %4402 = vmatprep.subr.bf16.mxu0 0
    %4403 = vmatpush1.bf16.msra.mxu0 0
    %4404 = vmatprep.subr.bf16.mxu0 0
    %4405 = vmatpush1.bf16.msra.mxu0 0
    %4406 = vmatprep.subr.bf16.mxu0 0
    %4407 = vmatpush1.bf16.msra.mxu0 0
    %4408 = vmatprep.subr.bf16.mxu0 0
    %4409 = vmatpush1.bf16.msra.mxu0 0
    %4410 = vmatprep.subr.bf16.mxu0 0
    %4411 = vmatpush1.bf16.msra.mxu0 0
    %4412 = vmatprep.subr.bf16.mxu0 0
    %4413 = vmatpush1.bf16.msra.mxu0 0
    %4414 = vmatprep.subr.bf16.mxu0 0
    %4415 = vmatpush1.bf16.msra.mxu0 0
    %4416 = vmatprep.subr.bf16.mxu0 0
    %4417 = vmatpush1.bf16.msra.mxu0 0
    %4418 = vmatprep.mubr.bf16.mxu0 0
    %4419 = vmatmul.mubr.bf16.gmra.mrb[0].mxu0 %v4343
    %v4420 = vpop.f32.mrb[0].mxu0
    %v4421 = vadd.f32 %v3952, %v4420
    %v4422 = vpop.f32.mrb[0].mxu0
    %v4423 = vadd.f32 %v3956, %v4422
    %v4424 = vpop.f32.mrb[0].mxu0
    %v4425 = vpop.f32.mrb[0].mxu0
    %4426 = vdwg.mxu0
    %4427 = vmatprep.subr.bf16.mxu0 %v4218
    %4428 = vmatpush1.bf16.msra.mxu0 %v4217
    %4429 = vmatprep.subr.bf16.mxu0 %v4234
    %4430 = vmatpush1.bf16.msra.mxu0 %v4233
    %4431 = vmatprep.subr.bf16.mxu0 %v4250
    %4432 = vmatpush1.bf16.msra.mxu0 %v4249
    %4433 = vmatprep.subr.bf16.mxu0 %v4266
    %4434 = vmatpush1.bf16.msra.mxu0 %v4265
    %4435 = vmatprep.subr.bf16.mxu0 0
    %4436 = vmatpush1.bf16.msra.mxu0 0
    %4437 = vmatprep.subr.bf16.mxu0 0
    %4438 = vmatpush1.bf16.msra.mxu0 0
    %4439 = vmatprep.subr.bf16.mxu0 0
    %4440 = vmatpush1.bf16.msra.mxu0 0
    %4441 = vmatprep.subr.bf16.mxu0 0
    %4442 = vmatpush1.bf16.msra.mxu0 0
    %4443 = vmatprep.subr.bf16.mxu0 0
    %4444 = vmatpush1.bf16.msra.mxu0 0
    %4445 = vmatprep.subr.bf16.mxu0 0
    %4446 = vmatpush1.bf16.msra.mxu0 0
    %4447 = vmatprep.subr.bf16.mxu0 0
    %4448 = vmatpush1.bf16.msra.mxu0 0
    %4449 = vmatprep.subr.bf16.mxu0 0
    %4450 = vmatpush1.bf16.msra.mxu0 0
    %4451 = vmatprep.subr.bf16.mxu0 0
    %4452 = vmatpush1.bf16.msra.mxu0 0
    %4453 = vmatprep.subr.bf16.mxu0 0
    %4454 = vmatpush1.bf16.msra.mxu0 0
    %4455 = vmatprep.subr.bf16.mxu0 0
    %4456 = vmatpush1.bf16.msra.mxu0 0
    %4457 = vmatprep.subr.bf16.mxu0 0
    %4458 = vmatpush1.bf16.msra.mxu0 0
    %4459 = vmatprep.mubr.bf16.mxu0 0
    %4460 = vmatmul.mubr.bf16.gmra.mrb[0].mxu0 %v4343
    %v4461 = vpop.f32.mrb[0].mxu0
    %v4462 = vadd.f32 %v3960, %v4461
    %v4463 = vpop.f32.mrb[0].mxu0
    %v4464 = vadd.f32 %v3964, %v4463
    %v4465 = vpop.f32.mrb[0].mxu0
    %v4466 = vpop.f32.mrb[0].mxu0
    %4467 = vdwg.mxu0
    %4468 = vmatprep.subr.bf16.mxu0 %v4220
    %4469 = vmatpush1.bf16.msra.mxu0 %v4219
    %4470 = vmatprep.subr.bf16.mxu0 %v4236
    %4471 = vmatpush1.bf16.msra.mxu0 %v4235
    %4472 = vmatprep.subr.bf16.mxu0 %v4252
    %4473 = vmatpush1.bf16.msra.mxu0 %v4251
    %4474 = vmatprep.subr.bf16.mxu0 %v4268
    %4475 = vmatpush1.bf16.msra.mxu0 %v4267
    %4476 = vmatprep.subr.bf16.mxu0 0
    %4477 = vmatpush1.bf16.msra.mxu0 0
    %4478 = vmatprep.subr.bf16.mxu0 0
    %4479 = vmatpush1.bf16.msra.mxu0 0
    %4480 = vmatprep.subr.bf16.mxu0 0
    %4481 = vmatpush1.bf16.msra.mxu0 0
    %4482 = vmatprep.subr.bf16.mxu0 0
    %4483 = vmatpush1.bf16.msra.mxu0 0
    %4484 = vmatprep.subr.bf16.mxu0 0
    %4485 = vmatpush1.bf16.msra.mxu0 0
    %4486 = vmatprep.subr.bf16.mxu0 0
    %4487 = vmatpush1.bf16.msra.mxu0 0
    %4488 = vmatprep.subr.bf16.mxu0 0
    %4489 = vmatpush1.bf16.msra.mxu0 0
    %4490 = vmatprep.subr.bf16.mxu0 0
    %4491 = vmatpush1.bf16.msra.mxu0 0
    %4492 = vmatprep.subr.bf16.mxu0 0
    %4493 = vmatpush1.bf16.msra.mxu0 0
    %4494 = vmatprep.subr.bf16.mxu0 0
    %4495 = vmatpush1.bf16.msra.mxu0 0
    %4496 = vmatprep.subr.bf16.mxu0 0
    %4497 = vmatpush1.bf16.msra.mxu0 0
    %4498 = vmatprep.subr.bf16.mxu0 0
    %4499 = vmatpush1.bf16.msra.mxu0 0
    %4500 = vmatprep.mubr.bf16.mxu0 0
    %4501 = vmatmul.mubr.bf16.gmra.mrb[0].mxu0 %v4343
    %v4502 = vpop.f32.mrb[0].mxu0
    %v4503 = vadd.f32 %v3968, %v4502
    %v4504 = vpop.f32.mrb[0].mxu0
    %v4505 = vadd.f32 %v3972, %v4504
    %v4506 = vpop.f32.mrb[0].mxu0
    %v4507 = vpop.f32.mrb[0].mxu0
    %4508 = vdwg.mxu0
    %4509 = vmatprep.subr.bf16.mxu0 %v4222
    %4510 = vmatpush1.bf16.msra.mxu0 %v4221
    %4511 = vmatprep.subr.bf16.mxu0 %v4238
    %4512 = vmatpush1.bf16.msra.mxu0 %v4237
    %4513 = vmatprep.subr.bf16.mxu0 %v4254
    %4514 = vmatpush1.bf16.msra.mxu0 %v4253
    %4515 = vmatprep.subr.bf16.mxu0 %v4270
    %4516 = vmatpush1.bf16.msra.mxu0 %v4269
    %4517 = vmatprep.subr.bf16.mxu0 0
    %4518 = vmatpush1.bf16.msra.mxu0 0
    %4519 = vmatprep.subr.bf16.mxu0 0
    %4520 = vmatpush1.bf16.msra.mxu0 0
    %4521 = vmatprep.subr.bf16.mxu0 0
    %4522 = vmatpush1.bf16.msra.mxu0 0
    %4523 = vmatprep.subr.bf16.mxu0 0
    %4524 = vmatpush1.bf16.msra.mxu0 0
    %4525 = vmatprep.subr.bf16.mxu0 0
    %4526 = vmatpush1.bf16.msra.mxu0 0
    %4527 = vmatprep.subr.bf16.mxu0 0
    %4528 = vmatpush1.bf16.msra.mxu0 0
    %4529 = vmatprep.subr.bf16.mxu0 0
    %4530 = vmatpush1.bf16.msra.mxu0 0
    %4531 = vmatprep.subr.bf16.mxu0 0
    %4532 = vmatpush1.bf16.msra.mxu0 0
    %4533 = vmatprep.subr.bf16.mxu0 0
    %4534 = vmatpush1.bf16.msra.mxu0 0
    %4535 = vmatprep.subr.bf16.mxu0 0
    %4536 = vmatpush1.bf16.msra.mxu0 0
    %4537 = vmatprep.subr.bf16.mxu0 0
    %4538 = vmatpush1.bf16.msra.mxu0 0
    %4539 = vmatprep.subr.bf16.mxu0 0
    %4540 = vmatpush1.bf16.msra.mxu0 0
    %4541 = vmatprep.mubr.bf16.mxu0 0
    %4542 = vmatmul.mubr.bf16.gmra.mrb[0].mxu0 %v4343
    %v4543 = vpop.f32.mrb[0].mxu0
    %v4544 = vadd.f32 %v3976, %v4543
    %v4545 = vpop.f32.mrb[0].mxu0
    %v4546 = vadd.f32 %v3980, %v4545
    %v4547 = vpop.f32.mrb[0].mxu0
    %v4548 = vpop.f32.mrb[0].mxu0
    %4549 = vdwg.mxu0
    %4550 = vmatprep.subr.bf16.mxu0 %v4224
    %4551 = vmatpush1.bf16.msra.mxu0 %v4223
    %4552 = vmatprep.subr.bf16.mxu0 %v4240
    %4553 = vmatpush1.bf16.msra.mxu0 %v4239
    %4554 = vmatprep.subr.bf16.mxu0 %v4256
    %4555 = vmatpush1.bf16.msra.mxu0 %v4255
    %4556 = vmatprep.subr.bf16.mxu0 %v4272
    %4557 = vmatpush1.bf16.msra.mxu0 %v4271
    %4558 = vmatprep.subr.bf16.mxu0 0
    %4559 = vmatpush1.bf16.msra.mxu0 0
    %4560 = vmatprep.subr.bf16.mxu0 0
    %4561 = vmatpush1.bf16.msra.mxu0 0
    %4562 = vmatprep.subr.bf16.mxu0 0
    %4563 = vmatpush1.bf16.msra.mxu0 0
    %4564 = vmatprep.subr.bf16.mxu0 0
    %4565 = vmatpush1.bf16.msra.mxu0 0
    %4566 = vmatprep.subr.bf16.mxu0 0
    %4567 = vmatpush1.bf16.msra.mxu0 0
    %4568 = vmatprep.subr.bf16.mxu0 0
    %4569 = vmatpush1.bf16.msra.mxu0 0
    %4570 = vmatprep.subr.bf16.mxu0 0
    %4571 = vmatpush1.bf16.msra.mxu0 0
    %4572 = vmatprep.subr.bf16.mxu0 0
    %4573 = vmatpush1.bf16.msra.mxu0 0
    %4574 = vmatprep.subr.bf16.mxu0 0
    %4575 = vmatpush1.bf16.msra.mxu0 0
    %4576 = vmatprep.subr.bf16.mxu0 0
    %4577 = vmatpush1.bf16.msra.mxu0 0
    %4578 = vmatprep.subr.bf16.mxu0 0
    %4579 = vmatpush1.bf16.msra.mxu0 0
    %4580 = vmatprep.subr.bf16.mxu0 0
    %4581 = vmatpush1.bf16.msra.mxu0 0
    %4582 = vmatprep.mubr.bf16.mxu0 0
    %4583 = vmatmul.mubr.bf16.gmra.mrb[0].mxu0 %v4343
    %v4584 = vpop.f32.mrb[0].mxu0
    %v4585 = vadd.f32 %v3984, %v4584
    %v4586 = vpop.f32.mrb[0].mxu0
    %v4587 = vadd.f32 %v3988, %v4586
    %v4588 = vpop.f32.mrb[0].mxu0
    %v4589 = vpop.f32.mrb[0].mxu0
    %4590 = vdwg.mxu0
    %4591 = vmatprep.subr.bf16.mxu0 %v4226
    %4592 = vmatpush1.bf16.msra.mxu0 %v4225
    %4593 = vmatprep.subr.bf16.mxu0 %v4242
    %4594 = vmatpush1.bf16.msra.mxu0 %v4241
    %4595 = vmatprep.subr.bf16.mxu0 %v4258
    %4596 = vmatpush1.bf16.msra.mxu0 %v4257
    %4597 = vmatprep.subr.bf16.mxu0 %v4274
    %4598 = vmatpush1.bf16.msra.mxu0 %v4273
    %4599 = vmatprep.subr.bf16.mxu0 0
    %4600 = vmatpush1.bf16.msra.mxu0 0
    %4601 = vmatprep.subr.bf16.mxu0 0
    %4602 = vmatpush1.bf16.msra.mxu0 0
    %4603 = vmatprep.subr.bf16.mxu0 0
    %4604 = vmatpush1.bf16.msra.mxu0 0
    %4605 = vmatprep.subr.bf16.mxu0 0
    %4606 = vmatpush1.bf16.msra.mxu0 0
    %4607 = vmatprep.subr.bf16.mxu0 0
    %4608 = vmatpush1.bf16.msra.mxu0 0
    %4609 = vmatprep.subr.bf16.mxu0 0
    %4610 = vmatpush1.bf16.msra.mxu0 0
    %4611 = vmatprep.subr.bf16.mxu0 0
    %4612 = vmatpush1.bf16.msra.mxu0 0
    %4613 = vmatprep.subr.bf16.mxu0 0
    %4614 = vmatpush1.bf16.msra.mxu0 0
    %4615 = vmatprep.subr.bf16.mxu0 0
    %4616 = vmatpush1.bf16.msra.mxu0 0
    %4617 = vmatprep.subr.bf16.mxu0 0
    %4618 = vmatpush1.bf16.msra.mxu0 0
    %4619 = vmatprep.subr.bf16.mxu0 0
    %4620 = vmatpush1.bf16.msra.mxu0 0
    %4621 = vmatprep.subr.bf16.mxu0 0
    %4622 = vmatpush1.bf16.msra.mxu0 0
    %4623 = vmatprep.mubr.bf16.mxu0 0
    %4624 = vmatmul.mubr.bf16.gmra.mrb[0].mxu0 %v4343
    %v4625 = vpop.f32.mrb[0].mxu0
    %v4626 = vadd.f32 %v3992, %v4625
    %v4627 = vpop.f32.mrb[0].mxu0
    %v4628 = vadd.f32 %v3996, %v4627
    %v4629 = vpop.f32.mrb[0].mxu0
    %v4630 = vpop.f32.mrb[0].mxu0
    %4631 = vdwg.mxu0
    %4632 = vmatprep.subr.bf16.mxu0 %v4228
    %4633 = vmatpush1.bf16.msra.mxu0 %v4227
    %4634 = vmatprep.subr.bf16.mxu0 %v4244
    %4635 = vmatpush1.bf16.msra.mxu0 %v4243
    %4636 = vmatprep.subr.bf16.mxu0 %v4260
    %4637 = vmatpush1.bf16.msra.mxu0 %v4259
    %4638 = vmatprep.subr.bf16.mxu0 %v4276
    %4639 = vmatpush1.bf16.msra.mxu0 %v4275
    %4640 = vmatprep.subr.bf16.mxu0 0
    %4641 = vmatpush1.bf16.msra.mxu0 0
    %4642 = vmatprep.subr.bf16.mxu0 0
    %4643 = vmatpush1.bf16.msra.mxu0 0
    %4644 = vmatprep.subr.bf16.mxu0 0
    %4645 = vmatpush1.bf16.msra.mxu0 0
    %4646 = vmatprep.subr.bf16.mxu0 0
    %4647 = vmatpush1.bf16.msra.mxu0 0
    %4648 = vmatprep.subr.bf16.mxu0 0
    %4649 = vmatpush1.bf16.msra.mxu0 0
    %4650 = vmatprep.subr.bf16.mxu0 0
    %4651 = vmatpush1.bf16.msra.mxu0 0
    %4652 = vmatprep.subr.bf16.mxu0 0
    %4653 = vmatpush1.bf16.msra.mxu0 0
    %4654 = vmatprep.subr.bf16.mxu0 0
    %4655 = vmatpush1.bf16.msra.mxu0 0
    %4656 = vmatprep.subr.bf16.mxu0 0
    %4657 = vmatpush1.bf16.msra.mxu0 0
    %4658 = vmatprep.subr.bf16.mxu0 0
    %4659 = vmatpush1.bf16.msra.mxu0 0
    %4660 = vmatprep.subr.bf16.mxu0 0
    %4661 = vmatpush1.bf16.msra.mxu0 0
    %4662 = vmatprep.subr.bf16.mxu0 0
    %4663 = vmatpush1.bf16.msra.mxu0 0
    %4664 = vmatprep.mubr.bf16.mxu0 0
    %4665 = vmatmul.mubr.bf16.gmra.mrb[0].mxu0 %v4343
    %v4666 = vpop.f32.mrb[0].mxu0
    %v4667 = vadd.f32 %v4000, %v4666
    %v4668 = vpop.f32.mrb[0].mxu0
    %v4669 = vadd.f32 %v4004, %v4668
    %v4670 = vpop.f32.mrb[0].mxu0
    %v4671 = vpop.f32.mrb[0].mxu0
    %4672 = vdwg.mxu0
    %v4673 = vmax.f32 %v4380, 0.0
    %v4674 = vmax.f32 %v4382, 0.0
    %v4675 = vmax.f32 %v4421, 0.0
    %v4676 = vmax.f32 %v4423, 0.0
    %v4677 = vmax.f32 %v4462, 0.0
    %v4678 = vmax.f32 %v4464, 0.0
    %v4679 = vmax.f32 %v4503, 0.0
    %v4680 = vmax.f32 %v4505, 0.0
    %v4681 = vmax.f32 %v4544, 0.0
    %v4682 = vmax.f32 %v4546, 0.0
    %v4683 = vmax.f32 %v4585, 0.0
    %v4684 = vmax.f32 %v4587, 0.0
    %v4685 = vmax.f32 %v4626, 0.0
    %v4686 = vmax.f32 %v4628, 0.0
    %v4687 = vmax.f32 %v4667, 0.0
    %v4688 = vmax.f32 %v4669, 0.0
    %s4689 = smul.u32 4, 256
    %s4690 = smul.u32 %s4689, 8
    %s4691 = sshll.u32 %s4690, 4
    %4692 = dma.done [#allocation3], %s4691
    %v4693 = vpack.c.bf16 %v4673, %v4673
    %v4694 = vpack.c.bf16 %v4674, %v4674
    %v4695 = vpack.c.bf16 %v4675, %v4675
    %v4696 = vpack.c.bf16 %v4676, %v4676
    %v4697 = vpack.c.bf16 %v4677, %v4677
    %v4698 = vpack.c.bf16 %v4678, %v4678
    %v4699 = vpack.c.bf16 %v4679, %v4679
    %v4700 = vpack.c.bf16 %v4680, %v4680
    %v4701 = vpack.c.bf16 %v4681, %v4681
    %v4702 = vpack.c.bf16 %v4682, %v4682
    %v4703 = vpack.c.bf16 %v4683, %v4683
    %v4704 = vpack.c.bf16 %v4684, %v4684
    %v4705 = vpack.c.bf16 %v4685, %v4685
    %v4706 = vpack.c.bf16 %v4686, %v4686
    %v4707 = vpack.c.bf16 %v4687, %v4687
    %v4708 = vpack.c.bf16 %v4688, %v4688
    %v4709 = vld [vmem:[#allocation2] sm:$0xff]
    %v4710 = vld [vmem:[#allocation2 + $0x8] sm:$0xff]
    %v4711 = vld [vmem:[#allocation2 + $0x10] sm:$0xff]
    %v4712 = vld [vmem:[#allocation2 + $0x18] sm:$0xff]
    %v4713 = vld [vmem:[#allocation2 + $0x20] sm:$0xff]
    %v4714 = vld [vmem:[#allocation2 + $0x28] sm:$0xff]
    %v4715 = vld [vmem:[#allocation2 + $0x30] sm:$0xff]
    %v4716 = vld [vmem:[#allocation2 + $0x38] sm:$0xff]
    %v4717 = vld [vmem:[#allocation2 + $0x40] sm:$0xff]
    %v4718 = vld [vmem:[#allocation2 + $0x48] sm:$0xff]
    %v4719 = vld [vmem:[#allocation2 + $0x50] sm:$0xff]
    %v4720 = vld [vmem:[#allocation2 + $0x58] sm:$0xff]
    %v4721 = vld [vmem:[#allocation2 + $0x60] sm:$0xff]
    %v4722 = vld [vmem:[#allocation2 + $0x68] sm:$0xff]
    %v4723 = vld [vmem:[#allocation2 + $0x70] sm:$0xff]
    %v4724 = vld [vmem:[#allocation2 + $0x78] sm:$0xff]
    %v4725 = vld [vmem:[#allocation2 + $0x80] sm:$0xff]
    %v4726 = vld [vmem:[#allocation2 + $0x88] sm:$0xff]
    %v4727 = vld [vmem:[#allocation2 + $0x90] sm:$0xff]
    %v4728 = vld [vmem:[#allocation2 + $0x98] sm:$0xff]
    %v4729 = vld [vmem:[#allocation2 + $0xa0] sm:$0xff]
    %v4730 = vld [vmem:[#allocation2 + $0xa8] sm:$0xff]
    %v4731 = vld [vmem:[#allocation2 + $0xb0] sm:$0xff]
    %v4732 = vld [vmem:[#allocation2 + $0xb8] sm:$0xff]
    %v4733 = vld [vmem:[#allocation2 + $0xc0] sm:$0xff]
    %v4734 = vld [vmem:[#allocation2 + $0xc8] sm:$0xff]
    %v4735 = vld [vmem:[#allocation2 + $0xd0] sm:$0xff]
    %v4736 = vld [vmem:[#allocation2 + $0xd8] sm:$0xff]
    %v4737 = vld [vmem:[#allocation2 + $0xe0] sm:$0xff]
    %v4738 = vld [vmem:[#allocation2 + $0xe8] sm:$0xff]
    %v4739 = vld [vmem:[#allocation2 + $0xf0] sm:$0xff]
    %v4740 = vld [vmem:[#allocation2 + $0xf8] sm:$0xff]
    %v4741 = vld [vmem:[#allocation2 + $0x100] sm:$0xff]
    %v4742 = vld [vmem:[#allocation2 + $0x108] sm:$0xff]
    %v4743 = vld [vmem:[#allocation2 + $0x110] sm:$0xff]
    %v4744 = vld [vmem:[#allocation2 + $0x118] sm:$0xff]
    %v4745 = vld [vmem:[#allocation2 + $0x120] sm:$0xff]
    %v4746 = vld [vmem:[#allocation2 + $0x128] sm:$0xff]
    %v4747 = vld [vmem:[#allocation2 + $0x130] sm:$0xff]
    %v4748 = vld [vmem:[#allocation2 + $0x138] sm:$0xff]
    %v4749 = vld [vmem:[#allocation2 + $0x140] sm:$0xff]
    %v4750 = vld [vmem:[#allocation2 + $0x148] sm:$0xff]
    %v4751 = vld [vmem:[#allocation2 + $0x150] sm:$0xff]
    %v4752 = vld [vmem:[#allocation2 + $0x158] sm:$0xff]
    %v4753 = vld [vmem:[#allocation2 + $0x160] sm:$0xff]
    %v4754 = vld [vmem:[#allocation2 + $0x168] sm:$0xff]
    %v4755 = vld [vmem:[#allocation2 + $0x170] sm:$0xff]
    %v4756 = vld [vmem:[#allocation2 + $0x178] sm:$0xff]
    %v4757 = vld [vmem:[#allocation2 + $0x180] sm:$0xff]
    %v4758 = vld [vmem:[#allocation2 + $0x188] sm:$0xff]
    %v4759 = vld [vmem:[#allocation2 + $0x190] sm:$0xff]
    %v4760 = vld [vmem:[#allocation2 + $0x198] sm:$0xff]
    %v4761 = vld [vmem:[#allocation2 + $0x1a0] sm:$0xff]
    %v4762 = vld [vmem:[#allocation2 + $0x1a8] sm:$0xff]
    %v4763 = vld [vmem:[#allocation2 + $0x1b0] sm:$0xff]
    %v4764 = vld [vmem:[#allocation2 + $0x1b8] sm:$0xff]
    %v4765 = vld [vmem:[#allocation2 + $0x1c0] sm:$0xff]
    %v4766 = vld [vmem:[#allocation2 + $0x1c8] sm:$0xff]
    %v4767 = vld [vmem:[#allocation2 + $0x1d0] sm:$0xff]
    %v4768 = vld [vmem:[#allocation2 + $0x1d8] sm:$0xff]
    %v4769 = vld [vmem:[#allocation2 + $0x1e0] sm:$0xff]
    %v4770 = vld [vmem:[#allocation2 + $0x1e8] sm:$0xff]
    %v4771 = vld [vmem:[#allocation2 + $0x1f0] sm:$0xff]
    %v4772 = vld [vmem:[#allocation2 + $0x1f8] sm:$0xff]
    %v4773 = vld [vmem:[#allocation2 + $0x200] sm:$0xff]
    %v4774 = vld [vmem:[#allocation2 + $0x208] sm:$0xff]
    %v4775 = vld [vmem:[#allocation2 + $0x210] sm:$0xff]
    %v4776 = vld [vmem:[#allocation2 + $0x218] sm:$0xff]
    %v4777 = vld [vmem:[#allocation2 + $0x220] sm:$0xff]
    %v4778 = vld [vmem:[#allocation2 + $0x228] sm:$0xff]
    %v4779 = vld [vmem:[#allocation2 + $0x230] sm:$0xff]
    %v4780 = vld [vmem:[#allocation2 + $0x238] sm:$0xff]
    %v4781 = vld [vmem:[#allocation2 + $0x240] sm:$0xff]
    %v4782 = vld [vmem:[#allocation2 + $0x248] sm:$0xff]
    %v4783 = vld [vmem:[#allocation2 + $0x250] sm:$0xff]
    %v4784 = vld [vmem:[#allocation2 + $0x258] sm:$0xff]
    %v4785 = vld [vmem:[#allocation2 + $0x260] sm:$0xff]
    %v4786 = vld [vmem:[#allocation2 + $0x268] sm:$0xff]
    %v4787 = vld [vmem:[#allocation2 + $0x270] sm:$0xff]
    %v4788 = vld [vmem:[#allocation2 + $0x278] sm:$0xff]
    %v4789 = vld [vmem:[#allocation2 + $0x280] sm:$0xff]
    %v4790 = vld [vmem:[#allocation2 + $0x288] sm:$0xff]
    %v4791 = vld [vmem:[#allocation2 + $0x290] sm:$0xff]
    %v4792 = vld [vmem:[#allocation2 + $0x298] sm:$0xff]
    %v4793 = vld [vmem:[#allocation2 + $0x2a0] sm:$0xff]
    %v4794 = vld [vmem:[#allocation2 + $0x2a8] sm:$0xff]
    %v4795 = vld [vmem:[#allocation2 + $0x2b0] sm:$0xff]
    %v4796 = vld [vmem:[#allocation2 + $0x2b8] sm:$0xff]
    %v4797 = vld [vmem:[#allocation2 + $0x2c0] sm:$0xff]
    %v4798 = vld [vmem:[#allocation2 + $0x2c8] sm:$0xff]
    %v4799 = vld [vmem:[#allocation2 + $0x2d0] sm:$0xff]
    %v4800 = vld [vmem:[#allocation2 + $0x2d8] sm:$0xff]
    %v4801 = vld [vmem:[#allocation2 + $0x2e0] sm:$0xff]
    %v4802 = vld [vmem:[#allocation2 + $0x2e8] sm:$0xff]
    %v4803 = vld [vmem:[#allocation2 + $0x2f0] sm:$0xff]
    %v4804 = vld [vmem:[#allocation2 + $0x2f8] sm:$0xff]
    %v4805 = vld [vmem:[#allocation2 + $0x300] sm:$0xff]
    %v4806 = vld [vmem:[#allocation2 + $0x308] sm:$0xff]
    %v4807 = vld [vmem:[#allocation2 + $0x310] sm:$0xff]
    %v4808 = vld [vmem:[#allocation2 + $0x318] sm:$0xff]
    %v4809 = vld [vmem:[#allocation2 + $0x320] sm:$0xff]
    %v4810 = vld [vmem:[#allocation2 + $0x328] sm:$0xff]
    %v4811 = vld [vmem:[#allocation2 + $0x330] sm:$0xff]
    %v4812 = vld [vmem:[#allocation2 + $0x338] sm:$0xff]
    %v4813 = vld [vmem:[#allocation2 + $0x340] sm:$0xff]
    %v4814 = vld [vmem:[#allocation2 + $0x348] sm:$0xff]
    %v4815 = vld [vmem:[#allocation2 + $0x350] sm:$0xff]
    %v4816 = vld [vmem:[#allocation2 + $0x358] sm:$0xff]
    %v4817 = vld [vmem:[#allocation2 + $0x360] sm:$0xff]
    %v4818 = vld [vmem:[#allocation2 + $0x368] sm:$0xff]
    %v4819 = vld [vmem:[#allocation2 + $0x370] sm:$0xff]
    %v4820 = vld [vmem:[#allocation2 + $0x378] sm:$0xff]
    %v4821 = vld [vmem:[#allocation2 + $0x380] sm:$0xff]
    %v4822 = vld [vmem:[#allocation2 + $0x388] sm:$0xff]
    %v4823 = vld [vmem:[#allocation2 + $0x390] sm:$0xff]
    %v4824 = vld [vmem:[#allocation2 + $0x398] sm:$0xff]
    %v4825 = vld [vmem:[#allocation2 + $0x3a0] sm:$0xff]
    %v4826 = vld [vmem:[#allocation2 + $0x3a8] sm:$0xff]
    %v4827 = vld [vmem:[#allocation2 + $0x3b0] sm:$0xff]
    %v4828 = vld [vmem:[#allocation2 + $0x3b8] sm:$0xff]
    %v4829 = vld [vmem:[#allocation2 + $0x3c0] sm:$0xff]
    %v4830 = vld [vmem:[#allocation2 + $0x3c8] sm:$0xff]
    %v4831 = vld [vmem:[#allocation2 + $0x3d0] sm:$0xff]
    %v4832 = vld [vmem:[#allocation2 + $0x3d8] sm:$0xff]
    %v4833 = vld [vmem:[#allocation2 + $0x3e0] sm:$0xff]
    %v4834 = vld [vmem:[#allocation2 + $0x3e8] sm:$0xff]
    %v4835 = vld [vmem:[#allocation2 + $0x3f0] sm:$0xff]
    %v4836 = vld [vmem:[#allocation2 + $0x3f8] sm:$0xff]
    %v4837 = vld [vmem:[#allocation2 + $0x400] sm:$0xff]
    %v4838 = vld [vmem:[#allocation2 + $0x408] sm:$0xff]
    %v4839 = vld [vmem:[#allocation2 + $0x410] sm:$0xff]
    %v4840 = vld [vmem:[#allocation2 + $0x418] sm:$0xff]
    %v4841 = vld [vmem:[#allocation2 + $0x420] sm:$0xff]
    %v4842 = vld [vmem:[#allocation2 + $0x428] sm:$0xff]
    %v4843 = vld [vmem:[#allocation2 + $0x430] sm:$0xff]
    %v4844 = vld [vmem:[#allocation2 + $0x438] sm:$0xff]
    %v4845 = vld [vmem:[#allocation2 + $0x440] sm:$0xff]
    %v4846 = vld [vmem:[#allocation2 + $0x448] sm:$0xff]
    %v4847 = vld [vmem:[#allocation2 + $0x450] sm:$0xff]
    %v4848 = vld [vmem:[#allocation2 + $0x458] sm:$0xff]
    %v4849 = vld [vmem:[#allocation2 + $0x460] sm:$0xff]
    %v4850 = vld [vmem:[#allocation2 + $0x468] sm:$0xff]
    %v4851 = vld [vmem:[#allocation2 + $0x470] sm:$0xff]
    %v4852 = vld [vmem:[#allocation2 + $0x478] sm:$0xff]
    %v4853 = vld [vmem:[#allocation2 + $0x480] sm:$0xff]
    %v4854 = vld [vmem:[#allocation2 + $0x488] sm:$0xff]
    %v4855 = vld [vmem:[#allocation2 + $0x490] sm:$0xff]
    %v4856 = vld [vmem:[#allocation2 + $0x498] sm:$0xff]
    %v4857 = vld [vmem:[#allocation2 + $0x4a0] sm:$0xff]
    %v4858 = vld [vmem:[#allocation2 + $0x4a8] sm:$0xff]
    %v4859 = vld [vmem:[#allocation2 + $0x4b0] sm:$0xff]
    %v4860 = vld [vmem:[#allocation2 + $0x4b8] sm:$0xff]
    %v4861 = vld [vmem:[#allocation2 + $0x4c0] sm:$0xff]
    %v4862 = vld [vmem:[#allocation2 + $0x4c8] sm:$0xff]
    %v4863 = vld [vmem:[#allocation2 + $0x4d0] sm:$0xff]
    %v4864 = vld [vmem:[#allocation2 + $0x4d8] sm:$0xff]
    %v4865 = vld [vmem:[#allocation2 + $0x4e0] sm:$0xff]
    %v4866 = vld [vmem:[#allocation2 + $0x4e8] sm:$0xff]
    %v4867 = vld [vmem:[#allocation2 + $0x4f0] sm:$0xff]
    %v4868 = vld [vmem:[#allocation2 + $0x4f8] sm:$0xff]
    %v4869 = vld [vmem:[#allocation2 + $0x500] sm:$0xff]
    %v4870 = vld [vmem:[#allocation2 + $0x508] sm:$0xff]
    %v4871 = vld [vmem:[#allocation2 + $0x510] sm:$0xff]
    %v4872 = vld [vmem:[#allocation2 + $0x518] sm:$0xff]
    %v4873 = vld [vmem:[#allocation2 + $0x520] sm:$0xff]
    %v4874 = vld [vmem:[#allocation2 + $0x528] sm:$0xff]
    %v4875 = vld [vmem:[#allocation2 + $0x530] sm:$0xff]
    %v4876 = vld [vmem:[#allocation2 + $0x538] sm:$0xff]
    %v4877 = vld [vmem:[#allocation2 + $0x540] sm:$0xff]
    %v4878 = vld [vmem:[#allocation2 + $0x548] sm:$0xff]
    %v4879 = vld [vmem:[#allocation2 + $0x550] sm:$0xff]
    %v4880 = vld [vmem:[#allocation2 + $0x558] sm:$0xff]
    %v4881 = vld [vmem:[#allocation2 + $0x560] sm:$0xff]
    %v4882 = vld [vmem:[#allocation2 + $0x568] sm:$0xff]
    %v4883 = vld [vmem:[#allocation2 + $0x570] sm:$0xff]
    %v4884 = vld [vmem:[#allocation2 + $0x578] sm:$0xff]
    %v4885 = vld [vmem:[#allocation2 + $0x580] sm:$0xff]
    %v4886 = vld [vmem:[#allocation2 + $0x588] sm:$0xff]
    %v4887 = vld [vmem:[#allocation2 + $0x590] sm:$0xff]
    %v4888 = vld [vmem:[#allocation2 + $0x598] sm:$0xff]
    %v4889 = vld [vmem:[#allocation2 + $0x5a0] sm:$0xff]
    %v4890 = vld [vmem:[#allocation2 + $0x5a8] sm:$0xff]
    %v4891 = vld [vmem:[#allocation2 + $0x5b0] sm:$0xff]
    %v4892 = vld [vmem:[#allocation2 + $0x5b8] sm:$0xff]
    %v4893 = vld [vmem:[#allocation2 + $0x5c0] sm:$0xff]
    %v4894 = vld [vmem:[#allocation2 + $0x5c8] sm:$0xff]
    %v4895 = vld [vmem:[#allocation2 + $0x5d0] sm:$0xff]
    %v4896 = vld [vmem:[#allocation2 + $0x5d8] sm:$0xff]
    %v4897 = vld [vmem:[#allocation2 + $0x5e0] sm:$0xff]
    %v4898 = vld [vmem:[#allocation2 + $0x5e8] sm:$0xff]
    %v4899 = vld [vmem:[#allocation2 + $0x5f0] sm:$0xff]
    %v4900 = vld [vmem:[#allocation2 + $0x5f8] sm:$0xff]
    %v4901 = vld [vmem:[#allocation2 + $0x600] sm:$0xff]
    %v4902 = vld [vmem:[#allocation2 + $0x608] sm:$0xff]
    %v4903 = vld [vmem:[#allocation2 + $0x610] sm:$0xff]
    %v4904 = vld [vmem:[#allocation2 + $0x618] sm:$0xff]
    %v4905 = vld [vmem:[#allocation2 + $0x620] sm:$0xff]
    %v4906 = vld [vmem:[#allocation2 + $0x628] sm:$0xff]
    %v4907 = vld [vmem:[#allocation2 + $0x630] sm:$0xff]
    %v4908 = vld [vmem:[#allocation2 + $0x638] sm:$0xff]
    %v4909 = vld [vmem:[#allocation2 + $0x640] sm:$0xff]
    %v4910 = vld [vmem:[#allocation2 + $0x648] sm:$0xff]
    %v4911 = vld [vmem:[#allocation2 + $0x650] sm:$0xff]
    %v4912 = vld [vmem:[#allocation2 + $0x658] sm:$0xff]
    %v4913 = vld [vmem:[#allocation2 + $0x660] sm:$0xff]
    %v4914 = vld [vmem:[#allocation2 + $0x668] sm:$0xff]
    %v4915 = vld [vmem:[#allocation2 + $0x670] sm:$0xff]
    %v4916 = vld [vmem:[#allocation2 + $0x678] sm:$0xff]
    %v4917 = vld [vmem:[#allocation2 + $0x680] sm:$0xff]
    %v4918 = vld [vmem:[#allocation2 + $0x688] sm:$0xff]
    %v4919 = vld [vmem:[#allocation2 + $0x690] sm:$0xff]
    %v4920 = vld [vmem:[#allocation2 + $0x698] sm:$0xff]
    %v4921 = vld [vmem:[#allocation2 + $0x6a0] sm:$0xff]
    %v4922 = vld [vmem:[#allocation2 + $0x6a8] sm:$0xff]
    %v4923 = vld [vmem:[#allocation2 + $0x6b0] sm:$0xff]
    %v4924 = vld [vmem:[#allocation2 + $0x6b8] sm:$0xff]
    %v4925 = vld [vmem:[#allocation2 + $0x6c0] sm:$0xff]
    %v4926 = vld [vmem:[#allocation2 + $0x6c8] sm:$0xff]
    %v4927 = vld [vmem:[#allocation2 + $0x6d0] sm:$0xff]
    %v4928 = vld [vmem:[#allocation2 + $0x6d8] sm:$0xff]
    %v4929 = vld [vmem:[#allocation2 + $0x6e0] sm:$0xff]
    %v4930 = vld [vmem:[#allocation2 + $0x6e8] sm:$0xff]
    %v4931 = vld [vmem:[#allocation2 + $0x6f0] sm:$0xff]
    %v4932 = vld [vmem:[#allocation2 + $0x6f8] sm:$0xff]
    %v4933 = vld [vmem:[#allocation2 + $0x700] sm:$0xff]
    %v4934 = vld [vmem:[#allocation2 + $0x708] sm:$0xff]
    %v4935 = vld [vmem:[#allocation2 + $0x710] sm:$0xff]
    %v4936 = vld [vmem:[#allocation2 + $0x718] sm:$0xff]
    %v4937 = vld [vmem:[#allocation2 + $0x720] sm:$0xff]
    %v4938 = vld [vmem:[#allocation2 + $0x728] sm:$0xff]
    %v4939 = vld [vmem:[#allocation2 + $0x730] sm:$0xff]
    %v4940 = vld [vmem:[#allocation2 + $0x738] sm:$0xff]
    %v4941 = vld [vmem:[#allocation2 + $0x740] sm:$0xff]
    %v4942 = vld [vmem:[#allocation2 + $0x748] sm:$0xff]
    %v4943 = vld [vmem:[#allocation2 + $0x750] sm:$0xff]
    %v4944 = vld [vmem:[#allocation2 + $0x758] sm:$0xff]
    %v4945 = vld [vmem:[#allocation2 + $0x760] sm:$0xff]
    %v4946 = vld [vmem:[#allocation2 + $0x768] sm:$0xff]
    %v4947 = vld [vmem:[#allocation2 + $0x770] sm:$0xff]
    %v4948 = vld [vmem:[#allocation2 + $0x778] sm:$0xff]
    %v4949 = vld [vmem:[#allocation2 + $0x780] sm:$0xff]
    %v4950 = vld [vmem:[#allocation2 + $0x788] sm:$0xff]
    %v4951 = vld [vmem:[#allocation2 + $0x790] sm:$0xff]
    %v4952 = vld [vmem:[#allocation2 + $0x798] sm:$0xff]
    %v4953 = vld [vmem:[#allocation2 + $0x7a0] sm:$0xff]
    %v4954 = vld [vmem:[#allocation2 + $0x7a8] sm:$0xff]
    %v4955 = vld [vmem:[#allocation2 + $0x7b0] sm:$0xff]
    %v4956 = vld [vmem:[#allocation2 + $0x7b8] sm:$0xff]
    %v4957 = vld [vmem:[#allocation2 + $0x7c0] sm:$0xff]
    %v4958 = vld [vmem:[#allocation2 + $0x7c8] sm:$0xff]
    %v4959 = vld [vmem:[#allocation2 + $0x7d0] sm:$0xff]
    %v4960 = vld [vmem:[#allocation2 + $0x7d8] sm:$0xff]
    %v4961 = vld [vmem:[#allocation2 + $0x7e0] sm:$0xff]
    %v4962 = vld [vmem:[#allocation2 + $0x7e8] sm:$0xff]
    %v4963 = vld [vmem:[#allocation2 + $0x7f0] sm:$0xff]
    %v4964 = vld [vmem:[#allocation2 + $0x7f8] sm:$0xff]
    %v4965 = vld [vmem:[#allocation2 + $0x800] sm:$0xff]
    %v4966 = vld [vmem:[#allocation2 + $0x808] sm:$0xff]
    %v4967 = vld [vmem:[#allocation2 + $0x810] sm:$0xff]
    %v4968 = vld [vmem:[#allocation2 + $0x818] sm:$0xff]
    %v4969 = vld [vmem:[#allocation2 + $0x820] sm:$0xff]
    %v4970 = vld [vmem:[#allocation2 + $0x828] sm:$0xff]
    %v4971 = vld [vmem:[#allocation2 + $0x830] sm:$0xff]
    %v4972 = vld [vmem:[#allocation2 + $0x838] sm:$0xff]
    %v4973 = vld [vmem:[#allocation2 + $0x840] sm:$0xff]
    %v4974 = vld [vmem:[#allocation2 + $0x848] sm:$0xff]
    %v4975 = vld [vmem:[#allocation2 + $0x850] sm:$0xff]
    %v4976 = vld [vmem:[#allocation2 + $0x858] sm:$0xff]
    %v4977 = vld [vmem:[#allocation2 + $0x860] sm:$0xff]
    %v4978 = vld [vmem:[#allocation2 + $0x868] sm:$0xff]
    %v4979 = vld [vmem:[#allocation2 + $0x870] sm:$0xff]
    %v4980 = vld [vmem:[#allocation2 + $0x878] sm:$0xff]
    %v4981 = vld [vmem:[#allocation2 + $0x880] sm:$0xff]
    %v4982 = vld [vmem:[#allocation2 + $0x888] sm:$0xff]
    %v4983 = vld [vmem:[#allocation2 + $0x890] sm:$0xff]
    %v4984 = vld [vmem:[#allocation2 + $0x898] sm:$0xff]
    %v4985 = vld [vmem:[#allocation2 + $0x8a0] sm:$0xff]
    %v4986 = vld [vmem:[#allocation2 + $0x8a8] sm:$0xff]
    %v4987 = vld [vmem:[#allocation2 + $0x8b0] sm:$0xff]
    %v4988 = vld [vmem:[#allocation2 + $0x8b8] sm:$0xff]
    %v4989 = vld [vmem:[#allocation2 + $0x8c0] sm:$0xff]
    %v4990 = vld [vmem:[#allocation2 + $0x8c8] sm:$0xff]
    %v4991 = vld [vmem:[#allocation2 + $0x8d0] sm:$0xff]
    %v4992 = vld [vmem:[#allocation2 + $0x8d8] sm:$0xff]
    %v4993 = vld [vmem:[#allocation2 + $0x8e0] sm:$0xff]
    %v4994 = vld [vmem:[#allocation2 + $0x8e8] sm:$0xff]
    %v4995 = vld [vmem:[#allocation2 + $0x8f0] sm:$0xff]
    %v4996 = vld [vmem:[#allocation2 + $0x8f8] sm:$0xff]
    %v4997 = vld [vmem:[#allocation2 + $0x900] sm:$0xff]
    %v4998 = vld [vmem:[#allocation2 + $0x908] sm:$0xff]
    %v4999 = vld [vmem:[#allocation2 + $0x910] sm:$0xff]
    %v5000 = vld [vmem:[#allocation2 + $0x918] sm:$0xff]
    %v5001 = vld [vmem:[#allocation2 + $0x920] sm:$0xff]
    %v5002 = vld [vmem:[#allocation2 + $0x928] sm:$0xff]
    %v5003 = vld [vmem:[#allocation2 + $0x930] sm:$0xff]
    %v5004 = vld [vmem:[#allocation2 + $0x938] sm:$0xff]
    %v5005 = vld [vmem:[#allocation2 + $0x940] sm:$0xff]
    %v5006 = vld [vmem:[#allocation2 + $0x948] sm:$0xff]
    %v5007 = vld [vmem:[#allocation2 + $0x950] sm:$0xff]
    %v5008 = vld [vmem:[#allocation2 + $0x958] sm:$0xff]
    %v5009 = vld [vmem:[#allocation2 + $0x960] sm:$0xff]
    %v5010 = vld [vmem:[#allocation2 + $0x968] sm:$0xff]
    %v5011 = vld [vmem:[#allocation2 + $0x970] sm:$0xff]
    %v5012 = vld [vmem:[#allocation2 + $0x978] sm:$0xff]
    %v5013 = vld [vmem:[#allocation2 + $0x980] sm:$0xff]
    %v5014 = vld [vmem:[#allocation2 + $0x988] sm:$0xff]
    %v5015 = vld [vmem:[#allocation2 + $0x990] sm:$0xff]
    %v5016 = vld [vmem:[#allocation2 + $0x998] sm:$0xff]
    %v5017 = vld [vmem:[#allocation2 + $0x9a0] sm:$0xff]
    %v5018 = vld [vmem:[#allocation2 + $0x9a8] sm:$0xff]
    %v5019 = vld [vmem:[#allocation2 + $0x9b0] sm:$0xff]
    %v5020 = vld [vmem:[#allocation2 + $0x9b8] sm:$0xff]
    %v5021 = vld [vmem:[#allocation2 + $0x9c0] sm:$0xff]
    %v5022 = vld [vmem:[#allocation2 + $0x9c8] sm:$0xff]
    %v5023 = vld [vmem:[#allocation2 + $0x9d0] sm:$0xff]
    %v5024 = vld [vmem:[#allocation2 + $0x9d8] sm:$0xff]
    %v5025 = vld [vmem:[#allocation2 + $0x9e0] sm:$0xff]
    %v5026 = vld [vmem:[#allocation2 + $0x9e8] sm:$0xff]
    %v5027 = vld [vmem:[#allocation2 + $0x9f0] sm:$0xff]
    %v5028 = vld [vmem:[#allocation2 + $0x9f8] sm:$0xff]
    %v5029 = vld [vmem:[#allocation2 + $0xa00] sm:$0xff]
    %v5030 = vld [vmem:[#allocation2 + $0xa08] sm:$0xff]
    %v5031 = vld [vmem:[#allocation2 + $0xa10] sm:$0xff]
    %v5032 = vld [vmem:[#allocation2 + $0xa18] sm:$0xff]
    %v5033 = vld [vmem:[#allocation2 + $0xa20] sm:$0xff]
    %v5034 = vld [vmem:[#allocation2 + $0xa28] sm:$0xff]
    %v5035 = vld [vmem:[#allocation2 + $0xa30] sm:$0xff]
    %v5036 = vld [vmem:[#allocation2 + $0xa38] sm:$0xff]
    %v5037 = vld [vmem:[#allocation2 + $0xa40] sm:$0xff]
    %v5038 = vld [vmem:[#allocation2 + $0xa48] sm:$0xff]
    %v5039 = vld [vmem:[#allocation2 + $0xa50] sm:$0xff]
    %v5040 = vld [vmem:[#allocation2 + $0xa58] sm:$0xff]
    %v5041 = vld [vmem:[#allocation2 + $0xa60] sm:$0xff]
    %v5042 = vld [vmem:[#allocation2 + $0xa68] sm:$0xff]
    %v5043 = vld [vmem:[#allocation2 + $0xa70] sm:$0xff]
    %v5044 = vld [vmem:[#allocation2 + $0xa78] sm:$0xff]
    %v5045 = vld [vmem:[#allocation2 + $0xa80] sm:$0xff]
    %v5046 = vld [vmem:[#allocation2 + $0xa88] sm:$0xff]
    %v5047 = vld [vmem:[#allocation2 + $0xa90] sm:$0xff]
    %v5048 = vld [vmem:[#allocation2 + $0xa98] sm:$0xff]
    %v5049 = vld [vmem:[#allocation2 + $0xaa0] sm:$0xff]
    %v5050 = vld [vmem:[#allocation2 + $0xaa8] sm:$0xff]
    %v5051 = vld [vmem:[#allocation2 + $0xab0] sm:$0xff]
    %v5052 = vld [vmem:[#allocation2 + $0xab8] sm:$0xff]
    %v5053 = vld [vmem:[#allocation2 + $0xac0] sm:$0xff]
    %v5054 = vld [vmem:[#allocation2 + $0xac8] sm:$0xff]
    %v5055 = vld [vmem:[#allocation2 + $0xad0] sm:$0xff]
    %v5056 = vld [vmem:[#allocation2 + $0xad8] sm:$0xff]
    %v5057 = vld [vmem:[#allocation2 + $0xae0] sm:$0xff]
    %v5058 = vld [vmem:[#allocation2 + $0xae8] sm:$0xff]
    %v5059 = vld [vmem:[#allocation2 + $0xaf0] sm:$0xff]
    %v5060 = vld [vmem:[#allocation2 + $0xaf8] sm:$0xff]
    %v5061 = vld [vmem:[#allocation2 + $0xb00] sm:$0xff]
    %v5062 = vld [vmem:[#allocation2 + $0xb08] sm:$0xff]
    %v5063 = vld [vmem:[#allocation2 + $0xb10] sm:$0xff]
    %v5064 = vld [vmem:[#allocation2 + $0xb18] sm:$0xff]
    %v5065 = vld [vmem:[#allocation2 + $0xb20] sm:$0xff]
    %v5066 = vld [vmem:[#allocation2 + $0xb28] sm:$0xff]
    %v5067 = vld [vmem:[#allocation2 + $0xb30] sm:$0xff]
    %v5068 = vld [vmem:[#allocation2 + $0xb38] sm:$0xff]
    %v5069 = vld [vmem:[#allocation2 + $0xb40] sm:$0xff]
    %v5070 = vld [vmem:[#allocation2 + $0xb48] sm:$0xff]
    %v5071 = vld [vmem:[#allocation2 + $0xb50] sm:$0xff]
    %v5072 = vld [vmem:[#allocation2 + $0xb58] sm:$0xff]
    %v5073 = vld [vmem:[#allocation2 + $0xb60] sm:$0xff]
    %v5074 = vld [vmem:[#allocation2 + $0xb68] sm:$0xff]
    %v5075 = vld [vmem:[#allocation2 + $0xb70] sm:$0xff]
    %v5076 = vld [vmem:[#allocation2 + $0xb78] sm:$0xff]
    %v5077 = vld [vmem:[#allocation2 + $0xb80] sm:$0xff]
    %v5078 = vld [vmem:[#allocation2 + $0xb88] sm:$0xff]
    %v5079 = vld [vmem:[#allocation2 + $0xb90] sm:$0xff]
    %v5080 = vld [vmem:[#allocation2 + $0xb98] sm:$0xff]
    %v5081 = vld [vmem:[#allocation2 + $0xba0] sm:$0xff]
    %v5082 = vld [vmem:[#allocation2 + $0xba8] sm:$0xff]
    %v5083 = vld [vmem:[#allocation2 + $0xbb0] sm:$0xff]
    %v5084 = vld [vmem:[#allocation2 + $0xbb8] sm:$0xff]
    %v5085 = vld [vmem:[#allocation2 + $0xbc0] sm:$0xff]
    %v5086 = vld [vmem:[#allocation2 + $0xbc8] sm:$0xff]
    %v5087 = vld [vmem:[#allocation2 + $0xbd0] sm:$0xff]
    %v5088 = vld [vmem:[#allocation2 + $0xbd8] sm:$0xff]
    %v5089 = vld [vmem:[#allocation2 + $0xbe0] sm:$0xff]
    %v5090 = vld [vmem:[#allocation2 + $0xbe8] sm:$0xff]
    %v5091 = vld [vmem:[#allocation2 + $0xbf0] sm:$0xff]
    %v5092 = vld [vmem:[#allocation2 + $0xbf8] sm:$0xff]
    %v5093 = vld [vmem:[#allocation2 + $0xc00] sm:$0xff]
    %v5094 = vld [vmem:[#allocation2 + $0xc08] sm:$0xff]
    %v5095 = vld [vmem:[#allocation2 + $0xc10] sm:$0xff]
    %v5096 = vld [vmem:[#allocation2 + $0xc18] sm:$0xff]
    %v5097 = vld [vmem:[#allocation2 + $0xc20] sm:$0xff]
    %v5098 = vld [vmem:[#allocation2 + $0xc28] sm:$0xff]
    %v5099 = vld [vmem:[#allocation2 + $0xc30] sm:$0xff]
    %v5100 = vld [vmem:[#allocation2 + $0xc38] sm:$0xff]
    %v5101 = vld [vmem:[#allocation2 + $0xc40] sm:$0xff]
    %v5102 = vld [vmem:[#allocation2 + $0xc48] sm:$0xff]
    %v5103 = vld [vmem:[#allocation2 + $0xc50] sm:$0xff]
    %v5104 = vld [vmem:[#allocation2 + $0xc58] sm:$0xff]
    %v5105 = vld [vmem:[#allocation2 + $0xc60] sm:$0xff]
    %v5106 = vld [vmem:[#allocation2 + $0xc68] sm:$0xff]
    %v5107 = vld [vmem:[#allocation2 + $0xc70] sm:$0xff]
    %v5108 = vld [vmem:[#allocation2 + $0xc78] sm:$0xff]
    %v5109 = vld [vmem:[#allocation2 + $0xc80] sm:$0xff]
    %v5110 = vld [vmem:[#allocation2 + $0xc88] sm:$0xff]
    %v5111 = vld [vmem:[#allocation2 + $0xc90] sm:$0xff]
    %v5112 = vld [vmem:[#allocation2 + $0xc98] sm:$0xff]
    %v5113 = vld [vmem:[#allocation2 + $0xca0] sm:$0xff]
    %v5114 = vld [vmem:[#allocation2 + $0xca8] sm:$0xff]
    %v5115 = vld [vmem:[#allocation2 + $0xcb0] sm:$0xff]
    %v5116 = vld [vmem:[#allocation2 + $0xcb8] sm:$0xff]
    %v5117 = vld [vmem:[#allocation2 + $0xcc0] sm:$0xff]
    %v5118 = vld [vmem:[#allocation2 + $0xcc8] sm:$0xff]
    %v5119 = vld [vmem:[#allocation2 + $0xcd0] sm:$0xff]
    %v5120 = vld [vmem:[#allocation2 + $0xcd8] sm:$0xff]
    %v5121 = vld [vmem:[#allocation2 + $0xce0] sm:$0xff]
    %v5122 = vld [vmem:[#allocation2 + $0xce8] sm:$0xff]
    %v5123 = vld [vmem:[#allocation2 + $0xcf0] sm:$0xff]
    %v5124 = vld [vmem:[#allocation2 + $0xcf8] sm:$0xff]
    %v5125 = vld [vmem:[#allocation2 + $0xd00] sm:$0xff]
    %v5126 = vld [vmem:[#allocation2 + $0xd08] sm:$0xff]
    %v5127 = vld [vmem:[#allocation2 + $0xd10] sm:$0xff]
    %v5128 = vld [vmem:[#allocation2 + $0xd18] sm:$0xff]
    %v5129 = vld [vmem:[#allocation2 + $0xd20] sm:$0xff]
    %v5130 = vld [vmem:[#allocation2 + $0xd28] sm:$0xff]
    %v5131 = vld [vmem:[#allocation2 + $0xd30] sm:$0xff]
    %v5132 = vld [vmem:[#allocation2 + $0xd38] sm:$0xff]
    %v5133 = vld [vmem:[#allocation2 + $0xd40] sm:$0xff]
    %v5134 = vld [vmem:[#allocation2 + $0xd48] sm:$0xff]
    %v5135 = vld [vmem:[#allocation2 + $0xd50] sm:$0xff]
    %v5136 = vld [vmem:[#allocation2 + $0xd58] sm:$0xff]
    %v5137 = vld [vmem:[#allocation2 + $0xd60] sm:$0xff]
    %v5138 = vld [vmem:[#allocation2 + $0xd68] sm:$0xff]
    %v5139 = vld [vmem:[#allocation2 + $0xd70] sm:$0xff]
    %v5140 = vld [vmem:[#allocation2 + $0xd78] sm:$0xff]
    %v5141 = vld [vmem:[#allocation2 + $0xd80] sm:$0xff]
    %v5142 = vld [vmem:[#allocation2 + $0xd88] sm:$0xff]
    %v5143 = vld [vmem:[#allocation2 + $0xd90] sm:$0xff]
    %v5144 = vld [vmem:[#allocation2 + $0xd98] sm:$0xff]
    %v5145 = vld [vmem:[#allocation2 + $0xda0] sm:$0xff]
    %v5146 = vld [vmem:[#allocation2 + $0xda8] sm:$0xff]
    %v5147 = vld [vmem:[#allocation2 + $0xdb0] sm:$0xff]
    %v5148 = vld [vmem:[#allocation2 + $0xdb8] sm:$0xff]
    %v5149 = vld [vmem:[#allocation2 + $0xdc0] sm:$0xff]
    %v5150 = vld [vmem:[#allocation2 + $0xdc8] sm:$0xff]
    %v5151 = vld [vmem:[#allocation2 + $0xdd0] sm:$0xff]
    %v5152 = vld [vmem:[#allocation2 + $0xdd8] sm:$0xff]
    %v5153 = vld [vmem:[#allocation2 + $0xde0] sm:$0xff]
    %v5154 = vld [vmem:[#allocation2 + $0xde8] sm:$0xff]
    %v5155 = vld [vmem:[#allocation2 + $0xdf0] sm:$0xff]
    %v5156 = vld [vmem:[#allocation2 + $0xdf8] sm:$0xff]
    %v5157 = vld [vmem:[#allocation2 + $0xe00] sm:$0xff]
    %v5158 = vld [vmem:[#allocation2 + $0xe08] sm:$0xff]
    %v5159 = vld [vmem:[#allocation2 + $0xe10] sm:$0xff]
    %v5160 = vld [vmem:[#allocation2 + $0xe18] sm:$0xff]
    %v5161 = vld [vmem:[#allocation2 + $0xe20] sm:$0xff]
    %v5162 = vld [vmem:[#allocation2 + $0xe28] sm:$0xff]
    %v5163 = vld [vmem:[#allocation2 + $0xe30] sm:$0xff]
    %v5164 = vld [vmem:[#allocation2 + $0xe38] sm:$0xff]
    %v5165 = vld [vmem:[#allocation2 + $0xe40] sm:$0xff]
    %v5166 = vld [vmem:[#allocation2 + $0xe48] sm:$0xff]
    %v5167 = vld [vmem:[#allocation2 + $0xe50] sm:$0xff]
    %v5168 = vld [vmem:[#allocation2 + $0xe58] sm:$0xff]
    %v5169 = vld [vmem:[#allocation2 + $0xe60] sm:$0xff]
    %v5170 = vld [vmem:[#allocation2 + $0xe68] sm:$0xff]
    %v5171 = vld [vmem:[#allocation2 + $0xe70] sm:$0xff]
    %v5172 = vld [vmem:[#allocation2 + $0xe78] sm:$0xff]
    %v5173 = vld [vmem:[#allocation2 + $0xe80] sm:$0xff]
    %v5174 = vld [vmem:[#allocation2 + $0xe88] sm:$0xff]
    %v5175 = vld [vmem:[#allocation2 + $0xe90] sm:$0xff]
    %v5176 = vld [vmem:[#allocation2 + $0xe98] sm:$0xff]
    %v5177 = vld [vmem:[#allocation2 + $0xea0] sm:$0xff]
    %v5178 = vld [vmem:[#allocation2 + $0xea8] sm:$0xff]
    %v5179 = vld [vmem:[#allocation2 + $0xeb0] sm:$0xff]
    %v5180 = vld [vmem:[#allocation2 + $0xeb8] sm:$0xff]
    %v5181 = vld [vmem:[#allocation2 + $0xec0] sm:$0xff]
    %v5182 = vld [vmem:[#allocation2 + $0xec8] sm:$0xff]
    %v5183 = vld [vmem:[#allocation2 + $0xed0] sm:$0xff]
    %v5184 = vld [vmem:[#allocation2 + $0xed8] sm:$0xff]
    %v5185 = vld [vmem:[#allocation2 + $0xee0] sm:$0xff]
    %v5186 = vld [vmem:[#allocation2 + $0xee8] sm:$0xff]
    %v5187 = vld [vmem:[#allocation2 + $0xef0] sm:$0xff]
    %v5188 = vld [vmem:[#allocation2 + $0xef8] sm:$0xff]
    %v5189 = vld [vmem:[#allocation2 + $0xf00] sm:$0xff]
    %v5190 = vld [vmem:[#allocation2 + $0xf08] sm:$0xff]
    %v5191 = vld [vmem:[#allocation2 + $0xf10] sm:$0xff]
    %v5192 = vld [vmem:[#allocation2 + $0xf18] sm:$0xff]
    %v5193 = vld [vmem:[#allocation2 + $0xf20] sm:$0xff]
    %v5194 = vld [vmem:[#allocation2 + $0xf28] sm:$0xff]
    %v5195 = vld [vmem:[#allocation2 + $0xf30] sm:$0xff]
    %v5196 = vld [vmem:[#allocation2 + $0xf38] sm:$0xff]
    %v5197 = vld [vmem:[#allocation2 + $0xf40] sm:$0xff]
    %v5198 = vld [vmem:[#allocation2 + $0xf48] sm:$0xff]
    %v5199 = vld [vmem:[#allocation2 + $0xf50] sm:$0xff]
    %v5200 = vld [vmem:[#allocation2 + $0xf58] sm:$0xff]
    %v5201 = vld [vmem:[#allocation2 + $0xf60] sm:$0xff]
    %v5202 = vld [vmem:[#allocation2 + $0xf68] sm:$0xff]
    %v5203 = vld [vmem:[#allocation2 + $0xf70] sm:$0xff]
    %v5204 = vld [vmem:[#allocation2 + $0xf78] sm:$0xff]
    %v5205 = vld [vmem:[#allocation2 + $0xf80] sm:$0xff]
    %v5206 = vld [vmem:[#allocation2 + $0xf88] sm:$0xff]
    %v5207 = vld [vmem:[#allocation2 + $0xf90] sm:$0xff]
    %v5208 = vld [vmem:[#allocation2 + $0xf98] sm:$0xff]
    %v5209 = vld [vmem:[#allocation2 + $0xfa0] sm:$0xff]
    %v5210 = vld [vmem:[#allocation2 + $0xfa8] sm:$0xff]
    %v5211 = vld [vmem:[#allocation2 + $0xfb0] sm:$0xff]
    %v5212 = vld [vmem:[#allocation2 + $0xfb8] sm:$0xff]
    %v5213 = vld [vmem:[#allocation2 + $0xfc0] sm:$0xff]
    %v5214 = vld [vmem:[#allocation2 + $0xfc8] sm:$0xff]
    %v5215 = vld [vmem:[#allocation2 + $0xfd0] sm:$0xff]
    %v5216 = vld [vmem:[#allocation2 + $0xfd8] sm:$0xff]
    %v5217 = vld [vmem:[#allocation2 + $0xfe0] sm:$0xff]
    %v5218 = vld [vmem:[#allocation2 + $0xfe8] sm:$0xff]
    %v5219 = vld [vmem:[#allocation2 + $0xff0] sm:$0xff]
    %v5220 = vld [vmem:[#allocation2 + $0xff8] sm:$0xff]
    %v5221 = vld [vmem:[#allocation2 + $0x1000] sm:$0xff]
    %v5222 = vld [vmem:[#allocation2 + $0x1008] sm:$0xff]
    %v5223 = vld [vmem:[#allocation2 + $0x1010] sm:$0xff]
    %v5224 = vld [vmem:[#allocation2 + $0x1018] sm:$0xff]
    %v5225 = vld [vmem:[#allocation2 + $0x1020] sm:$0xff]
    %v5226 = vld [vmem:[#allocation2 + $0x1028] sm:$0xff]
    %v5227 = vld [vmem:[#allocation2 + $0x1030] sm:$0xff]
    %v5228 = vld [vmem:[#allocation2 + $0x1038] sm:$0xff]
    %v5229 = vld [vmem:[#allocation2 + $0x1040] sm:$0xff]
    %v5230 = vld [vmem:[#allocation2 + $0x1048] sm:$0xff]
    %v5231 = vld [vmem:[#allocation2 + $0x1050] sm:$0xff]
    %v5232 = vld [vmem:[#allocation2 + $0x1058] sm:$0xff]
    %v5233 = vld [vmem:[#allocation2 + $0x1060] sm:$0xff]
    %v5234 = vld [vmem:[#allocation2 + $0x1068] sm:$0xff]
    %v5235 = vld [vmem:[#allocation2 + $0x1070] sm:$0xff]
    %v5236 = vld [vmem:[#allocation2 + $0x1078] sm:$0xff]
    %v5237 = vld [vmem:[#allocation2 + $0x1080] sm:$0xff]
    %v5238 = vld [vmem:[#allocation2 + $0x1088] sm:$0xff]
    %v5239 = vld [vmem:[#allocation2 + $0x1090] sm:$0xff]
    %v5240 = vld [vmem:[#allocation2 + $0x1098] sm:$0xff]
    %v5241 = vld [vmem:[#allocation2 + $0x10a0] sm:$0xff]
    %v5242 = vld [vmem:[#allocation2 + $0x10a8] sm:$0xff]
    %v5243 = vld [vmem:[#allocation2 + $0x10b0] sm:$0xff]
    %v5244 = vld [vmem:[#allocation2 + $0x10b8] sm:$0xff]
    %v5245 = vld [vmem:[#allocation2 + $0x10c0] sm:$0xff]
    %v5246 = vld [vmem:[#allocation2 + $0x10c8] sm:$0xff]
    %v5247 = vld [vmem:[#allocation2 + $0x10d0] sm:$0xff]
    %v5248 = vld [vmem:[#allocation2 + $0x10d8] sm:$0xff]
    %v5249 = vld [vmem:[#allocation2 + $0x10e0] sm:$0xff]
    %v5250 = vld [vmem:[#allocation2 + $0x10e8] sm:$0xff]
    %v5251 = vld [vmem:[#allocation2 + $0x10f0] sm:$0xff]
    %v5252 = vld [vmem:[#allocation2 + $0x10f8] sm:$0xff]
    %v5253 = vld [vmem:[#allocation2 + $0x1100] sm:$0xff]
    %v5254 = vld [vmem:[#allocation2 + $0x1108] sm:$0xff]
    %v5255 = vld [vmem:[#allocation2 + $0x1110] sm:$0xff]
    %v5256 = vld [vmem:[#allocation2 + $0x1118] sm:$0xff]
    %v5257 = vld [vmem:[#allocation2 + $0x1120] sm:$0xff]
    %v5258 = vld [vmem:[#allocation2 + $0x1128] sm:$0xff]
    %v5259 = vld [vmem:[#allocation2 + $0x1130] sm:$0xff]
    %v5260 = vld [vmem:[#allocation2 + $0x1138] sm:$0xff]
    %v5261 = vld [vmem:[#allocation2 + $0x1140] sm:$0xff]
    %v5262 = vld [vmem:[#allocation2 + $0x1148] sm:$0xff]
    %v5263 = vld [vmem:[#allocation2 + $0x1150] sm:$0xff]
    %v5264 = vld [vmem:[#allocation2 + $0x1158] sm:$0xff]
    %v5265 = vld [vmem:[#allocation2 + $0x1160] sm:$0xff]
    %v5266 = vld [vmem:[#allocation2 + $0x1168] sm:$0xff]
    %v5267 = vld [vmem:[#allocation2 + $0x1170] sm:$0xff]
    %v5268 = vld [vmem:[#allocation2 + $0x1178] sm:$0xff]
    %v5269 = vld [vmem:[#allocation2 + $0x1180] sm:$0xff]
    %v5270 = vld [vmem:[#allocation2 + $0x1188] sm:$0xff]
    %v5271 = vld [vmem:[#allocation2 + $0x1190] sm:$0xff]
    %v5272 = vld [vmem:[#allocation2 + $0x1198] sm:$0xff]
    %v5273 = vld [vmem:[#allocation2 + $0x11a0] sm:$0xff]
    %v5274 = vld [vmem:[#allocation2 + $0x11a8] sm:$0xff]
    %v5275 = vld [vmem:[#allocation2 + $0x11b0] sm:$0xff]
    %v5276 = vld [vmem:[#allocation2 + $0x11b8] sm:$0xff]
    %v5277 = vld [vmem:[#allocation2 + $0x11c0] sm:$0xff]
    %v5278 = vld [vmem:[#allocation2 + $0x11c8] sm:$0xff]
    %v5279 = vld [vmem:[#allocation2 + $0x11d0] sm:$0xff]
    %v5280 = vld [vmem:[#allocation2 + $0x11d8] sm:$0xff]
    %v5281 = vld [vmem:[#allocation2 + $0x11e0] sm:$0xff]
    %v5282 = vld [vmem:[#allocation2 + $0x11e8] sm:$0xff]
    %v5283 = vld [vmem:[#allocation2 + $0x11f0] sm:$0xff]
    %v5284 = vld [vmem:[#allocation2 + $0x11f8] sm:$0xff]
    %v5285 = vld [vmem:[#allocation2 + $0x1200] sm:$0xff]
    %v5286 = vld [vmem:[#allocation2 + $0x1208] sm:$0xff]
    %v5287 = vld [vmem:[#allocation2 + $0x1210] sm:$0xff]
    %v5288 = vld [vmem:[#allocation2 + $0x1218] sm:$0xff]
    %v5289 = vld [vmem:[#allocation2 + $0x1220] sm:$0xff]
    %v5290 = vld [vmem:[#allocation2 + $0x1228] sm:$0xff]
    %v5291 = vld [vmem:[#allocation2 + $0x1230] sm:$0xff]
    %v5292 = vld [vmem:[#allocation2 + $0x1238] sm:$0xff]
    %v5293 = vld [vmem:[#allocation2 + $0x1240] sm:$0xff]
    %v5294 = vld [vmem:[#allocation2 + $0x1248] sm:$0xff]
    %v5295 = vld [vmem:[#allocation2 + $0x1250] sm:$0xff]
    %v5296 = vld [vmem:[#allocation2 + $0x1258] sm:$0xff]
    %v5297 = vld [vmem:[#allocation2 + $0x1260] sm:$0xff]
    %v5298 = vld [vmem:[#allocation2 + $0x1268] sm:$0xff]
    %v5299 = vld [vmem:[#allocation2 + $0x1270] sm:$0xff]
    %v5300 = vld [vmem:[#allocation2 + $0x1278] sm:$0xff]
    %v5301 = vld [vmem:[#allocation2 + $0x1280] sm:$0xff]
    %v5302 = vld [vmem:[#allocation2 + $0x1288] sm:$0xff]
    %v5303 = vld [vmem:[#allocation2 + $0x1290] sm:$0xff]
    %v5304 = vld [vmem:[#allocation2 + $0x1298] sm:$0xff]
    %v5305 = vld [vmem:[#allocation2 + $0x12a0] sm:$0xff]
    %v5306 = vld [vmem:[#allocation2 + $0x12a8] sm:$0xff]
    %v5307 = vld [vmem:[#allocation2 + $0x12b0] sm:$0xff]
    %v5308 = vld [vmem:[#allocation2 + $0x12b8] sm:$0xff]
    %v5309 = vld [vmem:[#allocation2 + $0x12c0] sm:$0xff]
    %v5310 = vld [vmem:[#allocation2 + $0x12c8] sm:$0xff]
    %v5311 = vld [vmem:[#allocation2 + $0x12d0] sm:$0xff]
    %v5312 = vld [vmem:[#allocation2 + $0x12d8] sm:$0xff]
    %v5313 = vld [vmem:[#allocation2 + $0x12e0] sm:$0xff]
    %v5314 = vld [vmem:[#allocation2 + $0x12e8] sm:$0xff]
    %v5315 = vld [vmem:[#allocation2 + $0x12f0] sm:$0xff]
    %v5316 = vld [vmem:[#allocation2 + $0x12f8] sm:$0xff]
    %v5317 = vld [vmem:[#allocation2 + $0x1300] sm:$0xff]
    %v5318 = vld [vmem:[#allocation2 + $0x1308] sm:$0xff]
    %v5319 = vld [vmem:[#allocation2 + $0x1310] sm:$0xff]
    %v5320 = vld [vmem:[#allocation2 + $0x1318] sm:$0xff]
    %v5321 = vld [vmem:[#allocation2 + $0x1320] sm:$0xff]
    %v5322 = vld [vmem:[#allocation2 + $0x1328] sm:$0xff]
    %v5323 = vld [vmem:[#allocation2 + $0x1330] sm:$0xff]
    %v5324 = vld [vmem:[#allocation2 + $0x1338] sm:$0xff]
    %v5325 = vld [vmem:[#allocation2 + $0x1340] sm:$0xff]
    %v5326 = vld [vmem:[#allocation2 + $0x1348] sm:$0xff]
    %v5327 = vld [vmem:[#allocation2 + $0x1350] sm:$0xff]
    %v5328 = vld [vmem:[#allocation2 + $0x1358] sm:$0xff]
    %v5329 = vld [vmem:[#allocation2 + $0x1360] sm:$0xff]
    %v5330 = vld [vmem:[#allocation2 + $0x1368] sm:$0xff]
    %v5331 = vld [vmem:[#allocation2 + $0x1370] sm:$0xff]
    %v5332 = vld [vmem:[#allocation2 + $0x1378] sm:$0xff]
    %v5333 = vld [vmem:[#allocation2 + $0x1380] sm:$0xff]
    %v5334 = vld [vmem:[#allocation2 + $0x1388] sm:$0xff]
    %v5335 = vld [vmem:[#allocation2 + $0x1390] sm:$0xff]
    %v5336 = vld [vmem:[#allocation2 + $0x1398] sm:$0xff]
    %v5337 = vld [vmem:[#allocation2 + $0x13a0] sm:$0xff]
    %v5338 = vld [vmem:[#allocation2 + $0x13a8] sm:$0xff]
    %v5339 = vld [vmem:[#allocation2 + $0x13b0] sm:$0xff]
    %v5340 = vld [vmem:[#allocation2 + $0x13b8] sm:$0xff]
    %v5341 = vld [vmem:[#allocation2 + $0x13c0] sm:$0xff]
    %v5342 = vld [vmem:[#allocation2 + $0x13c8] sm:$0xff]
    %v5343 = vld [vmem:[#allocation2 + $0x13d0] sm:$0xff]
    %v5344 = vld [vmem:[#allocation2 + $0x13d8] sm:$0xff]
    %v5345 = vld [vmem:[#allocation2 + $0x13e0] sm:$0xff]
    %v5346 = vld [vmem:[#allocation2 + $0x13e8] sm:$0xff]
    %v5347 = vld [vmem:[#allocation2 + $0x13f0] sm:$0xff]
    %v5348 = vld [vmem:[#allocation2 + $0x13f8] sm:$0xff]
    %v5349 = vld [vmem:[#allocation2 + $0x1400] sm:$0xff]
    %v5350 = vld [vmem:[#allocation2 + $0x1408] sm:$0xff]
    %v5351 = vld [vmem:[#allocation2 + $0x1410] sm:$0xff]
    %v5352 = vld [vmem:[#allocation2 + $0x1418] sm:$0xff]
    %v5353 = vld [vmem:[#allocation2 + $0x1420] sm:$0xff]
    %v5354 = vld [vmem:[#allocation2 + $0x1428] sm:$0xff]
    %v5355 = vld [vmem:[#allocation2 + $0x1430] sm:$0xff]
    %v5356 = vld [vmem:[#allocation2 + $0x1438] sm:$0xff]
    %v5357 = vld [vmem:[#allocation2 + $0x1440] sm:$0xff]
    %v5358 = vld [vmem:[#allocation2 + $0x1448] sm:$0xff]
    %v5359 = vld [vmem:[#allocation2 + $0x1450] sm:$0xff]
    %v5360 = vld [vmem:[#allocation2 + $0x1458] sm:$0xff]
    %v5361 = vld [vmem:[#allocation2 + $0x1460] sm:$0xff]
    %v5362 = vld [vmem:[#allocation2 + $0x1468] sm:$0xff]
    %v5363 = vld [vmem:[#allocation2 + $0x1470] sm:$0xff]
    %v5364 = vld [vmem:[#allocation2 + $0x1478] sm:$0xff]
    %v5365 = vld [vmem:[#allocation2 + $0x1480] sm:$0xff]
    %v5366 = vld [vmem:[#allocation2 + $0x1488] sm:$0xff]
    %v5367 = vld [vmem:[#allocation2 + $0x1490] sm:$0xff]
    %v5368 = vld [vmem:[#allocation2 + $0x1498] sm:$0xff]
    %v5369 = vld [vmem:[#allocation2 + $0x14a0] sm:$0xff]
    %v5370 = vld [vmem:[#allocation2 + $0x14a8] sm:$0xff]
    %v5371 = vld [vmem:[#allocation2 + $0x14b0] sm:$0xff]
    %v5372 = vld [vmem:[#allocation2 + $0x14b8] sm:$0xff]
    %v5373 = vld [vmem:[#allocation2 + $0x14c0] sm:$0xff]
    %v5374 = vld [vmem:[#allocation2 + $0x14c8] sm:$0xff]
    %v5375 = vld [vmem:[#allocation2 + $0x14d0] sm:$0xff]
    %v5376 = vld [vmem:[#allocation2 + $0x14d8] sm:$0xff]
    %v5377 = vld [vmem:[#allocation2 + $0x14e0] sm:$0xff]
    %v5378 = vld [vmem:[#allocation2 + $0x14e8] sm:$0xff]
    %v5379 = vld [vmem:[#allocation2 + $0x14f0] sm:$0xff]
    %v5380 = vld [vmem:[#allocation2 + $0x14f8] sm:$0xff]
    %v5381 = vld [vmem:[#allocation2 + $0x1500] sm:$0xff]
    %v5382 = vld [vmem:[#allocation2 + $0x1508] sm:$0xff]
    %v5383 = vld [vmem:[#allocation2 + $0x1510] sm:$0xff]
    %v5384 = vld [vmem:[#allocation2 + $0x1518] sm:$0xff]
    %v5385 = vld [vmem:[#allocation2 + $0x1520] sm:$0xff]
    %v5386 = vld [vmem:[#allocation2 + $0x1528] sm:$0xff]
    %v5387 = vld [vmem:[#allocation2 + $0x1530] sm:$0xff]
    %v5388 = vld [vmem:[#allocation2 + $0x1538] sm:$0xff]
    %v5389 = vld [vmem:[#allocation2 + $0x1540] sm:$0xff]
    %v5390 = vld [vmem:[#allocation2 + $0x1548] sm:$0xff]
    %v5391 = vld [vmem:[#allocation2 + $0x1550] sm:$0xff]
    %v5392 = vld [vmem:[#allocation2 + $0x1558] sm:$0xff]
    %v5393 = vld [vmem:[#allocation2 + $0x1560] sm:$0xff]
    %v5394 = vld [vmem:[#allocation2 + $0x1568] sm:$0xff]
    %v5395 = vld [vmem:[#allocation2 + $0x1570] sm:$0xff]
    %v5396 = vld [vmem:[#allocation2 + $0x1578] sm:$0xff]
    %v5397 = vld [vmem:[#allocation2 + $0x1580] sm:$0xff]
    %v5398 = vld [vmem:[#allocation2 + $0x1588] sm:$0xff]
    %v5399 = vld [vmem:[#allocation2 + $0x1590] sm:$0xff]
    %v5400 = vld [vmem:[#allocation2 + $0x1598] sm:$0xff]
    %v5401 = vld [vmem:[#allocation2 + $0x15a0] sm:$0xff]
    %v5402 = vld [vmem:[#allocation2 + $0x15a8] sm:$0xff]
    %v5403 = vld [vmem:[#allocation2 + $0x15b0] sm:$0xff]
    %v5404 = vld [vmem:[#allocation2 + $0x15b8] sm:$0xff]
    %v5405 = vld [vmem:[#allocation2 + $0x15c0] sm:$0xff]
    %v5406 = vld [vmem:[#allocation2 + $0x15c8] sm:$0xff]
    %v5407 = vld [vmem:[#allocation2 + $0x15d0] sm:$0xff]
    %v5408 = vld [vmem:[#allocation2 + $0x15d8] sm:$0xff]
    %v5409 = vld [vmem:[#allocation2 + $0x15e0] sm:$0xff]
    %v5410 = vld [vmem:[#allocation2 + $0x15e8] sm:$0xff]
    %v5411 = vld [vmem:[#allocation2 + $0x15f0] sm:$0xff]
    %v5412 = vld [vmem:[#allocation2 + $0x15f8] sm:$0xff]
    %v5413 = vld [vmem:[#allocation2 + $0x1600] sm:$0xff]
    %v5414 = vld [vmem:[#allocation2 + $0x1608] sm:$0xff]
    %v5415 = vld [vmem:[#allocation2 + $0x1610] sm:$0xff]
    %v5416 = vld [vmem:[#allocation2 + $0x1618] sm:$0xff]
    %v5417 = vld [vmem:[#allocation2 + $0x1620] sm:$0xff]
    %v5418 = vld [vmem:[#allocation2 + $0x1628] sm:$0xff]
    %v5419 = vld [vmem:[#allocation2 + $0x1630] sm:$0xff]
    %v5420 = vld [vmem:[#allocation2 + $0x1638] sm:$0xff]
    %v5421 = vld [vmem:[#allocation2 + $0x1640] sm:$0xff]
    %v5422 = vld [vmem:[#allocation2 + $0x1648] sm:$0xff]
    %v5423 = vld [vmem:[#allocation2 + $0x1650] sm:$0xff]
    %v5424 = vld [vmem:[#allocation2 + $0x1658] sm:$0xff]
    %v5425 = vld [vmem:[#allocation2 + $0x1660] sm:$0xff]
    %v5426 = vld [vmem:[#allocation2 + $0x1668] sm:$0xff]
    %v5427 = vld [vmem:[#allocation2 + $0x1670] sm:$0xff]
    %v5428 = vld [vmem:[#allocation2 + $0x1678] sm:$0xff]
    %v5429 = vld [vmem:[#allocation2 + $0x1680] sm:$0xff]
    %v5430 = vld [vmem:[#allocation2 + $0x1688] sm:$0xff]
    %v5431 = vld [vmem:[#allocation2 + $0x1690] sm:$0xff]
    %v5432 = vld [vmem:[#allocation2 + $0x1698] sm:$0xff]
    %v5433 = vld [vmem:[#allocation2 + $0x16a0] sm:$0xff]
    %v5434 = vld [vmem:[#allocation2 + $0x16a8] sm:$0xff]
    %v5435 = vld [vmem:[#allocation2 + $0x16b0] sm:$0xff]
    %v5436 = vld [vmem:[#allocation2 + $0x16b8] sm:$0xff]
    %v5437 = vld [vmem:[#allocation2 + $0x16c0] sm:$0xff]
    %v5438 = vld [vmem:[#allocation2 + $0x16c8] sm:$0xff]
    %v5439 = vld [vmem:[#allocation2 + $0x16d0] sm:$0xff]
    %v5440 = vld [vmem:[#allocation2 + $0x16d8] sm:$0xff]
    %v5441 = vld [vmem:[#allocation2 + $0x16e0] sm:$0xff]
    %v5442 = vld [vmem:[#allocation2 + $0x16e8] sm:$0xff]
    %v5443 = vld [vmem:[#allocation2 + $0x16f0] sm:$0xff]
    %v5444 = vld [vmem:[#allocation2 + $0x16f8] sm:$0xff]
    %v5445 = vld [vmem:[#allocation2 + $0x1700] sm:$0xff]
    %v5446 = vld [vmem:[#allocation2 + $0x1708] sm:$0xff]
    %v5447 = vld [vmem:[#allocation2 + $0x1710] sm:$0xff]
    %v5448 = vld [vmem:[#allocation2 + $0x1718] sm:$0xff]
    %v5449 = vld [vmem:[#allocation2 + $0x1720] sm:$0xff]
    %v5450 = vld [vmem:[#allocation2 + $0x1728] sm:$0xff]
    %v5451 = vld [vmem:[#allocation2 + $0x1730] sm:$0xff]
    %v5452 = vld [vmem:[#allocation2 + $0x1738] sm:$0xff]
    %v5453 = vld [vmem:[#allocation2 + $0x1740] sm:$0xff]
    %v5454 = vld [vmem:[#allocation2 + $0x1748] sm:$0xff]
    %v5455 = vld [vmem:[#allocation2 + $0x1750] sm:$0xff]
    %v5456 = vld [vmem:[#allocation2 + $0x1758] sm:$0xff]
    %v5457 = vld [vmem:[#allocation2 + $0x1760] sm:$0xff]
    %v5458 = vld [vmem:[#allocation2 + $0x1768] sm:$0xff]
    %v5459 = vld [vmem:[#allocation2 + $0x1770] sm:$0xff]
    %v5460 = vld [vmem:[#allocation2 + $0x1778] sm:$0xff]
    %v5461 = vld [vmem:[#allocation2 + $0x1780] sm:$0xff]
    %v5462 = vld [vmem:[#allocation2 + $0x1788] sm:$0xff]
    %v5463 = vld [vmem:[#allocation2 + $0x1790] sm:$0xff]
    %v5464 = vld [vmem:[#allocation2 + $0x1798] sm:$0xff]
    %v5465 = vld [vmem:[#allocation2 + $0x17a0] sm:$0xff]
    %v5466 = vld [vmem:[#allocation2 + $0x17a8] sm:$0xff]
    %v5467 = vld [vmem:[#allocation2 + $0x17b0] sm:$0xff]
    %v5468 = vld [vmem:[#allocation2 + $0x17b8] sm:$0xff]
    %v5469 = vld [vmem:[#allocation2 + $0x17c0] sm:$0xff]
    %v5470 = vld [vmem:[#allocation2 + $0x17c8] sm:$0xff]
    %v5471 = vld [vmem:[#allocation2 + $0x17d0] sm:$0xff]
    %v5472 = vld [vmem:[#allocation2 + $0x17d8] sm:$0xff]
    %v5473 = vld [vmem:[#allocation2 + $0x17e0] sm:$0xff]
    %v5474 = vld [vmem:[#allocation2 + $0x17e8] sm:$0xff]
    %v5475 = vld [vmem:[#allocation2 + $0x17f0] sm:$0xff]
    %v5476 = vld [vmem:[#allocation2 + $0x17f8] sm:$0xff]
    %v5477 = vld [vmem:[#allocation2 + $0x1800] sm:$0xff]
    %v5478 = vld [vmem:[#allocation2 + $0x1808] sm:$0xff]
    %v5479 = vld [vmem:[#allocation2 + $0x1810] sm:$0xff]
    %v5480 = vld [vmem:[#allocation2 + $0x1818] sm:$0xff]
    %v5481 = vld [vmem:[#allocation2 + $0x1820] sm:$0xff]
    %v5482 = vld [vmem:[#allocation2 + $0x1828] sm:$0xff]
    %v5483 = vld [vmem:[#allocation2 + $0x1830] sm:$0xff]
    %v5484 = vld [vmem:[#allocation2 + $0x1838] sm:$0xff]
    %v5485 = vld [vmem:[#allocation2 + $0x1840] sm:$0xff]
    %v5486 = vld [vmem:[#allocation2 + $0x1848] sm:$0xff]
    %v5487 = vld [vmem:[#allocation2 + $0x1850] sm:$0xff]
    %v5488 = vld [vmem:[#allocation2 + $0x1858] sm:$0xff]
    %v5489 = vld [vmem:[#allocation2 + $0x1860] sm:$0xff]
    %v5490 = vld [vmem:[#allocation2 + $0x1868] sm:$0xff]
    %v5491 = vld [vmem:[#allocation2 + $0x1870] sm:$0xff]
    %v5492 = vld [vmem:[#allocation2 + $0x1878] sm:$0xff]
    %v5493 = vld [vmem:[#allocation2 + $0x1880] sm:$0xff]
    %v5494 = vld [vmem:[#allocation2 + $0x1888] sm:$0xff]
    %v5495 = vld [vmem:[#allocation2 + $0x1890] sm:$0xff]
    %v5496 = vld [vmem:[#allocation2 + $0x1898] sm:$0xff]
    %v5497 = vld [vmem:[#allocation2 + $0x18a0] sm:$0xff]
    %v5498 = vld [vmem:[#allocation2 + $0x18a8] sm:$0xff]
    %v5499 = vld [vmem:[#allocation2 + $0x18b0] sm:$0xff]
    %v5500 = vld [vmem:[#allocation2 + $0x18b8] sm:$0xff]
    %v5501 = vld [vmem:[#allocation2 + $0x18c0] sm:$0xff]
    %v5502 = vld [vmem:[#allocation2 + $0x18c8] sm:$0xff]
    %v5503 = vld [vmem:[#allocation2 + $0x18d0] sm:$0xff]
    %v5504 = vld [vmem:[#allocation2 + $0x18d8] sm:$0xff]
    %v5505 = vld [vmem:[#allocation2 + $0x18e0] sm:$0xff]
    %v5506 = vld [vmem:[#allocation2 + $0x18e8] sm:$0xff]
    %v5507 = vld [vmem:[#allocation2 + $0x18f0] sm:$0xff]
    %v5508 = vld [vmem:[#allocation2 + $0x18f8] sm:$0xff]
    %v5509 = vld [vmem:[#allocation2 + $0x1900] sm:$0xff]
    %v5510 = vld [vmem:[#allocation2 + $0x1908] sm:$0xff]
    %v5511 = vld [vmem:[#allocation2 + $0x1910] sm:$0xff]
    %v5512 = vld [vmem:[#allocation2 + $0x1918] sm:$0xff]
    %v5513 = vld [vmem:[#allocation2 + $0x1920] sm:$0xff]
    %v5514 = vld [vmem:[#allocation2 + $0x1928] sm:$0xff]
    %v5515 = vld [vmem:[#allocation2 + $0x1930] sm:$0xff]
    %v5516 = vld [vmem:[#allocation2 + $0x1938] sm:$0xff]
    %v5517 = vld [vmem:[#allocation2 + $0x1940] sm:$0xff]
    %v5518 = vld [vmem:[#allocation2 + $0x1948] sm:$0xff]
    %v5519 = vld [vmem:[#allocation2 + $0x1950] sm:$0xff]
    %v5520 = vld [vmem:[#allocation2 + $0x1958] sm:$0xff]
    %v5521 = vld [vmem:[#allocation2 + $0x1960] sm:$0xff]
    %v5522 = vld [vmem:[#allocation2 + $0x1968] sm:$0xff]
    %v5523 = vld [vmem:[#allocation2 + $0x1970] sm:$0xff]
    %v5524 = vld [vmem:[#allocation2 + $0x1978] sm:$0xff]
    %v5525 = vld [vmem:[#allocation2 + $0x1980] sm:$0xff]
    %v5526 = vld [vmem:[#allocation2 + $0x1988] sm:$0xff]
    %v5527 = vld [vmem:[#allocation2 + $0x1990] sm:$0xff]
    %v5528 = vld [vmem:[#allocation2 + $0x1998] sm:$0xff]
    %v5529 = vld [vmem:[#allocation2 + $0x19a0] sm:$0xff]
    %v5530 = vld [vmem:[#allocation2 + $0x19a8] sm:$0xff]
    %v5531 = vld [vmem:[#allocation2 + $0x19b0] sm:$0xff]
    %v5532 = vld [vmem:[#allocation2 + $0x19b8] sm:$0xff]
    %v5533 = vld [vmem:[#allocation2 + $0x19c0] sm:$0xff]
    %v5534 = vld [vmem:[#allocation2 + $0x19c8] sm:$0xff]
    %v5535 = vld [vmem:[#allocation2 + $0x19d0] sm:$0xff]
    %v5536 = vld [vmem:[#allocation2 + $0x19d8] sm:$0xff]
    %v5537 = vld [vmem:[#allocation2 + $0x19e0] sm:$0xff]
    %v5538 = vld [vmem:[#allocation2 + $0x19e8] sm:$0xff]
    %v5539 = vld [vmem:[#allocation2 + $0x19f0] sm:$0xff]
    %v5540 = vld [vmem:[#allocation2 + $0x19f8] sm:$0xff]
    %v5541 = vld [vmem:[#allocation2 + $0x1a00] sm:$0xff]
    %v5542 = vld [vmem:[#allocation2 + $0x1a08] sm:$0xff]
    %v5543 = vld [vmem:[#allocation2 + $0x1a10] sm:$0xff]
    %v5544 = vld [vmem:[#allocation2 + $0x1a18] sm:$0xff]
    %v5545 = vld [vmem:[#allocation2 + $0x1a20] sm:$0xff]
    %v5546 = vld [vmem:[#allocation2 + $0x1a28] sm:$0xff]
    %v5547 = vld [vmem:[#allocation2 + $0x1a30] sm:$0xff]
    %v5548 = vld [vmem:[#allocation2 + $0x1a38] sm:$0xff]
    %v5549 = vld [vmem:[#allocation2 + $0x1a40] sm:$0xff]
    %v5550 = vld [vmem:[#allocation2 + $0x1a48] sm:$0xff]
    %v5551 = vld [vmem:[#allocation2 + $0x1a50] sm:$0xff]
    %v5552 = vld [vmem:[#allocation2 + $0x1a58] sm:$0xff]
    %v5553 = vld [vmem:[#allocation2 + $0x1a60] sm:$0xff]
    %v5554 = vld [vmem:[#allocation2 + $0x1a68] sm:$0xff]
    %v5555 = vld [vmem:[#allocation2 + $0x1a70] sm:$0xff]
    %v5556 = vld [vmem:[#allocation2 + $0x1a78] sm:$0xff]
    %v5557 = vld [vmem:[#allocation2 + $0x1a80] sm:$0xff]
    %v5558 = vld [vmem:[#allocation2 + $0x1a88] sm:$0xff]
    %v5559 = vld [vmem:[#allocation2 + $0x1a90] sm:$0xff]
    %v5560 = vld [vmem:[#allocation2 + $0x1a98] sm:$0xff]
    %v5561 = vld [vmem:[#allocation2 + $0x1aa0] sm:$0xff]
    %v5562 = vld [vmem:[#allocation2 + $0x1aa8] sm:$0xff]
    %v5563 = vld [vmem:[#allocation2 + $0x1ab0] sm:$0xff]
    %v5564 = vld [vmem:[#allocation2 + $0x1ab8] sm:$0xff]
    %v5565 = vld [vmem:[#allocation2 + $0x1ac0] sm:$0xff]
    %v5566 = vld [vmem:[#allocation2 + $0x1ac8] sm:$0xff]
    %v5567 = vld [vmem:[#allocation2 + $0x1ad0] sm:$0xff]
    %v5568 = vld [vmem:[#allocation2 + $0x1ad8] sm:$0xff]
    %v5569 = vld [vmem:[#allocation2 + $0x1ae0] sm:$0xff]
    %v5570 = vld [vmem:[#allocation2 + $0x1ae8] sm:$0xff]
    %v5571 = vld [vmem:[#allocation2 + $0x1af0] sm:$0xff]
    %v5572 = vld [vmem:[#allocation2 + $0x1af8] sm:$0xff]
    %v5573 = vld [vmem:[#allocation2 + $0x1b00] sm:$0xff]
    %v5574 = vld [vmem:[#allocation2 + $0x1b08] sm:$0xff]
    %v5575 = vld [vmem:[#allocation2 + $0x1b10] sm:$0xff]
    %v5576 = vld [vmem:[#allocation2 + $0x1b18] sm:$0xff]
    %v5577 = vld [vmem:[#allocation2 + $0x1b20] sm:$0xff]
    %v5578 = vld [vmem:[#allocation2 + $0x1b28] sm:$0xff]
    %v5579 = vld [vmem:[#allocation2 + $0x1b30] sm:$0xff]
    %v5580 = vld [vmem:[#allocation2 + $0x1b38] sm:$0xff]
    %v5581 = vld [vmem:[#allocation2 + $0x1b40] sm:$0xff]
    %v5582 = vld [vmem:[#allocation2 + $0x1b48] sm:$0xff]
    %v5583 = vld [vmem:[#allocation2 + $0x1b50] sm:$0xff]
    %v5584 = vld [vmem:[#allocation2 + $0x1b58] sm:$0xff]
    %v5585 = vld [vmem:[#allocation2 + $0x1b60] sm:$0xff]
    %v5586 = vld [vmem:[#allocation2 + $0x1b68] sm:$0xff]
    %v5587 = vld [vmem:[#allocation2 + $0x1b70] sm:$0xff]
    %v5588 = vld [vmem:[#allocation2 + $0x1b78] sm:$0xff]
    %v5589 = vld [vmem:[#allocation2 + $0x1b80] sm:$0xff]
    %v5590 = vld [vmem:[#allocation2 + $0x1b88] sm:$0xff]
    %v5591 = vld [vmem:[#allocation2 + $0x1b90] sm:$0xff]
    %v5592 = vld [vmem:[#allocation2 + $0x1b98] sm:$0xff]
    %v5593 = vld [vmem:[#allocation2 + $0x1ba0] sm:$0xff]
    %v5594 = vld [vmem:[#allocation2 + $0x1ba8] sm:$0xff]
    %v5595 = vld [vmem:[#allocation2 + $0x1bb0] sm:$0xff]
    %v5596 = vld [vmem:[#allocation2 + $0x1bb8] sm:$0xff]
    %v5597 = vld [vmem:[#allocation2 + $0x1bc0] sm:$0xff]
    %v5598 = vld [vmem:[#allocation2 + $0x1bc8] sm:$0xff]
    %v5599 = vld [vmem:[#allocation2 + $0x1bd0] sm:$0xff]
    %v5600 = vld [vmem:[#allocation2 + $0x1bd8] sm:$0xff]
    %v5601 = vld [vmem:[#allocation2 + $0x1be0] sm:$0xff]
    %v5602 = vld [vmem:[#allocation2 + $0x1be8] sm:$0xff]
    %v5603 = vld [vmem:[#allocation2 + $0x1bf0] sm:$0xff]
    %v5604 = vld [vmem:[#allocation2 + $0x1bf8] sm:$0xff]
    %v5605 = vld [vmem:[#allocation2 + $0x1c00] sm:$0xff]
    %v5606 = vld [vmem:[#allocation2 + $0x1c08] sm:$0xff]
    %v5607 = vld [vmem:[#allocation2 + $0x1c10] sm:$0xff]
    %v5608 = vld [vmem:[#allocation2 + $0x1c18] sm:$0xff]
    %v5609 = vld [vmem:[#allocation2 + $0x1c20] sm:$0xff]
    %v5610 = vld [vmem:[#allocation2 + $0x1c28] sm:$0xff]
    %v5611 = vld [vmem:[#allocation2 + $0x1c30] sm:$0xff]
    %v5612 = vld [vmem:[#allocation2 + $0x1c38] sm:$0xff]
    %v5613 = vld [vmem:[#allocation2 + $0x1c40] sm:$0xff]
    %v5614 = vld [vmem:[#allocation2 + $0x1c48] sm:$0xff]
    %v5615 = vld [vmem:[#allocation2 + $0x1c50] sm:$0xff]
    %v5616 = vld [vmem:[#allocation2 + $0x1c58] sm:$0xff]
    %v5617 = vld [vmem:[#allocation2 + $0x1c60] sm:$0xff]
    %v5618 = vld [vmem:[#allocation2 + $0x1c68] sm:$0xff]
    %v5619 = vld [vmem:[#allocation2 + $0x1c70] sm:$0xff]
    %v5620 = vld [vmem:[#allocation2 + $0x1c78] sm:$0xff]
    %v5621 = vld [vmem:[#allocation2 + $0x1c80] sm:$0xff]
    %v5622 = vld [vmem:[#allocation2 + $0x1c88] sm:$0xff]
    %v5623 = vld [vmem:[#allocation2 + $0x1c90] sm:$0xff]
    %v5624 = vld [vmem:[#allocation2 + $0x1c98] sm:$0xff]
    %v5625 = vld [vmem:[#allocation2 + $0x1ca0] sm:$0xff]
    %v5626 = vld [vmem:[#allocation2 + $0x1ca8] sm:$0xff]
    %v5627 = vld [vmem:[#allocation2 + $0x1cb0] sm:$0xff]
    %v5628 = vld [vmem:[#allocation2 + $0x1cb8] sm:$0xff]
    %v5629 = vld [vmem:[#allocation2 + $0x1cc0] sm:$0xff]
    %v5630 = vld [vmem:[#allocation2 + $0x1cc8] sm:$0xff]
    %v5631 = vld [vmem:[#allocation2 + $0x1cd0] sm:$0xff]
    %v5632 = vld [vmem:[#allocation2 + $0x1cd8] sm:$0xff]
    %v5633 = vld [vmem:[#allocation2 + $0x1ce0] sm:$0xff]
    %v5634 = vld [vmem:[#allocation2 + $0x1ce8] sm:$0xff]
    %v5635 = vld [vmem:[#allocation2 + $0x1cf0] sm:$0xff]
    %v5636 = vld [vmem:[#allocation2 + $0x1cf8] sm:$0xff]
    %v5637 = vld [vmem:[#allocation2 + $0x1d00] sm:$0xff]
    %v5638 = vld [vmem:[#allocation2 + $0x1d08] sm:$0xff]
    %v5639 = vld [vmem:[#allocation2 + $0x1d10] sm:$0xff]
    %v5640 = vld [vmem:[#allocation2 + $0x1d18] sm:$0xff]
    %v5641 = vld [vmem:[#allocation2 + $0x1d20] sm:$0xff]
    %v5642 = vld [vmem:[#allocation2 + $0x1d28] sm:$0xff]
    %v5643 = vld [vmem:[#allocation2 + $0x1d30] sm:$0xff]
    %v5644 = vld [vmem:[#allocation2 + $0x1d38] sm:$0xff]
    %v5645 = vld [vmem:[#allocation2 + $0x1d40] sm:$0xff]
    %v5646 = vld [vmem:[#allocation2 + $0x1d48] sm:$0xff]
    %v5647 = vld [vmem:[#allocation2 + $0x1d50] sm:$0xff]
    %v5648 = vld [vmem:[#allocation2 + $0x1d58] sm:$0xff]
    %v5649 = vld [vmem:[#allocation2 + $0x1d60] sm:$0xff]
    %v5650 = vld [vmem:[#allocation2 + $0x1d68] sm:$0xff]
    %v5651 = vld [vmem:[#allocation2 + $0x1d70] sm:$0xff]
    %v5652 = vld [vmem:[#allocation2 + $0x1d78] sm:$0xff]
    %v5653 = vld [vmem:[#allocation2 + $0x1d80] sm:$0xff]
    %v5654 = vld [vmem:[#allocation2 + $0x1d88] sm:$0xff]
    %v5655 = vld [vmem:[#allocation2 + $0x1d90] sm:$0xff]
    %v5656 = vld [vmem:[#allocation2 + $0x1d98] sm:$0xff]
    %v5657 = vld [vmem:[#allocation2 + $0x1da0] sm:$0xff]
    %v5658 = vld [vmem:[#allocation2 + $0x1da8] sm:$0xff]
    %v5659 = vld [vmem:[#allocation2 + $0x1db0] sm:$0xff]
    %v5660 = vld [vmem:[#allocation2 + $0x1db8] sm:$0xff]
    %v5661 = vld [vmem:[#allocation2 + $0x1dc0] sm:$0xff]
    %v5662 = vld [vmem:[#allocation2 + $0x1dc8] sm:$0xff]
    %v5663 = vld [vmem:[#allocation2 + $0x1dd0] sm:$0xff]
    %v5664 = vld [vmem:[#allocation2 + $0x1dd8] sm:$0xff]
    %v5665 = vld [vmem:[#allocation2 + $0x1de0] sm:$0xff]
    %v5666 = vld [vmem:[#allocation2 + $0x1de8] sm:$0xff]
    %v5667 = vld [vmem:[#allocation2 + $0x1df0] sm:$0xff]
    %v5668 = vld [vmem:[#allocation2 + $0x1df8] sm:$0xff]
    %v5669 = vld [vmem:[#allocation2 + $0x1e00] sm:$0xff]
    %v5670 = vld [vmem:[#allocation2 + $0x1e08] sm:$0xff]
    %v5671 = vld [vmem:[#allocation2 + $0x1e10] sm:$0xff]
    %v5672 = vld [vmem:[#allocation2 + $0x1e18] sm:$0xff]
    %v5673 = vld [vmem:[#allocation2 + $0x1e20] sm:$0xff]
    %v5674 = vld [vmem:[#allocation2 + $0x1e28] sm:$0xff]
    %v5675 = vld [vmem:[#allocation2 + $0x1e30] sm:$0xff]
    %v5676 = vld [vmem:[#allocation2 + $0x1e38] sm:$0xff]
    %v5677 = vld [vmem:[#allocation2 + $0x1e40] sm:$0xff]
    %v5678 = vld [vmem:[#allocation2 + $0x1e48] sm:$0xff]
    %v5679 = vld [vmem:[#allocation2 + $0x1e50] sm:$0xff]
    %v5680 = vld [vmem:[#allocation2 + $0x1e58] sm:$0xff]
    %v5681 = vld [vmem:[#allocation2 + $0x1e60] sm:$0xff]
    %v5682 = vld [vmem:[#allocation2 + $0x1e68] sm:$0xff]
    %v5683 = vld [vmem:[#allocation2 + $0x1e70] sm:$0xff]
    %v5684 = vld [vmem:[#allocation2 + $0x1e78] sm:$0xff]
    %v5685 = vld [vmem:[#allocation2 + $0x1e80] sm:$0xff]
    %v5686 = vld [vmem:[#allocation2 + $0x1e88] sm:$0xff]
    %v5687 = vld [vmem:[#allocation2 + $0x1e90] sm:$0xff]
    %v5688 = vld [vmem:[#allocation2 + $0x1e98] sm:$0xff]
    %v5689 = vld [vmem:[#allocation2 + $0x1ea0] sm:$0xff]
    %v5690 = vld [vmem:[#allocation2 + $0x1ea8] sm:$0xff]
    %v5691 = vld [vmem:[#allocation2 + $0x1eb0] sm:$0xff]
    %v5692 = vld [vmem:[#allocation2 + $0x1eb8] sm:$0xff]
    %v5693 = vld [vmem:[#allocation2 + $0x1ec0] sm:$0xff]
    %v5694 = vld [vmem:[#allocation2 + $0x1ec8] sm:$0xff]
    %v5695 = vld [vmem:[#allocation2 + $0x1ed0] sm:$0xff]
    %v5696 = vld [vmem:[#allocation2 + $0x1ed8] sm:$0xff]
    %v5697 = vld [vmem:[#allocation2 + $0x1ee0] sm:$0xff]
    %v5698 = vld [vmem:[#allocation2 + $0x1ee8] sm:$0xff]
    %v5699 = vld [vmem:[#allocation2 + $0x1ef0] sm:$0xff]
    %v5700 = vld [vmem:[#allocation2 + $0x1ef8] sm:$0xff]
    %v5701 = vld [vmem:[#allocation2 + $0x1f00] sm:$0xff]
    %v5702 = vld [vmem:[#allocation2 + $0x1f08] sm:$0xff]
    %v5703 = vld [vmem:[#allocation2 + $0x1f10] sm:$0xff]
    %v5704 = vld [vmem:[#allocation2 + $0x1f18] sm:$0xff]
    %v5705 = vld [vmem:[#allocation2 + $0x1f20] sm:$0xff]
    %v5706 = vld [vmem:[#allocation2 + $0x1f28] sm:$0xff]
    %v5707 = vld [vmem:[#allocation2 + $0x1f30] sm:$0xff]
    %v5708 = vld [vmem:[#allocation2 + $0x1f38] sm:$0xff]
    %v5709 = vld [vmem:[#allocation2 + $0x1f40] sm:$0xff]
    %v5710 = vld [vmem:[#allocation2 + $0x1f48] sm:$0xff]
    %v5711 = vld [vmem:[#allocation2 + $0x1f50] sm:$0xff]
    %v5712 = vld [vmem:[#allocation2 + $0x1f58] sm:$0xff]
    %v5713 = vld [vmem:[#allocation2 + $0x1f60] sm:$0xff]
    %v5714 = vld [vmem:[#allocation2 + $0x1f68] sm:$0xff]
    %v5715 = vld [vmem:[#allocation2 + $0x1f70] sm:$0xff]
    %v5716 = vld [vmem:[#allocation2 + $0x1f78] sm:$0xff]
    %v5717 = vld [vmem:[#allocation2 + $0x1f80] sm:$0xff]
    %v5718 = vld [vmem:[#allocation2 + $0x1f88] sm:$0xff]
    %v5719 = vld [vmem:[#allocation2 + $0x1f90] sm:$0xff]
    %v5720 = vld [vmem:[#allocation2 + $0x1f98] sm:$0xff]
    %v5721 = vld [vmem:[#allocation2 + $0x1fa0] sm:$0xff]
    %v5722 = vld [vmem:[#allocation2 + $0x1fa8] sm:$0xff]
    %v5723 = vld [vmem:[#allocation2 + $0x1fb0] sm:$0xff]
    %v5724 = vld [vmem:[#allocation2 + $0x1fb8] sm:$0xff]
    %v5725 = vld [vmem:[#allocation2 + $0x1fc0] sm:$0xff]
    %v5726 = vld [vmem:[#allocation2 + $0x1fc8] sm:$0xff]
    %v5727 = vld [vmem:[#allocation2 + $0x1fd0] sm:$0xff]
    %v5728 = vld [vmem:[#allocation2 + $0x1fd8] sm:$0xff]
    %v5729 = vld [vmem:[#allocation2 + $0x1fe0] sm:$0xff]
    %v5730 = vld [vmem:[#allocation2 + $0x1fe8] sm:$0xff]
    %v5731 = vld [vmem:[#allocation2 + $0x1ff0] sm:$0xff]
    %v5732 = vld [vmem:[#allocation2 + $0x1ff8] sm:$0xff]
    %v5733 = vld [vmem:[#allocation16] sm:$0xff]
    %v5735 = vlaneseq
    %v5736 = vshrl.u32 %v5735, 7
    %v5737 = vsub.s32 0, %v5736
    %v5738 = vrot.slane %v5733, %v5737
    %v5739 = vlaneseq
    %v5740 = vshrl.u32 %v5739, 7
    %v5741 = vsub.s32 1, %v5740
    %v5742 = vrot.slane %v5733, %v5741
    %v5743 = vlaneseq
    %v5744 = vshrl.u32 %v5743, 7
    %v5745 = vsub.s32 2, %v5744
    %v5746 = vrot.slane %v5733, %v5745
    %v5747 = vlaneseq
    %v5748 = vshrl.u32 %v5747, 7
    %v5749 = vsub.s32 3, %v5748
    %v5750 = vrot.slane %v5733, %v5749
    %v5751 = vlaneseq
    %v5752 = vshrl.u32 %v5751, 7
    %v5753 = vsub.s32 4, %v5752
    %v5754 = vrot.slane %v5733, %v5753
    %v5755 = vlaneseq
    %v5756 = vshrl.u32 %v5755, 7
    %v5757 = vsub.s32 5, %v5756
    %v5758 = vrot.slane %v5733, %v5757
    %v5759 = vlaneseq
    %v5760 = vshrl.u32 %v5759, 7
    %v5761 = vsub.s32 6, %v5760
    %v5762 = vrot.slane %v5733, %v5761
    %v5763 = vlaneseq
    %v5764 = vshrl.u32 %v5763, 7
    %v5765 = vsub.s32 7, %v5764
    %v5766 = vrot.slane %v5733, %v5765
    %5775 = vmatprep.subr.bf16.mxu0 %v4710
    %5776 = vmatpush1.bf16.msra.mxu0 %v4709
    %5777 = vmatprep.subr.bf16.mxu0 %v4718
    %5778 = vmatpush1.bf16.msra.mxu0 %v4717
    %5779 = vmatprep.subr.bf16.mxu0 %v4726
    %5780 = vmatpush1.bf16.msra.mxu0 %v4725
    %5781 = vmatprep.subr.bf16.mxu0 %v4734
    %5782 = vmatpush1.bf16.msra.mxu0 %v4733
    %5783 = vmatprep.subr.bf16.mxu0 %v4742
    %5784 = vmatpush1.bf16.msra.mxu0 %v4741
    %5785 = vmatprep.subr.bf16.mxu0 %v4750
    %5786 = vmatpush1.bf16.msra.mxu0 %v4749
    %5787 = vmatprep.subr.bf16.mxu0 %v4758
    %5788 = vmatpush1.bf16.msra.mxu0 %v4757
    %5789 = vmatprep.subr.bf16.mxu0 %v4766
    %5790 = vmatpush1.bf16.msra.mxu0 %v4765
    %5791 = vmatprep.subr.bf16.mxu0 %v4774
    %5792 = vmatpush1.bf16.msra.mxu0 %v4773
    %5793 = vmatprep.subr.bf16.mxu0 %v4782
    %5794 = vmatpush1.bf16.msra.mxu0 %v4781
    %5795 = vmatprep.subr.bf16.mxu0 %v4790
    %5796 = vmatpush1.bf16.msra.mxu0 %v4789
    %5797 = vmatprep.subr.bf16.mxu0 %v4798
    %5798 = vmatpush1.bf16.msra.mxu0 %v4797
    %5799 = vmatprep.subr.bf16.mxu0 %v4806
    %5800 = vmatpush1.bf16.msra.mxu0 %v4805
    %5801 = vmatprep.subr.bf16.mxu0 %v4814
    %5802 = vmatpush1.bf16.msra.mxu0 %v4813
    %5803 = vmatprep.subr.bf16.mxu0 %v4822
    %5804 = vmatpush1.bf16.msra.mxu0 %v4821
    %5805 = vmatprep.subr.bf16.mxu0 %v4830
    %5806 = vmatpush1.bf16.msra.mxu0 %v4829
    %5807 = vmatprep.mubr.bf16.mxu0 %v4694
    %5808 = vmatmul.mubr.bf16.gmra.mrb[0].mxu0 %v4693
    %v5809 = vpop.f32.mrb[0].mxu0
    %v5810 = vadd.f32 %v5738, %v5809
    %v5811 = vpop.f32.mrb[0].mxu0
    %v5812 = vadd.f32 %v5742, %v5811
    %v5813 = vpop.f32.mrb[0].mxu0
    %v5814 = vpop.f32.mrb[0].mxu0
    %5815 = vdwg.mxu0
    %5816 = vmatprep.subr.bf16.mxu0 %v4838
    %5817 = vmatpush1.bf16.msra.mxu0 %v4837
    %5818 = vmatprep.subr.bf16.mxu0 %v4846
    %5819 = vmatpush1.bf16.msra.mxu0 %v4845
    %5820 = vmatprep.subr.bf16.mxu0 %v4854
    %5821 = vmatpush1.bf16.msra.mxu0 %v4853
    %5822 = vmatprep.subr.bf16.mxu0 %v4862
    %5823 = vmatpush1.bf16.msra.mxu0 %v4861
    %5824 = vmatprep.subr.bf16.mxu0 %v4870
    %5825 = vmatpush1.bf16.msra.mxu0 %v4869
    %5826 = vmatprep.subr.bf16.mxu0 %v4878
    %5827 = vmatpush1.bf16.msra.mxu0 %v4877
    %5828 = vmatprep.subr.bf16.mxu0 %v4886
    %5829 = vmatpush1.bf16.msra.mxu0 %v4885
    %5830 = vmatprep.subr.bf16.mxu0 %v4894
    %5831 = vmatpush1.bf16.msra.mxu0 %v4893
    %5832 = vmatprep.subr.bf16.mxu0 %v4902
    %5833 = vmatpush1.bf16.msra.mxu0 %v4901
    %5834 = vmatprep.subr.bf16.mxu0 %v4910
    %5835 = vmatpush1.bf16.msra.mxu0 %v4909
    %5836 = vmatprep.subr.bf16.mxu0 %v4918
    %5837 = vmatpush1.bf16.msra.mxu0 %v4917
    %5838 = vmatprep.subr.bf16.mxu0 %v4926
    %5839 = vmatpush1.bf16.msra.mxu0 %v4925
    %5840 = vmatprep.subr.bf16.mxu0 %v4934
    %5841 = vmatpush1.bf16.msra.mxu0 %v4933
    %5842 = vmatprep.subr.bf16.mxu0 %v4942
    %5843 = vmatpush1.bf16.msra.mxu0 %v4941
    %5844 = vmatprep.subr.bf16.mxu0 %v4950
    %5845 = vmatpush1.bf16.msra.mxu0 %v4949
    %5846 = vmatprep.subr.bf16.mxu0 %v4958
    %5847 = vmatpush1.bf16.msra.mxu0 %v4957
    %5848 = vmatprep.mubr.bf16.mxu0 %v4696
    %5849 = vmatmul.mubr.bf16.gmra.mrb[0].mxu0 %v4695
    %v5850 = vpop.f32.mrb[0].mxu0
    %v5851 = vadd.f32 %v5810, %v5850
    %v5852 = vpop.f32.mrb[0].mxu0
    %v5853 = vadd.f32 %v5812, %v5852
    %v5854 = vpop.f32.mrb[0].mxu0
    %v5855 = vpop.f32.mrb[0].mxu0
    %5856 = vdwg.mxu0
    %5857 = vmatprep.subr.bf16.mxu0 %v4966
    %5858 = vmatpush1.bf16.msra.mxu0 %v4965
    %5859 = vmatprep.subr.bf16.mxu0 %v4974
    %5860 = vmatpush1.bf16.msra.mxu0 %v4973
    %5861 = vmatprep.subr.bf16.mxu0 %v4982
    %5862 = vmatpush1.bf16.msra.mxu0 %v4981
    %5863 = vmatprep.subr.bf16.mxu0 %v4990
    %5864 = vmatpush1.bf16.msra.mxu0 %v4989
    %5865 = vmatprep.subr.bf16.mxu0 %v4998
    %5866 = vmatpush1.bf16.msra.mxu0 %v4997
    %5867 = vmatprep.subr.bf16.mxu0 %v5006
    %5868 = vmatpush1.bf16.msra.mxu0 %v5005
    %5869 = vmatprep.subr.bf16.mxu0 %v5014
    %5870 = vmatpush1.bf16.msra.mxu0 %v5013
    %5871 = vmatprep.subr.bf16.mxu0 %v5022
    %5872 = vmatpush1.bf16.msra.mxu0 %v5021
    %5873 = vmatprep.subr.bf16.mxu0 %v5030
    %5874 = vmatpush1.bf16.msra.mxu0 %v5029
    %5875 = vmatprep.subr.bf16.mxu0 %v5038
    %5876 = vmatpush1.bf16.msra.mxu0 %v5037
    %5877 = vmatprep.subr.bf16.mxu0 %v5046
    %5878 = vmatpush1.bf16.msra.mxu0 %v5045
    %5879 = vmatprep.subr.bf16.mxu0 %v5054
    %5880 = vmatpush1.bf16.msra.mxu0 %v5053
    %5881 = vmatprep.subr.bf16.mxu0 %v5062
    %5882 = vmatpush1.bf16.msra.mxu0 %v5061
    %5883 = vmatprep.subr.bf16.mxu0 %v5070
    %5884 = vmatpush1.bf16.msra.mxu0 %v5069
    %5885 = vmatprep.subr.bf16.mxu0 %v5078
    %5886 = vmatpush1.bf16.msra.mxu0 %v5077
    %5887 = vmatprep.subr.bf16.mxu0 %v5086
    %5888 = vmatpush1.bf16.msra.mxu0 %v5085
    %5889 = vmatprep.mubr.bf16.mxu0 %v4698
    %5890 = vmatmul.mubr.bf16.gmra.mrb[0].mxu0 %v4697
    %v5891 = vpop.f32.mrb[0].mxu0
    %v5892 = vadd.f32 %v5851, %v5891
    %v5893 = vpop.f32.mrb[0].mxu0
    %v5894 = vadd.f32 %v5853, %v5893
    %v5895 = vpop.f32.mrb[0].mxu0
    %v5896 = vpop.f32.mrb[0].mxu0
    %5897 = vdwg.mxu0
    %5898 = vmatprep.subr.bf16.mxu0 %v5094
    %5899 = vmatpush1.bf16.msra.mxu0 %v5093
    %5900 = vmatprep.subr.bf16.mxu0 %v5102
    %5901 = vmatpush1.bf16.msra.mxu0 %v5101
    %5902 = vmatprep.subr.bf16.mxu0 %v5110
    %5903 = vmatpush1.bf16.msra.mxu0 %v5109
    %5904 = vmatprep.subr.bf16.mxu0 %v5118
    %5905 = vmatpush1.bf16.msra.mxu0 %v5117
    %5906 = vmatprep.subr.bf16.mxu0 %v5126
    %5907 = vmatpush1.bf16.msra.mxu0 %v5125
    %5908 = vmatprep.subr.bf16.mxu0 %v5134
    %5909 = vmatpush1.bf16.msra.mxu0 %v5133
    %5910 = vmatprep.subr.bf16.mxu0 %v5142
    %5911 = vmatpush1.bf16.msra.mxu0 %v5141
    %5912 = vmatprep.subr.bf16.mxu0 %v5150
    %5913 = vmatpush1.bf16.msra.mxu0 %v5149
    %5914 = vmatprep.subr.bf16.mxu0 %v5158
    %5915 = vmatpush1.bf16.msra.mxu0 %v5157
    %5916 = vmatprep.subr.bf16.mxu0 %v5166
    %5917 = vmatpush1.bf16.msra.mxu0 %v5165
    %5918 = vmatprep.subr.bf16.mxu0 %v5174
    %5919 = vmatpush1.bf16.msra.mxu0 %v5173
    %5920 = vmatprep.subr.bf16.mxu0 %v5182
    %5921 = vmatpush1.bf16.msra.mxu0 %v5181
    %5922 = vmatprep.subr.bf16.mxu0 %v5190
    %5923 = vmatpush1.bf16.msra.mxu0 %v5189
    %5924 = vmatprep.subr.bf16.mxu0 %v5198
    %5925 = vmatpush1.bf16.msra.mxu0 %v5197
    %5926 = vmatprep.subr.bf16.mxu0 %v5206
    %5927 = vmatpush1.bf16.msra.mxu0 %v5205
    %5928 = vmatprep.subr.bf16.mxu0 %v5214
    %5929 = vmatpush1.bf16.msra.mxu0 %v5213
    %5930 = vmatprep.mubr.bf16.mxu0 %v4700
    %5931 = vmatmul.mubr.bf16.gmra.mrb[0].mxu0 %v4699
    %v5932 = vpop.f32.mrb[0].mxu0
    %v5933 = vadd.f32 %v5892, %v5932
    %v5934 = vpop.f32.mrb[0].mxu0
    %v5935 = vadd.f32 %v5894, %v5934
    %v5936 = vpop.f32.mrb[0].mxu0
    %v5937 = vpop.f32.mrb[0].mxu0
    %5938 = vdwg.mxu0
    %5939 = vmatprep.subr.bf16.mxu0 %v5222
    %5940 = vmatpush1.bf16.msra.mxu0 %v5221
    %5941 = vmatprep.subr.bf16.mxu0 %v5230
    %5942 = vmatpush1.bf16.msra.mxu0 %v5229
    %5943 = vmatprep.subr.bf16.mxu0 %v5238
    %5944 = vmatpush1.bf16.msra.mxu0 %v5237
    %5945 = vmatprep.subr.bf16.mxu0 %v5246
    %5946 = vmatpush1.bf16.msra.mxu0 %v5245
    %5947 = vmatprep.subr.bf16.mxu0 %v5254
    %5948 = vmatpush1.bf16.msra.mxu0 %v5253
    %5949 = vmatprep.subr.bf16.mxu0 %v5262
    %5950 = vmatpush1.bf16.msra.mxu0 %v5261
    %5951 = vmatprep.subr.bf16.mxu0 %v5270
    %5952 = vmatpush1.bf16.msra.mxu0 %v5269
    %5953 = vmatprep.subr.bf16.mxu0 %v5278
    %5954 = vmatpush1.bf16.msra.mxu0 %v5277
    %5955 = vmatprep.subr.bf16.mxu0 %v5286
    %5956 = vmatpush1.bf16.msra.mxu0 %v5285
    %5957 = vmatprep.subr.bf16.mxu0 %v5294
    %5958 = vmatpush1.bf16.msra.mxu0 %v5293
    %5959 = vmatprep.subr.bf16.mxu0 %v5302
    %5960 = vmatpush1.bf16.msra.mxu0 %v5301
    %5961 = vmatprep.subr.bf16.mxu0 %v5310
    %5962 = vmatpush1.bf16.msra.mxu0 %v5309
    %5963 = vmatprep.subr.bf16.mxu0 %v5318
    %5964 = vmatpush1.bf16.msra.mxu0 %v5317
    %5965 = vmatprep.subr.bf16.mxu0 %v5326
    %5966 = vmatpush1.bf16.msra.mxu0 %v5325
    %5967 = vmatprep.subr.bf16.mxu0 %v5334
    %5968 = vmatpush1.bf16.msra.mxu0 %v5333
    %5969 = vmatprep.subr.bf16.mxu0 %v5342
    %5970 = vmatpush1.bf16.msra.mxu0 %v5341
    %5971 = vmatprep.mubr.bf16.mxu0 %v4702
    %5972 = vmatmul.mubr.bf16.gmra.mrb[0].mxu0 %v4701
    %v5973 = vpop.f32.mrb[0].mxu0
    %v5974 = vadd.f32 %v5933, %v5973
    %v5975 = vpop.f32.mrb[0].mxu0
    %v5976 = vadd.f32 %v5935, %v5975
    %v5977 = vpop.f32.mrb[0].mxu0
    %v5978 = vpop.f32.mrb[0].mxu0
    %5979 = vdwg.mxu0
    %5980 = vmatprep.subr.bf16.mxu0 %v5350
    %5981 = vmatpush1.bf16.msra.mxu0 %v5349
    %5982 = vmatprep.subr.bf16.mxu0 %v5358
    %5983 = vmatpush1.bf16.msra.mxu0 %v5357
    %5984 = vmatprep.subr.bf16.mxu0 %v5366
    %5985 = vmatpush1.bf16.msra.mxu0 %v5365
    %5986 = vmatprep.subr.bf16.mxu0 %v5374
    %5987 = vmatpush1.bf16.msra.mxu0 %v5373
    %5988 = vmatprep.subr.bf16.mxu0 %v5382
    %5989 = vmatpush1.bf16.msra.mxu0 %v5381
    %5990 = vmatprep.subr.bf16.mxu0 %v5390
    %5991 = vmatpush1.bf16.msra.mxu0 %v5389
    %5992 = vmatprep.subr.bf16.mxu0 %v5398
    %5993 = vmatpush1.bf16.msra.mxu0 %v5397
    %5994 = vmatprep.subr.bf16.mxu0 %v5406
    %5995 = vmatpush1.bf16.msra.mxu0 %v5405
    %5996 = vmatprep.subr.bf16.mxu0 %v5414
    %5997 = vmatpush1.bf16.msra.mxu0 %v5413
    %5998 = vmatprep.subr.bf16.mxu0 %v5422
    %5999 = vmatpush1.bf16.msra.mxu0 %v5421
    %6000 = vmatprep.subr.bf16.mxu0 %v5430
    %6001 = vmatpush1.bf16.msra.mxu0 %v5429
    %6002 = vmatprep.subr.bf16.mxu0 %v5438
    %6003 = vmatpush1.bf16.msra.mxu0 %v5437
    %6004 = vmatprep.subr.bf16.mxu0 %v5446
    %6005 = vmatpush1.bf16.msra.mxu0 %v5445
    %6006 = vmatprep.subr.bf16.mxu0 %v5454
    %6007 = vmatpush1.bf16.msra.mxu0 %v5453
    %6008 = vmatprep.subr.bf16.mxu0 %v5462
    %6009 = vmatpush1.bf16.msra.mxu0 %v5461
    %6010 = vmatprep.subr.bf16.mxu0 %v5470
    %6011 = vmatpush1.bf16.msra.mxu0 %v5469
    %6012 = vmatprep.mubr.bf16.mxu0 %v4704
    %6013 = vmatmul.mubr.bf16.gmra.mrb[0].mxu0 %v4703
    %v6014 = vpop.f32.mrb[0].mxu0
    %v6015 = vadd.f32 %v5974, %v6014
    %v6016 = vpop.f32.mrb[0].mxu0
    %v6017 = vadd.f32 %v5976, %v6016
    %v6018 = vpop.f32.mrb[0].mxu0
    %v6019 = vpop.f32.mrb[0].mxu0
    %6020 = vdwg.mxu0
    %6021 = vmatprep.subr.bf16.mxu0 %v5478
    %6022 = vmatpush1.bf16.msra.mxu0 %v5477
    %6023 = vmatprep.subr.bf16.mxu0 %v5486
    %6024 = vmatpush1.bf16.msra.mxu0 %v5485
    %6025 = vmatprep.subr.bf16.mxu0 %v5494
    %6026 = vmatpush1.bf16.msra.mxu0 %v5493
    %6027 = vmatprep.subr.bf16.mxu0 %v5502
    %6028 = vmatpush1.bf16.msra.mxu0 %v5501
    %6029 = vmatprep.subr.bf16.mxu0 %v5510
    %6030 = vmatpush1.bf16.msra.mxu0 %v5509
    %6031 = vmatprep.subr.bf16.mxu0 %v5518
    %6032 = vmatpush1.bf16.msra.mxu0 %v5517
    %6033 = vmatprep.subr.bf16.mxu0 %v5526
    %6034 = vmatpush1.bf16.msra.mxu0 %v5525
    %6035 = vmatprep.subr.bf16.mxu0 %v5534
    %6036 = vmatpush1.bf16.msra.mxu0 %v5533
    %6037 = vmatprep.subr.bf16.mxu0 %v5542
    %6038 = vmatpush1.bf16.msra.mxu0 %v5541
    %6039 = vmatprep.subr.bf16.mxu0 %v5550
    %6040 = vmatpush1.bf16.msra.mxu0 %v5549
    %6041 = vmatprep.subr.bf16.mxu0 %v5558
    %6042 = vmatpush1.bf16.msra.mxu0 %v5557
    %6043 = vmatprep.subr.bf16.mxu0 %v5566
    %6044 = vmatpush1.bf16.msra.mxu0 %v5565
    %6045 = vmatprep.subr.bf16.mxu0 %v5574
    %6046 = vmatpush1.bf16.msra.mxu0 %v5573
    %6047 = vmatprep.subr.bf16.mxu0 %v5582
    %6048 = vmatpush1.bf16.msra.mxu0 %v5581
    %6049 = vmatprep.subr.bf16.mxu0 %v5590
    %6050 = vmatpush1.bf16.msra.mxu0 %v5589
    %6051 = vmatprep.subr.bf16.mxu0 %v5598
    %6052 = vmatpush1.bf16.msra.mxu0 %v5597
    %6053 = vmatprep.mubr.bf16.mxu0 %v4706
    %6054 = vmatmul.mubr.bf16.gmra.mrb[0].mxu0 %v4705
    %v6055 = vpop.f32.mrb[0].mxu0
    %v6056 = vadd.f32 %v6015, %v6055
    %v6057 = vpop.f32.mrb[0].mxu0
    %v6058 = vadd.f32 %v6017, %v6057
    %v6059 = vpop.f32.mrb[0].mxu0
    %v6060 = vpop.f32.mrb[0].mxu0
    %6061 = vdwg.mxu0
    %6062 = vmatprep.subr.bf16.mxu0 %v5606
    %6063 = vmatpush1.bf16.msra.mxu0 %v5605
    %6064 = vmatprep.subr.bf16.mxu0 %v5614
    %6065 = vmatpush1.bf16.msra.mxu0 %v5613
    %6066 = vmatprep.subr.bf16.mxu0 %v5622
    %6067 = vmatpush1.bf16.msra.mxu0 %v5621
    %6068 = vmatprep.subr.bf16.mxu0 %v5630
    %6069 = vmatpush1.bf16.msra.mxu0 %v5629
    %6070 = vmatprep.subr.bf16.mxu0 %v5638
    %6071 = vmatpush1.bf16.msra.mxu0 %v5637
    %6072 = vmatprep.subr.bf16.mxu0 %v5646
    %6073 = vmatpush1.bf16.msra.mxu0 %v5645
    %6074 = vmatprep.subr.bf16.mxu0 %v5654
    %6075 = vmatpush1.bf16.msra.mxu0 %v5653
    %6076 = vmatprep.subr.bf16.mxu0 %v5662
    %6077 = vmatpush1.bf16.msra.mxu0 %v5661
    %6078 = vmatprep.subr.bf16.mxu0 %v5670
    %6079 = vmatpush1.bf16.msra.mxu0 %v5669
    %6080 = vmatprep.subr.bf16.mxu0 %v5678
    %6081 = vmatpush1.bf16.msra.mxu0 %v5677
    %6082 = vmatprep.subr.bf16.mxu0 %v5686
    %6083 = vmatpush1.bf16.msra.mxu0 %v5685
    %6084 = vmatprep.subr.bf16.mxu0 %v5694
    %6085 = vmatpush1.bf16.msra.mxu0 %v5693
    %6086 = vmatprep.subr.bf16.mxu0 %v5702
    %6087 = vmatpush1.bf16.msra.mxu0 %v5701
    %6088 = vmatprep.subr.bf16.mxu0 %v5710
    %6089 = vmatpush1.bf16.msra.mxu0 %v5709
    %6090 = vmatprep.subr.bf16.mxu0 %v5718
    %6091 = vmatpush1.bf16.msra.mxu0 %v5717
    %6092 = vmatprep.subr.bf16.mxu0 %v5726
    %6093 = vmatpush1.bf16.msra.mxu0 %v5725
    %6094 = vmatprep.mubr.bf16.mxu0 %v4708
    %6095 = vmatmul.mubr.bf16.gmra.mrb[0].mxu0 %v4707
    %v6096 = vpop.f32.mrb[0].mxu0
    %v6097 = vadd.f32 %v6056, %v6096
    %v6098 = vpop.f32.mrb[0].mxu0
    %v6099 = vadd.f32 %v6058, %v6098
    %v6100 = vpop.f32.mrb[0].mxu0
    %v6101 = vpop.f32.mrb[0].mxu0
    %6102 = vdwg.mxu0
    %6103 = vmatprep.subr.bf16.mxu0 %v4712
    %6104 = vmatpush1.bf16.msra.mxu0 %v4711
    %6105 = vmatprep.subr.bf16.mxu0 %v4720
    %6106 = vmatpush1.bf16.msra.mxu0 %v4719
    %6107 = vmatprep.subr.bf16.mxu0 %v4728
    %6108 = vmatpush1.bf16.msra.mxu0 %v4727
    %6109 = vmatprep.subr.bf16.mxu0 %v4736
    %6110 = vmatpush1.bf16.msra.mxu0 %v4735
    %6111 = vmatprep.subr.bf16.mxu0 %v4744
    %6112 = vmatpush1.bf16.msra.mxu0 %v4743
    %6113 = vmatprep.subr.bf16.mxu0 %v4752
    %6114 = vmatpush1.bf16.msra.mxu0 %v4751
    %6115 = vmatprep.subr.bf16.mxu0 %v4760
    %6116 = vmatpush1.bf16.msra.mxu0 %v4759
    %6117 = vmatprep.subr.bf16.mxu0 %v4768
    %6118 = vmatpush1.bf16.msra.mxu0 %v4767
    %6119 = vmatprep.subr.bf16.mxu0 %v4776
    %6120 = vmatpush1.bf16.msra.mxu0 %v4775
    %6121 = vmatprep.subr.bf16.mxu0 %v4784
    %6122 = vmatpush1.bf16.msra.mxu0 %v4783
    %6123 = vmatprep.subr.bf16.mxu0 %v4792
    %6124 = vmatpush1.bf16.msra.mxu0 %v4791
    %6125 = vmatprep.subr.bf16.mxu0 %v4800
    %6126 = vmatpush1.bf16.msra.mxu0 %v4799
    %6127 = vmatprep.subr.bf16.mxu0 %v4808
    %6128 = vmatpush1.bf16.msra.mxu0 %v4807
    %6129 = vmatprep.subr.bf16.mxu0 %v4816
    %6130 = vmatpush1.bf16.msra.mxu0 %v4815
    %6131 = vmatprep.subr.bf16.mxu0 %v4824
    %6132 = vmatpush1.bf16.msra.mxu0 %v4823
    %6133 = vmatprep.subr.bf16.mxu0 %v4832
    %6134 = vmatpush1.bf16.msra.mxu0 %v4831
    %6135 = vmatprep.mubr.bf16.mxu0 %v4694
    %6136 = vmatmul.mubr.bf16.gmra.mrb[0].mxu0 %v4693
    %v6137 = vpop.f32.mrb[0].mxu0
    %v6138 = vadd.f32 %v5746, %v6137
    %v6139 = vpop.f32.mrb[0].mxu0
    %v6140 = vadd.f32 %v5750, %v6139
    %v6141 = vpop.f32.mrb[0].mxu0
    %v6142 = vpop.f32.mrb[0].mxu0
    %6143 = vdwg.mxu0
    %6144 = vmatprep.subr.bf16.mxu0 %v4840
    %6145 = vmatpush1.bf16.msra.mxu0 %v4839
    %6146 = vmatprep.subr.bf16.mxu0 %v4848
    %6147 = vmatpush1.bf16.msra.mxu0 %v4847
    %6148 = vmatprep.subr.bf16.mxu0 %v4856
    %6149 = vmatpush1.bf16.msra.mxu0 %v4855
    %6150 = vmatprep.subr.bf16.mxu0 %v4864
    %6151 = vmatpush1.bf16.msra.mxu0 %v4863
    %6152 = vmatprep.subr.bf16.mxu0 %v4872
    %6153 = vmatpush1.bf16.msra.mxu0 %v4871
    %6154 = vmatprep.subr.bf16.mxu0 %v4880
    %6155 = vmatpush1.bf16.msra.mxu0 %v4879
    %6156 = vmatprep.subr.bf16.mxu0 %v4888
    %6157 = vmatpush1.bf16.msra.mxu0 %v4887
    %6158 = vmatprep.subr.bf16.mxu0 %v4896
    %6159 = vmatpush1.bf16.msra.mxu0 %v4895
    %6160 = vmatprep.subr.bf16.mxu0 %v4904
    %6161 = vmatpush1.bf16.msra.mxu0 %v4903
    %6162 = vmatprep.subr.bf16.mxu0 %v4912
    %6163 = vmatpush1.bf16.msra.mxu0 %v4911
    %6164 = vmatprep.subr.bf16.mxu0 %v4920
    %6165 = vmatpush1.bf16.msra.mxu0 %v4919
    %6166 = vmatprep.subr.bf16.mxu0 %v4928
    %6167 = vmatpush1.bf16.msra.mxu0 %v4927
    %6168 = vmatprep.subr.bf16.mxu0 %v4936
    %6169 = vmatpush1.bf16.msra.mxu0 %v4935
    %6170 = vmatprep.subr.bf16.mxu0 %v4944
    %6171 = vmatpush1.bf16.msra.mxu0 %v4943
    %6172 = vmatprep.subr.bf16.mxu0 %v4952
    %6173 = vmatpush1.bf16.msra.mxu0 %v4951
    %6174 = vmatprep.subr.bf16.mxu0 %v4960
    %6175 = vmatpush1.bf16.msra.mxu0 %v4959
    %6176 = vmatprep.mubr.bf16.mxu0 %v4696
    %6177 = vmatmul.mubr.bf16.gmra.mrb[0].mxu0 %v4695
    %v6178 = vpop.f32.mrb[0].mxu0
    %v6179 = vadd.f32 %v6138, %v6178
    %v6180 = vpop.f32.mrb[0].mxu0
    %v6181 = vadd.f32 %v6140, %v6180
    %v6182 = vpop.f32.mrb[0].mxu0
    %v6183 = vpop.f32.mrb[0].mxu0
    %6184 = vdwg.mxu0
    %6185 = vmatprep.subr.bf16.mxu0 %v4968
    %6186 = vmatpush1.bf16.msra.mxu0 %v4967
    %6187 = vmatprep.subr.bf16.mxu0 %v4976
    %6188 = vmatpush1.bf16.msra.mxu0 %v4975
    %6189 = vmatprep.subr.bf16.mxu0 %v4984
    %6190 = vmatpush1.bf16.msra.mxu0 %v4983
    %6191 = vmatprep.subr.bf16.mxu0 %v4992
    %6192 = vmatpush1.bf16.msra.mxu0 %v4991
    %6193 = vmatprep.subr.bf16.mxu0 %v5000
    %6194 = vmatpush1.bf16.msra.mxu0 %v4999
    %6195 = vmatprep.subr.bf16.mxu0 %v5008
    %6196 = vmatpush1.bf16.msra.mxu0 %v5007
    %6197 = vmatprep.subr.bf16.mxu0 %v5016
    %6198 = vmatpush1.bf16.msra.mxu0 %v5015
    %6199 = vmatprep.subr.bf16.mxu0 %v5024
    %6200 = vmatpush1.bf16.msra.mxu0 %v5023
    %6201 = vmatprep.subr.bf16.mxu0 %v5032
    %6202 = vmatpush1.bf16.msra.mxu0 %v5031
    %6203 = vmatprep.subr.bf16.mxu0 %v5040
    %6204 = vmatpush1.bf16.msra.mxu0 %v5039
    %6205 = vmatprep.subr.bf16.mxu0 %v5048
    %6206 = vmatpush1.bf16.msra.mxu0 %v5047
    %6207 = vmatprep.subr.bf16.mxu0 %v5056
    %6208 = vmatpush1.bf16.msra.mxu0 %v5055
    %6209 = vmatprep.subr.bf16.mxu0 %v5064
    %6210 = vmatpush1.bf16.msra.mxu0 %v5063
    %6211 = vmatprep.subr.bf16.mxu0 %v5072
    %6212 = vmatpush1.bf16.msra.mxu0 %v5071
    %6213 = vmatprep.subr.bf16.mxu0 %v5080
    %6214 = vmatpush1.bf16.msra.mxu0 %v5079
    %6215 = vmatprep.subr.bf16.mxu0 %v5088
    %6216 = vmatpush1.bf16.msra.mxu0 %v5087
    %6217 = vmatprep.mubr.bf16.mxu0 %v4698
    %6218 = vmatmul.mubr.bf16.gmra.mrb[0].mxu0 %v4697
    %v6219 = vpop.f32.mrb[0].mxu0
    %v6220 = vadd.f32 %v6179, %v6219
    %v6221 = vpop.f32.mrb[0].mxu0
    %v6222 = vadd.f32 %v6181, %v6221
    %v6223 = vpop.f32.mrb[0].mxu0
    %v6224 = vpop.f32.mrb[0].mxu0
    %6225 = vdwg.mxu0
    %6226 = vmatprep.subr.bf16.mxu0 %v5096
    %6227 = vmatpush1.bf16.msra.mxu0 %v5095
    %6228 = vmatprep.subr.bf16.mxu0 %v5104
    %6229 = vmatpush1.bf16.msra.mxu0 %v5103
    %6230 = vmatprep.subr.bf16.mxu0 %v5112
    %6231 = vmatpush1.bf16.msra.mxu0 %v5111
    %6232 = vmatprep.subr.bf16.mxu0 %v5120
    %6233 = vmatpush1.bf16.msra.mxu0 %v5119
    %6234 = vmatprep.subr.bf16.mxu0 %v5128
    %6235 = vmatpush1.bf16.msra.mxu0 %v5127
    %6236 = vmatprep.subr.bf16.mxu0 %v5136
    %6237 = vmatpush1.bf16.msra.mxu0 %v5135
    %6238 = vmatprep.subr.bf16.mxu0 %v5144
    %6239 = vmatpush1.bf16.msra.mxu0 %v5143
    %6240 = vmatprep.subr.bf16.mxu0 %v5152
    %6241 = vmatpush1.bf16.msra.mxu0 %v5151
    %6242 = vmatprep.subr.bf16.mxu0 %v5160
    %6243 = vmatpush1.bf16.msra.mxu0 %v5159
    %6244 = vmatprep.subr.bf16.mxu0 %v5168
    %6245 = vmatpush1.bf16.msra.mxu0 %v5167
    %6246 = vmatprep.subr.bf16.mxu0 %v5176
    %6247 = vmatpush1.bf16.msra.mxu0 %v5175
    %6248 = vmatprep.subr.bf16.mxu0 %v5184
    %6249 = vmatpush1.bf16.msra.mxu0 %v5183
    %6250 = vmatprep.subr.bf16.mxu0 %v5192
    %6251 = vmatpush1.bf16.msra.mxu0 %v5191
    %6252 = vmatprep.subr.bf16.mxu0 %v5200
    %6253 = vmatpush1.bf16.msra.mxu0 %v5199
    %6254 = vmatprep.subr.bf16.mxu0 %v5208
    %6255 = vmatpush1.bf16.msra.mxu0 %v5207
    %6256 = vmatprep.subr.bf16.mxu0 %v5216
    %6257 = vmatpush1.bf16.msra.mxu0 %v5215
    %6258 = vmatprep.mubr.bf16.mxu0 %v4700
    %6259 = vmatmul.mubr.bf16.gmra.mrb[0].mxu0 %v4699
    %v6260 = vpop.f32.mrb[0].mxu0
    %v6261 = vadd.f32 %v6220, %v6260
    %v6262 = vpop.f32.mrb[0].mxu0
    %v6263 = vadd.f32 %v6222, %v6262
    %v6264 = vpop.f32.mrb[0].mxu0
    %v6265 = vpop.f32.mrb[0].mxu0
    %6266 = vdwg.mxu0
    %6267 = vmatprep.subr.bf16.mxu0 %v5224
    %6268 = vmatpush1.bf16.msra.mxu0 %v5223
    %6269 = vmatprep.subr.bf16.mxu0 %v5232
    %6270 = vmatpush1.bf16.msra.mxu0 %v5231
    %6271 = vmatprep.subr.bf16.mxu0 %v5240
    %6272 = vmatpush1.bf16.msra.mxu0 %v5239
    %6273 = vmatprep.subr.bf16.mxu0 %v5248
    %6274 = vmatpush1.bf16.msra.mxu0 %v5247
    %6275 = vmatprep.subr.bf16.mxu0 %v5256
    %6276 = vmatpush1.bf16.msra.mxu0 %v5255
    %6277 = vmatprep.subr.bf16.mxu0 %v5264
    %6278 = vmatpush1.bf16.msra.mxu0 %v5263
    %6279 = vmatprep.subr.bf16.mxu0 %v5272
    %6280 = vmatpush1.bf16.msra.mxu0 %v5271
    %6281 = vmatprep.subr.bf16.mxu0 %v5280
    %6282 = vmatpush1.bf16.msra.mxu0 %v5279
    %6283 = vmatprep.subr.bf16.mxu0 %v5288
    %6284 = vmatpush1.bf16.msra.mxu0 %v5287
    %6285 = vmatprep.subr.bf16.mxu0 %v5296
    %6286 = vmatpush1.bf16.msra.mxu0 %v5295
    %6287 = vmatprep.subr.bf16.mxu0 %v5304
    %6288 = vmatpush1.bf16.msra.mxu0 %v5303
    %6289 = vmatprep.subr.bf16.mxu0 %v5312
    %6290 = vmatpush1.bf16.msra.mxu0 %v5311
    %6291 = vmatprep.subr.bf16.mxu0 %v5320
    %6292 = vmatpush1.bf16.msra.mxu0 %v5319
    %6293 = vmatprep.subr.bf16.mxu0 %v5328
    %6294 = vmatpush1.bf16.msra.mxu0 %v5327
    %6295 = vmatprep.subr.bf16.mxu0 %v5336
    %6296 = vmatpush1.bf16.msra.mxu0 %v5335
    %6297 = vmatprep.subr.bf16.mxu0 %v5344
    %6298 = vmatpush1.bf16.msra.mxu0 %v5343
    %6299 = vmatprep.mubr.bf16.mxu0 %v4702
    %6300 = vmatmul.mubr.bf16.gmra.mrb[0].mxu0 %v4701
    %v6301 = vpop.f32.mrb[0].mxu0
    %v6302 = vadd.f32 %v6261, %v6301
    %v6303 = vpop.f32.mrb[0].mxu0
    %v6304 = vadd.f32 %v6263, %v6303
    %v6305 = vpop.f32.mrb[0].mxu0
    %v6306 = vpop.f32.mrb[0].mxu0
    %6307 = vdwg.mxu0
    %6308 = vmatprep.subr.bf16.mxu0 %v5352
    %6309 = vmatpush1.bf16.msra.mxu0 %v5351
    %6310 = vmatprep.subr.bf16.mxu0 %v5360
    %6311 = vmatpush1.bf16.msra.mxu0 %v5359
    %6312 = vmatprep.subr.bf16.mxu0 %v5368
    %6313 = vmatpush1.bf16.msra.mxu0 %v5367
    %6314 = vmatprep.subr.bf16.mxu0 %v5376
    %6315 = vmatpush1.bf16.msra.mxu0 %v5375
    %6316 = vmatprep.subr.bf16.mxu0 %v5384
    %6317 = vmatpush1.bf16.msra.mxu0 %v5383
    %6318 = vmatprep.subr.bf16.mxu0 %v5392
    %6319 = vmatpush1.bf16.msra.mxu0 %v5391
    %6320 = vmatprep.subr.bf16.mxu0 %v5400
    %6321 = vmatpush1.bf16.msra.mxu0 %v5399
    %6322 = vmatprep.subr.bf16.mxu0 %v5408
    %6323 = vmatpush1.bf16.msra.mxu0 %v5407
    %6324 = vmatprep.subr.bf16.mxu0 %v5416
    %6325 = vmatpush1.bf16.msra.mxu0 %v5415
    %6326 = vmatprep.subr.bf16.mxu0 %v5424
    %6327 = vmatpush1.bf16.msra.mxu0 %v5423
    %6328 = vmatprep.subr.bf16.mxu0 %v5432
    %6329 = vmatpush1.bf16.msra.mxu0 %v5431
    %6330 = vmatprep.subr.bf16.mxu0 %v5440
    %6331 = vmatpush1.bf16.msra.mxu0 %v5439
    %6332 = vmatprep.subr.bf16.mxu0 %v5448
    %6333 = vmatpush1.bf16.msra.mxu0 %v5447
    %6334 = vmatprep.subr.bf16.mxu0 %v5456
    %6335 = vmatpush1.bf16.msra.mxu0 %v5455
    %6336 = vmatprep.subr.bf16.mxu0 %v5464
    %6337 = vmatpush1.bf16.msra.mxu0 %v5463
    %6338 = vmatprep.subr.bf16.mxu0 %v5472
    %6339 = vmatpush1.bf16.msra.mxu0 %v5471
    %6340 = vmatprep.mubr.bf16.mxu0 %v4704
    %6341 = vmatmul.mubr.bf16.gmra.mrb[0].mxu0 %v4703
    %v6342 = vpop.f32.mrb[0].mxu0
    %v6343 = vadd.f32 %v6302, %v6342
    %v6344 = vpop.f32.mrb[0].mxu0
    %v6345 = vadd.f32 %v6304, %v6344
    %v6346 = vpop.f32.mrb[0].mxu0
    %v6347 = vpop.f32.mrb[0].mxu0
    %6348 = vdwg.mxu0
    %6349 = vmatprep.subr.bf16.mxu0 %v5480
    %6350 = vmatpush1.bf16.msra.mxu0 %v5479
    %6351 = vmatprep.subr.bf16.mxu0 %v5488
    %6352 = vmatpush1.bf16.msra.mxu0 %v5487
    %6353 = vmatprep.subr.bf16.mxu0 %v5496
    %6354 = vmatpush1.bf16.msra.mxu0 %v5495
    %6355 = vmatprep.subr.bf16.mxu0 %v5504
    %6356 = vmatpush1.bf16.msra.mxu0 %v5503
    %6357 = vmatprep.subr.bf16.mxu0 %v5512
    %6358 = vmatpush1.bf16.msra.mxu0 %v5511
    %6359 = vmatprep.subr.bf16.mxu0 %v5520
    %6360 = vmatpush1.bf16.msra.mxu0 %v5519
    %6361 = vmatprep.subr.bf16.mxu0 %v5528
    %6362 = vmatpush1.bf16.msra.mxu0 %v5527
    %6363 = vmatprep.subr.bf16.mxu0 %v5536
    %6364 = vmatpush1.bf16.msra.mxu0 %v5535
    %6365 = vmatprep.subr.bf16.mxu0 %v5544
    %6366 = vmatpush1.bf16.msra.mxu0 %v5543
    %6367 = vmatprep.subr.bf16.mxu0 %v5552
    %6368 = vmatpush1.bf16.msra.mxu0 %v5551
    %6369 = vmatprep.subr.bf16.mxu0 %v5560
    %6370 = vmatpush1.bf16.msra.mxu0 %v5559
    %6371 = vmatprep.subr.bf16.mxu0 %v5568
    %6372 = vmatpush1.bf16.msra.mxu0 %v5567
    %6373 = vmatprep.subr.bf16.mxu0 %v5576
    %6374 = vmatpush1.bf16.msra.mxu0 %v5575
    %6375 = vmatprep.subr.bf16.mxu0 %v5584
    %6376 = vmatpush1.bf16.msra.mxu0 %v5583
    %6377 = vmatprep.subr.bf16.mxu0 %v5592
    %6378 = vmatpush1.bf16.msra.mxu0 %v5591
    %6379 = vmatprep.subr.bf16.mxu0 %v5600
    %6380 = vmatpush1.bf16.msra.mxu0 %v5599
    %6381 = vmatprep.mubr.bf16.mxu0 %v4706
    %6382 = vmatmul.mubr.bf16.gmra.mrb[0].mxu0 %v4705
    %v6383 = vpop.f32.mrb[0].mxu0
    %v6384 = vadd.f32 %v6343, %v6383
    %v6385 = vpop.f32.mrb[0].mxu0
    %v6386 = vadd.f32 %v6345, %v6385
    %v6387 = vpop.f32.mrb[0].mxu0
    %v6388 = vpop.f32.mrb[0].mxu0
    %6389 = vdwg.mxu0
    %6390 = vmatprep.subr.bf16.mxu0 %v5608
    %6391 = vmatpush1.bf16.msra.mxu0 %v5607
    %6392 = vmatprep.subr.bf16.mxu0 %v5616
    %6393 = vmatpush1.bf16.msra.mxu0 %v5615
    %6394 = vmatprep.subr.bf16.mxu0 %v5624
    %6395 = vmatpush1.bf16.msra.mxu0 %v5623
    %6396 = vmatprep.subr.bf16.mxu0 %v5632
    %6397 = vmatpush1.bf16.msra.mxu0 %v5631
    %6398 = vmatprep.subr.bf16.mxu0 %v5640
    %6399 = vmatpush1.bf16.msra.mxu0 %v5639
    %6400 = vmatprep.subr.bf16.mxu0 %v5648
    %6401 = vmatpush1.bf16.msra.mxu0 %v5647
    %6402 = vmatprep.subr.bf16.mxu0 %v5656
    %6403 = vmatpush1.bf16.msra.mxu0 %v5655
    %6404 = vmatprep.subr.bf16.mxu0 %v5664
    %6405 = vmatpush1.bf16.msra.mxu0 %v5663
    %6406 = vmatprep.subr.bf16.mxu0 %v5672
    %6407 = vmatpush1.bf16.msra.mxu0 %v5671
    %6408 = vmatprep.subr.bf16.mxu0 %v5680
    %6409 = vmatpush1.bf16.msra.mxu0 %v5679
    %6410 = vmatprep.subr.bf16.mxu0 %v5688
    %6411 = vmatpush1.bf16.msra.mxu0 %v5687
    %6412 = vmatprep.subr.bf16.mxu0 %v5696
    %6413 = vmatpush1.bf16.msra.mxu0 %v5695
    %6414 = vmatprep.subr.bf16.mxu0 %v5704
    %6415 = vmatpush1.bf16.msra.mxu0 %v5703
    %6416 = vmatprep.subr.bf16.mxu0 %v5712
    %6417 = vmatpush1.bf16.msra.mxu0 %v5711
    %6418 = vmatprep.subr.bf16.mxu0 %v5720
    %6419 = vmatpush1.bf16.msra.mxu0 %v5719
    %6420 = vmatprep.subr.bf16.mxu0 %v5728
    %6421 = vmatpush1.bf16.msra.mxu0 %v5727
    %6422 = vmatprep.mubr.bf16.mxu0 %v4708
    %6423 = vmatmul.mubr.bf16.gmra.mrb[0].mxu0 %v4707
    %v6424 = vpop.f32.mrb[0].mxu0
    %v6425 = vadd.f32 %v6384, %v6424
    %v6426 = vpop.f32.mrb[0].mxu0
    %v6427 = vadd.f32 %v6386, %v6426
    %v6428 = vpop.f32.mrb[0].mxu0
    %v6429 = vpop.f32.mrb[0].mxu0
    %6430 = vdwg.mxu0
    %6431 = vmatprep.subr.bf16.mxu0 %v4714
    %6432 = vmatpush1.bf16.msra.mxu0 %v4713
    %6433 = vmatprep.subr.bf16.mxu0 %v4722
    %6434 = vmatpush1.bf16.msra.mxu0 %v4721
    %6435 = vmatprep.subr.bf16.mxu0 %v4730
    %6436 = vmatpush1.bf16.msra.mxu0 %v4729
    %6437 = vmatprep.subr.bf16.mxu0 %v4738
    %6438 = vmatpush1.bf16.msra.mxu0 %v4737
    %6439 = vmatprep.subr.bf16.mxu0 %v4746
    %6440 = vmatpush1.bf16.msra.mxu0 %v4745
    %6441 = vmatprep.subr.bf16.mxu0 %v4754
    %6442 = vmatpush1.bf16.msra.mxu0 %v4753
    %6443 = vmatprep.subr.bf16.mxu0 %v4762
    %6444 = vmatpush1.bf16.msra.mxu0 %v4761
    %6445 = vmatprep.subr.bf16.mxu0 %v4770
    %6446 = vmatpush1.bf16.msra.mxu0 %v4769
    %6447 = vmatprep.subr.bf16.mxu0 %v4778
    %6448 = vmatpush1.bf16.msra.mxu0 %v4777
    %6449 = vmatprep.subr.bf16.mxu0 %v4786
    %6450 = vmatpush1.bf16.msra.mxu0 %v4785
    %6451 = vmatprep.subr.bf16.mxu0 %v4794
    %6452 = vmatpush1.bf16.msra.mxu0 %v4793
    %6453 = vmatprep.subr.bf16.mxu0 %v4802
    %6454 = vmatpush1.bf16.msra.mxu0 %v4801
    %6455 = vmatprep.subr.bf16.mxu0 %v4810
    %6456 = vmatpush1.bf16.msra.mxu0 %v4809
    %6457 = vmatprep.subr.bf16.mxu0 %v4818
    %6458 = vmatpush1.bf16.msra.mxu0 %v4817
    %6459 = vmatprep.subr.bf16.mxu0 %v4826
    %6460 = vmatpush1.bf16.msra.mxu0 %v4825
    %6461 = vmatprep.subr.bf16.mxu0 %v4834
    %6462 = vmatpush1.bf16.msra.mxu0 %v4833
    %6463 = vmatprep.mubr.bf16.mxu0 %v4694
    %6464 = vmatmul.mubr.bf16.gmra.mrb[0].mxu0 %v4693
    %v6465 = vpop.f32.mrb[0].mxu0
    %v6466 = vadd.f32 %v5754, %v6465
    %v6467 = vpop.f32.mrb[0].mxu0
    %v6468 = vadd.f32 %v5758, %v6467
    %v6469 = vpop.f32.mrb[0].mxu0
    %v6470 = vpop.f32.mrb[0].mxu0
    %6471 = vdwg.mxu0
    %6472 = vmatprep.subr.bf16.mxu0 %v4842
    %6473 = vmatpush1.bf16.msra.mxu0 %v4841
    %6474 = vmatprep.subr.bf16.mxu0 %v4850
    %6475 = vmatpush1.bf16.msra.mxu0 %v4849
    %6476 = vmatprep.subr.bf16.mxu0 %v4858
    %6477 = vmatpush1.bf16.msra.mxu0 %v4857
    %6478 = vmatprep.subr.bf16.mxu0 %v4866
    %6479 = vmatpush1.bf16.msra.mxu0 %v4865
    %6480 = vmatprep.subr.bf16.mxu0 %v4874
    %6481 = vmatpush1.bf16.msra.mxu0 %v4873
    %6482 = vmatprep.subr.bf16.mxu0 %v4882
    %6483 = vmatpush1.bf16.msra.mxu0 %v4881
    %6484 = vmatprep.subr.bf16.mxu0 %v4890
    %6485 = vmatpush1.bf16.msra.mxu0 %v4889
    %6486 = vmatprep.subr.bf16.mxu0 %v4898
    %6487 = vmatpush1.bf16.msra.mxu0 %v4897
    %6488 = vmatprep.subr.bf16.mxu0 %v4906
    %6489 = vmatpush1.bf16.msra.mxu0 %v4905
    %6490 = vmatprep.subr.bf16.mxu0 %v4914
    %6491 = vmatpush1.bf16.msra.mxu0 %v4913
    %6492 = vmatprep.subr.bf16.mxu0 %v4922
    %6493 = vmatpush1.bf16.msra.mxu0 %v4921
    %6494 = vmatprep.subr.bf16.mxu0 %v4930
    %6495 = vmatpush1.bf16.msra.mxu0 %v4929
    %6496 = vmatprep.subr.bf16.mxu0 %v4938
    %6497 = vmatpush1.bf16.msra.mxu0 %v4937
    %6498 = vmatprep.subr.bf16.mxu0 %v4946
    %6499 = vmatpush1.bf16.msra.mxu0 %v4945
    %6500 = vmatprep.subr.bf16.mxu0 %v4954
    %6501 = vmatpush1.bf16.msra.mxu0 %v4953
    %6502 = vmatprep.subr.bf16.mxu0 %v4962
    %6503 = vmatpush1.bf16.msra.mxu0 %v4961
    %6504 = vmatprep.mubr.bf16.mxu0 %v4696
    %6505 = vmatmul.mubr.bf16.gmra.mrb[0].mxu0 %v4695
    %v6506 = vpop.f32.mrb[0].mxu0
    %v6507 = vadd.f32 %v6466, %v6506
    %v6508 = vpop.f32.mrb[0].mxu0
    %v6509 = vadd.f32 %v6468, %v6508
    %v6510 = vpop.f32.mrb[0].mxu0
    %v6511 = vpop.f32.mrb[0].mxu0
    %6512 = vdwg.mxu0
    %6513 = vmatprep.subr.bf16.mxu0 %v4970
    %6514 = vmatpush1.bf16.msra.mxu0 %v4969
    %6515 = vmatprep.subr.bf16.mxu0 %v4978
    %6516 = vmatpush1.bf16.msra.mxu0 %v4977
    %6517 = vmatprep.subr.bf16.mxu0 %v4986
    %6518 = vmatpush1.bf16.msra.mxu0 %v4985
    %6519 = vmatprep.subr.bf16.mxu0 %v4994
    %6520 = vmatpush1.bf16.msra.mxu0 %v4993
    %6521 = vmatprep.subr.bf16.mxu0 %v5002
    %6522 = vmatpush1.bf16.msra.mxu0 %v5001
    %6523 = vmatprep.subr.bf16.mxu0 %v5010
    %6524 = vmatpush1.bf16.msra.mxu0 %v5009
    %6525 = vmatprep.subr.bf16.mxu0 %v5018
    %6526 = vmatpush1.bf16.msra.mxu0 %v5017
    %6527 = vmatprep.subr.bf16.mxu0 %v5026
    %6528 = vmatpush1.bf16.msra.mxu0 %v5025
    %6529 = vmatprep.subr.bf16.mxu0 %v5034
    %6530 = vmatpush1.bf16.msra.mxu0 %v5033
    %6531 = vmatprep.subr.bf16.mxu0 %v5042
    %6532 = vmatpush1.bf16.msra.mxu0 %v5041
    %6533 = vmatprep.subr.bf16.mxu0 %v5050
    %6534 = vmatpush1.bf16.msra.mxu0 %v5049
    %6535 = vmatprep.subr.bf16.mxu0 %v5058
    %6536 = vmatpush1.bf16.msra.mxu0 %v5057
    %6537 = vmatprep.subr.bf16.mxu0 %v5066
    %6538 = vmatpush1.bf16.msra.mxu0 %v5065
    %6539 = vmatprep.subr.bf16.mxu0 %v5074
    %6540 = vmatpush1.bf16.msra.mxu0 %v5073
    %6541 = vmatprep.subr.bf16.mxu0 %v5082
    %6542 = vmatpush1.bf16.msra.mxu0 %v5081
    %6543 = vmatprep.subr.bf16.mxu0 %v5090
    %6544 = vmatpush1.bf16.msra.mxu0 %v5089
    %6545 = vmatprep.mubr.bf16.mxu0 %v4698
    %6546 = vmatmul.mubr.bf16.gmra.mrb[0].mxu0 %v4697
    %v6547 = vpop.f32.mrb[0].mxu0
    %v6548 = vadd.f32 %v6507, %v6547
    %v6549 = vpop.f32.mrb[0].mxu0
    %v6550 = vadd.f32 %v6509, %v6549
    %v6551 = vpop.f32.mrb[0].mxu0
    %v6552 = vpop.f32.mrb[0].mxu0
    %6553 = vdwg.mxu0
    %6554 = vmatprep.subr.bf16.mxu0 %v5098
    %6555 = vmatpush1.bf16.msra.mxu0 %v5097
    %6556 = vmatprep.subr.bf16.mxu0 %v5106
    %6557 = vmatpush1.bf16.msra.mxu0 %v5105
    %6558 = vmatprep.subr.bf16.mxu0 %v5114
    %6559 = vmatpush1.bf16.msra.mxu0 %v5113
    %6560 = vmatprep.subr.bf16.mxu0 %v5122
    %6561 = vmatpush1.bf16.msra.mxu0 %v5121
    %6562 = vmatprep.subr.bf16.mxu0 %v5130
    %6563 = vmatpush1.bf16.msra.mxu0 %v5129
    %6564 = vmatprep.subr.bf16.mxu0 %v5138
    %6565 = vmatpush1.bf16.msra.mxu0 %v5137
    %6566 = vmatprep.subr.bf16.mxu0 %v5146
    %6567 = vmatpush1.bf16.msra.mxu0 %v5145
    %6568 = vmatprep.subr.bf16.mxu0 %v5154
    %6569 = vmatpush1.bf16.msra.mxu0 %v5153
    %6570 = vmatprep.subr.bf16.mxu0 %v5162
    %6571 = vmatpush1.bf16.msra.mxu0 %v5161
    %6572 = vmatprep.subr.bf16.mxu0 %v5170
    %6573 = vmatpush1.bf16.msra.mxu0 %v5169
    %6574 = vmatprep.subr.bf16.mxu0 %v5178
    %6575 = vmatpush1.bf16.msra.mxu0 %v5177
    %6576 = vmatprep.subr.bf16.mxu0 %v5186
    %6577 = vmatpush1.bf16.msra.mxu0 %v5185
    %6578 = vmatprep.subr.bf16.mxu0 %v5194
    %6579 = vmatpush1.bf16.msra.mxu0 %v5193
    %6580 = vmatprep.subr.bf16.mxu0 %v5202
    %6581 = vmatpush1.bf16.msra.mxu0 %v5201
    %6582 = vmatprep.subr.bf16.mxu0 %v5210
    %6583 = vmatpush1.bf16.msra.mxu0 %v5209
    %6584 = vmatprep.subr.bf16.mxu0 %v5218
    %6585 = vmatpush1.bf16.msra.mxu0 %v5217
    %6586 = vmatprep.mubr.bf16.mxu0 %v4700
    %6587 = vmatmul.mubr.bf16.gmra.mrb[0].mxu0 %v4699
    %v6588 = vpop.f32.mrb[0].mxu0
    %v6589 = vadd.f32 %v6548, %v6588
    %v6590 = vpop.f32.mrb[0].mxu0
    %v6591 = vadd.f32 %v6550, %v6590
    %v6592 = vpop.f32.mrb[0].mxu0
    %v6593 = vpop.f32.mrb[0].mxu0
    %6594 = vdwg.mxu0
    %6595 = vmatprep.subr.bf16.mxu0 %v5226
    %6596 = vmatpush1.bf16.msra.mxu0 %v5225
    %6597 = vmatprep.subr.bf16.mxu0 %v5234
    %6598 = vmatpush1.bf16.msra.mxu0 %v5233
    %6599 = vmatprep.subr.bf16.mxu0 %v5242
    %6600 = vmatpush1.bf16.msra.mxu0 %v5241
    %6601 = vmatprep.subr.bf16.mxu0 %v5250
    %6602 = vmatpush1.bf16.msra.mxu0 %v5249
    %6603 = vmatprep.subr.bf16.mxu0 %v5258
    %6604 = vmatpush1.bf16.msra.mxu0 %v5257
    %6605 = vmatprep.subr.bf16.mxu0 %v5266
    %6606 = vmatpush1.bf16.msra.mxu0 %v5265
    %6607 = vmatprep.subr.bf16.mxu0 %v5274
    %6608 = vmatpush1.bf16.msra.mxu0 %v5273
    %6609 = vmatprep.subr.bf16.mxu0 %v5282
    %6610 = vmatpush1.bf16.msra.mxu0 %v5281
    %6611 = vmatprep.subr.bf16.mxu0 %v5290
    %6612 = vmatpush1.bf16.msra.mxu0 %v5289
    %6613 = vmatprep.subr.bf16.mxu0 %v5298
    %6614 = vmatpush1.bf16.msra.mxu0 %v5297
    %6615 = vmatprep.subr.bf16.mxu0 %v5306
    %6616 = vmatpush1.bf16.msra.mxu0 %v5305
    %6617 = vmatprep.subr.bf16.mxu0 %v5314
    %6618 = vmatpush1.bf16.msra.mxu0 %v5313
    %6619 = vmatprep.subr.bf16.mxu0 %v5322
    %6620 = vmatpush1.bf16.msra.mxu0 %v5321
    %6621 = vmatprep.subr.bf16.mxu0 %v5330
    %6622 = vmatpush1.bf16.msra.mxu0 %v5329
    %6623 = vmatprep.subr.bf16.mxu0 %v5338
    %6624 = vmatpush1.bf16.msra.mxu0 %v5337
    %6625 = vmatprep.subr.bf16.mxu0 %v5346
    %6626 = vmatpush1.bf16.msra.mxu0 %v5345
    %6627 = vmatprep.mubr.bf16.mxu0 %v4702
    %6628 = vmatmul.mubr.bf16.gmra.mrb[0].mxu0 %v4701
    %v6629 = vpop.f32.mrb[0].mxu0
    %v6630 = vadd.f32 %v6589, %v6629
    %v6631 = vpop.f32.mrb[0].mxu0
    %v6632 = vadd.f32 %v6591, %v6631
    %v6633 = vpop.f32.mrb[0].mxu0
    %v6634 = vpop.f32.mrb[0].mxu0
    %6635 = vdwg.mxu0
    %6636 = vmatprep.subr.bf16.mxu0 %v5354
    %6637 = vmatpush1.bf16.msra.mxu0 %v5353
    %6638 = vmatprep.subr.bf16.mxu0 %v5362
    %6639 = vmatpush1.bf16.msra.mxu0 %v5361
    %6640 = vmatprep.subr.bf16.mxu0 %v5370
    %6641 = vmatpush1.bf16.msra.mxu0 %v5369
    %6642 = vmatprep.subr.bf16.mxu0 %v5378
    %6643 = vmatpush1.bf16.msra.mxu0 %v5377
    %6644 = vmatprep.subr.bf16.mxu0 %v5386
    %6645 = vmatpush1.bf16.msra.mxu0 %v5385
    %6646 = vmatprep.subr.bf16.mxu0 %v5394
    %6647 = vmatpush1.bf16.msra.mxu0 %v5393
    %6648 = vmatprep.subr.bf16.mxu0 %v5402
    %6649 = vmatpush1.bf16.msra.mxu0 %v5401
    %6650 = vmatprep.subr.bf16.mxu0 %v5410
    %6651 = vmatpush1.bf16.msra.mxu0 %v5409
    %6652 = vmatprep.subr.bf16.mxu0 %v5418
    %6653 = vmatpush1.bf16.msra.mxu0 %v5417
    %6654 = vmatprep.subr.bf16.mxu0 %v5426
    %6655 = vmatpush1.bf16.msra.mxu0 %v5425
    %6656 = vmatprep.subr.bf16.mxu0 %v5434
    %6657 = vmatpush1.bf16.msra.mxu0 %v5433
    %6658 = vmatprep.subr.bf16.mxu0 %v5442
    %6659 = vmatpush1.bf16.msra.mxu0 %v5441
    %6660 = vmatprep.subr.bf16.mxu0 %v5450
    %6661 = vmatpush1.bf16.msra.mxu0 %v5449
    %6662 = vmatprep.subr.bf16.mxu0 %v5458
    %6663 = vmatpush1.bf16.msra.mxu0 %v5457
    %6664 = vmatprep.subr.bf16.mxu0 %v5466
    %6665 = vmatpush1.bf16.msra.mxu0 %v5465
    %6666 = vmatprep.subr.bf16.mxu0 %v5474
    %6667 = vmatpush1.bf16.msra.mxu0 %v5473
    %6668 = vmatprep.mubr.bf16.mxu0 %v4704
    %6669 = vmatmul.mubr.bf16.gmra.mrb[0].mxu0 %v4703
    %v6670 = vpop.f32.mrb[0].mxu0
    %v6671 = vadd.f32 %v6630, %v6670
    %v6672 = vpop.f32.mrb[0].mxu0
    %v6673 = vadd.f32 %v6632, %v6672
    %v6674 = vpop.f32.mrb[0].mxu0
    %v6675 = vpop.f32.mrb[0].mxu0
    %6676 = vdwg.mxu0
    %6677 = vmatprep.subr.bf16.mxu0 %v5482
    %6678 = vmatpush1.bf16.msra.mxu0 %v5481
    %6679 = vmatprep.subr.bf16.mxu0 %v5490
    %6680 = vmatpush1.bf16.msra.mxu0 %v5489
    %6681 = vmatprep.subr.bf16.mxu0 %v5498
    %6682 = vmatpush1.bf16.msra.mxu0 %v5497
    %6683 = vmatprep.subr.bf16.mxu0 %v5506
    %6684 = vmatpush1.bf16.msra.mxu0 %v5505
    %6685 = vmatprep.subr.bf16.mxu0 %v5514
    %6686 = vmatpush1.bf16.msra.mxu0 %v5513
    %6687 = vmatprep.subr.bf16.mxu0 %v5522
    %6688 = vmatpush1.bf16.msra.mxu0 %v5521
    %6689 = vmatprep.subr.bf16.mxu0 %v5530
    %6690 = vmatpush1.bf16.msra.mxu0 %v5529
    %6691 = vmatprep.subr.bf16.mxu0 %v5538
    %6692 = vmatpush1.bf16.msra.mxu0 %v5537
    %6693 = vmatprep.subr.bf16.mxu0 %v5546
    %6694 = vmatpush1.bf16.msra.mxu0 %v5545
    %6695 = vmatprep.subr.bf16.mxu0 %v5554
    %6696 = vmatpush1.bf16.msra.mxu0 %v5553
    %6697 = vmatprep.subr.bf16.mxu0 %v5562
    %6698 = vmatpush1.bf16.msra.mxu0 %v5561
    %6699 = vmatprep.subr.bf16.mxu0 %v5570
    %6700 = vmatpush1.bf16.msra.mxu0 %v5569
    %6701 = vmatprep.subr.bf16.mxu0 %v5578
    %6702 = vmatpush1.bf16.msra.mxu0 %v5577
    %6703 = vmatprep.subr.bf16.mxu0 %v5586
    %6704 = vmatpush1.bf16.msra.mxu0 %v5585
    %6705 = vmatprep.subr.bf16.mxu0 %v5594
    %6706 = vmatpush1.bf16.msra.mxu0 %v5593
    %6707 = vmatprep.subr.bf16.mxu0 %v5602
    %6708 = vmatpush1.bf16.msra.mxu0 %v5601
    %6709 = vmatprep.mubr.bf16.mxu0 %v4706
    %6710 = vmatmul.mubr.bf16.gmra.mrb[0].mxu0 %v4705
    %v6711 = vpop.f32.mrb[0].mxu0
    %v6712 = vadd.f32 %v6671, %v6711
    %v6713 = vpop.f32.mrb[0].mxu0
    %v6714 = vadd.f32 %v6673, %v6713
    %v6715 = vpop.f32.mrb[0].mxu0
    %v6716 = vpop.f32.mrb[0].mxu0
    %6717 = vdwg.mxu0
    %6718 = vmatprep.subr.bf16.mxu0 %v5610
    %6719 = vmatpush1.bf16.msra.mxu0 %v5609
    %6720 = vmatprep.subr.bf16.mxu0 %v5618
    %6721 = vmatpush1.bf16.msra.mxu0 %v5617
    %6722 = vmatprep.subr.bf16.mxu0 %v5626
    %6723 = vmatpush1.bf16.msra.mxu0 %v5625
    %6724 = vmatprep.subr.bf16.mxu0 %v5634
    %6725 = vmatpush1.bf16.msra.mxu0 %v5633
    %6726 = vmatprep.subr.bf16.mxu0 %v5642
    %6727 = vmatpush1.bf16.msra.mxu0 %v5641
    %6728 = vmatprep.subr.bf16.mxu0 %v5650
    %6729 = vmatpush1.bf16.msra.mxu0 %v5649
    %6730 = vmatprep.subr.bf16.mxu0 %v5658
    %6731 = vmatpush1.bf16.msra.mxu0 %v5657
    %6732 = vmatprep.subr.bf16.mxu0 %v5666
    %6733 = vmatpush1.bf16.msra.mxu0 %v5665
    %6734 = vmatprep.subr.bf16.mxu0 %v5674
    %6735 = vmatpush1.bf16.msra.mxu0 %v5673
    %6736 = vmatprep.subr.bf16.mxu0 %v5682
    %6737 = vmatpush1.bf16.msra.mxu0 %v5681
    %6738 = vmatprep.subr.bf16.mxu0 %v5690
    %6739 = vmatpush1.bf16.msra.mxu0 %v5689
    %6740 = vmatprep.subr.bf16.mxu0 %v5698
    %6741 = vmatpush1.bf16.msra.mxu0 %v5697
    %6742 = vmatprep.subr.bf16.mxu0 %v5706
    %6743 = vmatpush1.bf16.msra.mxu0 %v5705
    %6744 = vmatprep.subr.bf16.mxu0 %v5714
    %6745 = vmatpush1.bf16.msra.mxu0 %v5713
    %6746 = vmatprep.subr.bf16.mxu0 %v5722
    %6747 = vmatpush1.bf16.msra.mxu0 %v5721
    %6748 = vmatprep.subr.bf16.mxu0 %v5730
    %6749 = vmatpush1.bf16.msra.mxu0 %v5729
    %6750 = vmatprep.mubr.bf16.mxu0 %v4708
    %6751 = vmatmul.mubr.bf16.gmra.mrb[0].mxu0 %v4707
    %v6752 = vpop.f32.mrb[0].mxu0
    %v6753 = vadd.f32 %v6712, %v6752
    %v6754 = vpop.f32.mrb[0].mxu0
    %v6755 = vadd.f32 %v6714, %v6754
    %v6756 = vpop.f32.mrb[0].mxu0
    %v6757 = vpop.f32.mrb[0].mxu0
    %6758 = vdwg.mxu0
    %6759 = vmatprep.subr.bf16.mxu0 %v4716
    %6760 = vmatpush1.bf16.msra.mxu0 %v4715
    %6761 = vmatprep.subr.bf16.mxu0 %v4724
    %6762 = vmatpush1.bf16.msra.mxu0 %v4723
    %6763 = vmatprep.subr.bf16.mxu0 %v4732
    %6764 = vmatpush1.bf16.msra.mxu0 %v4731
    %6765 = vmatprep.subr.bf16.mxu0 %v4740
    %6766 = vmatpush1.bf16.msra.mxu0 %v4739
    %6767 = vmatprep.subr.bf16.mxu0 %v4748
    %6768 = vmatpush1.bf16.msra.mxu0 %v4747
    %6769 = vmatprep.subr.bf16.mxu0 %v4756
    %6770 = vmatpush1.bf16.msra.mxu0 %v4755
    %6771 = vmatprep.subr.bf16.mxu0 %v4764
    %6772 = vmatpush1.bf16.msra.mxu0 %v4763
    %6773 = vmatprep.subr.bf16.mxu0 %v4772
    %6774 = vmatpush1.bf16.msra.mxu0 %v4771
    %6775 = vmatprep.subr.bf16.mxu0 %v4780
    %6776 = vmatpush1.bf16.msra.mxu0 %v4779
    %6777 = vmatprep.subr.bf16.mxu0 %v4788
    %6778 = vmatpush1.bf16.msra.mxu0 %v4787
    %6779 = vmatprep.subr.bf16.mxu0 %v4796
    %6780 = vmatpush1.bf16.msra.mxu0 %v4795
    %6781 = vmatprep.subr.bf16.mxu0 %v4804
    %6782 = vmatpush1.bf16.msra.mxu0 %v4803
    %6783 = vmatprep.subr.bf16.mxu0 %v4812
    %6784 = vmatpush1.bf16.msra.mxu0 %v4811
    %6785 = vmatprep.subr.bf16.mxu0 %v4820
    %6786 = vmatpush1.bf16.msra.mxu0 %v4819
    %6787 = vmatprep.subr.bf16.mxu0 %v4828
    %6788 = vmatpush1.bf16.msra.mxu0 %v4827
    %6789 = vmatprep.subr.bf16.mxu0 %v4836
    %6790 = vmatpush1.bf16.msra.mxu0 %v4835
    %6791 = vmatprep.mubr.bf16.mxu0 %v4694
    %6792 = vmatmul.mubr.bf16.gmra.mrb[0].mxu0 %v4693
    %v6793 = vpop.f32.mrb[0].mxu0
    %v6794 = vadd.f32 %v5762, %v6793
    %v6795 = vpop.f32.mrb[0].mxu0
    %v6796 = vadd.f32 %v5766, %v6795
    %v6797 = vpop.f32.mrb[0].mxu0
    %v6798 = vpop.f32.mrb[0].mxu0
    %6799 = vdwg.mxu0
    %6800 = vmatprep.subr.bf16.mxu0 %v4844
    %6801 = vmatpush1.bf16.msra.mxu0 %v4843
    %6802 = vmatprep.subr.bf16.mxu0 %v4852
    %6803 = vmatpush1.bf16.msra.mxu0 %v4851
    %6804 = vmatprep.subr.bf16.mxu0 %v4860
    %6805 = vmatpush1.bf16.msra.mxu0 %v4859
    %6806 = vmatprep.subr.bf16.mxu0 %v4868
    %6807 = vmatpush1.bf16.msra.mxu0 %v4867
    %6808 = vmatprep.subr.bf16.mxu0 %v4876
    %6809 = vmatpush1.bf16.msra.mxu0 %v4875
    %6810 = vmatprep.subr.bf16.mxu0 %v4884
    %6811 = vmatpush1.bf16.msra.mxu0 %v4883
    %6812 = vmatprep.subr.bf16.mxu0 %v4892
    %6813 = vmatpush1.bf16.msra.mxu0 %v4891
    %6814 = vmatprep.subr.bf16.mxu0 %v4900
    %6815 = vmatpush1.bf16.msra.mxu0 %v4899
    %6816 = vmatprep.subr.bf16.mxu0 %v4908
    %6817 = vmatpush1.bf16.msra.mxu0 %v4907
    %6818 = vmatprep.subr.bf16.mxu0 %v4916
    %6819 = vmatpush1.bf16.msra.mxu0 %v4915
    %6820 = vmatprep.subr.bf16.mxu0 %v4924
    %6821 = vmatpush1.bf16.msra.mxu0 %v4923
    %6822 = vmatprep.subr.bf16.mxu0 %v4932
    %6823 = vmatpush1.bf16.msra.mxu0 %v4931
    %6824 = vmatprep.subr.bf16.mxu0 %v4940
    %6825 = vmatpush1.bf16.msra.mxu0 %v4939
    %6826 = vmatprep.subr.bf16.mxu0 %v4948
    %6827 = vmatpush1.bf16.msra.mxu0 %v4947
    %6828 = vmatprep.subr.bf16.mxu0 %v4956
    %6829 = vmatpush1.bf16.msra.mxu0 %v4955
    %6830 = vmatprep.subr.bf16.mxu0 %v4964
    %6831 = vmatpush1.bf16.msra.mxu0 %v4963
    %6832 = vmatprep.mubr.bf16.mxu0 %v4696
    %6833 = vmatmul.mubr.bf16.gmra.mrb[0].mxu0 %v4695
    %v6834 = vpop.f32.mrb[0].mxu0
    %v6835 = vadd.f32 %v6794, %v6834
    %v6836 = vpop.f32.mrb[0].mxu0
    %v6837 = vadd.f32 %v6796, %v6836
    %v6838 = vpop.f32.mrb[0].mxu0
    %v6839 = vpop.f32.mrb[0].mxu0
    %6840 = vdwg.mxu0
    %6841 = vmatprep.subr.bf16.mxu0 %v4972
    %6842 = vmatpush1.bf16.msra.mxu0 %v4971
    %6843 = vmatprep.subr.bf16.mxu0 %v4980
    %6844 = vmatpush1.bf16.msra.mxu0 %v4979
    %6845 = vmatprep.subr.bf16.mxu0 %v4988
    %6846 = vmatpush1.bf16.msra.mxu0 %v4987
    %6847 = vmatprep.subr.bf16.mxu0 %v4996
    %6848 = vmatpush1.bf16.msra.mxu0 %v4995
    %6849 = vmatprep.subr.bf16.mxu0 %v5004
    %6850 = vmatpush1.bf16.msra.mxu0 %v5003
    %6851 = vmatprep.subr.bf16.mxu0 %v5012
    %6852 = vmatpush1.bf16.msra.mxu0 %v5011
    %6853 = vmatprep.subr.bf16.mxu0 %v5020
    %6854 = vmatpush1.bf16.msra.mxu0 %v5019
    %6855 = vmatprep.subr.bf16.mxu0 %v5028
    %6856 = vmatpush1.bf16.msra.mxu0 %v5027
    %6857 = vmatprep.subr.bf16.mxu0 %v5036
    %6858 = vmatpush1.bf16.msra.mxu0 %v5035
    %6859 = vmatprep.subr.bf16.mxu0 %v5044
    %6860 = vmatpush1.bf16.msra.mxu0 %v5043
    %6861 = vmatprep.subr.bf16.mxu0 %v5052
    %6862 = vmatpush1.bf16.msra.mxu0 %v5051
    %6863 = vmatprep.subr.bf16.mxu0 %v5060
    %6864 = vmatpush1.bf16.msra.mxu0 %v5059
    %6865 = vmatprep.subr.bf16.mxu0 %v5068
    %6866 = vmatpush1.bf16.msra.mxu0 %v5067
    %6867 = vmatprep.subr.bf16.mxu0 %v5076
    %6868 = vmatpush1.bf16.msra.mxu0 %v5075
    %6869 = vmatprep.subr.bf16.mxu0 %v5084
    %6870 = vmatpush1.bf16.msra.mxu0 %v5083
    %6871 = vmatprep.subr.bf16.mxu0 %v5092
    %6872 = vmatpush1.bf16.msra.mxu0 %v5091
    %6873 = vmatprep.mubr.bf16.mxu0 %v4698
    %6874 = vmatmul.mubr.bf16.gmra.mrb[0].mxu0 %v4697
    %v6875 = vpop.f32.mrb[0].mxu0
    %v6876 = vadd.f32 %v6835, %v6875
    %v6877 = vpop.f32.mrb[0].mxu0
    %v6878 = vadd.f32 %v6837, %v6877
    %v6879 = vpop.f32.mrb[0].mxu0
    %v6880 = vpop.f32.mrb[0].mxu0
    %6881 = vdwg.mxu0
    %6882 = vmatprep.subr.bf16.mxu0 %v5100
    %6883 = vmatpush1.bf16.msra.mxu0 %v5099
    %6884 = vmatprep.subr.bf16.mxu0 %v5108
    %6885 = vmatpush1.bf16.msra.mxu0 %v5107
    %6886 = vmatprep.subr.bf16.mxu0 %v5116
    %6887 = vmatpush1.bf16.msra.mxu0 %v5115
    %6888 = vmatprep.subr.bf16.mxu0 %v5124
    %6889 = vmatpush1.bf16.msra.mxu0 %v5123
    %6890 = vmatprep.subr.bf16.mxu0 %v5132
    %6891 = vmatpush1.bf16.msra.mxu0 %v5131
    %6892 = vmatprep.subr.bf16.mxu0 %v5140
    %6893 = vmatpush1.bf16.msra.mxu0 %v5139
    %6894 = vmatprep.subr.bf16.mxu0 %v5148
    %6895 = vmatpush1.bf16.msra.mxu0 %v5147
    %6896 = vmatprep.subr.bf16.mxu0 %v5156
    %6897 = vmatpush1.bf16.msra.mxu0 %v5155
    %6898 = vmatprep.subr.bf16.mxu0 %v5164
    %6899 = vmatpush1.bf16.msra.mxu0 %v5163
    %6900 = vmatprep.subr.bf16.mxu0 %v5172
    %6901 = vmatpush1.bf16.msra.mxu0 %v5171
    %6902 = vmatprep.subr.bf16.mxu0 %v5180
    %6903 = vmatpush1.bf16.msra.mxu0 %v5179
    %6904 = vmatprep.subr.bf16.mxu0 %v5188
    %6905 = vmatpush1.bf16.msra.mxu0 %v5187
    %6906 = vmatprep.subr.bf16.mxu0 %v5196
    %6907 = vmatpush1.bf16.msra.mxu0 %v5195
    %6908 = vmatprep.subr.bf16.mxu0 %v5204
    %6909 = vmatpush1.bf16.msra.mxu0 %v5203
    %6910 = vmatprep.subr.bf16.mxu0 %v5212
    %6911 = vmatpush1.bf16.msra.mxu0 %v5211
    %6912 = vmatprep.subr.bf16.mxu0 %v5220
    %6913 = vmatpush1.bf16.msra.mxu0 %v5219
    %6914 = vmatprep.mubr.bf16.mxu0 %v4700
    %6915 = vmatmul.mubr.bf16.gmra.mrb[0].mxu0 %v4699
    %v6916 = vpop.f32.mrb[0].mxu0
    %v6917 = vadd.f32 %v6876, %v6916
    %v6918 = vpop.f32.mrb[0].mxu0
    %v6919 = vadd.f32 %v6878, %v6918
    %v6920 = vpop.f32.mrb[0].mxu0
    %v6921 = vpop.f32.mrb[0].mxu0
    %6922 = vdwg.mxu0
    %6923 = vmatprep.subr.bf16.mxu0 %v5228
    %6924 = vmatpush1.bf16.msra.mxu0 %v5227
    %6925 = vmatprep.subr.bf16.mxu0 %v5236
    %6926 = vmatpush1.bf16.msra.mxu0 %v5235
    %6927 = vmatprep.subr.bf16.mxu0 %v5244
    %6928 = vmatpush1.bf16.msra.mxu0 %v5243
    %6929 = vmatprep.subr.bf16.mxu0 %v5252
    %6930 = vmatpush1.bf16.msra.mxu0 %v5251
    %6931 = vmatprep.subr.bf16.mxu0 %v5260
    %6932 = vmatpush1.bf16.msra.mxu0 %v5259
    %6933 = vmatprep.subr.bf16.mxu0 %v5268
    %6934 = vmatpush1.bf16.msra.mxu0 %v5267
    %6935 = vmatprep.subr.bf16.mxu0 %v5276
    %6936 = vmatpush1.bf16.msra.mxu0 %v5275
    %6937 = vmatprep.subr.bf16.mxu0 %v5284
    %6938 = vmatpush1.bf16.msra.mxu0 %v5283
    %6939 = vmatprep.subr.bf16.mxu0 %v5292
    %6940 = vmatpush1.bf16.msra.mxu0 %v5291
    %6941 = vmatprep.subr.bf16.mxu0 %v5300
    %6942 = vmatpush1.bf16.msra.mxu0 %v5299
    %6943 = vmatprep.subr.bf16.mxu0 %v5308
    %6944 = vmatpush1.bf16.msra.mxu0 %v5307
    %6945 = vmatprep.subr.bf16.mxu0 %v5316
    %6946 = vmatpush1.bf16.msra.mxu0 %v5315
    %6947 = vmatprep.subr.bf16.mxu0 %v5324
    %6948 = vmatpush1.bf16.msra.mxu0 %v5323
    %6949 = vmatprep.subr.bf16.mxu0 %v5332
    %6950 = vmatpush1.bf16.msra.mxu0 %v5331
    %6951 = vmatprep.subr.bf16.mxu0 %v5340
    %6952 = vmatpush1.bf16.msra.mxu0 %v5339
    %6953 = vmatprep.subr.bf16.mxu0 %v5348
    %6954 = vmatpush1.bf16.msra.mxu0 %v5347
    %6955 = vmatprep.mubr.bf16.mxu0 %v4702
    %6956 = vmatmul.mubr.bf16.gmra.mrb[0].mxu0 %v4701
    %v6957 = vpop.f32.mrb[0].mxu0
    %v6958 = vadd.f32 %v6917, %v6957
    %v6959 = vpop.f32.mrb[0].mxu0
    %v6960 = vadd.f32 %v6919, %v6959
    %v6961 = vpop.f32.mrb[0].mxu0
    %v6962 = vpop.f32.mrb[0].mxu0
    %6963 = vdwg.mxu0
    %6964 = vmatprep.subr.bf16.mxu0 %v5356
    %6965 = vmatpush1.bf16.msra.mxu0 %v5355
    %6966 = vmatprep.subr.bf16.mxu0 %v5364
    %6967 = vmatpush1.bf16.msra.mxu0 %v5363
    %6968 = vmatprep.subr.bf16.mxu0 %v5372
    %6969 = vmatpush1.bf16.msra.mxu0 %v5371
    %6970 = vmatprep.subr.bf16.mxu0 %v5380
    %6971 = vmatpush1.bf16.msra.mxu0 %v5379
    %6972 = vmatprep.subr.bf16.mxu0 %v5388
    %6973 = vmatpush1.bf16.msra.mxu0 %v5387
    %6974 = vmatprep.subr.bf16.mxu0 %v5396
    %6975 = vmatpush1.bf16.msra.mxu0 %v5395
    %6976 = vmatprep.subr.bf16.mxu0 %v5404
    %6977 = vmatpush1.bf16.msra.mxu0 %v5403
    %6978 = vmatprep.subr.bf16.mxu0 %v5412
    %6979 = vmatpush1.bf16.msra.mxu0 %v5411
    %6980 = vmatprep.subr.bf16.mxu0 %v5420
    %6981 = vmatpush1.bf16.msra.mxu0 %v5419
    %6982 = vmatprep.subr.bf16.mxu0 %v5428
    %6983 = vmatpush1.bf16.msra.mxu0 %v5427
    %6984 = vmatprep.subr.bf16.mxu0 %v5436
    %6985 = vmatpush1.bf16.msra.mxu0 %v5435
    %6986 = vmatprep.subr.bf16.mxu0 %v5444
    %6987 = vmatpush1.bf16.msra.mxu0 %v5443
    %6988 = vmatprep.subr.bf16.mxu0 %v5452
    %6989 = vmatpush1.bf16.msra.mxu0 %v5451
    %6990 = vmatprep.subr.bf16.mxu0 %v5460
    %6991 = vmatpush1.bf16.msra.mxu0 %v5459
    %6992 = vmatprep.subr.bf16.mxu0 %v5468
    %6993 = vmatpush1.bf16.msra.mxu0 %v5467
    %6994 = vmatprep.subr.bf16.mxu0 %v5476
    %6995 = vmatpush1.bf16.msra.mxu0 %v5475
    %6996 = vmatprep.mubr.bf16.mxu0 %v4704
    %6997 = vmatmul.mubr.bf16.gmra.mrb[0].mxu0 %v4703
    %v6998 = vpop.f32.mrb[0].mxu0
    %v6999 = vadd.f32 %v6958, %v6998
    %v7000 = vpop.f32.mrb[0].mxu0
    %v7001 = vadd.f32 %v6960, %v7000
    %v7002 = vpop.f32.mrb[0].mxu0
    %v7003 = vpop.f32.mrb[0].mxu0
    %7004 = vdwg.mxu0
    %7005 = vmatprep.subr.bf16.mxu0 %v5484
    %7006 = vmatpush1.bf16.msra.mxu0 %v5483
    %7007 = vmatprep.subr.bf16.mxu0 %v5492
    %7008 = vmatpush1.bf16.msra.mxu0 %v5491
    %7009 = vmatprep.subr.bf16.mxu0 %v5500
    %7010 = vmatpush1.bf16.msra.mxu0 %v5499
    %7011 = vmatprep.subr.bf16.mxu0 %v5508
    %7012 = vmatpush1.bf16.msra.mxu0 %v5507
    %7013 = vmatprep.subr.bf16.mxu0 %v5516
    %7014 = vmatpush1.bf16.msra.mxu0 %v5515
    %7015 = vmatprep.subr.bf16.mxu0 %v5524
    %7016 = vmatpush1.bf16.msra.mxu0 %v5523
    %7017 = vmatprep.subr.bf16.mxu0 %v5532
    %7018 = vmatpush1.bf16.msra.mxu0 %v5531
    %7019 = vmatprep.subr.bf16.mxu0 %v5540
    %7020 = vmatpush1.bf16.msra.mxu0 %v5539
    %7021 = vmatprep.subr.bf16.mxu0 %v5548
    %7022 = vmatpush1.bf16.msra.mxu0 %v5547
    %7023 = vmatprep.subr.bf16.mxu0 %v5556
    %7024 = vmatpush1.bf16.msra.mxu0 %v5555
    %7025 = vmatprep.subr.bf16.mxu0 %v5564
    %7026 = vmatpush1.bf16.msra.mxu0 %v5563
    %7027 = vmatprep.subr.bf16.mxu0 %v5572
    %7028 = vmatpush1.bf16.msra.mxu0 %v5571
    %7029 = vmatprep.subr.bf16.mxu0 %v5580
    %7030 = vmatpush1.bf16.msra.mxu0 %v5579
    %7031 = vmatprep.subr.bf16.mxu0 %v5588
    %7032 = vmatpush1.bf16.msra.mxu0 %v5587
    %7033 = vmatprep.subr.bf16.mxu0 %v5596
    %7034 = vmatpush1.bf16.msra.mxu0 %v5595
    %7035 = vmatprep.subr.bf16.mxu0 %v5604
    %7036 = vmatpush1.bf16.msra.mxu0 %v5603
    %7037 = vmatprep.mubr.bf16.mxu0 %v4706
    %7038 = vmatmul.mubr.bf16.gmra.mrb[0].mxu0 %v4705
    %v7039 = vpop.f32.mrb[0].mxu0
    %v7040 = vadd.f32 %v6999, %v7039
    %v7041 = vpop.f32.mrb[0].mxu0
    %v7042 = vadd.f32 %v7001, %v7041
    %v7043 = vpop.f32.mrb[0].mxu0
    %v7044 = vpop.f32.mrb[0].mxu0
    %7045 = vdwg.mxu0
    %7046 = vmatprep.subr.bf16.mxu0 %v5612
    %7047 = vmatpush1.bf16.msra.mxu0 %v5611
    %7048 = vmatprep.subr.bf16.mxu0 %v5620
    %7049 = vmatpush1.bf16.msra.mxu0 %v5619
    %7050 = vmatprep.subr.bf16.mxu0 %v5628
    %7051 = vmatpush1.bf16.msra.mxu0 %v5627
    %7052 = vmatprep.subr.bf16.mxu0 %v5636
    %7053 = vmatpush1.bf16.msra.mxu0 %v5635
    %7054 = vmatprep.subr.bf16.mxu0 %v5644
    %7055 = vmatpush1.bf16.msra.mxu0 %v5643
    %7056 = vmatprep.subr.bf16.mxu0 %v5652
    %7057 = vmatpush1.bf16.msra.mxu0 %v5651
    %7058 = vmatprep.subr.bf16.mxu0 %v5660
    %7059 = vmatpush1.bf16.msra.mxu0 %v5659
    %7060 = vmatprep.subr.bf16.mxu0 %v5668
    %7061 = vmatpush1.bf16.msra.mxu0 %v5667
    %7062 = vmatprep.subr.bf16.mxu0 %v5676
    %7063 = vmatpush1.bf16.msra.mxu0 %v5675
    %7064 = vmatprep.subr.bf16.mxu0 %v5684
    %7065 = vmatpush1.bf16.msra.mxu0 %v5683
    %7066 = vmatprep.subr.bf16.mxu0 %v5692
    %7067 = vmatpush1.bf16.msra.mxu0 %v5691
    %7068 = vmatprep.subr.bf16.mxu0 %v5700
    %7069 = vmatpush1.bf16.msra.mxu0 %v5699
    %7070 = vmatprep.subr.bf16.mxu0 %v5708
    %7071 = vmatpush1.bf16.msra.mxu0 %v5707
    %7072 = vmatprep.subr.bf16.mxu0 %v5716
    %7073 = vmatpush1.bf16.msra.mxu0 %v5715
    %7074 = vmatprep.subr.bf16.mxu0 %v5724
    %7075 = vmatpush1.bf16.msra.mxu0 %v5723
    %7076 = vmatprep.subr.bf16.mxu0 %v5732
    %7077 = vmatpush1.bf16.msra.mxu0 %v5731
    %7078 = vmatprep.mubr.bf16.mxu0 %v4708
    %7079 = vmatmul.mubr.bf16.gmra.mrb[0].mxu0 %v4707
    %v7080 = vpop.f32.mrb[0].mxu0
    %v7081 = vadd.f32 %v7040, %v7080
    %v7082 = vpop.f32.mrb[0].mxu0
    %v7083 = vadd.f32 %v7042, %v7082
    %v7084 = vpop.f32.mrb[0].mxu0
    %v7085 = vpop.f32.mrb[0].mxu0
    %7086 = vdwg.mxu0
    %v7087 = vmax.f32 %v6097, 0.0
    %v7088 = vmax.f32 %v6099, 0.0
    %v7089 = vmax.f32 %v6425, 0.0
    %v7090 = vmax.f32 %v6427, 0.0
    %v7091 = vmax.f32 %v6753, 0.0
    %v7092 = vmax.f32 %v6755, 0.0
    %v7093 = vmax.f32 %v7081, 0.0
    %v7094 = vmax.f32 %v7083, 0.0
    %v7095 = vpack.c.bf16 %v7087, %v7087
    %v7096 = vpack.c.bf16 %v7088, %v7088
    %v7097 = vpack.c.bf16 %v7089, %v7089
    %v7098 = vpack.c.bf16 %v7090, %v7090
    %v7099 = vpack.c.bf16 %v7091, %v7091
    %v7100 = vpack.c.bf16 %v7092, %v7092
    %v7101 = vpack.c.bf16 %v7093, %v7093
    %v7102 = vpack.c.bf16 %v7094, %v7094
    %v7103 = vld [vmem:[%s11] sm:$0xf]
    %v7104 = vld [vmem:[%s11 + $0x4] sm:$0xf]
    %v7105 = vld [vmem:[%s11 + $0x8] sm:$0xf]
    %v7106 = vld [vmem:[%s11 + $0xc] sm:$0xf]
    %v7107 = vld [vmem:[%s11 + $0x10] sm:$0xf]
    %v7108 = vld [vmem:[%s11 + $0x14] sm:$0xf]
    %v7109 = vld [vmem:[%s11 + $0x18] sm:$0xf]
    %v7110 = vld [vmem:[%s11 + $0x1c] sm:$0xf]
    %v7111 = vld [vmem:[%s11 + $0x20] sm:$0xf]
    %v7112 = vld [vmem:[%s11 + $0x24] sm:$0xf]
    %v7113 = vld [vmem:[%s11 + $0x28] sm:$0xf]
    %v7114 = vld [vmem:[%s11 + $0x2c] sm:$0xf]
    %v7115 = vld [vmem:[%s11 + $0x30] sm:$0xf]
    %v7116 = vld [vmem:[%s11 + $0x34] sm:$0xf]
    %v7117 = vld [vmem:[%s11 + $0x38] sm:$0xf]
    %v7118 = vld [vmem:[%s11 + $0x3c] sm:$0xf]
    %v7119 = vld [vmem:[%s11 + $0x40] sm:$0xf]
    %v7120 = vld [vmem:[%s11 + $0x44] sm:$0xf]
    %v7121 = vld [vmem:[%s11 + $0x48] sm:$0xf]
    %v7122 = vld [vmem:[%s11 + $0x4c] sm:$0xf]
    %v7123 = vld [vmem:[%s11 + $0x50] sm:$0xf]
    %v7124 = vld [vmem:[%s11 + $0x54] sm:$0xf]
    %v7125 = vld [vmem:[%s11 + $0x58] sm:$0xf]
    %v7126 = vld [vmem:[%s11 + $0x5c] sm:$0xf]
    %v7127 = vld [vmem:[%s11 + $0x60] sm:$0xf]
    %v7128 = vld [vmem:[%s11 + $0x64] sm:$0xf]
    %v7129 = vld [vmem:[%s11 + $0x68] sm:$0xf]
    %v7130 = vld [vmem:[%s11 + $0x6c] sm:$0xf]
    %v7131 = vld [vmem:[%s11 + $0x70] sm:$0xf]
    %v7132 = vld [vmem:[%s11 + $0x74] sm:$0xf]
    %v7133 = vld [vmem:[%s11 + $0x78] sm:$0xf]
    %v7134 = vld [vmem:[%s11 + $0x7c] sm:$0xf]
    %v7135 = vld [vmem:[%s11 + $0x80] sm:$0xf]
    %v7136 = vld [vmem:[%s11 + $0x84] sm:$0xf]
    %v7137 = vld [vmem:[%s11 + $0x88] sm:$0xf]
    %v7138 = vld [vmem:[%s11 + $0x8c] sm:$0xf]
    %v7139 = vld [vmem:[%s11 + $0x90] sm:$0xf]
    %v7140 = vld [vmem:[%s11 + $0x94] sm:$0xf]
    %v7141 = vld [vmem:[%s11 + $0x98] sm:$0xf]
    %v7142 = vld [vmem:[%s11 + $0x9c] sm:$0xf]
    %v7143 = vld [vmem:[%s11 + $0xa0] sm:$0xf]
    %v7144 = vld [vmem:[%s11 + $0xa4] sm:$0xf]
    %v7145 = vld [vmem:[%s11 + $0xa8] sm:$0xf]
    %v7146 = vld [vmem:[%s11 + $0xac] sm:$0xf]
    %v7147 = vld [vmem:[%s11 + $0xb0] sm:$0xf]
    %v7148 = vld [vmem:[%s11 + $0xb4] sm:$0xf]
    %v7149 = vld [vmem:[%s11 + $0xb8] sm:$0xf]
    %v7150 = vld [vmem:[%s11 + $0xbc] sm:$0xf]
    %v7151 = vld [vmem:[%s11 + $0xc0] sm:$0xf]
    %v7152 = vld [vmem:[%s11 + $0xc4] sm:$0xf]
    %v7153 = vld [vmem:[%s11 + $0xc8] sm:$0xf]
    %v7154 = vld [vmem:[%s11 + $0xcc] sm:$0xf]
    %v7155 = vld [vmem:[%s11 + $0xd0] sm:$0xf]
    %v7156 = vld [vmem:[%s11 + $0xd4] sm:$0xf]
    %v7157 = vld [vmem:[%s11 + $0xd8] sm:$0xf]
    %v7158 = vld [vmem:[%s11 + $0xdc] sm:$0xf]
    %v7159 = vld [vmem:[%s11 + $0xe0] sm:$0xf]
    %v7160 = vld [vmem:[%s11 + $0xe4] sm:$0xf]
    %v7161 = vld [vmem:[%s11 + $0xe8] sm:$0xf]
    %v7162 = vld [vmem:[%s11 + $0xec] sm:$0xf]
    %v7163 = vld [vmem:[%s11 + $0xf0] sm:$0xf]
    %v7164 = vld [vmem:[%s11 + $0xf4] sm:$0xf]
    %v7165 = vld [vmem:[%s11 + $0xf8] sm:$0xf]
    %v7166 = vld [vmem:[%s11 + $0xfc] sm:$0xf]
    %v7167 = vld [vmem:[%s11 + $0x100] sm:$0xf]
    %v7168 = vld [vmem:[%s11 + $0x104] sm:$0xf]
    %v7169 = vld [vmem:[%s11 + $0x108] sm:$0xf]
    %v7170 = vld [vmem:[%s11 + $0x10c] sm:$0xf]
    %v7171 = vld [vmem:[%s11 + $0x110] sm:$0xf]
    %v7172 = vld [vmem:[%s11 + $0x114] sm:$0xf]
    %v7173 = vld [vmem:[%s11 + $0x118] sm:$0xf]
    %v7174 = vld [vmem:[%s11 + $0x11c] sm:$0xf]
    %v7175 = vld [vmem:[%s11 + $0x120] sm:$0xf]
    %v7176 = vld [vmem:[%s11 + $0x124] sm:$0xf]
    %v7177 = vld [vmem:[%s11 + $0x128] sm:$0xf]
    %v7178 = vld [vmem:[%s11 + $0x12c] sm:$0xf]
    %v7179 = vld [vmem:[%s11 + $0x130] sm:$0xf]
    %v7180 = vld [vmem:[%s11 + $0x134] sm:$0xf]
    %v7181 = vld [vmem:[%s11 + $0x138] sm:$0xf]
    %v7182 = vld [vmem:[%s11 + $0x13c] sm:$0xf]
    %v7183 = vld [vmem:[%s11 + $0x140] sm:$0xf]
    %v7184 = vld [vmem:[%s11 + $0x144] sm:$0xf]
    %v7185 = vld [vmem:[%s11 + $0x148] sm:$0xf]
    %v7186 = vld [vmem:[%s11 + $0x14c] sm:$0xf]
    %v7187 = vld [vmem:[%s11 + $0x150] sm:$0xf]
    %v7188 = vld [vmem:[%s11 + $0x154] sm:$0xf]
    %v7189 = vld [vmem:[%s11 + $0x158] sm:$0xf]
    %v7190 = vld [vmem:[%s11 + $0x15c] sm:$0xf]
    %v7191 = vld [vmem:[%s11 + $0x160] sm:$0xf]
    %v7192 = vld [vmem:[%s11 + $0x164] sm:$0xf]
    %v7193 = vld [vmem:[%s11 + $0x168] sm:$0xf]
    %v7194 = vld [vmem:[%s11 + $0x16c] sm:$0xf]
    %v7195 = vld [vmem:[%s11 + $0x170] sm:$0xf]
    %v7196 = vld [vmem:[%s11 + $0x174] sm:$0xf]
    %v7197 = vld [vmem:[%s11 + $0x178] sm:$0xf]
    %v7198 = vld [vmem:[%s11 + $0x17c] sm:$0xf]
    %v7199 = vld [vmem:[%s11 + $0x180] sm:$0xf]
    %v7200 = vld [vmem:[%s11 + $0x184] sm:$0xf]
    %v7201 = vld [vmem:[%s11 + $0x188] sm:$0xf]
    %v7202 = vld [vmem:[%s11 + $0x18c] sm:$0xf]
    %v7203 = vld [vmem:[%s11 + $0x190] sm:$0xf]
    %v7204 = vld [vmem:[%s11 + $0x194] sm:$0xf]
    %v7205 = vld [vmem:[%s11 + $0x198] sm:$0xf]
    %v7206 = vld [vmem:[%s11 + $0x19c] sm:$0xf]
    %v7207 = vld [vmem:[%s11 + $0x1a0] sm:$0xf]
    %v7208 = vld [vmem:[%s11 + $0x1a4] sm:$0xf]
    %v7209 = vld [vmem:[%s11 + $0x1a8] sm:$0xf]
    %v7210 = vld [vmem:[%s11 + $0x1ac] sm:$0xf]
    %v7211 = vld [vmem:[%s11 + $0x1b0] sm:$0xf]
    %v7212 = vld [vmem:[%s11 + $0x1b4] sm:$0xf]
    %v7213 = vld [vmem:[%s11 + $0x1b8] sm:$0xf]
    %v7214 = vld [vmem:[%s11 + $0x1bc] sm:$0xf]
    %v7215 = vld [vmem:[%s11 + $0x1c0] sm:$0xf]
    %v7216 = vld [vmem:[%s11 + $0x1c4] sm:$0xf]
    %v7217 = vld [vmem:[%s11 + $0x1c8] sm:$0xf]
    %v7218 = vld [vmem:[%s11 + $0x1cc] sm:$0xf]
    %v7219 = vld [vmem:[%s11 + $0x1d0] sm:$0xf]
    %v7220 = vld [vmem:[%s11 + $0x1d4] sm:$0xf]
    %v7221 = vld [vmem:[%s11 + $0x1d8] sm:$0xf]
    %v7222 = vld [vmem:[%s11 + $0x1dc] sm:$0xf]
    %v7223 = vld [vmem:[%s11 + $0x1e0] sm:$0xf]
    %v7224 = vld [vmem:[%s11 + $0x1e4] sm:$0xf]
    %v7225 = vld [vmem:[%s11 + $0x1e8] sm:$0xf]
    %v7226 = vld [vmem:[%s11 + $0x1ec] sm:$0xf]
    %v7227 = vld [vmem:[%s11 + $0x1f0] sm:$0xf]
    %v7228 = vld [vmem:[%s11 + $0x1f4] sm:$0xf]
    %v7229 = vld [vmem:[%s11 + $0x1f8] sm:$0xf]
    %v7230 = vld [vmem:[%s11 + $0x1fc] sm:$0xf]
    %v7231 = vld [vmem:[#allocation4] sm:$0x1]
    %v7233 = vlaneseq
    %v7234 = vshrl.u32 %v7233, 7
    %v7235 = vsub.s32 0, %v7234
    %v7236 = vrot.slane %v7231, %v7235
    %v7366 = vunpack.c.l.b16 %v7103
    %v7367 = vunpack.c.l.b16 %v7104
    %v7368 = vunpack.c.l.b16 %v7105
    %v7369 = vunpack.c.l.b16 %v7106
    %v7370 = vunpack.c.l.b16 %v7107
    %v7371 = vunpack.c.l.b16 %v7108
    %v7372 = vunpack.c.l.b16 %v7109
    %v7373 = vunpack.c.l.b16 %v7110
    %v7374 = vunpack.c.l.b16 %v7111
    %v7375 = vunpack.c.l.b16 %v7112
    %v7376 = vunpack.c.l.b16 %v7113
    %v7377 = vunpack.c.l.b16 %v7114
    %v7378 = vunpack.c.l.b16 %v7115
    %v7379 = vunpack.c.l.b16 %v7116
    %v7380 = vunpack.c.l.b16 %v7117
    %v7381 = vunpack.c.l.b16 %v7118
    %v7382 = vunpack.c.l.b16 %v7119
    %v7383 = vunpack.c.l.b16 %v7120
    %v7384 = vunpack.c.l.b16 %v7121
    %v7385 = vunpack.c.l.b16 %v7122
    %v7386 = vunpack.c.l.b16 %v7123
    %v7387 = vunpack.c.l.b16 %v7124
    %v7388 = vunpack.c.l.b16 %v7125
    %v7389 = vunpack.c.l.b16 %v7126
    %v7390 = vunpack.c.l.b16 %v7127
    %v7391 = vunpack.c.l.b16 %v7128
    %v7392 = vunpack.c.l.b16 %v7129
    %v7393 = vunpack.c.l.b16 %v7130
    %v7394 = vunpack.c.l.b16 %v7131
    %v7395 = vunpack.c.l.b16 %v7132
    %v7396 = vunpack.c.l.b16 %v7133
    %v7397 = vunpack.c.l.b16 %v7134
    %v7398 = vunpack.c.l.b16 %v7135
    %v7399 = vunpack.c.l.b16 %v7136
    %v7400 = vunpack.c.l.b16 %v7137
    %v7401 = vunpack.c.l.b16 %v7138
    %v7402 = vunpack.c.l.b16 %v7139
    %v7403 = vunpack.c.l.b16 %v7140
    %v7404 = vunpack.c.l.b16 %v7141
    %v7405 = vunpack.c.l.b16 %v7142
    %v7406 = vunpack.c.l.b16 %v7143
    %v7407 = vunpack.c.l.b16 %v7144
    %v7408 = vunpack.c.l.b16 %v7145
    %v7409 = vunpack.c.l.b16 %v7146
    %v7410 = vunpack.c.l.b16 %v7147
    %v7411 = vunpack.c.l.b16 %v7148
    %v7412 = vunpack.c.l.b16 %v7149
    %v7413 = vunpack.c.l.b16 %v7150
    %v7414 = vunpack.c.l.b16 %v7151
    %v7415 = vunpack.c.l.b16 %v7152
    %v7416 = vunpack.c.l.b16 %v7153
    %v7417 = vunpack.c.l.b16 %v7154
    %v7418 = vunpack.c.l.b16 %v7155
    %v7419 = vunpack.c.l.b16 %v7156
    %v7420 = vunpack.c.l.b16 %v7157
    %v7421 = vunpack.c.l.b16 %v7158
    %v7422 = vunpack.c.l.b16 %v7159
    %v7423 = vunpack.c.l.b16 %v7160
    %v7424 = vunpack.c.l.b16 %v7161
    %v7425 = vunpack.c.l.b16 %v7162
    %v7426 = vunpack.c.l.b16 %v7163
    %v7427 = vunpack.c.l.b16 %v7164
    %v7428 = vunpack.c.l.b16 %v7165
    %v7429 = vunpack.c.l.b16 %v7166
    %v7430 = vunpack.c.l.b16 %v7167
    %v7431 = vunpack.c.l.b16 %v7168
    %v7432 = vunpack.c.l.b16 %v7169
    %v7433 = vunpack.c.l.b16 %v7170
    %v7434 = vunpack.c.l.b16 %v7171
    %v7435 = vunpack.c.l.b16 %v7172
    %v7436 = vunpack.c.l.b16 %v7173
    %v7437 = vunpack.c.l.b16 %v7174
    %v7438 = vunpack.c.l.b16 %v7175
    %v7439 = vunpack.c.l.b16 %v7176
    %v7440 = vunpack.c.l.b16 %v7177
    %v7441 = vunpack.c.l.b16 %v7178
    %v7442 = vunpack.c.l.b16 %v7179
    %v7443 = vunpack.c.l.b16 %v7180
    %v7444 = vunpack.c.l.b16 %v7181
    %v7445 = vunpack.c.l.b16 %v7182
    %v7446 = vunpack.c.l.b16 %v7183
    %v7447 = vunpack.c.l.b16 %v7184
    %v7448 = vunpack.c.l.b16 %v7185
    %v7449 = vunpack.c.l.b16 %v7186
    %v7450 = vunpack.c.l.b16 %v7187
    %v7451 = vunpack.c.l.b16 %v7188
    %v7452 = vunpack.c.l.b16 %v7189
    %v7453 = vunpack.c.l.b16 %v7190
    %v7454 = vunpack.c.l.b16 %v7191
    %v7455 = vunpack.c.l.b16 %v7192
    %v7456 = vunpack.c.l.b16 %v7193
    %v7457 = vunpack.c.l.b16 %v7194
    %v7458 = vunpack.c.l.b16 %v7195
    %v7459 = vunpack.c.l.b16 %v7196
    %v7460 = vunpack.c.l.b16 %v7197
    %v7461 = vunpack.c.l.b16 %v7198
    %v7462 = vunpack.c.l.b16 %v7199
    %v7463 = vunpack.c.l.b16 %v7200
    %v7464 = vunpack.c.l.b16 %v7201
    %v7465 = vunpack.c.l.b16 %v7202
    %v7466 = vunpack.c.l.b16 %v7203
    %v7467 = vunpack.c.l.b16 %v7204
    %v7468 = vunpack.c.l.b16 %v7205
    %v7469 = vunpack.c.l.b16 %v7206
    %v7470 = vunpack.c.l.b16 %v7207
    %v7471 = vunpack.c.l.b16 %v7208
    %v7472 = vunpack.c.l.b16 %v7209
    %v7473 = vunpack.c.l.b16 %v7210
    %v7474 = vunpack.c.l.b16 %v7211
    %v7475 = vunpack.c.l.b16 %v7212
    %v7476 = vunpack.c.l.b16 %v7213
    %v7477 = vunpack.c.l.b16 %v7214
    %v7478 = vunpack.c.l.b16 %v7215
    %v7479 = vunpack.c.l.b16 %v7216
    %v7480 = vunpack.c.l.b16 %v7217
    %v7481 = vunpack.c.l.b16 %v7218
    %v7482 = vunpack.c.l.b16 %v7219
    %v7483 = vunpack.c.l.b16 %v7220
    %v7484 = vunpack.c.l.b16 %v7221
    %v7485 = vunpack.c.l.b16 %v7222
    %v7486 = vunpack.c.l.b16 %v7223
    %v7487 = vunpack.c.l.b16 %v7224
    %v7488 = vunpack.c.l.b16 %v7225
    %v7489 = vunpack.c.l.b16 %v7226
    %v7490 = vunpack.c.l.b16 %v7227
    %v7491 = vunpack.c.l.b16 %v7228
    %v7492 = vunpack.c.l.b16 %v7229
    %v7493 = vunpack.c.l.b16 %v7230
    %v7494 = vpack.c.b16 %v7367, %v7366
    %v7495 = vpack.c.b16 %v7369, %v7368
    %v7496 = vpack.c.b16 %v7371, %v7370
    %v7497 = vpack.c.b16 %v7373, %v7372
    %v7498 = vpack.c.b16 %v7375, %v7374
    %v7499 = vpack.c.b16 %v7377, %v7376
    %v7500 = vpack.c.b16 %v7379, %v7378
    %v7501 = vpack.c.b16 %v7381, %v7380
    %v7502 = vpack.c.b16 %v7383, %v7382
    %v7503 = vpack.c.b16 %v7385, %v7384
    %v7504 = vpack.c.b16 %v7387, %v7386
    %v7505 = vpack.c.b16 %v7389, %v7388
    %v7506 = vpack.c.b16 %v7391, %v7390
    %v7507 = vpack.c.b16 %v7393, %v7392
    %v7508 = vpack.c.b16 %v7395, %v7394
    %v7509 = vpack.c.b16 %v7397, %v7396
    %v7510 = vpack.c.b16 %v7399, %v7398
    %v7511 = vpack.c.b16 %v7401, %v7400
    %v7512 = vpack.c.b16 %v7403, %v7402
    %v7513 = vpack.c.b16 %v7405, %v7404
    %v7514 = vpack.c.b16 %v7407, %v7406
    %v7515 = vpack.c.b16 %v7409, %v7408
    %v7516 = vpack.c.b16 %v7411, %v7410
    %v7517 = vpack.c.b16 %v7413, %v7412
    %v7518 = vpack.c.b16 %v7415, %v7414
    %v7519 = vpack.c.b16 %v7417, %v7416
    %v7520 = vpack.c.b16 %v7419, %v7418
    %v7521 = vpack.c.b16 %v7421, %v7420
    %v7522 = vpack.c.b16 %v7423, %v7422
    %v7523 = vpack.c.b16 %v7425, %v7424
    %v7524 = vpack.c.b16 %v7427, %v7426
    %v7525 = vpack.c.b16 %v7429, %v7428
    %v7526 = vpack.c.b16 %v7431, %v7430
    %v7527 = vpack.c.b16 %v7433, %v7432
    %v7528 = vpack.c.b16 %v7435, %v7434
    %v7529 = vpack.c.b16 %v7437, %v7436
    %v7530 = vpack.c.b16 %v7439, %v7438
    %v7531 = vpack.c.b16 %v7441, %v7440
    %v7532 = vpack.c.b16 %v7443, %v7442
    %v7533 = vpack.c.b16 %v7445, %v7444
    %v7534 = vpack.c.b16 %v7447, %v7446
    %v7535 = vpack.c.b16 %v7449, %v7448
    %v7536 = vpack.c.b16 %v7451, %v7450
    %v7537 = vpack.c.b16 %v7453, %v7452
    %v7538 = vpack.c.b16 %v7455, %v7454
    %v7539 = vpack.c.b16 %v7457, %v7456
    %v7540 = vpack.c.b16 %v7459, %v7458
    %v7541 = vpack.c.b16 %v7461, %v7460
    %v7542 = vpack.c.b16 %v7463, %v7462
    %v7543 = vpack.c.b16 %v7465, %v7464
    %v7544 = vpack.c.b16 %v7467, %v7466
    %v7545 = vpack.c.b16 %v7469, %v7468
    %v7546 = vpack.c.b16 %v7471, %v7470
    %v7547 = vpack.c.b16 %v7473, %v7472
    %v7548 = vpack.c.b16 %v7475, %v7474
    %v7549 = vpack.c.b16 %v7477, %v7476
    %v7550 = vpack.c.b16 %v7479, %v7478
    %v7551 = vpack.c.b16 %v7481, %v7480
    %v7552 = vpack.c.b16 %v7483, %v7482
    %v7553 = vpack.c.b16 %v7485, %v7484
    %v7554 = vpack.c.b16 %v7487, %v7486
    %v7555 = vpack.c.b16 %v7489, %v7488
    %v7556 = vpack.c.b16 %v7491, %v7490
    %v7557 = vpack.c.b16 %v7493, %v7492
    %7622 = vmatprep.subr.bf16.mxu0 0
    %7623 = vmatpush1.bf16.msra.mxu0 %v7494
    %7624 = vmatprep.subr.bf16.mxu0 0
    %7625 = vmatpush1.bf16.msra.mxu0 %v7495
    %7626 = vmatprep.subr.bf16.mxu0 0
    %7627 = vmatpush1.bf16.msra.mxu0 %v7496
    %7628 = vmatprep.subr.bf16.mxu0 0
    %7629 = vmatpush1.bf16.msra.mxu0 %v7497
    %7630 = vmatprep.subr.bf16.mxu0 0
    %7631 = vmatpush1.bf16.msra.mxu0 %v7498
    %7632 = vmatprep.subr.bf16.mxu0 0
    %7633 = vmatpush1.bf16.msra.mxu0 %v7499
    %7634 = vmatprep.subr.bf16.mxu0 0
    %7635 = vmatpush1.bf16.msra.mxu0 %v7500
    %7636 = vmatprep.subr.bf16.mxu0 0
    %7637 = vmatpush1.bf16.msra.mxu0 %v7501
    %7638 = vmatprep.subr.bf16.mxu0 0
    %7639 = vmatpush1.bf16.msra.mxu0 %v7502
    %7640 = vmatprep.subr.bf16.mxu0 0
    %7641 = vmatpush1.bf16.msra.mxu0 %v7503
    %7642 = vmatprep.subr.bf16.mxu0 0
    %7643 = vmatpush1.bf16.msra.mxu0 %v7504
    %7644 = vmatprep.subr.bf16.mxu0 0
    %7645 = vmatpush1.bf16.msra.mxu0 %v7505
    %7646 = vmatprep.subr.bf16.mxu0 0
    %7647 = vmatpush1.bf16.msra.mxu0 %v7506
    %7648 = vmatprep.subr.bf16.mxu0 0
    %7649 = vmatpush1.bf16.msra.mxu0 %v7507
    %7650 = vmatprep.subr.bf16.mxu0 0
    %7651 = vmatpush1.bf16.msra.mxu0 %v7508
    %7652 = vmatprep.subr.bf16.mxu0 0
    %7653 = vmatpush1.bf16.msra.mxu0 %v7509
    %7654 = vmatprep.mubr.bf16.mxu0 %v7096
    %7655 = vmatmul.mubr.bf16.gmra.mrb[0].mxu0 %v7095
    %v7656 = vpop.f32.mrb[0].mxu0
    %v7657 = vadd.f32 %v7236, %v7656
    %v7658 = vpop.f32.mrb[0].mxu0
    %v7659 = vpop.f32.mrb[0].mxu0
    %v7660 = vpop.f32.mrb[0].mxu0
    %7661 = vdwg.mxu0
    %7662 = vmatprep.subr.bf16.mxu0 0
    %7663 = vmatpush1.bf16.msra.mxu0 %v7510
    %7664 = vmatprep.subr.bf16.mxu0 0
    %7665 = vmatpush1.bf16.msra.mxu0 %v7511
    %7666 = vmatprep.subr.bf16.mxu0 0
    %7667 = vmatpush1.bf16.msra.mxu0 %v7512
    %7668 = vmatprep.subr.bf16.mxu0 0
    %7669 = vmatpush1.bf16.msra.mxu0 %v7513
    %7670 = vmatprep.subr.bf16.mxu0 0
    %7671 = vmatpush1.bf16.msra.mxu0 %v7514
    %7672 = vmatprep.subr.bf16.mxu0 0
    %7673 = vmatpush1.bf16.msra.mxu0 %v7515
    %7674 = vmatprep.subr.bf16.mxu0 0
    %7675 = vmatpush1.bf16.msra.mxu0 %v7516
    %7676 = vmatprep.subr.bf16.mxu0 0
    %7677 = vmatpush1.bf16.msra.mxu0 %v7517
    %7678 = vmatprep.subr.bf16.mxu0 0
    %7679 = vmatpush1.bf16.msra.mxu0 %v7518
    %7680 = vmatprep.subr.bf16.mxu0 0
    %7681 = vmatpush1.bf16.msra.mxu0 %v7519
    %7682 = vmatprep.subr.bf16.mxu0 0
    %7683 = vmatpush1.bf16.msra.mxu0 %v7520
    %7684 = vmatprep.subr.bf16.mxu0 0
    %7685 = vmatpush1.bf16.msra.mxu0 %v7521
    %7686 = vmatprep.subr.bf16.mxu0 0
    %7687 = vmatpush1.bf16.msra.mxu0 %v7522
    %7688 = vmatprep.subr.bf16.mxu0 0
    %7689 = vmatpush1.bf16.msra.mxu0 %v7523
    %7690 = vmatprep.subr.bf16.mxu0 0
    %7691 = vmatpush1.bf16.msra.mxu0 %v7524
    %7692 = vmatprep.subr.bf16.mxu0 0
    %7693 = vmatpush1.bf16.msra.mxu0 %v7525
    %7694 = vmatprep.mubr.bf16.mxu0 %v7098
    %7695 = vmatmul.mubr.bf16.gmra.mrb[0].mxu0 %v7097
    %v7696 = vpop.f32.mrb[0].mxu0
    %v7697 = vadd.f32 %v7657, %v7696
    %v7698 = vpop.f32.mrb[0].mxu0
    %v7699 = vpop.f32.mrb[0].mxu0
    %v7700 = vpop.f32.mrb[0].mxu0
    %7701 = vdwg.mxu0
    %7702 = vmatprep.subr.bf16.mxu0 0
    %7703 = vmatpush1.bf16.msra.mxu0 %v7526
    %7704 = vmatprep.subr.bf16.mxu0 0
    %7705 = vmatpush1.bf16.msra.mxu0 %v7527
    %7706 = vmatprep.subr.bf16.mxu0 0
    %7707 = vmatpush1.bf16.msra.mxu0 %v7528
    %7708 = vmatprep.subr.bf16.mxu0 0
    %7709 = vmatpush1.bf16.msra.mxu0 %v7529
    %7710 = vmatprep.subr.bf16.mxu0 0
    %7711 = vmatpush1.bf16.msra.mxu0 %v7530
    %7712 = vmatprep.subr.bf16.mxu0 0
    %7713 = vmatpush1.bf16.msra.mxu0 %v7531
    %7714 = vmatprep.subr.bf16.mxu0 0
    %7715 = vmatpush1.bf16.msra.mxu0 %v7532
    %7716 = vmatprep.subr.bf16.mxu0 0
    %7717 = vmatpush1.bf16.msra.mxu0 %v7533
    %7718 = vmatprep.subr.bf16.mxu0 0
    %7719 = vmatpush1.bf16.msra.mxu0 %v7534
    %7720 = vmatprep.subr.bf16.mxu0 0
    %7721 = vmatpush1.bf16.msra.mxu0 %v7535
    %7722 = vmatprep.subr.bf16.mxu0 0
    %7723 = vmatpush1.bf16.msra.mxu0 %v7536
    %7724 = vmatprep.subr.bf16.mxu0 0
    %7725 = vmatpush1.bf16.msra.mxu0 %v7537
    %7726 = vmatprep.subr.bf16.mxu0 0
    %7727 = vmatpush1.bf16.msra.mxu0 %v7538
    %7728 = vmatprep.subr.bf16.mxu0 0
    %7729 = vmatpush1.bf16.msra.mxu0 %v7539
    %7730 = vmatprep.subr.bf16.mxu0 0
    %7731 = vmatpush1.bf16.msra.mxu0 %v7540
    %7732 = vmatprep.subr.bf16.mxu0 0
    %7733 = vmatpush1.bf16.msra.mxu0 %v7541
    %7734 = vmatprep.mubr.bf16.mxu0 %v7100
    %7735 = vmatmul.mubr.bf16.gmra.mrb[0].mxu0 %v7099
    %v7736 = vpop.f32.mrb[0].mxu0
    %v7737 = vadd.f32 %v7697, %v7736
    %v7738 = vpop.f32.mrb[0].mxu0
    %v7739 = vpop.f32.mrb[0].mxu0
    %v7740 = vpop.f32.mrb[0].mxu0
    %7741 = vdwg.mxu0
    %7742 = vmatprep.subr.bf16.mxu0 0
    %7743 = vmatpush1.bf16.msra.mxu0 %v7542
    %7744 = vmatprep.subr.bf16.mxu0 0
    %7745 = vmatpush1.bf16.msra.mxu0 %v7543
    %7746 = vmatprep.subr.bf16.mxu0 0
    %7747 = vmatpush1.bf16.msra.mxu0 %v7544
    %7748 = vmatprep.subr.bf16.mxu0 0
    %7749 = vmatpush1.bf16.msra.mxu0 %v7545
    %7750 = vmatprep.subr.bf16.mxu0 0
    %7751 = vmatpush1.bf16.msra.mxu0 %v7546
    %7752 = vmatprep.subr.bf16.mxu0 0
    %7753 = vmatpush1.bf16.msra.mxu0 %v7547
    %7754 = vmatprep.subr.bf16.mxu0 0
    %7755 = vmatpush1.bf16.msra.mxu0 %v7548
    %7756 = vmatprep.subr.bf16.mxu0 0
    %7757 = vmatpush1.bf16.msra.mxu0 %v7549
    %7758 = vmatprep.subr.bf16.mxu0 0
    %7759 = vmatpush1.bf16.msra.mxu0 %v7550
    %7760 = vmatprep.subr.bf16.mxu0 0
    %7761 = vmatpush1.bf16.msra.mxu0 %v7551
    %7762 = vmatprep.subr.bf16.mxu0 0
    %7763 = vmatpush1.bf16.msra.mxu0 %v7552
    %7764 = vmatprep.subr.bf16.mxu0 0
    %7765 = vmatpush1.bf16.msra.mxu0 %v7553
    %7766 = vmatprep.subr.bf16.mxu0 0
    %7767 = vmatpush1.bf16.msra.mxu0 %v7554
    %7768 = vmatprep.subr.bf16.mxu0 0
    %7769 = vmatpush1.bf16.msra.mxu0 %v7555
    %7770 = vmatprep.subr.bf16.mxu0 0
    %7771 = vmatpush1.bf16.msra.mxu0 %v7556
    %7772 = vmatprep.subr.bf16.mxu0 0
    %7773 = vmatpush1.bf16.msra.mxu0 %v7557
    %7774 = vmatprep.mubr.bf16.mxu0 %v7102
    %7775 = vmatmul.mubr.bf16.gmra.mrb[0].mxu0 %v7101
    %v7776 = vpop.f32.mrb[0].mxu0
    %v7777 = vadd.f32 %v7737, %v7776
    %v7778 = vpop.f32.mrb[0].mxu0
    %v7779 = vpop.f32.mrb[0].mxu0
    %v7780 = vpop.f32.mrb[0].mxu0
    %7781 = vdwg.mxu0
    %v7782 = vmax.f32 %v7777, -30.0
    %v7783 = vmin.f32 %v7782, 30.0
    %v7784 = vsub.f32 0.0, %v7783
    %v7785 = vmul.f32 %v7784, 1.442695
    %v7786 = vpow.pop %v7785
    %v7787 = vadd.f32 %v7786, 1.0
    %v7788 = vrcp.pop %v7787
    %v7789 = vmul.f32 1.0, %v7788
    %vm7790 = vcmask 1024
    %7791 = vst.msk [vmem:[%s13] sm:$0x3] %vm7790, %v7789
    // Predicated region
    $region82: #{score_predictor.1} parent=1 // pred_check
      _
    $region83: #{score_predictor.1} parent=1 // pred_check_branch
      %7793 = sbr.rel (0) target = $region85
    $region84: #{score_predictor.1} parent=1 // pred_region
      _
    $region85: #{score_predictor.1} parent=1 // pred_fallthru
      _
    // Predicated region
    $region86: #{score_predictor.1} parent=1 // pred_check
      _
    $region87: #{score_predictor.1} parent=1 // pred_check_branch
      %7795 = sbr.rel (0) target = $region89
    $region88: #{score_predictor.1} parent=1 // pred_region
      _
    $region89: #{score_predictor.1} parent=1 // pred_fallthru
      _
    %7796 = vsyncpa [#allocation6], 1
    %7797 = vsyncpa [#allocation8], 1
    %7798 = vsyncpa [#allocation11], 1
    %7799 = vsyncpa [#allocation14], 1
    %7800 = vsyncpa [#allocation17], 1
  %7801 = vsyncmov [#allocation3]
  %s7802 = vpop.sfrf %7801
  %p7803 = scmp.eq.s32.totalorder %s7802, 0
  %p7804 = pneg %p7803
  %7806 = shalt.err (%p7804)

</llo_original>
